<compile_context>
chip_gen: v7x
topology: tpu7x:2x2x1
jax: 0.10.0
libtpu: 0.0.40
codegen_flags: <defaults>
</compile_context>

<pallas_src>
import jax
import jax.numpy as jnp
from jax.experimental import pallas as pl
from jax.experimental.pallas import tpu as pltpu

NC = 3          # nc
NDF = 8         # ndf (small deterministic choice)
KH = KW = 4
BN_EPS = 1e-5
SLOPE = 0.2
N_BATCH = 2
H_IN = 16       # square input


def _layer_cfgs():
    cfgs = []
    enc_ch = [NC, NDF, NDF * 2, NDF * 4, NDF * 8]
    h = H_IN
    for l in range(4):
        cfgs.append(dict(kind="conv", cout=enc_ch[l + 1],
                         hin=h, hout=h // 2, bn=(l != 0), act=True))
        h //= 2
    dec_ch = [NDF * 8, NDF * 4, NDF * 2, NDF, NC]
    for l in range(4):
        cfgs.append(dict(kind="deconv", cout=dec_ch[l + 1],
                         hin=h, hout=h * 2, bn=(l != 3), act=(l != 3)))
        h *= 2
    return tuple(cfgs)


LAYER_CFGS = _layer_cfgs()
LAYER_NAMES = ("enc_conv1", "enc_conv2", "enc_conv3", "enc_conv4",
               "dec_conv4", "dec_conv3", "dec_conv2", "dec_conv1")
BN_NAMES = ("enc_bn2", "enc_bn3", "enc_bn4", "dec_bn4", "dec_bn3", "dec_bn2")


def _log2(v):
    return int(v).bit_length() - 1


# ---------------------------------------------------------------------------
# in-kernel constant builders (2-D iota + integer ops only -> pure VPU work)
# ---------------------------------------------------------------------------
def _h_select(kind, n, hin, hout, dh):
    """(n*hout, n*hin) 0/1 matrix selecting the H-direction tap `dh`."""
    rows, cols = n * hout, n * hin
    r = jax.lax.broadcasted_iota(jnp.int32, (rows, cols), 0)
    p = jax.lax.broadcasted_iota(jnp.int32, (rows, cols), 1)
    n_out = r >> _log2(hout)
    h_out = r & (hout - 1)
    n_in = p >> _log2(hin)
    h_in = p & (hin - 1)
    if kind == "conv":          # stride 2, pad 1: input row = 2*i + dh - 1
        hit = h_in == (2 * h_out + dh - 1)
    else:                       # ConvTranspose2d stride 2, pad 1: 2*i = oi + 1 - dh
        hit = (2 * h_in) == (h_out + 1 - dh)
    keep = jnp.logical_and(n_out == n_in, hit)
    return jnp.where(keep, 1.0, 0.0).astype(jnp.float32)


def _channel_group(wout, cout):
    """One-hot maps between flattened (w, c) columns and channels c."""
    woc = wout * cout
    k = jax.lax.broadcasted_iota(jnp.int32, (woc, cout), 0)
    c = jax.lax.broadcasted_iota(jnp.int32, (woc, cout), 1)
    g = jnp.where((k & (cout - 1)) == c, 1.0, 0.0).astype(jnp.float32)
    kt = jax.lax.broadcasted_iota(jnp.int32, (cout, woc), 1)
    ct = jax.lax.broadcasted_iota(jnp.int32, (cout, woc), 0)
    gt = jnp.where((kt & (cout - 1)) == ct, 1.0, 0.0).astype(jnp.float32)
    return g, gt


def _batch_norm(y, gamma, beta, wout, cout):
    """Training-mode BatchNorm2d on the (n*h, w*c) 2-D layout."""
    g, gt = _channel_group(wout, cout)
    count = float(y.shape[0] * wout)                    # N*Hout*Wout per channel
    col_sum = jnp.sum(y, axis=0, keepdims=True)
    col_sq = jnp.sum(y * y, axis=0, keepdims=True)
    ch_mean = jnp.dot(col_sum, g, preferred_element_type=jnp.float32) / count
    ch_sq = jnp.dot(col_sq, g, preferred_element_type=jnp.float32) / count
    ch_var = ch_sq - ch_mean * ch_mean
    scale = gamma * jax.lax.rsqrt(ch_var + BN_EPS)      # (1, cout)   EUP rsqrt
    shift = beta - ch_mean * scale                      # (1, cout)
    scale_b = jnp.dot(scale, gt, preferred_element_type=jnp.float32)
    shift_b = jnp.dot(shift, gt, preferred_element_type=jnp.float32)
    return y * scale_b + shift_b                        # single FMA per element


# ---------------------------------------------------------------------------
# the single fused kernel
# ---------------------------------------------------------------------------
def _netd_fused_kernel(*refs):
    n_layers = len(LAYER_CFGS)
    x_ref = refs[0]
    band_refs = refs[1:1 + n_layers]
    bn_refs = refs[1 + n_layers:-1]
    out_ref = refs[-1]

    x = x_ref[...]                                      # (N*H, W*C) f32
    bn_i = 0
    for li, cfg in enumerate(LAYER_CFGS):
        acc = None
        for dh in range(KH):                            # 4 H-direction taps
            sel = _h_select(cfg["kind"], N_BATCH, cfg["hin"], cfg["hout"], dh)
            rows = jnp.dot(sel, x, preferred_element_type=jnp.float32)
            part = jnp.dot(rows, band_refs[li][dh],
                           preferred_element_type=jnp.float32)
            acc = part if acc is None else acc + part
        if cfg["bn"]:
            gamma = bn_refs[2 * bn_i][...]
            beta = bn_refs[2 * bn_i + 1][...]
            bn_i += 1
            acc = _batch_norm(acc, gamma, beta, cfg["hout"], cfg["cout"])
        if cfg["act"]:
            acc = jnp.where(acc > 0, acc, SLOPE * acc)  # leaky_relu(0.2)
        x = acc
    out_ref[...] = x


# ---------------------------------------------------------------------------
# wrapper-side weight preprocessing (tiny, done by XLA once per call)
# ---------------------------------------------------------------------------
def _band_conv(w, win):
    """Conv2d weight (Cout, Cin, 4, 4), s=2, p=1 -> (4, win*Cin, wout*Cout)."""
    cout, cin, kh, kw = w.shape
    wout = win // 2
    wt = jnp.transpose(w, (2, 3, 1, 0))          # [dh, dw, ci, co]
    wi = jnp.arange(win)[:, None]                # input column
    jo = jnp.arange(wout)[None, :]               # output column
    dw = wi - 2 * jo + 1
    valid = (dw >= 0) & (dw < kw)
    dwc = jnp.clip(dw, 0, kw - 1)
    bands = []
    for dh in range(kh):
        g = wt[dh][dwc]                          # (win, wout, cin, cout)
        g = jnp.where(valid[:, :, None, None], g, 0.0)
        bands.append(jnp.transpose(g, (0, 2, 1, 3)).reshape(win * cin, wout * cout))
    return jnp.stack(bands, axis=0)


def _band_deconv(w, win):
    """ConvTranspose2d weight (Cin, Cout, 4, 4), s=2, p=1 -> (4, win*Cin, wout*Cout)."""
    cin, cout, kh, kw = w.shape
    wout = win * 2
    wt = jnp.transpose(w, (2, 3, 0, 1))          # [dh, dw, ci, co]
    ji = jnp.arange(win)[:, None]                # input column
    oj = jnp.arange(wout)[None, :]               # output column
    dw = oj - 2 * ji + 1
    valid = (dw >= 0) & (dw < kw)
    dwc = jnp.clip(dw, 0, kw - 1)
    bands = []
    for dh in range(kh):
        g = wt[dh][dwc]                          # (win, wout, cin, cout)
        g = jnp.where(valid[:, :, None, None], g, 0.0)
        bands.append(jnp.transpose(g, (0, 2, 1, 3)).reshape(win * cin, wout * cout))
    return jnp.stack(bands, axis=0)


def netD_forward(x_nchw, params):
    n, c, h, w = x_nchw.shape
    assert (n, c, h, w) == (N_BATCH, NC, H_IN, H_IN)
    x2d = jnp.transpose(x_nchw, (0, 2, 3, 1)).reshape(n * h, w * c)

    inputs = [x2d.astype(jnp.float32)]
    for name, cfg in zip(LAYER_NAMES, LAYER_CFGS):
        wgt = params[name].astype(jnp.float32)
        if cfg["kind"] == "conv":
            inputs.append(_band_conv(wgt, cfg["hin"]))
        else:
            inputs.append(_band_deconv(wgt, cfg["hin"]))
    for name in BN_NAMES:
        gamma, beta = params[name]
        inputs.append(gamma.reshape(1, -1).astype(jnp.float32))
        inputs.append(beta.reshape(1, -1).astype(jnp.float32))

    out2d = pl.pallas_call(
        _netd_fused_kernel,
        out_shape=jax.ShapeDtypeStruct((n * h, w * NC), jnp.float32),
        in_specs=[pl.BlockSpec(memory_space=pltpu.MemorySpace.VMEM)] * len(inputs),
        out_specs=pl.BlockSpec(memory_space=pltpu.MemorySpace.VMEM),
        compiler_params=pltpu.CompilerParams(vmem_limit_bytes=32 * 1024 * 1024),
    )(*inputs)

    return out2d.reshape(n, h, w, NC).transpose(0, 3, 1, 2)   # back to NCHW


# ---------------------------------------------------------------------------
# params, plain-XLA reference, and self-check
# ---------------------------------------------------------------------------
def init_params(key):
    ks = jax.random.split(key, 16)
    def conv_w(k, shape):                       # DCGAN-style N(0, 0.02)
        return 0.02 * jax.random.normal(k, shape, jnp.float32)
    def bn_p(k, ch):                            # gamma ~ N(1, 0.02), beta = 0
        return (1.0 + 0.02 * jax.random.normal(k, (ch,), jnp.float32),
                jnp.zeros((ch,), jnp.float32))
    return {
        "enc_conv1": conv_w(ks[0], (NDF, NC, KH, KW)),
        "enc_conv2": conv_w(ks[1], (NDF * 2, NDF, KH, KW)),
        "enc_bn2": bn_p(ks[2], NDF * 2),
        "enc_conv3": conv_w(ks[3], (NDF * 4, NDF * 2, KH, KW)),
        "enc_bn3": bn_p(ks[4], NDF * 4),
        "enc_conv4": conv_w(ks[5], (NDF * 8, NDF * 4, KH, KW)),
        "enc_bn4": bn_p(ks[6], NDF * 8),
        "dec_conv4": conv_w(ks[7], (NDF * 8, NDF * 4, KH, KW)),   # ConvTranspose: (Cin, Cout, kh, kw)
        "dec_bn4": bn_p(ks[8], NDF * 4),
        "dec_conv3": conv_w(ks[9], (NDF * 4, NDF * 2, KH, KW)),
        "dec_bn3": bn_p(ks[10], NDF * 2),
        "dec_conv2": conv_w(ks[11], (NDF * 2, NDF, KH, KW)),
        "dec_bn2": bn_p(ks[12], NDF),
        "dec_conv1": conv_w(ks[13], (NDF, NC, KH, KW)),
    }


def _ref_forward(x, p):
    hp = jax.lax.Precision.HIGHEST
    def conv(h, w):
        return jax.lax.conv_general_dilated(
            h, w, (2, 2), ((1, 1), (1, 1)),
            dimension_numbers=("NCHW", "OIHW", "NCHW"), precision=hp)
    def deconv(h, w):
        wf = jnp.transpose(jnp.flip(w, (2, 3)), (1, 0, 2, 3))
        return jax.lax.conv_general_dilated(
            h, wf, (1, 1), ((2, 2), (2, 2)), lhs_dilation=(2, 2),
            dimension_numbers=("NCHW", "OIHW", "NCHW"), precision=hp)
    def bn(h, gb):
        g, b = gb
        m = jnp.mean(h, axis=(0, 2, 3), keepdims=True)
        v = jnp.mean((h - m) ** 2, axis=(0, 2, 3), keepdims=True)
        return ((h - m) * jax.lax.rsqrt(v + BN_EPS)
                * g.reshape(1, -1, 1, 1) + b.reshape(1, -1, 1, 1))
    def lrelu(h):
        return jnp.where(h > 0, h, SLOPE * h)
    h = lrelu(conv(x, p["enc_conv1"]))
    h = lrelu(bn(conv(h, p["enc_conv2"]), p["enc_bn2"]))
    h = lrelu(bn(conv(h, p["enc_conv3"]), p["enc_bn3"]))
    h = lrelu(bn(conv(h, p["enc_conv4"]), p["enc_bn4"]))
    h = lrelu(bn(deconv(h, p["dec_conv4"]), p["dec_bn4"]))
    h = lrelu(bn(deconv(h, p["dec_conv3"]), p["dec_bn3"]))
    h = lrelu(bn(deconv(h, p["dec_conv2"]), p["dec_bn2"]))
    return deconv(h, p["dec_conv1"])


if __name__ == "__main__":
    key = jax.random.PRNGKey(0)
    k_param, k_in = jax.random.split(key)
    params = init_params(k_param)
    x = jax.random.normal(k_in, (N_BATCH, NC, H_IN, H_IN), jnp.float32)  # NCHW

    fwd = jax.jit(netD_forward)
    y = fwd(x, params)
    jax.block_until_ready(y)
    assert y.shape == (N_BATCH, NC, H_IN, H_IN)

    # correctness check against a plain-XLA reference of the same forward pass
    y_ref = jax.jit(_ref_forward)(x, params)
    jax.block_until_ready(y_ref)
    rel_err = float(jnp.max(jnp.abs(y - y_ref)) /
                    (jnp.max(jnp.abs(y_ref)) + 1e-12))
    assert rel_err < 3e-2, f"mismatch vs reference: rel_err={rel_err}"

    print("KERNEL_OK")
</pallas_src>

<mosaic_0001>
module attributes {stable_mosaic.version = 11 : i64} {
  func.func @_netd_fused_kernel(%arg0: memref<32x48xf32, #tpu.memory_space<vmem>>, %arg1: memref<4x48x64xf32, #tpu.memory_space<vmem>>, %arg2: memref<4x64x64xf32, #tpu.memory_space<vmem>>, %arg3: memref<4x64x64xf32, #tpu.memory_space<vmem>>, %arg4: memref<4x64x64xf32, #tpu.memory_space<vmem>>, %arg5: memref<4x64x64xf32, #tpu.memory_space<vmem>>, %arg6: memref<4x64x64xf32, #tpu.memory_space<vmem>>, %arg7: memref<4x64x64xf32, #tpu.memory_space<vmem>>, %arg8: memref<4x64x48xf32, #tpu.memory_space<vmem>>, %arg9: memref<1x16xf32, #tpu.memory_space<vmem>>, %arg10: memref<1x16xf32, #tpu.memory_space<vmem>>, %arg11: memref<1x32xf32, #tpu.memory_space<vmem>>, %arg12: memref<1x32xf32, #tpu.memory_space<vmem>>, %arg13: memref<1x64xf32, #tpu.memory_space<vmem>>, %arg14: memref<1x64xf32, #tpu.memory_space<vmem>>, %arg15: memref<1x32xf32, #tpu.memory_space<vmem>>, %arg16: memref<1x32xf32, #tpu.memory_space<vmem>>, %arg17: memref<1x16xf32, #tpu.memory_space<vmem>>, %arg18: memref<1x16xf32, #tpu.memory_space<vmem>>, %arg19: memref<1x8xf32, #tpu.memory_space<vmem>>, %arg20: memref<1x8xf32, #tpu.memory_space<vmem>>, %arg21: memref<32x48xf32, #tpu.memory_space<vmem>>) attributes {dimension_semantics = [], scalar_prefetch = 0 : i64, scratch_operands = 0 : i64, tpu.core_type = #tpu.core_type<tc>} {
    %c0 = arith.constant 0 : index
    %c0_0 = arith.constant 0 : index
    %0 = vector.load %arg0[%c0, %c0_0] : memref<32x48xf32, #tpu.memory_space<vmem>>, vector<32x48xf32>
    %1 = tpu.iota {dimensions = array<i32: 0>} : vector<16x32xi32>
    %2 = tpu.iota {dimensions = array<i32: 1>} : vector<16x32xi32>
    %c3_i32 = arith.constant 3 : i32
    %3 = vector.broadcast %c3_i32 : i32 to vector<16x32xi32>
    %4 = arith.shrsi %1, %3 : vector<16x32xi32>
    %c7_i32 = arith.constant 7 : i32
    %5 = vector.broadcast %c7_i32 : i32 to vector<16x32xi32>
    %6 = arith.andi %1, %5 : vector<16x32xi32>
    %c4_i32 = arith.constant 4 : i32
    %7 = vector.broadcast %c4_i32 : i32 to vector<16x32xi32>
    %8 = arith.shrsi %2, %7 : vector<16x32xi32>
    %c15_i32 = arith.constant 15 : i32
    %9 = vector.broadcast %c15_i32 : i32 to vector<16x32xi32>
    %10 = arith.andi %2, %9 : vector<16x32xi32>
    %c2_i32 = arith.constant 2 : i32
    %11 = vector.broadcast %c2_i32 : i32 to vector<16x32xi32>
    %12 = arith.muli %11, %6 : vector<16x32xi32>
    %c0_i32 = arith.constant 0 : i32
    %13 = vector.broadcast %c0_i32 : i32 to vector<16x32xi32>
    %14 = arith.addi %12, %13 : vector<16x32xi32>
    %c1_i32 = arith.constant 1 : i32
    %15 = vector.broadcast %c1_i32 : i32 to vector<16x32xi32>
    %16 = arith.subi %14, %15 : vector<16x32xi32>
    %17 = arith.cmpi eq, %10, %16 : vector<16x32xi32>
    %18 = arith.cmpi eq, %4, %8 : vector<16x32xi32>
    %19 = arith.andi %18, %17 : vector<16x32xi1>
    %cst = arith.constant 1.000000e+00 : f32
    %cst_1 = arith.constant 0.000000e+00 : f32
    %20 = vector.broadcast %cst : f32 to vector<16x32xf32>
    %21 = vector.broadcast %cst_1 : f32 to vector<16x32xf32>
    %22 = arith.select %19, %20, %21 : vector<16x32xi1>, vector<16x32xf32>
    %cst_2 = arith.constant dense<0.000000e+00> : vector<16x48xf32>
    %23 = tpu.matmul %22, %0, %cst_2 {dimension_numbers = #tpu.dot_dimension_numbers<[1], [0], [0], [1], [0, 0, 1, 1], [], []>} : vector<16x32xf32>, vector<32x48xf32>, vector<16x48xf32> -> vector<16x48xf32>
    %c0_3 = arith.constant 0 : index
    %c0_4 = arith.constant 0 : index
    %c0_5 = arith.constant 0 : index
    %24 = vector.load %arg1[%c0_3, %c0_4, %c0_5] : memref<4x48x64xf32, #tpu.memory_space<vmem>>, vector<1x48x64xf32>
    %25 = vector.shape_cast %24 : vector<1x48x64xf32> to vector<48x64xf32>
    %cst_6 = arith.constant dense<0.000000e+00> : vector<16x64xf32>
    %26 = tpu.matmul %23, %25, %cst_6 {dimension_numbers = #tpu.dot_dimension_numbers<[1], [0], [0], [1], [0, 0, 1, 1], [], []>} : vector<16x48xf32>, vector<48x64xf32>, vector<16x64xf32> -> vector<16x64xf32>
    %27 = tpu.iota {dimensions = array<i32: 0>} : vector<16x32xi32>
    %28 = tpu.iota {dimensions = array<i32: 1>} : vector<16x32xi32>
    %c3_i32_7 = arith.constant 3 : i32
    %29 = vector.broadcast %c3_i32_7 : i32 to vector<16x32xi32>
    %30 = arith.shrsi %27, %29 : vector<16x32xi32>
    %c7_i32_8 = arith.constant 7 : i32
    %31 = vector.broadcast %c7_i32_8 : i32 to vector<16x32xi32>
    %32 = arith.andi %27, %31 : vector<16x32xi32>
    %c4_i32_9 = arith.constant 4 : i32
    %33 = vector.broadcast %c4_i32_9 : i32 to vector<16x32xi32>
    %34 = arith.shrsi %28, %33 : vector<16x32xi32>
    %c15_i32_10 = arith.constant 15 : i32
    %35 = vector.broadcast %c15_i32_10 : i32 to vector<16x32xi32>
    %36 = arith.andi %28, %35 : vector<16x32xi32>
    %c2_i32_11 = arith.constant 2 : i32
    %37 = vector.broadcast %c2_i32_11 : i32 to vector<16x32xi32>
    %38 = arith.muli %37, %32 : vector<16x32xi32>
    %c1_i32_12 = arith.constant 1 : i32
    %39 = vector.broadcast %c1_i32_12 : i32 to vector<16x32xi32>
    %40 = arith.addi %38, %39 : vector<16x32xi32>
    %c1_i32_13 = arith.constant 1 : i32
    %41 = vector.broadcast %c1_i32_13 : i32 to vector<16x32xi32>
    %42 = arith.subi %40, %41 : vector<16x32xi32>
    %43 = arith.cmpi eq, %36, %42 : vector<16x32xi32>
    %44 = arith.cmpi eq, %30, %34 : vector<16x32xi32>
    %45 = arith.andi %44, %43 : vector<16x32xi1>
    %cst_14 = arith.constant 1.000000e+00 : f32
    %cst_15 = arith.constant 0.000000e+00 : f32
    %46 = vector.broadcast %cst_14 : f32 to vector<16x32xf32>
    %47 = vector.broadcast %cst_15 : f32 to vector<16x32xf32>
    %48 = arith.select %45, %46, %47 : vector<16x32xi1>, vector<16x32xf32>
    %cst_16 = arith.constant dense<0.000000e+00> : vector<16x48xf32>
    %49 = tpu.matmul %48, %0, %cst_16 {dimension_numbers = #tpu.dot_dimension_numbers<[1], [0], [0], [1], [0, 0, 1, 1], [], []>} : vector<16x32xf32>, vector<32x48xf32>, vector<16x48xf32> -> vector<16x48xf32>
    %c1 = arith.constant 1 : index
    %c0_17 = arith.constant 0 : index
    %c0_18 = arith.constant 0 : index
    %50 = vector.load %arg1[%c1, %c0_17, %c0_18] : memref<4x48x64xf32, #tpu.memory_space<vmem>>, vector<1x48x64xf32>
    %51 = vector.shape_cast %50 : vector<1x48x64xf32> to vector<48x64xf32>
    %cst_19 = arith.constant dense<0.000000e+00> : vector<16x64xf32>
    %52 = tpu.matmul %49, %51, %cst_19 {dimension_numbers = #tpu.dot_dimension_numbers<[1], [0], [0], [1], [0, 0, 1, 1], [], []>} : vector<16x48xf32>, vector<48x64xf32>, vector<16x64xf32> -> vector<16x64xf32>
    %53 = arith.addf %26, %52 : vector<16x64xf32>
    %54 = tpu.iota {dimensions = array<i32: 0>} : vector<16x32xi32>
    %55 = tpu.iota {dimensions = array<i32: 1>} : vector<16x32xi32>
    %c3_i32_20 = arith.constant 3 : i32
    %56 = vector.broadcast %c3_i32_20 : i32 to vector<16x32xi32>
    %57 = arith.shrsi %54, %56 : vector<16x32xi32>
    %c7_i32_21 = arith.constant 7 : i32
    %58 = vector.broadcast %c7_i32_21 : i32 to vector<16x32xi32>
    %59 = arith.andi %54, %58 : vector<16x32xi32>
    %c4_i32_22 = arith.constant 4 : i32
    %60 = vector.broadcast %c4_i32_22 : i32 to vector<16x32xi32>
    %61 = arith.shrsi %55, %60 : vector<16x32xi32>
    %c15_i32_23 = arith.constant 15 : i32
    %62 = vector.broadcast %c15_i32_23 : i32 to vector<16x32xi32>
    %63 = arith.andi %55, %62 : vector<16x32xi32>
    %c2_i32_24 = arith.constant 2 : i32
    %64 = vector.broadcast %c2_i32_24 : i32 to vector<16x32xi32>
    %65 = arith.muli %64, %59 : vector<16x32xi32>
    %c2_i32_25 = arith.constant 2 : i32
    %66 = vector.broadcast %c2_i32_25 : i32 to vector<16x32xi32>
    %67 = arith.addi %65, %66 : vector<16x32xi32>
    %c1_i32_26 = arith.constant 1 : i32
    %68 = vector.broadcast %c1_i32_26 : i32 to vector<16x32xi32>
    %69 = arith.subi %67, %68 : vector<16x32xi32>
    %70 = arith.cmpi eq, %63, %69 : vector<16x32xi32>
    %71 = arith.cmpi eq, %57, %61 : vector<16x32xi32>
    %72 = arith.andi %71, %70 : vector<16x32xi1>
    %cst_27 = arith.constant 1.000000e+00 : f32
    %cst_28 = arith.constant 0.000000e+00 : f32
    %73 = vector.broadcast %cst_27 : f32 to vector<16x32xf32>
    %74 = vector.broadcast %cst_28 : f32 to vector<16x32xf32>
    %75 = arith.select %72, %73, %74 : vector<16x32xi1>, vector<16x32xf32>
    %cst_29 = arith.constant dense<0.000000e+00> : vector<16x48xf32>
    %76 = tpu.matmul %75, %0, %cst_29 {dimension_numbers = #tpu.dot_dimension_numbers<[1], [0], [0], [1], [0, 0, 1, 1], [], []>} : vector<16x32xf32>, vector<32x48xf32>, vector<16x48xf32> -> vector<16x48xf32>
    %c2 = arith.constant 2 : index
    %c0_30 = arith.constant 0 : index
    %c0_31 = arith.constant 0 : index
    %77 = vector.load %arg1[%c2, %c0_30, %c0_31] : memref<4x48x64xf32, #tpu.memory_space<vmem>>, vector<1x48x64xf32>
    %78 = vector.shape_cast %77 : vector<1x48x64xf32> to vector<48x64xf32>
    %cst_32 = arith.constant dense<0.000000e+00> : vector<16x64xf32>
    %79 = tpu.matmul %76, %78, %cst_32 {dimension_numbers = #tpu.dot_dimension_numbers<[1], [0], [0], [1], [0, 0, 1, 1], [], []>} : vector<16x48xf32>, vector<48x64xf32>, vector<16x64xf32> -> vector<16x64xf32>
    %80 = arith.addf %53, %79 : vector<16x64xf32>
    %81 = tpu.iota {dimensions = array<i32: 0>} : vector<16x32xi32>
    %82 = tpu.iota {dimensions = array<i32: 1>} : vector<16x32xi32>
    %c3_i32_33 = arith.constant 3 : i32
    %83 = vector.broadcast %c3_i32_33 : i32 to vector<16x32xi32>
    %84 = arith.shrsi %81, %83 : vector<16x32xi32>
    %c7_i32_34 = arith.constant 7 : i32
    %85 = vector.broadcast %c7_i32_34 : i32 to vector<16x32xi32>
    %86 = arith.andi %81, %85 : vector<16x32xi32>
    %c4_i32_35 = arith.constant 4 : i32
    %87 = vector.broadcast %c4_i32_35 : i32 to vector<16x32xi32>
    %88 = arith.shrsi %82, %87 : vector<16x32xi32>
    %c15_i32_36 = arith.constant 15 : i32
    %89 = vector.broadcast %c15_i32_36 : i32 to vector<16x32xi32>
    %90 = arith.andi %82, %89 : vector<16x32xi32>
    %c2_i32_37 = arith.constant 2 : i32
    %91 = vector.broadcast %c2_i32_37 : i32 to vector<16x32xi32>
    %92 = arith.muli %91, %86 : vector<16x32xi32>
    %c3_i32_38 = arith.constant 3 : i32
    %93 = vector.broadcast %c3_i32_38 : i32 to vector<16x32xi32>
    %94 = arith.addi %92, %93 : vector<16x32xi32>
    %c1_i32_39 = arith.constant 1 : i32
    %95 = vector.broadcast %c1_i32_39 : i32 to vector<16x32xi32>
    %96 = arith.subi %94, %95 : vector<16x32xi32>
    %97 = arith.cmpi eq, %90, %96 : vector<16x32xi32>
    %98 = arith.cmpi eq, %84, %88 : vector<16x32xi32>
    %99 = arith.andi %98, %97 : vector<16x32xi1>
    %cst_40 = arith.constant 1.000000e+00 : f32
    %cst_41 = arith.constant 0.000000e+00 : f32
    %100 = vector.broadcast %cst_40 : f32 to vector<16x32xf32>
    %101 = vector.broadcast %cst_41 : f32 to vector<16x32xf32>
    %102 = arith.select %99, %100, %101 : vector<16x32xi1>, vector<16x32xf32>
    %cst_42 = arith.constant dense<0.000000e+00> : vector<16x48xf32>
    %103 = tpu.matmul %102, %0, %cst_42 {dimension_numbers = #tpu.dot_dimension_numbers<[1], [0], [0], [1], [0, 0, 1, 1], [], []>} : vector<16x32xf32>, vector<32x48xf32>, vector<16x48xf32> -> vector<16x48xf32>
    %c3 = arith.constant 3 : index
    %c0_43 = arith.constant 0 : index
    %c0_44 = arith.constant 0 : index
    %104 = vector.load %arg1[%c3, %c0_43, %c0_44] : memref<4x48x64xf32, #tpu.memory_space<vmem>>, vector<1x48x64xf32>
    %105 = vector.shape_cast %104 : vector<1x48x64xf32> to vector<48x64xf32>
    %cst_45 = arith.constant dense<0.000000e+00> : vector<16x64xf32>
    %106 = tpu.matmul %103, %105, %cst_45 {dimension_numbers = #tpu.dot_dimension_numbers<[1], [0], [0], [1], [0, 0, 1, 1], [], []>} : vector<16x48xf32>, vector<48x64xf32>, vector<16x64xf32> -> vector<16x64xf32>
    %107 = arith.addf %80, %106 : vector<16x64xf32>
    %cst_46 = arith.constant 0.000000e+00 : f32
    %108 = vector.broadcast %cst_46 : f32 to vector<16x64xf32>
    %109 = arith.cmpf ogt, %107, %108 : vector<16x64xf32>
    %cst_47 = arith.constant 2.000000e-01 : f32
    %110 = vector.broadcast %cst_47 : f32 to vector<16x64xf32>
    %111 = arith.mulf %110, %107 : vector<16x64xf32>
    %112 = arith.select %109, %107, %111 : vector<16x64xi1>, vector<16x64xf32>
    %113 = tpu.iota {dimensions = array<i32: 0>} : vector<8x16xi32>
    %114 = tpu.iota {dimensions = array<i32: 1>} : vector<8x16xi32>
    %c2_i32_48 = arith.constant 2 : i32
    %115 = vector.broadcast %c2_i32_48 : i32 to vector<8x16xi32>
    %116 = arith.shrsi %113, %115 : vector<8x16xi32>
    %c3_i32_49 = arith.constant 3 : i32
    %117 = vector.broadcast %c3_i32_49 : i32 to vector<8x16xi32>
    %118 = arith.andi %113, %117 : vector<8x16xi32>
    %c3_i32_50 = arith.constant 3 : i32
    %119 = vector.broadcast %c3_i32_50 : i32 to vector<8x16xi32>
    %120 = arith.shrsi %114, %119 : vector<8x16xi32>
    %c7_i32_51 = arith.constant 7 : i32
    %121 = vector.broadcast %c7_i32_51 : i32 to vector<8x16xi32>
    %122 = arith.andi %114, %121 : vector<8x16xi32>
    %c2_i32_52 = arith.constant 2 : i32
    %123 = vector.broadcast %c2_i32_52 : i32 to vector<8x16xi32>
    %124 = arith.muli %123, %118 : vector<8x16xi32>
    %c0_i32_53 = arith.constant 0 : i32
    %125 = vector.broadcast %c0_i32_53 : i32 to vector<8x16xi32>
    %126 = arith.addi %124, %125 : vector<8x16xi32>
    %c1_i32_54 = arith.constant 1 : i32
    %127 = vector.broadcast %c1_i32_54 : i32 to vector<8x16xi32>
    %128 = arith.subi %126, %127 : vector<8x16xi32>
    %129 = arith.cmpi eq, %122, %128 : vector<8x16xi32>
    %130 = arith.cmpi eq, %116, %120 : vector<8x16xi32>
    %131 = arith.andi %130, %129 : vector<8x16xi1>
    %cst_55 = arith.constant 1.000000e+00 : f32
    %cst_56 = arith.constant 0.000000e+00 : f32
    %132 = vector.broadcast %cst_55 : f32 to vector<8x16xf32>
    %133 = vector.broadcast %cst_56 : f32 to vector<8x16xf32>
    %134 = arith.select %131, %132, %133 : vector<8x16xi1>, vector<8x16xf32>
    %cst_57 = arith.constant dense<0.000000e+00> : vector<8x64xf32>
    %135 = tpu.matmul %134, %112, %cst_57 {dimension_numbers = #tpu.dot_dimension_numbers<[1], [0], [0], [1], [0, 0, 1, 1], [], []>} : vector<8x16xf32>, vector<16x64xf32>, vector<8x64xf32> -> vector<8x64xf32>
    %c0_58 = arith.constant 0 : index
    %c0_59 = arith.constant 0 : index
    %c0_60 = arith.constant 0 : index
    %136 = vector.load %arg2[%c0_58, %c0_59, %c0_60] : memref<4x64x64xf32, #tpu.memory_space<vmem>>, vector<1x64x64xf32>
    %137 = vector.shape_cast %136 : vector<1x64x64xf32> to vector<64x64xf32>
    %cst_61 = arith.constant dense<0.000000e+00> : vector<8x64xf32>
    %138 = tpu.matmul %135, %137, %cst_61 {dimension_numbers = #tpu.dot_dimension_numbers<[1], [0], [0], [1], [0, 0, 1, 1], [], []>} : vector<8x64xf32>, vector<64x64xf32>, vector<8x64xf32> -> vector<8x64xf32>
    %139 = tpu.iota {dimensions = array<i32: 0>} : vector<8x16xi32>
    %140 = tpu.iota {dimensions = array<i32: 1>} : vector<8x16xi32>
    %c2_i32_62 = arith.constant 2 : i32
    %141 = vector.broadcast %c2_i32_62 : i32 to vector<8x16xi32>
    %142 = arith.shrsi %139, %141 : vector<8x16xi32>
    %c3_i32_63 = arith.constant 3 : i32
    %143 = vector.broadcast %c3_i32_63 : i32 to vector<8x16xi32>
    %144 = arith.andi %139, %143 : vector<8x16xi32>
    %c3_i32_64 = arith.constant 3 : i32
    %145 = vector.broadcast %c3_i32_64 : i32 to vector<8x16xi32>
    %146 = arith.shrsi %140, %145 : vector<8x16xi32>
    %c7_i32_65 = arith.constant 7 : i32
    %147 = vector.broadcast %c7_i32_65 : i32 to vector<8x16xi32>
    %148 = arith.andi %140, %147 : vector<8x16xi32>
    %c2_i32_66 = arith.constant 2 : i32
    %149 = vector.broadcast %c2_i32_66 : i32 to vector<8x16xi32>
    %150 = arith.muli %149, %144 : vector<8x16xi32>
    %c1_i32_67 = arith.constant 1 : i32
    %151 = vector.broadcast %c1_i32_67 : i32 to vector<8x16xi32>
    %152 = arith.addi %150, %151 : vector<8x16xi32>
    %c1_i32_68 = arith.constant 1 : i32
    %153 = vector.broadcast %c1_i32_68 : i32 to vector<8x16xi32>
    %154 = arith.subi %152, %153 : vector<8x16xi32>
    %155 = arith.cmpi eq, %148, %154 : vector<8x16xi32>
    %156 = arith.cmpi eq, %142, %146 : vector<8x16xi32>
    %157 = arith.andi %156, %155 : vector<8x16xi1>
    %cst_69 = arith.constant 1.000000e+00 : f32
    %cst_70 = arith.constant 0.000000e+00 : f32
    %158 = vector.broadcast %cst_69 : f32 to vector<8x16xf32>
    %159 = vector.broadcast %cst_70 : f32 to vector<8x16xf32>
    %160 = arith.select %157, %158, %159 : vector<8x16xi1>, vector<8x16xf32>
    %cst_71 = arith.constant dense<0.000000e+00> : vector<8x64xf32>
    %161 = tpu.matmul %160, %112, %cst_71 {dimension_numbers = #tpu.dot_dimension_numbers<[1], [0], [0], [1], [0, 0, 1, 1], [], []>} : vector<8x16xf32>, vector<16x64xf32>, vector<8x64xf32> -> vector<8x64xf32>
    %c1_72 = arith.constant 1 : index
    %c0_73 = arith.constant 0 : index
    %c0_74 = arith.constant 0 : index
    %162 = vector.load %arg2[%c1_72, %c0_73, %c0_74] : memref<4x64x64xf32, #tpu.memory_space<vmem>>, vector<1x64x64xf32>
    %163 = vector.shape_cast %162 : vector<1x64x64xf32> to vector<64x64xf32>
    %cst_75 = arith.constant dense<0.000000e+00> : vector<8x64xf32>
    %164 = tpu.matmul %161, %163, %cst_75 {dimension_numbers = #tpu.dot_dimension_numbers<[1], [0], [0], [1], [0, 0, 1, 1], [], []>} : vector<8x64xf32>, vector<64x64xf32>, vector<8x64xf32> -> vector<8x64xf32>
    %165 = arith.addf %138, %164 : vector<8x64xf32>
    %166 = tpu.iota {dimensions = array<i32: 0>} : vector<8x16xi32>
    %167 = tpu.iota {dimensions = array<i32: 1>} : vector<8x16xi32>
    %c2_i32_76 = arith.constant 2 : i32
    %168 = vector.broadcast %c2_i32_76 : i32 to vector<8x16xi32>
    %169 = arith.shrsi %166, %168 : vector<8x16xi32>
    %c3_i32_77 = arith.constant 3 : i32
    %170 = vector.broadcast %c3_i32_77 : i32 to vector<8x16xi32>
    %171 = arith.andi %166, %170 : vector<8x16xi32>
    %c3_i32_78 = arith.constant 3 : i32
    %172 = vector.broadcast %c3_i32_78 : i32 to vector<8x16xi32>
    %173 = arith.shrsi %167, %172 : vector<8x16xi32>
    %c7_i32_79 = arith.constant 7 : i32
    %174 = vector.broadcast %c7_i32_79 : i32 to vector<8x16xi32>
    %175 = arith.andi %167, %174 : vector<8x16xi32>
    %c2_i32_80 = arith.constant 2 : i32
    %176 = vector.broadcast %c2_i32_80 : i32 to vector<8x16xi32>
    %177 = arith.muli %176, %171 : vector<8x16xi32>
    %c2_i32_81 = arith.constant 2 : i32
    %178 = vector.broadcast %c2_i32_81 : i32 to vector<8x16xi32>
    %179 = arith.addi %177, %178 : vector<8x16xi32>
    %c1_i32_82 = arith.constant 1 : i32
    %180 = vector.broadcast %c1_i32_82 : i32 to vector<8x16xi32>
    %181 = arith.subi %179, %180 : vector<8x16xi32>
    %182 = arith.cmpi eq, %175, %181 : vector<8x16xi32>
    %183 = arith.cmpi eq, %169, %173 : vector<8x16xi32>
    %184 = arith.andi %183, %182 : vector<8x16xi1>
    %cst_83 = arith.constant 1.000000e+00 : f32
    %cst_84 = arith.constant 0.000000e+00 : f32
    %185 = vector.broadcast %cst_83 : f32 to vector<8x16xf32>
    %186 = vector.broadcast %cst_84 : f32 to vector<8x16xf32>
    %187 = arith.select %184, %185, %186 : vector<8x16xi1>, vector<8x16xf32>
    %cst_85 = arith.constant dense<0.000000e+00> : vector<8x64xf32>
    %188 = tpu.matmul %187, %112, %cst_85 {dimension_numbers = #tpu.dot_dimension_numbers<[1], [0], [0], [1], [0, 0, 1, 1], [], []>} : vector<8x16xf32>, vector<16x64xf32>, vector<8x64xf32> -> vector<8x64xf32>
    %c2_86 = arith.constant 2 : index
    %c0_87 = arith.constant 0 : index
    %c0_88 = arith.constant 0 : index
    %189 = vector.load %arg2[%c2_86, %c0_87, %c0_88] : memref<4x64x64xf32, #tpu.memory_space<vmem>>, vector<1x64x64xf32>
    %190 = vector.shape_cast %189 : vector<1x64x64xf32> to vector<64x64xf32>
    %cst_89 = arith.constant dense<0.000000e+00> : vector<8x64xf32>
    %191 = tpu.matmul %188, %190, %cst_89 {dimension_numbers = #tpu.dot_dimension_numbers<[1], [0], [0], [1], [0, 0, 1, 1], [], []>} : vector<8x64xf32>, vector<64x64xf32>, vector<8x64xf32> -> vector<8x64xf32>
    %192 = arith.addf %165, %191 : vector<8x64xf32>
    %193 = tpu.iota {dimensions = array<i32: 0>} : vector<8x16xi32>
    %194 = tpu.iota {dimensions = array<i32: 1>} : vector<8x16xi32>
    %c2_i32_90 = arith.constant 2 : i32
    %195 = vector.broadcast %c2_i32_90 : i32 to vector<8x16xi32>
    %196 = arith.shrsi %193, %195 : vector<8x16xi32>
    %c3_i32_91 = arith.constant 3 : i32
    %197 = vector.broadcast %c3_i32_91 : i32 to vector<8x16xi32>
    %198 = arith.andi %193, %197 : vector<8x16xi32>
    %c3_i32_92 = arith.constant 3 : i32
    %199 = vector.broadcast %c3_i32_92 : i32 to vector<8x16xi32>
    %200 = arith.shrsi %194, %199 : vector<8x16xi32>
    %c7_i32_93 = arith.constant 7 : i32
    %201 = vector.broadcast %c7_i32_93 : i32 to vector<8x16xi32>
    %202 = arith.andi %194, %201 : vector<8x16xi32>
    %c2_i32_94 = arith.constant 2 : i32
    %203 = vector.broadcast %c2_i32_94 : i32 to vector<8x16xi32>
    %204 = arith.muli %203, %198 : vector<8x16xi32>
    %c3_i32_95 = arith.constant 3 : i32
    %205 = vector.broadcast %c3_i32_95 : i32 to vector<8x16xi32>
    %206 = arith.addi %204, %205 : vector<8x16xi32>
    %c1_i32_96 = arith.constant 1 : i32
    %207 = vector.broadcast %c1_i32_96 : i32 to vector<8x16xi32>
    %208 = arith.subi %206, %207 : vector<8x16xi32>
    %209 = arith.cmpi eq, %202, %208 : vector<8x16xi32>
    %210 = arith.cmpi eq, %196, %200 : vector<8x16xi32>
    %211 = arith.andi %210, %209 : vector<8x16xi1>
    %cst_97 = arith.constant 1.000000e+00 : f32
    %cst_98 = arith.constant 0.000000e+00 : f32
    %212 = vector.broadcast %cst_97 : f32 to vector<8x16xf32>
    %213 = vector.broadcast %cst_98 : f32 to vector<8x16xf32>
    %214 = arith.select %211, %212, %213 : vector<8x16xi1>, vector<8x16xf32>
    %cst_99 = arith.constant dense<0.000000e+00> : vector<8x64xf32>
    %215 = tpu.matmul %214, %112, %cst_99 {dimension_numbers = #tpu.dot_dimension_numbers<[1], [0], [0], [1], [0, 0, 1, 1], [], []>} : vector<8x16xf32>, vector<16x64xf32>, vector<8x64xf32> -> vector<8x64xf32>
    %c3_100 = arith.constant 3 : index
    %c0_101 = arith.constant 0 : index
    %c0_102 = arith.constant 0 : index
    %216 = vector.load %arg2[%c3_100, %c0_101, %c0_102] : memref<4x64x64xf32, #tpu.memory_space<vmem>>, vector<1x64x64xf32>
    %217 = vector.shape_cast %216 : vector<1x64x64xf32> to vector<64x64xf32>
    %cst_103 = arith.constant dense<0.000000e+00> : vector<8x64xf32>
    %218 = tpu.matmul %215, %217, %cst_103 {dimension_numbers = #tpu.dot_dimension_numbers<[1], [0], [0], [1], [0, 0, 1, 1], [], []>} : vector<8x64xf32>, vector<64x64xf32>, vector<8x64xf32> -> vector<8x64xf32>
    %219 = arith.addf %192, %218 : vector<8x64xf32>
    %c0_104 = arith.constant 0 : index
    %c0_105 = arith.constant 0 : index
    %220 = vector.load %arg9[%c0_104, %c0_105] : memref<1x16xf32, #tpu.memory_space<vmem>>, vector<1x16xf32>
    %c0_106 = arith.constant 0 : index
    %c0_107 = arith.constant 0 : index
    %221 = vector.load %arg10[%c0_106, %c0_107] : memref<1x16xf32, #tpu.memory_space<vmem>>, vector<1x16xf32>
    %222 = tpu.iota {dimensions = array<i32: 0>} : vector<64x16xi32>
    %223 = tpu.iota {dimensions = array<i32: 1>} : vector<64x16xi32>
    %c15_i32_108 = arith.constant 15 : i32
    %224 = vector.broadcast %c15_i32_108 : i32 to vector<64x16xi32>
    %225 = arith.andi %222, %224 : vector<64x16xi32>
    %226 = arith.cmpi eq, %225, %223 : vector<64x16xi32>
    %cst_109 = arith.constant 1.000000e+00 : f32
    %cst_110 = arith.constant 0.000000e+00 : f32
    %227 = vector.broadcast %cst_109 : f32 to vector<64x16xf32>
    %228 = vector.broadcast %cst_110 : f32 to vector<64x16xf32>
    %229 = arith.select %226, %227, %228 : vector<64x16xi1>, vector<64x16xf32>
    %230 = tpu.iota {dimensions = array<i32: 1>} : vector<16x64xi32>
    %231 = tpu.iota {dimensions = array<i32: 0>} : vector<16x64xi32>
    %c15_i32_111 = arith.constant 15 : i32
    %232 = vector.broadcast %c15_i32_111 : i32 to vector<16x64xi32>
    %233 = arith.andi %230, %232 : vector<16x64xi32>
    %234 = arith.cmpi eq, %233, %231 : vector<16x64xi32>
    %cst_112 = arith.constant 1.000000e+00 : f32
    %cst_113 = arith.constant 0.000000e+00 : f32
    %235 = vector.broadcast %cst_112 : f32 to vector<16x64xf32>
    %236 = vector.broadcast %cst_113 : f32 to vector<16x64xf32>
    %237 = arith.select %234, %235, %236 : vector<16x64xi1>, vector<16x64xf32>
    %cst_114 = arith.constant dense<0.000000e+00> : vector<64xf32>
    %238 = vector.multi_reduction <add>, %219, %cst_114 [0] : vector<8x64xf32> to vector<64xf32>
    %239 = vector.shape_cast %238 : vector<64xf32> to vector<1x64xf32>
    %240 = arith.mulf %219, %219 : vector<8x64xf32>
    %cst_115 = arith.constant dense<0.000000e+00> : vector<64xf32>
    %241 = vector.multi_reduction <add>, %240, %cst_115 [0] : vector<8x64xf32> to vector<64xf32>
    %242 = vector.shape_cast %241 : vector<64xf32> to vector<1x64xf32>
    %cst_116 = arith.constant dense<0.000000e+00> : vector<1x16xf32>
    %243 = tpu.matmul %239, %229, %cst_116 {dimension_numbers = #tpu.dot_dimension_numbers<[1], [0], [0], [1], [0, 0, 1, 1], [], []>} : vector<1x64xf32>, vector<64x16xf32>, vector<1x16xf32> -> vector<1x16xf32>
    %cst_117 = arith.constant 3.200000e+01 : f32
    %244 = vector.broadcast %cst_117 : f32 to vector<1x16xf32>
    %245 = arith.divf %243, %244 : vector<1x16xf32>
    %cst_118 = arith.constant dense<0.000000e+00> : vector<1x16xf32>
    %246 = tpu.matmul %242, %229, %cst_118 {dimension_numbers = #tpu.dot_dimension_numbers<[1], [0], [0], [1], [0, 0, 1, 1], [], []>} : vector<1x64xf32>, vector<64x16xf32>, vector<1x16xf32> -> vector<1x16xf32>
    %cst_119 = arith.constant 3.200000e+01 : f32
    %247 = vector.broadcast %cst_119 : f32 to vector<1x16xf32>
    %248 = arith.divf %246, %247 : vector<1x16xf32>
    %249 = arith.mulf %245, %245 : vector<1x16xf32>
    %250 = arith.subf %248, %249 : vector<1x16xf32>
    %cst_120 = arith.constant 9.99999974E-6 : f32
    %251 = vector.broadcast %cst_120 : f32 to vector<1x16xf32>
    %252 = arith.addf %250, %251 : vector<1x16xf32>
    %253 = math.rsqrt %252 : vector<1x16xf32>
    %254 = arith.mulf %220, %253 : vector<1x16xf32>
    %255 = arith.mulf %245, %254 : vector<1x16xf32>
    %256 = arith.subf %221, %255 : vector<1x16xf32>
    %cst_121 = arith.constant dense<0.000000e+00> : vector<1x64xf32>
    %257 = tpu.matmul %254, %237, %cst_121 {dimension_numbers = #tpu.dot_dimension_numbers<[1], [0], [0], [1], [0, 0, 1, 1], [], []>} : vector<1x16xf32>, vector<16x64xf32>, vector<1x64xf32> -> vector<1x64xf32>
    %cst_122 = arith.constant dense<0.000000e+00> : vector<1x64xf32>
    %258 = tpu.matmul %256, %237, %cst_122 {dimension_numbers = #tpu.dot_dimension_numbers<[1], [0], [0], [1], [0, 0, 1, 1], [], []>} : vector<1x16xf32>, vector<16x64xf32>, vector<1x64xf32> -> vector<1x64xf32>
    %259 = vector.broadcast %257 : vector<1x64xf32> to vector<8x64xf32>
    %260 = arith.mulf %219, %259 : vector<8x64xf32>
    %261 = vector.broadcast %258 : vector<1x64xf32> to vector<8x64xf32>
    %262 = arith.addf %260, %261 : vector<8x64xf32>
    %cst_123 = arith.constant 0.000000e+00 : f32
    %263 = vector.broadcast %cst_123 : f32 to vector<8x64xf32>
    %264 = arith.cmpf ogt, %262, %263 : vector<8x64xf32>
    %cst_124 = arith.constant 2.000000e-01 : f32
    %265 = vector.broadcast %cst_124 : f32 to vector<8x64xf32>
    %266 = arith.mulf %265, %262 : vector<8x64xf32>
    %267 = arith.select %264, %262, %266 : vector<8x64xi1>, vector<8x64xf32>
    %268 = tpu.iota {dimensions = array<i32: 0>} : vector<4x8xi32>
    %269 = tpu.iota {dimensions = array<i32: 1>} : vector<4x8xi32>
    %c1_i32_125 = arith.constant 1 : i32
    %270 = vector.broadcast %c1_i32_125 : i32 to vector<4x8xi32>
    %271 = arith.shrsi %268, %270 : vector<4x8xi32>
    %c1_i32_126 = arith.constant 1 : i32
    %272 = vector.broadcast %c1_i32_126 : i32 to vector<4x8xi32>
    %273 = arith.andi %268, %272 : vector<4x8xi32>
    %c2_i32_127 = arith.constant 2 : i32
    %274 = vector.broadcast %c2_i32_127 : i32 to vector<4x8xi32>
    %275 = arith.shrsi %269, %274 : vector<4x8xi32>
    %c3_i32_128 = arith.constant 3 : i32
    %276 = vector.broadcast %c3_i32_128 : i32 to vector<4x8xi32>
    %277 = arith.andi %269, %276 : vector<4x8xi32>
    %c2_i32_129 = arith.constant 2 : i32
    %278 = vector.broadcast %c2_i32_129 : i32 to vector<4x8xi32>
    %279 = arith.muli %278, %273 : vector<4x8xi32>
    %c0_i32_130 = arith.constant 0 : i32
    %280 = vector.broadcast %c0_i32_130 : i32 to vector<4x8xi32>
    %281 = arith.addi %279, %280 : vector<4x8xi32>
    %c1_i32_131 = arith.constant 1 : i32
    %282 = vector.broadcast %c1_i32_131 : i32 to vector<4x8xi32>
    %283 = arith.subi %281, %282 : vector<4x8xi32>
    %284 = arith.cmpi eq, %277, %283 : vector<4x8xi32>
    %285 = arith.cmpi eq, %271, %275 : vector<4x8xi32>
    %286 = arith.andi %285, %284 : vector<4x8xi1>
    %cst_132 = arith.constant 1.000000e+00 : f32
    %cst_133 = arith.constant 0.000000e+00 : f32
    %287 = vector.broadcast %cst_132 : f32 to vector<4x8xf32>
    %288 = vector.broadcast %cst_133 : f32 to vector<4x8xf32>
    %289 = arith.select %286, %287, %288 : vector<4x8xi1>, vector<4x8xf32>
    %cst_134 = arith.constant dense<0.000000e+00> : vector<4x64xf32>
    %290 = tpu.matmul %289, %267, %cst_134 {dimension_numbers = #tpu.dot_dimension_numbers<[1], [0], [0], [1], [0, 0, 1, 1], [], []>} : vector<4x8xf32>, vector<8x64xf32>, vector<4x64xf32> -> vector<4x64xf32>
    %c0_135 = arith.constant 0 : index
    %c0_136 = arith.constant 0 : index
    %c0_137 = arith.constant 0 : index
    %291 = vector.load %arg3[%c0_135, %c0_136, %c0_137] : memref<4x64x64xf32, #tpu.memory_space<vmem>>, vector<1x64x64xf32>
    %292 = vector.shape_cast %291 : vector<1x64x64xf32> to vector<64x64xf32>
    %cst_138 = arith.constant dense<0.000000e+00> : vector<4x64xf32>
    %293 = tpu.matmul %290, %292, %cst_138 {dimension_numbers = #tpu.dot_dimension_numbers<[1], [0], [0], [1], [0, 0, 1, 1], [], []>} : vector<4x64xf32>, vector<64x64xf32>, vector<4x64xf32> -> vector<4x64xf32>
    %294 = tpu.iota {dimensions = array<i32: 0>} : vector<4x8xi32>
    %295 = tpu.iota {dimensions = array<i32: 1>} : vector<4x8xi32>
    %c1_i32_139 = arith.constant 1 : i32
    %296 = vector.broadcast %c1_i32_139 : i32 to vector<4x8xi32>
    %297 = arith.shrsi %294, %296 : vector<4x8xi32>
    %c1_i32_140 = arith.constant 1 : i32
    %298 = vector.broadcast %c1_i32_140 : i32 to vector<4x8xi32>
    %299 = arith.andi %294, %298 : vector<4x8xi32>
    %c2_i32_141 = arith.constant 2 : i32
    %300 = vector.broadcast %c2_i32_141 : i32 to vector<4x8xi32>
    %301 = arith.shrsi %295, %300 : vector<4x8xi32>
    %c3_i32_142 = arith.constant 3 : i32
    %302 = vector.broadcast %c3_i32_142 : i32 to vector<4x8xi32>
    %303 = arith.andi %295, %302 : vector<4x8xi32>
    %c2_i32_143 = arith.constant 2 : i32
    %304 = vector.broadcast %c2_i32_143 : i32 to vector<4x8xi32>
    %305 = arith.muli %304, %299 : vector<4x8xi32>
    %c1_i32_144 = arith.constant 1 : i32
    %306 = vector.broadcast %c1_i32_144 : i32 to vector<4x8xi32>
    %307 = arith.addi %305, %306 : vector<4x8xi32>
    %c1_i32_145 = arith.constant 1 : i32
    %308 = vector.broadcast %c1_i32_145 : i32 to vector<4x8xi32>
    %309 = arith.subi %307, %308 : vector<4x8xi32>
    %310 = arith.cmpi eq, %303, %309 : vector<4x8xi32>
    %311 = arith.cmpi eq, %297, %301 : vector<4x8xi32>
    %312 = arith.andi %311, %310 : vector<4x8xi1>
    %cst_146 = arith.constant 1.000000e+00 : f32
    %cst_147 = arith.constant 0.000000e+00 : f32
    %313 = vector.broadcast %cst_146 : f32 to vector<4x8xf32>
    %314 = vector.broadcast %cst_147 : f32 to vector<4x8xf32>
    %315 = arith.select %312, %313, %314 : vector<4x8xi1>, vector<4x8xf32>
    %cst_148 = arith.constant dense<0.000000e+00> : vector<4x64xf32>
    %316 = tpu.matmul %315, %267, %cst_148 {dimension_numbers = #tpu.dot_dimension_numbers<[1], [0], [0], [1], [0, 0, 1, 1], [], []>} : vector<4x8xf32>, vector<8x64xf32>, vector<4x64xf32> -> vector<4x64xf32>
    %c1_149 = arith.constant 1 : index
    %c0_150 = arith.constant 0 : index
    %c0_151 = arith.constant 0 : index
    %317 = vector.load %arg3[%c1_149, %c0_150, %c0_151] : memref<4x64x64xf32, #tpu.memory_space<vmem>>, vector<1x64x64xf32>
    %318 = vector.shape_cast %317 : vector<1x64x64xf32> to vector<64x64xf32>
    %cst_152 = arith.constant dense<0.000000e+00> : vector<4x64xf32>
    %319 = tpu.matmul %316, %318, %cst_152 {dimension_numbers = #tpu.dot_dimension_numbers<[1], [0], [0], [1], [0, 0, 1, 1], [], []>} : vector<4x64xf32>, vector<64x64xf32>, vector<4x64xf32> -> vector<4x64xf32>
    %320 = arith.addf %293, %319 : vector<4x64xf32>
    %321 = tpu.iota {dimensions = array<i32: 0>} : vector<4x8xi32>
    %322 = tpu.iota {dimensions = array<i32: 1>} : vector<4x8xi32>
    %c1_i32_153 = arith.constant 1 : i32
    %323 = vector.broadcast %c1_i32_153 : i32 to vector<4x8xi32>
    %324 = arith.shrsi %321, %323 : vector<4x8xi32>
    %c1_i32_154 = arith.constant 1 : i32
    %325 = vector.broadcast %c1_i32_154 : i32 to vector<4x8xi32>
    %326 = arith.andi %321, %325 : vector<4x8xi32>
    %c2_i32_155 = arith.constant 2 : i32
    %327 = vector.broadcast %c2_i32_155 : i32 to vector<4x8xi32>
    %328 = arith.shrsi %322, %327 : vector<4x8xi32>
    %c3_i32_156 = arith.constant 3 : i32
    %329 = vector.broadcast %c3_i32_156 : i32 to vector<4x8xi32>
    %330 = arith.andi %322, %329 : vector<4x8xi32>
    %c2_i32_157 = arith.constant 2 : i32
    %331 = vector.broadcast %c2_i32_157 : i32 to vector<4x8xi32>
    %332 = arith.muli %331, %326 : vector<4x8xi32>
    %c2_i32_158 = arith.constant 2 : i32
    %333 = vector.broadcast %c2_i32_158 : i32 to vector<4x8xi32>
    %334 = arith.addi %332, %333 : vector<4x8xi32>
    %c1_i32_159 = arith.constant 1 : i32
    %335 = vector.broadcast %c1_i32_159 : i32 to vector<4x8xi32>
    %336 = arith.subi %334, %335 : vector<4x8xi32>
    %337 = arith.cmpi eq, %330, %336 : vector<4x8xi32>
    %338 = arith.cmpi eq, %324, %328 : vector<4x8xi32>
    %339 = arith.andi %338, %337 : vector<4x8xi1>
    %cst_160 = arith.constant 1.000000e+00 : f32
    %cst_161 = arith.constant 0.000000e+00 : f32
    %340 = vector.broadcast %cst_160 : f32 to vector<4x8xf32>
    %341 = vector.broadcast %cst_161 : f32 to vector<4x8xf32>
    %342 = arith.select %339, %340, %341 : vector<4x8xi1>, vector<4x8xf32>
    %cst_162 = arith.constant dense<0.000000e+00> : vector<4x64xf32>
    %343 = tpu.matmul %342, %267, %cst_162 {dimension_numbers = #tpu.dot_dimension_numbers<[1], [0], [0], [1], [0, 0, 1, 1], [], []>} : vector<4x8xf32>, vector<8x64xf32>, vector<4x64xf32> -> vector<4x64xf32>
    %c2_163 = arith.constant 2 : index
    %c0_164 = arith.constant 0 : index
    %c0_165 = arith.constant 0 : index
    %344 = vector.load %arg3[%c2_163, %c0_164, %c0_165] : memref<4x64x64xf32, #tpu.memory_space<vmem>>, vector<1x64x64xf32>
    %345 = vector.shape_cast %344 : vector<1x64x64xf32> to vector<64x64xf32>
    %cst_166 = arith.constant dense<0.000000e+00> : vector<4x64xf32>
    %346 = tpu.matmul %343, %345, %cst_166 {dimension_numbers = #tpu.dot_dimension_numbers<[1], [0], [0], [1], [0, 0, 1, 1], [], []>} : vector<4x64xf32>, vector<64x64xf32>, vector<4x64xf32> -> vector<4x64xf32>
    %347 = arith.addf %320, %346 : vector<4x64xf32>
    %348 = tpu.iota {dimensions = array<i32: 0>} : vector<4x8xi32>
    %349 = tpu.iota {dimensions = array<i32: 1>} : vector<4x8xi32>
    %c1_i32_167 = arith.constant 1 : i32
    %350 = vector.broadcast %c1_i32_167 : i32 to vector<4x8xi32>
    %351 = arith.shrsi %348, %350 : vector<4x8xi32>
    %c1_i32_168 = arith.constant 1 : i32
    %352 = vector.broadcast %c1_i32_168 : i32 to vector<4x8xi32>
    %353 = arith.andi %348, %352 : vector<4x8xi32>
    %c2_i32_169 = arith.constant 2 : i32
    %354 = vector.broadcast %c2_i32_169 : i32 to vector<4x8xi32>
    %355 = arith.shrsi %349, %354 : vector<4x8xi32>
    %c3_i32_170 = arith.constant 3 : i32
    %356 = vector.broadcast %c3_i32_170 : i32 to vector<4x8xi32>
    %357 = arith.andi %349, %356 : vector<4x8xi32>
    %c2_i32_171 = arith.constant 2 : i32
    %358 = vector.broadcast %c2_i32_171 : i32 to vector<4x8xi32>
    %359 = arith.muli %358, %353 : vector<4x8xi32>
    %c3_i32_172 = arith.constant 3 : i32
    %360 = vector.broadcast %c3_i32_172 : i32 to vector<4x8xi32>
    %361 = arith.addi %359, %360 : vector<4x8xi32>
    %c1_i32_173 = arith.constant 1 : i32
    %362 = vector.broadcast %c1_i32_173 : i32 to vector<4x8xi32>
    %363 = arith.subi %361, %362 : vector<4x8xi32>
    %364 = arith.cmpi eq, %357, %363 : vector<4x8xi32>
    %365 = arith.cmpi eq, %351, %355 : vector<4x8xi32>
    %366 = arith.andi %365, %364 : vector<4x8xi1>
    %cst_174 = arith.constant 1.000000e+00 : f32
    %cst_175 = arith.constant 0.000000e+00 : f32
    %367 = vector.broadcast %cst_174 : f32 to vector<4x8xf32>
    %368 = vector.broadcast %cst_175 : f32 to vector<4x8xf32>
    %369 = arith.select %366, %367, %368 : vector<4x8xi1>, vector<4x8xf32>
    %cst_176 = arith.constant dense<0.000000e+00> : vector<4x64xf32>
    %370 = tpu.matmul %369, %267, %cst_176 {dimension_numbers = #tpu.dot_dimension_numbers<[1], [0], [0], [1], [0, 0, 1, 1], [], []>} : vector<4x8xf32>, vector<8x64xf32>, vector<4x64xf32> -> vector<4x64xf32>
    %c3_177 = arith.constant 3 : index
    %c0_178 = arith.constant 0 : index
    %c0_179 = arith.constant 0 : index
    %371 = vector.load %arg3[%c3_177, %c0_178, %c0_179] : memref<4x64x64xf32, #tpu.memory_space<vmem>>, vector<1x64x64xf32>
    %372 = vector.shape_cast %371 : vector<1x64x64xf32> to vector<64x64xf32>
    %cst_180 = arith.constant dense<0.000000e+00> : vector<4x64xf32>
    %373 = tpu.matmul %370, %372, %cst_180 {dimension_numbers = #tpu.dot_dimension_numbers<[1], [0], [0], [1], [0, 0, 1, 1], [], []>} : vector<4x64xf32>, vector<64x64xf32>, vector<4x64xf32> -> vector<4x64xf32>
    %374 = arith.addf %347, %373 : vector<4x64xf32>
    %c0_181 = arith.constant 0 : index
    %c0_182 = arith.constant 0 : index
    %375 = vector.load %arg11[%c0_181, %c0_182] : memref<1x32xf32, #tpu.memory_space<vmem>>, vector<1x32xf32>
    %c0_183 = arith.constant 0 : index
    %c0_184 = arith.constant 0 : index
    %376 = vector.load %arg12[%c0_183, %c0_184] : memref<1x32xf32, #tpu.memory_space<vmem>>, vector<1x32xf32>
    %377 = tpu.iota {dimensions = array<i32: 0>} : vector<64x32xi32>
    %378 = tpu.iota {dimensions = array<i32: 1>} : vector<64x32xi32>
    %c31_i32 = arith.constant 31 : i32
    %379 = vector.broadcast %c31_i32 : i32 to vector<64x32xi32>
    %380 = arith.andi %377, %379 : vector<64x32xi32>
    %381 = arith.cmpi eq, %380, %378 : vector<64x32xi32>
    %cst_185 = arith.constant 1.000000e+00 : f32
    %cst_186 = arith.constant 0.000000e+00 : f32
    %382 = vector.broadcast %cst_185 : f32 to vector<64x32xf32>
    %383 = vector.broadcast %cst_186 : f32 to vector<64x32xf32>
    %384 = arith.select %381, %382, %383 : vector<64x32xi1>, vector<64x32xf32>
    %385 = tpu.iota {dimensions = array<i32: 1>} : vector<32x64xi32>
    %386 = tpu.iota {dimensions = array<i32: 0>} : vector<32x64xi32>
    %c31_i32_187 = arith.constant 31 : i32
    %387 = vector.broadcast %c31_i32_187 : i32 to vector<32x64xi32>
    %388 = arith.andi %385, %387 : vector<32x64xi32>
    %389 = arith.cmpi eq, %388, %386 : vector<32x64xi32>
    %cst_188 = arith.constant 1.000000e+00 : f32
    %cst_189 = arith.constant 0.000000e+00 : f32
    %390 = vector.broadcast %cst_188 : f32 to vector<32x64xf32>
    %391 = vector.broadcast %cst_189 : f32 to vector<32x64xf32>
    %392 = arith.select %389, %390, %391 : vector<32x64xi1>, vector<32x64xf32>
    %cst_190 = arith.constant dense<0.000000e+00> : vector<64xf32>
    %393 = vector.multi_reduction <add>, %374, %cst_190 [0] : vector<4x64xf32> to vector<64xf32>
    %394 = vector.shape_cast %393 : vector<64xf32> to vector<1x64xf32>
    %395 = arith.mulf %374, %374 : vector<4x64xf32>
    %cst_191 = arith.constant dense<0.000000e+00> : vector<64xf32>
    %396 = vector.multi_reduction <add>, %395, %cst_191 [0] : vector<4x64xf32> to vector<64xf32>
    %397 = vector.shape_cast %396 : vector<64xf32> to vector<1x64xf32>
    %cst_192 = arith.constant dense<0.000000e+00> : vector<1x32xf32>
    %398 = tpu.matmul %394, %384, %cst_192 {dimension_numbers = #tpu.dot_dimension_numbers<[1], [0], [0], [1], [0, 0, 1, 1], [], []>} : vector<1x64xf32>, vector<64x32xf32>, vector<1x32xf32> -> vector<1x32xf32>
    %cst_193 = arith.constant 8.000000e+00 : f32
    %399 = vector.broadcast %cst_193 : f32 to vector<1x32xf32>
    %400 = arith.divf %398, %399 : vector<1x32xf32>
    %cst_194 = arith.constant dense<0.000000e+00> : vector<1x32xf32>
    %401 = tpu.matmul %397, %384, %cst_194 {dimension_numbers = #tpu.dot_dimension_numbers<[1], [0], [0], [1], [0, 0, 1, 1], [], []>} : vector<1x64xf32>, vector<64x32xf32>, vector<1x32xf32> -> vector<1x32xf32>
    %cst_195 = arith.constant 8.000000e+00 : f32
    %402 = vector.broadcast %cst_195 : f32 to vector<1x32xf32>
    %403 = arith.divf %401, %402 : vector<1x32xf32>
    %404 = arith.mulf %400, %400 : vector<1x32xf32>
    %405 = arith.subf %403, %404 : vector<1x32xf32>
    %cst_196 = arith.constant 9.99999974E-6 : f32
    %406 = vector.broadcast %cst_196 : f32 to vector<1x32xf32>
    %407 = arith.addf %405, %406 : vector<1x32xf32>
    %408 = math.rsqrt %407 : vector<1x32xf32>
    %409 = arith.mulf %375, %408 : vector<1x32xf32>
    %410 = arith.mulf %400, %409 : vector<1x32xf32>
    %411 = arith.subf %376, %410 : vector<1x32xf32>
    %cst_197 = arith.constant dense<0.000000e+00> : vector<1x64xf32>
    %412 = tpu.matmul %409, %392, %cst_197 {dimension_numbers = #tpu.dot_dimension_numbers<[1], [0], [0], [1], [0, 0, 1, 1], [], []>} : vector<1x32xf32>, vector<32x64xf32>, vector<1x64xf32> -> vector<1x64xf32>
    %cst_198 = arith.constant dense<0.000000e+00> : vector<1x64xf32>
    %413 = tpu.matmul %411, %392, %cst_198 {dimension_numbers = #tpu.dot_dimension_numbers<[1], [0], [0], [1], [0, 0, 1, 1], [], []>} : vector<1x32xf32>, vector<32x64xf32>, vector<1x64xf32> -> vector<1x64xf32>
    %414 = vector.broadcast %412 : vector<1x64xf32> to vector<4x64xf32>
    %415 = arith.mulf %374, %414 : vector<4x64xf32>
    %416 = vector.broadcast %413 : vector<1x64xf32> to vector<4x64xf32>
    %417 = arith.addf %415, %416 : vector<4x64xf32>
    %cst_199 = arith.constant 0.000000e+00 : f32
    %418 = vector.broadcast %cst_199 : f32 to vector<4x64xf32>
    %419 = arith.cmpf ogt, %417, %418 : vector<4x64xf32>
    %cst_200 = arith.constant 2.000000e-01 : f32
    %420 = vector.broadcast %cst_200 : f32 to vector<4x64xf32>
    %421 = arith.mulf %420, %417 : vector<4x64xf32>
    %422 = arith.select %419, %417, %421 : vector<4x64xi1>, vector<4x64xf32>
    %423 = tpu.iota {dimensions = array<i32: 0>} : vector<2x4xi32>
    %424 = tpu.iota {dimensions = array<i32: 1>} : vector<2x4xi32>
    %c0_i32_201 = arith.constant 0 : i32
    %425 = vector.broadcast %c0_i32_201 : i32 to vector<2x4xi32>
    %426 = arith.shrsi %423, %425 : vector<2x4xi32>
    %c0_i32_202 = arith.constant 0 : i32
    %427 = vector.broadcast %c0_i32_202 : i32 to vector<2x4xi32>
    %428 = arith.andi %423, %427 : vector<2x4xi32>
    %c1_i32_203 = arith.constant 1 : i32
    %429 = vector.broadcast %c1_i32_203 : i32 to vector<2x4xi32>
    %430 = arith.shrsi %424, %429 : vector<2x4xi32>
    %c1_i32_204 = arith.constant 1 : i32
    %431 = vector.broadcast %c1_i32_204 : i32 to vector<2x4xi32>
    %432 = arith.andi %424, %431 : vector<2x4xi32>
    %c2_i32_205 = arith.constant 2 : i32
    %433 = vector.broadcast %c2_i32_205 : i32 to vector<2x4xi32>
    %434 = arith.muli %433, %428 : vector<2x4xi32>
    %c0_i32_206 = arith.constant 0 : i32
    %435 = vector.broadcast %c0_i32_206 : i32 to vector<2x4xi32>
    %436 = arith.addi %434, %435 : vector<2x4xi32>
    %c1_i32_207 = arith.constant 1 : i32
    %437 = vector.broadcast %c1_i32_207 : i32 to vector<2x4xi32>
    %438 = arith.subi %436, %437 : vector<2x4xi32>
    %439 = arith.cmpi eq, %432, %438 : vector<2x4xi32>
    %440 = arith.cmpi eq, %426, %430 : vector<2x4xi32>
    %441 = arith.andi %440, %439 : vector<2x4xi1>
    %cst_208 = arith.constant 1.000000e+00 : f32
    %cst_209 = arith.constant 0.000000e+00 : f32
    %442 = vector.broadcast %cst_208 : f32 to vector<2x4xf32>
    %443 = vector.broadcast %cst_209 : f32 to vector<2x4xf32>
    %444 = arith.select %441, %442, %443 : vector<2x4xi1>, vector<2x4xf32>
    %cst_210 = arith.constant dense<0.000000e+00> : vector<2x64xf32>
    %445 = tpu.matmul %444, %422, %cst_210 {dimension_numbers = #tpu.dot_dimension_numbers<[1], [0], [0], [1], [0, 0, 1, 1], [], []>} : vector<2x4xf32>, vector<4x64xf32>, vector<2x64xf32> -> vector<2x64xf32>
    %c0_211 = arith.constant 0 : index
    %c0_212 = arith.constant 0 : index
    %c0_213 = arith.constant 0 : index
    %446 = vector.load %arg4[%c0_211, %c0_212, %c0_213] : memref<4x64x64xf32, #tpu.memory_space<vmem>>, vector<1x64x64xf32>
    %447 = vector.shape_cast %446 : vector<1x64x64xf32> to vector<64x64xf32>
    %cst_214 = arith.constant dense<0.000000e+00> : vector<2x64xf32>
    %448 = tpu.matmul %445, %447, %cst_214 {dimension_numbers = #tpu.dot_dimension_numbers<[1], [0], [0], [1], [0, 0, 1, 1], [], []>} : vector<2x64xf32>, vector<64x64xf32>, vector<2x64xf32> -> vector<2x64xf32>
    %449 = tpu.iota {dimensions = array<i32: 0>} : vector<2x4xi32>
    %450 = tpu.iota {dimensions = array<i32: 1>} : vector<2x4xi32>
    %c0_i32_215 = arith.constant 0 : i32
    %451 = vector.broadcast %c0_i32_215 : i32 to vector<2x4xi32>
    %452 = arith.shrsi %449, %451 : vector<2x4xi32>
    %c0_i32_216 = arith.constant 0 : i32
    %453 = vector.broadcast %c0_i32_216 : i32 to vector<2x4xi32>
    %454 = arith.andi %449, %453 : vector<2x4xi32>
    %c1_i32_217 = arith.constant 1 : i32
    %455 = vector.broadcast %c1_i32_217 : i32 to vector<2x4xi32>
    %456 = arith.shrsi %450, %455 : vector<2x4xi32>
    %c1_i32_218 = arith.constant 1 : i32
    %457 = vector.broadcast %c1_i32_218 : i32 to vector<2x4xi32>
    %458 = arith.andi %450, %457 : vector<2x4xi32>
    %c2_i32_219 = arith.constant 2 : i32
    %459 = vector.broadcast %c2_i32_219 : i32 to vector<2x4xi32>
    %460 = arith.muli %459, %454 : vector<2x4xi32>
    %c1_i32_220 = arith.constant 1 : i32
    %461 = vector.broadcast %c1_i32_220 : i32 to vector<2x4xi32>
    %462 = arith.addi %460, %461 : vector<2x4xi32>
    %c1_i32_221 = arith.constant 1 : i32
    %463 = vector.broadcast %c1_i32_221 : i32 to vector<2x4xi32>
    %464 = arith.subi %462, %463 : vector<2x4xi32>
    %465 = arith.cmpi eq, %458, %464 : vector<2x4xi32>
    %466 = arith.cmpi eq, %452, %456 : vector<2x4xi32>
    %467 = arith.andi %466, %465 : vector<2x4xi1>
    %cst_222 = arith.constant 1.000000e+00 : f32
    %cst_223 = arith.constant 0.000000e+00 : f32
    %468 = vector.broadcast %cst_222 : f32 to vector<2x4xf32>
    %469 = vector.broadcast %cst_223 : f32 to vector<2x4xf32>
    %470 = arith.select %467, %468, %469 : vector<2x4xi1>, vector<2x4xf32>
    %cst_224 = arith.constant dense<0.000000e+00> : vector<2x64xf32>
    %471 = tpu.matmul %470, %422, %cst_224 {dimension_numbers = #tpu.dot_dimension_numbers<[1], [0], [0], [1], [0, 0, 1, 1], [], []>} : vector<2x4xf32>, vector<4x64xf32>, vector<2x64xf32> -> vector<2x64xf32>
    %c1_225 = arith.constant 1 : index
    %c0_226 = arith.constant 0 : index
    %c0_227 = arith.constant 0 : index
    %472 = vector.load %arg4[%c1_225, %c0_226, %c0_227] : memref<4x64x64xf32, #tpu.memory_space<vmem>>, vector<1x64x64xf32>
    %473 = vector.shape_cast %472 : vector<1x64x64xf32> to vector<64x64xf32>
    %cst_228 = arith.constant dense<0.000000e+00> : vector<2x64xf32>
    %474 = tpu.matmul %471, %473, %cst_228 {dimension_numbers = #tpu.dot_dimension_numbers<[1], [0], [0], [1], [0, 0, 1, 1], [], []>} : vector<2x64xf32>, vector<64x64xf32>, vector<2x64xf32> -> vector<2x64xf32>
    %475 = arith.addf %448, %474 : vector<2x64xf32>
    %476 = tpu.iota {dimensions = array<i32: 0>} : vector<2x4xi32>
    %477 = tpu.iota {dimensions = array<i32: 1>} : vector<2x4xi32>
    %c0_i32_229 = arith.constant 0 : i32
    %478 = vector.broadcast %c0_i32_229 : i32 to vector<2x4xi32>
    %479 = arith.shrsi %476, %478 : vector<2x4xi32>
    %c0_i32_230 = arith.constant 0 : i32
    %480 = vector.broadcast %c0_i32_230 : i32 to vector<2x4xi32>
    %481 = arith.andi %476, %480 : vector<2x4xi32>
    %c1_i32_231 = arith.constant 1 : i32
    %482 = vector.broadcast %c1_i32_231 : i32 to vector<2x4xi32>
    %483 = arith.shrsi %477, %482 : vector<2x4xi32>
    %c1_i32_232 = arith.constant 1 : i32
    %484 = vector.broadcast %c1_i32_232 : i32 to vector<2x4xi32>
    %485 = arith.andi %477, %484 : vector<2x4xi32>
    %c2_i32_233 = arith.constant 2 : i32
    %486 = vector.broadcast %c2_i32_233 : i32 to vector<2x4xi32>
    %487 = arith.muli %486, %481 : vector<2x4xi32>
    %c2_i32_234 = arith.constant 2 : i32
    %488 = vector.broadcast %c2_i32_234 : i32 to vector<2x4xi32>
    %489 = arith.addi %487, %488 : vector<2x4xi32>
    %c1_i32_235 = arith.constant 1 : i32
    %490 = vector.broadcast %c1_i32_235 : i32 to vector<2x4xi32>
    %491 = arith.subi %489, %490 : vector<2x4xi32>
    %492 = arith.cmpi eq, %485, %491 : vector<2x4xi32>
    %493 = arith.cmpi eq, %479, %483 : vector<2x4xi32>
    %494 = arith.andi %493, %492 : vector<2x4xi1>
    %cst_236 = arith.constant 1.000000e+00 : f32
    %cst_237 = arith.constant 0.000000e+00 : f32
    %495 = vector.broadcast %cst_236 : f32 to vector<2x4xf32>
    %496 = vector.broadcast %cst_237 : f32 to vector<2x4xf32>
    %497 = arith.select %494, %495, %496 : vector<2x4xi1>, vector<2x4xf32>
    %cst_238 = arith.constant dense<0.000000e+00> : vector<2x64xf32>
    %498 = tpu.matmul %497, %422, %cst_238 {dimension_numbers = #tpu.dot_dimension_numbers<[1], [0], [0], [1], [0, 0, 1, 1], [], []>} : vector<2x4xf32>, vector<4x64xf32>, vector<2x64xf32> -> vector<2x64xf32>
    %c2_239 = arith.constant 2 : index
    %c0_240 = arith.constant 0 : index
    %c0_241 = arith.constant 0 : index
    %499 = vector.load %arg4[%c2_239, %c0_240, %c0_241] : memref<4x64x64xf32, #tpu.memory_space<vmem>>, vector<1x64x64xf32>
    %500 = vector.shape_cast %499 : vector<1x64x64xf32> to vector<64x64xf32>
    %cst_242 = arith.constant dense<0.000000e+00> : vector<2x64xf32>
    %501 = tpu.matmul %498, %500, %cst_242 {dimension_numbers = #tpu.dot_dimension_numbers<[1], [0], [0], [1], [0, 0, 1, 1], [], []>} : vector<2x64xf32>, vector<64x64xf32>, vector<2x64xf32> -> vector<2x64xf32>
    %502 = arith.addf %475, %501 : vector<2x64xf32>
    %503 = tpu.iota {dimensions = array<i32: 0>} : vector<2x4xi32>
    %504 = tpu.iota {dimensions = array<i32: 1>} : vector<2x4xi32>
    %c0_i32_243 = arith.constant 0 : i32
    %505 = vector.broadcast %c0_i32_243 : i32 to vector<2x4xi32>
    %506 = arith.shrsi %503, %505 : vector<2x4xi32>
    %c0_i32_244 = arith.constant 0 : i32
    %507 = vector.broadcast %c0_i32_244 : i32 to vector<2x4xi32>
    %508 = arith.andi %503, %507 : vector<2x4xi32>
    %c1_i32_245 = arith.constant 1 : i32
    %509 = vector.broadcast %c1_i32_245 : i32 to vector<2x4xi32>
    %510 = arith.shrsi %504, %509 : vector<2x4xi32>
    %c1_i32_246 = arith.constant 1 : i32
    %511 = vector.broadcast %c1_i32_246 : i32 to vector<2x4xi32>
    %512 = arith.andi %504, %511 : vector<2x4xi32>
    %c2_i32_247 = arith.constant 2 : i32
    %513 = vector.broadcast %c2_i32_247 : i32 to vector<2x4xi32>
    %514 = arith.muli %513, %508 : vector<2x4xi32>
    %c3_i32_248 = arith.constant 3 : i32
    %515 = vector.broadcast %c3_i32_248 : i32 to vector<2x4xi32>
    %516 = arith.addi %514, %515 : vector<2x4xi32>
    %c1_i32_249 = arith.constant 1 : i32
    %517 = vector.broadcast %c1_i32_249 : i32 to vector<2x4xi32>
    %518 = arith.subi %516, %517 : vector<2x4xi32>
    %519 = arith.cmpi eq, %512, %518 : vector<2x4xi32>
    %520 = arith.cmpi eq, %506, %510 : vector<2x4xi32>
    %521 = arith.andi %520, %519 : vector<2x4xi1>
    %cst_250 = arith.constant 1.000000e+00 : f32
    %cst_251 = arith.constant 0.000000e+00 : f32
    %522 = vector.broadcast %cst_250 : f32 to vector<2x4xf32>
    %523 = vector.broadcast %cst_251 : f32 to vector<2x4xf32>
    %524 = arith.select %521, %522, %523 : vector<2x4xi1>, vector<2x4xf32>
    %cst_252 = arith.constant dense<0.000000e+00> : vector<2x64xf32>
    %525 = tpu.matmul %524, %422, %cst_252 {dimension_numbers = #tpu.dot_dimension_numbers<[1], [0], [0], [1], [0, 0, 1, 1], [], []>} : vector<2x4xf32>, vector<4x64xf32>, vector<2x64xf32> -> vector<2x64xf32>
    %c3_253 = arith.constant 3 : index
    %c0_254 = arith.constant 0 : index
    %c0_255 = arith.constant 0 : index
    %526 = vector.load %arg4[%c3_253, %c0_254, %c0_255] : memref<4x64x64xf32, #tpu.memory_space<vmem>>, vector<1x64x64xf32>
    %527 = vector.shape_cast %526 : vector<1x64x64xf32> to vector<64x64xf32>
    %cst_256 = arith.constant dense<0.000000e+00> : vector<2x64xf32>
    %528 = tpu.matmul %525, %527, %cst_256 {dimension_numbers = #tpu.dot_dimension_numbers<[1], [0], [0], [1], [0, 0, 1, 1], [], []>} : vector<2x64xf32>, vector<64x64xf32>, vector<2x64xf32> -> vector<2x64xf32>
    %529 = arith.addf %502, %528 : vector<2x64xf32>
    %c0_257 = arith.constant 0 : index
    %c0_258 = arith.constant 0 : index
    %530 = vector.load %arg13[%c0_257, %c0_258] : memref<1x64xf32, #tpu.memory_space<vmem>>, vector<1x64xf32>
    %c0_259 = arith.constant 0 : index
    %c0_260 = arith.constant 0 : index
    %531 = vector.load %arg14[%c0_259, %c0_260] : memref<1x64xf32, #tpu.memory_space<vmem>>, vector<1x64xf32>
    %532 = tpu.iota {dimensions = array<i32: 0>} : vector<64x64xi32>
    %533 = tpu.iota {dimensions = array<i32: 1>} : vector<64x64xi32>
    %c63_i32 = arith.constant 63 : i32
    %534 = vector.broadcast %c63_i32 : i32 to vector<64x64xi32>
    %535 = arith.andi %532, %534 : vector<64x64xi32>
    %536 = arith.cmpi eq, %535, %533 : vector<64x64xi32>
    %cst_261 = arith.constant 1.000000e+00 : f32
    %cst_262 = arith.constant 0.000000e+00 : f32
    %537 = vector.broadcast %cst_261 : f32 to vector<64x64xf32>
    %538 = vector.broadcast %cst_262 : f32 to vector<64x64xf32>
    %539 = arith.select %536, %537, %538 : vector<64x64xi1>, vector<64x64xf32>
    %540 = tpu.iota {dimensions = array<i32: 1>} : vector<64x64xi32>
    %541 = tpu.iota {dimensions = array<i32: 0>} : vector<64x64xi32>
    %c63_i32_263 = arith.constant 63 : i32
    %542 = vector.broadcast %c63_i32_263 : i32 to vector<64x64xi32>
    %543 = arith.andi %540, %542 : vector<64x64xi32>
    %544 = arith.cmpi eq, %543, %541 : vector<64x64xi32>
    %cst_264 = arith.constant 1.000000e+00 : f32
    %cst_265 = arith.constant 0.000000e+00 : f32
    %545 = vector.broadcast %cst_264 : f32 to vector<64x64xf32>
    %546 = vector.broadcast %cst_265 : f32 to vector<64x64xf32>
    %547 = arith.select %544, %545, %546 : vector<64x64xi1>, vector<64x64xf32>
    %cst_266 = arith.constant dense<0.000000e+00> : vector<64xf32>
    %548 = vector.multi_reduction <add>, %529, %cst_266 [0] : vector<2x64xf32> to vector<64xf32>
    %549 = vector.shape_cast %548 : vector<64xf32> to vector<1x64xf32>
    %550 = arith.mulf %529, %529 : vector<2x64xf32>
    %cst_267 = arith.constant dense<0.000000e+00> : vector<64xf32>
    %551 = vector.multi_reduction <add>, %550, %cst_267 [0] : vector<2x64xf32> to vector<64xf32>
    %552 = vector.shape_cast %551 : vector<64xf32> to vector<1x64xf32>
    %cst_268 = arith.constant dense<0.000000e+00> : vector<1x64xf32>
    %553 = tpu.matmul %549, %539, %cst_268 {dimension_numbers = #tpu.dot_dimension_numbers<[1], [0], [0], [1], [0, 0, 1, 1], [], []>} : vector<1x64xf32>, vector<64x64xf32>, vector<1x64xf32> -> vector<1x64xf32>
    %cst_269 = arith.constant 2.000000e+00 : f32
    %554 = vector.broadcast %cst_269 : f32 to vector<1x64xf32>
    %555 = arith.divf %553, %554 : vector<1x64xf32>
    %cst_270 = arith.constant dense<0.000000e+00> : vector<1x64xf32>
    %556 = tpu.matmul %552, %539, %cst_270 {dimension_numbers = #tpu.dot_dimension_numbers<[1], [0], [0], [1], [0, 0, 1, 1], [], []>} : vector<1x64xf32>, vector<64x64xf32>, vector<1x64xf32> -> vector<1x64xf32>
    %cst_271 = arith.constant 2.000000e+00 : f32
    %557 = vector.broadcast %cst_271 : f32 to vector<1x64xf32>
    %558 = arith.divf %556, %557 : vector<1x64xf32>
    %559 = arith.mulf %555, %555 : vector<1x64xf32>
    %560 = arith.subf %558, %559 : vector<1x64xf32>
    %cst_272 = arith.constant 9.99999974E-6 : f32
    %561 = vector.broadcast %cst_272 : f32 to vector<1x64xf32>
    %562 = arith.addf %560, %561 : vector<1x64xf32>
    %563 = math.rsqrt %562 : vector<1x64xf32>
    %564 = arith.mulf %530, %563 : vector<1x64xf32>
    %565 = arith.mulf %555, %564 : vector<1x64xf32>
    %566 = arith.subf %531, %565 : vector<1x64xf32>
    %cst_273 = arith.constant dense<0.000000e+00> : vector<1x64xf32>
    %567 = tpu.matmul %564, %547, %cst_273 {dimension_numbers = #tpu.dot_dimension_numbers<[1], [0], [0], [1], [0, 0, 1, 1], [], []>} : vector<1x64xf32>, vector<64x64xf32>, vector<1x64xf32> -> vector<1x64xf32>
    %cst_274 = arith.constant dense<0.000000e+00> : vector<1x64xf32>
    %568 = tpu.matmul %566, %547, %cst_274 {dimension_numbers = #tpu.dot_dimension_numbers<[1], [0], [0], [1], [0, 0, 1, 1], [], []>} : vector<1x64xf32>, vector<64x64xf32>, vector<1x64xf32> -> vector<1x64xf32>
    %569 = vector.broadcast %567 : vector<1x64xf32> to vector<2x64xf32>
    %570 = arith.mulf %529, %569 : vector<2x64xf32>
    %571 = vector.broadcast %568 : vector<1x64xf32> to vector<2x64xf32>
    %572 = arith.addf %570, %571 : vector<2x64xf32>
    %cst_275 = arith.constant 0.000000e+00 : f32
    %573 = vector.broadcast %cst_275 : f32 to vector<2x64xf32>
    %574 = arith.cmpf ogt, %572, %573 : vector<2x64xf32>
    %cst_276 = arith.constant 2.000000e-01 : f32
    %575 = vector.broadcast %cst_276 : f32 to vector<2x64xf32>
    %576 = arith.mulf %575, %572 : vector<2x64xf32>
    %577 = arith.select %574, %572, %576 : vector<2x64xi1>, vector<2x64xf32>
    %578 = tpu.iota {dimensions = array<i32: 0>} : vector<4x2xi32>
    %579 = tpu.iota {dimensions = array<i32: 1>} : vector<4x2xi32>
    %c1_i32_277 = arith.constant 1 : i32
    %580 = vector.broadcast %c1_i32_277 : i32 to vector<4x2xi32>
    %581 = arith.shrsi %578, %580 : vector<4x2xi32>
    %c1_i32_278 = arith.constant 1 : i32
    %582 = vector.broadcast %c1_i32_278 : i32 to vector<4x2xi32>
    %583 = arith.andi %578, %582 : vector<4x2xi32>
    %c0_i32_279 = arith.constant 0 : i32
    %584 = vector.broadcast %c0_i32_279 : i32 to vector<4x2xi32>
    %585 = arith.shrsi %579, %584 : vector<4x2xi32>
    %c0_i32_280 = arith.constant 0 : i32
    %586 = vector.broadcast %c0_i32_280 : i32 to vector<4x2xi32>
    %587 = arith.andi %579, %586 : vector<4x2xi32>
    %c2_i32_281 = arith.constant 2 : i32
    %588 = vector.broadcast %c2_i32_281 : i32 to vector<4x2xi32>
    %589 = arith.muli %588, %587 : vector<4x2xi32>
    %c1_i32_282 = arith.constant 1 : i32
    %590 = vector.broadcast %c1_i32_282 : i32 to vector<4x2xi32>
    %591 = arith.addi %583, %590 : vector<4x2xi32>
    %c0_i32_283 = arith.constant 0 : i32
    %592 = vector.broadcast %c0_i32_283 : i32 to vector<4x2xi32>
    %593 = arith.subi %591, %592 : vector<4x2xi32>
    %594 = arith.cmpi eq, %589, %593 : vector<4x2xi32>
    %595 = arith.cmpi eq, %581, %585 : vector<4x2xi32>
    %596 = arith.andi %595, %594 : vector<4x2xi1>
    %cst_284 = arith.constant 1.000000e+00 : f32
    %cst_285 = arith.constant 0.000000e+00 : f32
    %597 = vector.broadcast %cst_284 : f32 to vector<4x2xf32>
    %598 = vector.broadcast %cst_285 : f32 to vector<4x2xf32>
    %599 = arith.select %596, %597, %598 : vector<4x2xi1>, vector<4x2xf32>
    %cst_286 = arith.constant dense<0.000000e+00> : vector<4x64xf32>
    %600 = tpu.matmul %599, %577, %cst_286 {dimension_numbers = #tpu.dot_dimension_numbers<[1], [0], [0], [1], [0, 0, 1, 1], [], []>} : vector<4x2xf32>, vector<2x64xf32>, vector<4x64xf32> -> vector<4x64xf32>
    %c0_287 = arith.constant 0 : index
    %c0_288 = arith.constant 0 : index
    %c0_289 = arith.constant 0 : index
    %601 = vector.load %arg5[%c0_287, %c0_288, %c0_289] : memref<4x64x64xf32, #tpu.memory_space<vmem>>, vector<1x64x64xf32>
    %602 = vector.shape_cast %601 : vector<1x64x64xf32> to vector<64x64xf32>
    %cst_290 = arith.constant dense<0.000000e+00> : vector<4x64xf32>
    %603 = tpu.matmul %600, %602, %cst_290 {dimension_numbers = #tpu.dot_dimension_numbers<[1], [0], [0], [1], [0, 0, 1, 1], [], []>} : vector<4x64xf32>, vector<64x64xf32>, vector<4x64xf32> -> vector<4x64xf32>
    %604 = tpu.iota {dimensions = array<i32: 0>} : vector<4x2xi32>
    %605 = tpu.iota {dimensions = array<i32: 1>} : vector<4x2xi32>
    %c1_i32_291 = arith.constant 1 : i32
    %606 = vector.broadcast %c1_i32_291 : i32 to vector<4x2xi32>
    %607 = arith.shrsi %604, %606 : vector<4x2xi32>
    %c1_i32_292 = arith.constant 1 : i32
    %608 = vector.broadcast %c1_i32_292 : i32 to vector<4x2xi32>
    %609 = arith.andi %604, %608 : vector<4x2xi32>
    %c0_i32_293 = arith.constant 0 : i32
    %610 = vector.broadcast %c0_i32_293 : i32 to vector<4x2xi32>
    %611 = arith.shrsi %605, %610 : vector<4x2xi32>
    %c0_i32_294 = arith.constant 0 : i32
    %612 = vector.broadcast %c0_i32_294 : i32 to vector<4x2xi32>
    %613 = arith.andi %605, %612 : vector<4x2xi32>
    %c2_i32_295 = arith.constant 2 : i32
    %614 = vector.broadcast %c2_i32_295 : i32 to vector<4x2xi32>
    %615 = arith.muli %614, %613 : vector<4x2xi32>
    %c1_i32_296 = arith.constant 1 : i32
    %616 = vector.broadcast %c1_i32_296 : i32 to vector<4x2xi32>
    %617 = arith.addi %609, %616 : vector<4x2xi32>
    %c1_i32_297 = arith.constant 1 : i32
    %618 = vector.broadcast %c1_i32_297 : i32 to vector<4x2xi32>
    %619 = arith.subi %617, %618 : vector<4x2xi32>
    %620 = arith.cmpi eq, %615, %619 : vector<4x2xi32>
    %621 = arith.cmpi eq, %607, %611 : vector<4x2xi32>
    %622 = arith.andi %621, %620 : vector<4x2xi1>
    %cst_298 = arith.constant 1.000000e+00 : f32
    %cst_299 = arith.constant 0.000000e+00 : f32
    %623 = vector.broadcast %cst_298 : f32 to vector<4x2xf32>
    %624 = vector.broadcast %cst_299 : f32 to vector<4x2xf32>
    %625 = arith.select %622, %623, %624 : vector<4x2xi1>, vector<4x2xf32>
    %cst_300 = arith.constant dense<0.000000e+00> : vector<4x64xf32>
    %626 = tpu.matmul %625, %577, %cst_300 {dimension_numbers = #tpu.dot_dimension_numbers<[1], [0], [0], [1], [0, 0, 1, 1], [], []>} : vector<4x2xf32>, vector<2x64xf32>, vector<4x64xf32> -> vector<4x64xf32>
    %c1_301 = arith.constant 1 : index
    %c0_302 = arith.constant 0 : index
    %c0_303 = arith.constant 0 : index
    %627 = vector.load %arg5[%c1_301, %c0_302, %c0_303] : memref<4x64x64xf32, #tpu.memory_space<vmem>>, vector<1x64x64xf32>
    %628 = vector.shape_cast %627 : vector<1x64x64xf32> to vector<64x64xf32>
    %cst_304 = arith.constant dense<0.000000e+00> : vector<4x64xf32>
    %629 = tpu.matmul %626, %628, %cst_304 {dimension_numbers = #tpu.dot_dimension_numbers<[1], [0], [0], [1], [0, 0, 1, 1], [], []>} : vector<4x64xf32>, vector<64x64xf32>, vector<4x64xf32> -> vector<4x64xf32>
    %630 = arith.addf %603, %629 : vector<4x64xf32>
    %631 = tpu.iota {dimensions = array<i32: 0>} : vector<4x2xi32>
    %632 = tpu.iota {dimensions = array<i32: 1>} : vector<4x2xi32>
    %c1_i32_305 = arith.constant 1 : i32
    %633 = vector.broadcast %c1_i32_305 : i32 to vector<4x2xi32>
    %634 = arith.shrsi %631, %633 : vector<4x2xi32>
    %c1_i32_306 = arith.constant 1 : i32
    %635 = vector.broadcast %c1_i32_306 : i32 to vector<4x2xi32>
    %636 = arith.andi %631, %635 : vector<4x2xi32>
    %c0_i32_307 = arith.constant 0 : i32
    %637 = vector.broadcast %c0_i32_307 : i32 to vector<4x2xi32>
    %638 = arith.shrsi %632, %637 : vector<4x2xi32>
    %c0_i32_308 = arith.constant 0 : i32
    %639 = vector.broadcast %c0_i32_308 : i32 to vector<4x2xi32>
    %640 = arith.andi %632, %639 : vector<4x2xi32>
    %c2_i32_309 = arith.constant 2 : i32
    %641 = vector.broadcast %c2_i32_309 : i32 to vector<4x2xi32>
    %642 = arith.muli %641, %640 : vector<4x2xi32>
    %c1_i32_310 = arith.constant 1 : i32
    %643 = vector.broadcast %c1_i32_310 : i32 to vector<4x2xi32>
    %644 = arith.addi %636, %643 : vector<4x2xi32>
    %c2_i32_311 = arith.constant 2 : i32
    %645 = vector.broadcast %c2_i32_311 : i32 to vector<4x2xi32>
    %646 = arith.subi %644, %645 : vector<4x2xi32>
    %647 = arith.cmpi eq, %642, %646 : vector<4x2xi32>
    %648 = arith.cmpi eq, %634, %638 : vector<4x2xi32>
    %649 = arith.andi %648, %647 : vector<4x2xi1>
    %cst_312 = arith.constant 1.000000e+00 : f32
    %cst_313 = arith.constant 0.000000e+00 : f32
    %650 = vector.broadcast %cst_312 : f32 to vector<4x2xf32>
    %651 = vector.broadcast %cst_313 : f32 to vector<4x2xf32>
    %652 = arith.select %649, %650, %651 : vector<4x2xi1>, vector<4x2xf32>
    %cst_314 = arith.constant dense<0.000000e+00> : vector<4x64xf32>
    %653 = tpu.matmul %652, %577, %cst_314 {dimension_numbers = #tpu.dot_dimension_numbers<[1], [0], [0], [1], [0, 0, 1, 1], [], []>} : vector<4x2xf32>, vector<2x64xf32>, vector<4x64xf32> -> vector<4x64xf32>
    %c2_315 = arith.constant 2 : index
    %c0_316 = arith.constant 0 : index
    %c0_317 = arith.constant 0 : index
    %654 = vector.load %arg5[%c2_315, %c0_316, %c0_317] : memref<4x64x64xf32, #tpu.memory_space<vmem>>, vector<1x64x64xf32>
    %655 = vector.shape_cast %654 : vector<1x64x64xf32> to vector<64x64xf32>
    %cst_318 = arith.constant dense<0.000000e+00> : vector<4x64xf32>
    %656 = tpu.matmul %653, %655, %cst_318 {dimension_numbers = #tpu.dot_dimension_numbers<[1], [0], [0], [1], [0, 0, 1, 1], [], []>} : vector<4x64xf32>, vector<64x64xf32>, vector<4x64xf32> -> vector<4x64xf32>
    %657 = arith.addf %630, %656 : vector<4x64xf32>
    %658 = tpu.iota {dimensions = array<i32: 0>} : vector<4x2xi32>
    %659 = tpu.iota {dimensions = array<i32: 1>} : vector<4x2xi32>
    %c1_i32_319 = arith.constant 1 : i32
    %660 = vector.broadcast %c1_i32_319 : i32 to vector<4x2xi32>
    %661 = arith.shrsi %658, %660 : vector<4x2xi32>
    %c1_i32_320 = arith.constant 1 : i32
    %662 = vector.broadcast %c1_i32_320 : i32 to vector<4x2xi32>
    %663 = arith.andi %658, %662 : vector<4x2xi32>
    %c0_i32_321 = arith.constant 0 : i32
    %664 = vector.broadcast %c0_i32_321 : i32 to vector<4x2xi32>
    %665 = arith.shrsi %659, %664 : vector<4x2xi32>
    %c0_i32_322 = arith.constant 0 : i32
    %666 = vector.broadcast %c0_i32_322 : i32 to vector<4x2xi32>
    %667 = arith.andi %659, %666 : vector<4x2xi32>
    %c2_i32_323 = arith.constant 2 : i32
    %668 = vector.broadcast %c2_i32_323 : i32 to vector<4x2xi32>
    %669 = arith.muli %668, %667 : vector<4x2xi32>
    %c1_i32_324 = arith.constant 1 : i32
    %670 = vector.broadcast %c1_i32_324 : i32 to vector<4x2xi32>
    %671 = arith.addi %663, %670 : vector<4x2xi32>
    %c3_i32_325 = arith.constant 3 : i32
    %672 = vector.broadcast %c3_i32_325 : i32 to vector<4x2xi32>
    %673 = arith.subi %671, %672 : vector<4x2xi32>
    %674 = arith.cmpi eq, %669, %673 : vector<4x2xi32>
    %675 = arith.cmpi eq, %661, %665 : vector<4x2xi32>
    %676 = arith.andi %675, %674 : vector<4x2xi1>
    %cst_326 = arith.constant 1.000000e+00 : f32
    %cst_327 = arith.constant 0.000000e+00 : f32
    %677 = vector.broadcast %cst_326 : f32 to vector<4x2xf32>
    %678 = vector.broadcast %cst_327 : f32 to vector<4x2xf32>
    %679 = arith.select %676, %677, %678 : vector<4x2xi1>, vector<4x2xf32>
    %cst_328 = arith.constant dense<0.000000e+00> : vector<4x64xf32>
    %680 = tpu.matmul %679, %577, %cst_328 {dimension_numbers = #tpu.dot_dimension_numbers<[1], [0], [0], [1], [0, 0, 1, 1], [], []>} : vector<4x2xf32>, vector<2x64xf32>, vector<4x64xf32> -> vector<4x64xf32>
    %c3_329 = arith.constant 3 : index
    %c0_330 = arith.constant 0 : index
    %c0_331 = arith.constant 0 : index
    %681 = vector.load %arg5[%c3_329, %c0_330, %c0_331] : memref<4x64x64xf32, #tpu.memory_space<vmem>>, vector<1x64x64xf32>
    %682 = vector.shape_cast %681 : vector<1x64x64xf32> to vector<64x64xf32>
    %cst_332 = arith.constant dense<0.000000e+00> : vector<4x64xf32>
    %683 = tpu.matmul %680, %682, %cst_332 {dimension_numbers = #tpu.dot_dimension_numbers<[1], [0], [0], [1], [0, 0, 1, 1], [], []>} : vector<4x64xf32>, vector<64x64xf32>, vector<4x64xf32> -> vector<4x64xf32>
    %684 = arith.addf %657, %683 : vector<4x64xf32>
    %c0_333 = arith.constant 0 : index
    %c0_334 = arith.constant 0 : index
    %685 = vector.load %arg15[%c0_333, %c0_334] : memref<1x32xf32, #tpu.memory_space<vmem>>, vector<1x32xf32>
    %c0_335 = arith.constant 0 : index
    %c0_336 = arith.constant 0 : index
    %686 = vector.load %arg16[%c0_335, %c0_336] : memref<1x32xf32, #tpu.memory_space<vmem>>, vector<1x32xf32>
    %687 = tpu.iota {dimensions = array<i32: 0>} : vector<64x32xi32>
    %688 = tpu.iota {dimensions = array<i32: 1>} : vector<64x32xi32>
    %c31_i32_337 = arith.constant 31 : i32
    %689 = vector.broadcast %c31_i32_337 : i32 to vector<64x32xi32>
    %690 = arith.andi %687, %689 : vector<64x32xi32>
    %691 = arith.cmpi eq, %690, %688 : vector<64x32xi32>
    %cst_338 = arith.constant 1.000000e+00 : f32
    %cst_339 = arith.constant 0.000000e+00 : f32
    %692 = vector.broadcast %cst_338 : f32 to vector<64x32xf32>
    %693 = vector.broadcast %cst_339 : f32 to vector<64x32xf32>
    %694 = arith.select %691, %692, %693 : vector<64x32xi1>, vector<64x32xf32>
    %695 = tpu.iota {dimensions = array<i32: 1>} : vector<32x64xi32>
    %696 = tpu.iota {dimensions = array<i32: 0>} : vector<32x64xi32>
    %c31_i32_340 = arith.constant 31 : i32
    %697 = vector.broadcast %c31_i32_340 : i32 to vector<32x64xi32>
    %698 = arith.andi %695, %697 : vector<32x64xi32>
    %699 = arith.cmpi eq, %698, %696 : vector<32x64xi32>
    %cst_341 = arith.constant 1.000000e+00 : f32
    %cst_342 = arith.constant 0.000000e+00 : f32
    %700 = vector.broadcast %cst_341 : f32 to vector<32x64xf32>
    %701 = vector.broadcast %cst_342 : f32 to vector<32x64xf32>
    %702 = arith.select %699, %700, %701 : vector<32x64xi1>, vector<32x64xf32>
    %cst_343 = arith.constant dense<0.000000e+00> : vector<64xf32>
    %703 = vector.multi_reduction <add>, %684, %cst_343 [0] : vector<4x64xf32> to vector<64xf32>
    %704 = vector.shape_cast %703 : vector<64xf32> to vector<1x64xf32>
    %705 = arith.mulf %684, %684 : vector<4x64xf32>
    %cst_344 = arith.constant dense<0.000000e+00> : vector<64xf32>
    %706 = vector.multi_reduction <add>, %705, %cst_344 [0] : vector<4x64xf32> to vector<64xf32>
    %707 = vector.shape_cast %706 : vector<64xf32> to vector<1x64xf32>
    %cst_345 = arith.constant dense<0.000000e+00> : vector<1x32xf32>
    %708 = tpu.matmul %704, %694, %cst_345 {dimension_numbers = #tpu.dot_dimension_numbers<[1], [0], [0], [1], [0, 0, 1, 1], [], []>} : vector<1x64xf32>, vector<64x32xf32>, vector<1x32xf32> -> vector<1x32xf32>
    %cst_346 = arith.constant 8.000000e+00 : f32
    %709 = vector.broadcast %cst_346 : f32 to vector<1x32xf32>
    %710 = arith.divf %708, %709 : vector<1x32xf32>
    %cst_347 = arith.constant dense<0.000000e+00> : vector<1x32xf32>
    %711 = tpu.matmul %707, %694, %cst_347 {dimension_numbers = #tpu.dot_dimension_numbers<[1], [0], [0], [1], [0, 0, 1, 1], [], []>} : vector<1x64xf32>, vector<64x32xf32>, vector<1x32xf32> -> vector<1x32xf32>
    %cst_348 = arith.constant 8.000000e+00 : f32
    %712 = vector.broadcast %cst_348 : f32 to vector<1x32xf32>
    %713 = arith.divf %711, %712 : vector<1x32xf32>
    %714 = arith.mulf %710, %710 : vector<1x32xf32>
    %715 = arith.subf %713, %714 : vector<1x32xf32>
    %cst_349 = arith.constant 9.99999974E-6 : f32
    %716 = vector.broadcast %cst_349 : f32 to vector<1x32xf32>
    %717 = arith.addf %715, %716 : vector<1x32xf32>
    %718 = math.rsqrt %717 : vector<1x32xf32>
    %719 = arith.mulf %685, %718 : vector<1x32xf32>
    %720 = arith.mulf %710, %719 : vector<1x32xf32>
    %721 = arith.subf %686, %720 : vector<1x32xf32>
    %cst_350 = arith.constant dense<0.000000e+00> : vector<1x64xf32>
    %722 = tpu.matmul %719, %702, %cst_350 {dimension_numbers = #tpu.dot_dimension_numbers<[1], [0], [0], [1], [0, 0, 1, 1], [], []>} : vector<1x32xf32>, vector<32x64xf32>, vector<1x64xf32> -> vector<1x64xf32>
    %cst_351 = arith.constant dense<0.000000e+00> : vector<1x64xf32>
    %723 = tpu.matmul %721, %702, %cst_351 {dimension_numbers = #tpu.dot_dimension_numbers<[1], [0], [0], [1], [0, 0, 1, 1], [], []>} : vector<1x32xf32>, vector<32x64xf32>, vector<1x64xf32> -> vector<1x64xf32>
    %724 = vector.broadcast %722 : vector<1x64xf32> to vector<4x64xf32>
    %725 = arith.mulf %684, %724 : vector<4x64xf32>
    %726 = vector.broadcast %723 : vector<1x64xf32> to vector<4x64xf32>
    %727 = arith.addf %725, %726 : vector<4x64xf32>
    %cst_352 = arith.constant 0.000000e+00 : f32
    %728 = vector.broadcast %cst_352 : f32 to vector<4x64xf32>
    %729 = arith.cmpf ogt, %727, %728 : vector<4x64xf32>
    %cst_353 = arith.constant 2.000000e-01 : f32
    %730 = vector.broadcast %cst_353 : f32 to vector<4x64xf32>
    %731 = arith.mulf %730, %727 : vector<4x64xf32>
    %732 = arith.select %729, %727, %731 : vector<4x64xi1>, vector<4x64xf32>
    %733 = tpu.iota {dimensions = array<i32: 0>} : vector<8x4xi32>
    %734 = tpu.iota {dimensions = array<i32: 1>} : vector<8x4xi32>
    %c2_i32_354 = arith.constant 2 : i32
    %735 = vector.broadcast %c2_i32_354 : i32 to vector<8x4xi32>
    %736 = arith.shrsi %733, %735 : vector<8x4xi32>
    %c3_i32_355 = arith.constant 3 : i32
    %737 = vector.broadcast %c3_i32_355 : i32 to vector<8x4xi32>
    %738 = arith.andi %733, %737 : vector<8x4xi32>
    %c1_i32_356 = arith.constant 1 : i32
    %739 = vector.broadcast %c1_i32_356 : i32 to vector<8x4xi32>
    %740 = arith.shrsi %734, %739 : vector<8x4xi32>
    %c1_i32_357 = arith.constant 1 : i32
    %741 = vector.broadcast %c1_i32_357 : i32 to vector<8x4xi32>
    %742 = arith.andi %734, %741 : vector<8x4xi32>
    %c2_i32_358 = arith.constant 2 : i32
    %743 = vector.broadcast %c2_i32_358 : i32 to vector<8x4xi32>
    %744 = arith.muli %743, %742 : vector<8x4xi32>
    %c1_i32_359 = arith.constant 1 : i32
    %745 = vector.broadcast %c1_i32_359 : i32 to vector<8x4xi32>
    %746 = arith.addi %738, %745 : vector<8x4xi32>
    %c0_i32_360 = arith.constant 0 : i32
    %747 = vector.broadcast %c0_i32_360 : i32 to vector<8x4xi32>
    %748 = arith.subi %746, %747 : vector<8x4xi32>
    %749 = arith.cmpi eq, %744, %748 : vector<8x4xi32>
    %750 = arith.cmpi eq, %736, %740 : vector<8x4xi32>
    %751 = arith.andi %750, %749 : vector<8x4xi1>
    %cst_361 = arith.constant 1.000000e+00 : f32
    %cst_362 = arith.constant 0.000000e+00 : f32
    %752 = vector.broadcast %cst_361 : f32 to vector<8x4xf32>
    %753 = vector.broadcast %cst_362 : f32 to vector<8x4xf32>
    %754 = arith.select %751, %752, %753 : vector<8x4xi1>, vector<8x4xf32>
    %cst_363 = arith.constant dense<0.000000e+00> : vector<8x64xf32>
    %755 = tpu.matmul %754, %732, %cst_363 {dimension_numbers = #tpu.dot_dimension_numbers<[1], [0], [0], [1], [0, 0, 1, 1], [], []>} : vector<8x4xf32>, vector<4x64xf32>, vector<8x64xf32> -> vector<8x64xf32>
    %c0_364 = arith.constant 0 : index
    %c0_365 = arith.constant 0 : index
    %c0_366 = arith.constant 0 : index
    %756 = vector.load %arg6[%c0_364, %c0_365, %c0_366] : memref<4x64x64xf32, #tpu.memory_space<vmem>>, vector<1x64x64xf32>
    %757 = vector.shape_cast %756 : vector<1x64x64xf32> to vector<64x64xf32>
    %cst_367 = arith.constant dense<0.000000e+00> : vector<8x64xf32>
    %758 = tpu.matmul %755, %757, %cst_367 {dimension_numbers = #tpu.dot_dimension_numbers<[1], [0], [0], [1], [0, 0, 1, 1], [], []>} : vector<8x64xf32>, vector<64x64xf32>, vector<8x64xf32> -> vector<8x64xf32>
    %759 = tpu.iota {dimensions = array<i32: 0>} : vector<8x4xi32>
    %760 = tpu.iota {dimensions = array<i32: 1>} : vector<8x4xi32>
    %c2_i32_368 = arith.constant 2 : i32
    %761 = vector.broadcast %c2_i32_368 : i32 to vector<8x4xi32>
    %762 = arith.shrsi %759, %761 : vector<8x4xi32>
    %c3_i32_369 = arith.constant 3 : i32
    %763 = vector.broadcast %c3_i32_369 : i32 to vector<8x4xi32>
    %764 = arith.andi %759, %763 : vector<8x4xi32>
    %c1_i32_370 = arith.constant 1 : i32
    %765 = vector.broadcast %c1_i32_370 : i32 to vector<8x4xi32>
    %766 = arith.shrsi %760, %765 : vector<8x4xi32>
    %c1_i32_371 = arith.constant 1 : i32
    %767 = vector.broadcast %c1_i32_371 : i32 to vector<8x4xi32>
    %768 = arith.andi %760, %767 : vector<8x4xi32>
    %c2_i32_372 = arith.constant 2 : i32
    %769 = vector.broadcast %c2_i32_372 : i32 to vector<8x4xi32>
    %770 = arith.muli %769, %768 : vector<8x4xi32>
    %c1_i32_373 = arith.constant 1 : i32
    %771 = vector.broadcast %c1_i32_373 : i32 to vector<8x4xi32>
    %772 = arith.addi %764, %771 : vector<8x4xi32>
    %c1_i32_374 = arith.constant 1 : i32
    %773 = vector.broadcast %c1_i32_374 : i32 to vector<8x4xi32>
    %774 = arith.subi %772, %773 : vector<8x4xi32>
    %775 = arith.cmpi eq, %770, %774 : vector<8x4xi32>
    %776 = arith.cmpi eq, %762, %766 : vector<8x4xi32>
    %777 = arith.andi %776, %775 : vector<8x4xi1>
    %cst_375 = arith.constant 1.000000e+00 : f32
    %cst_376 = arith.constant 0.000000e+00 : f32
    %778 = vector.broadcast %cst_375 : f32 to vector<8x4xf32>
    %779 = vector.broadcast %cst_376 : f32 to vector<8x4xf32>
    %780 = arith.select %777, %778, %779 : vector<8x4xi1>, vector<8x4xf32>
    %cst_377 = arith.constant dense<0.000000e+00> : vector<8x64xf32>
    %781 = tpu.matmul %780, %732, %cst_377 {dimension_numbers = #tpu.dot_dimension_numbers<[1], [0], [0], [1], [0, 0, 1, 1], [], []>} : vector<8x4xf32>, vector<4x64xf32>, vector<8x64xf32> -> vector<8x64xf32>
    %c1_378 = arith.constant 1 : index
    %c0_379 = arith.constant 0 : index
    %c0_380 = arith.constant 0 : index
    %782 = vector.load %arg6[%c1_378, %c0_379, %c0_380] : memref<4x64x64xf32, #tpu.memory_space<vmem>>, vector<1x64x64xf32>
    %783 = vector.shape_cast %782 : vector<1x64x64xf32> to vector<64x64xf32>
    %cst_381 = arith.constant dense<0.000000e+00> : vector<8x64xf32>
    %784 = tpu.matmul %781, %783, %cst_381 {dimension_numbers = #tpu.dot_dimension_numbers<[1], [0], [0], [1], [0, 0, 1, 1], [], []>} : vector<8x64xf32>, vector<64x64xf32>, vector<8x64xf32> -> vector<8x64xf32>
    %785 = arith.addf %758, %784 : vector<8x64xf32>
    %786 = tpu.iota {dimensions = array<i32: 0>} : vector<8x4xi32>
    %787 = tpu.iota {dimensions = array<i32: 1>} : vector<8x4xi32>
    %c2_i32_382 = arith.constant 2 : i32
    %788 = vector.broadcast %c2_i32_382 : i32 to vector<8x4xi32>
    %789 = arith.shrsi %786, %788 : vector<8x4xi32>
    %c3_i32_383 = arith.constant 3 : i32
    %790 = vector.broadcast %c3_i32_383 : i32 to vector<8x4xi32>
    %791 = arith.andi %786, %790 : vector<8x4xi32>
    %c1_i32_384 = arith.constant 1 : i32
    %792 = vector.broadcast %c1_i32_384 : i32 to vector<8x4xi32>
    %793 = arith.shrsi %787, %792 : vector<8x4xi32>
    %c1_i32_385 = arith.constant 1 : i32
    %794 = vector.broadcast %c1_i32_385 : i32 to vector<8x4xi32>
    %795 = arith.andi %787, %794 : vector<8x4xi32>
    %c2_i32_386 = arith.constant 2 : i32
    %796 = vector.broadcast %c2_i32_386 : i32 to vector<8x4xi32>
    %797 = arith.muli %796, %795 : vector<8x4xi32>
    %c1_i32_387 = arith.constant 1 : i32
    %798 = vector.broadcast %c1_i32_387 : i32 to vector<8x4xi32>
    %799 = arith.addi %791, %798 : vector<8x4xi32>
    %c2_i32_388 = arith.constant 2 : i32
    %800 = vector.broadcast %c2_i32_388 : i32 to vector<8x4xi32>
    %801 = arith.subi %799, %800 : vector<8x4xi32>
    %802 = arith.cmpi eq, %797, %801 : vector<8x4xi32>
    %803 = arith.cmpi eq, %789, %793 : vector<8x4xi32>
    %804 = arith.andi %803, %802 : vector<8x4xi1>
    %cst_389 = arith.constant 1.000000e+00 : f32
    %cst_390 = arith.constant 0.000000e+00 : f32
    %805 = vector.broadcast %cst_389 : f32 to vector<8x4xf32>
    %806 = vector.broadcast %cst_390 : f32 to vector<8x4xf32>
    %807 = arith.select %804, %805, %806 : vector<8x4xi1>, vector<8x4xf32>
    %cst_391 = arith.constant dense<0.000000e+00> : vector<8x64xf32>
    %808 = tpu.matmul %807, %732, %cst_391 {dimension_numbers = #tpu.dot_dimension_numbers<[1], [0], [0], [1], [0, 0, 1, 1], [], []>} : vector<8x4xf32>, vector<4x64xf32>, vector<8x64xf32> -> vector<8x64xf32>
    %c2_392 = arith.constant 2 : index
    %c0_393 = arith.constant 0 : index
    %c0_394 = arith.constant 0 : index
    %809 = vector.load %arg6[%c2_392, %c0_393, %c0_394] : memref<4x64x64xf32, #tpu.memory_space<vmem>>, vector<1x64x64xf32>
    %810 = vector.shape_cast %809 : vector<1x64x64xf32> to vector<64x64xf32>
    %cst_395 = arith.constant dense<0.000000e+00> : vector<8x64xf32>
    %811 = tpu.matmul %808, %810, %cst_395 {dimension_numbers = #tpu.dot_dimension_numbers<[1], [0], [0], [1], [0, 0, 1, 1], [], []>} : vector<8x64xf32>, vector<64x64xf32>, vector<8x64xf32> -> vector<8x64xf32>
    %812 = arith.addf %785, %811 : vector<8x64xf32>
    %813 = tpu.iota {dimensions = array<i32: 0>} : vector<8x4xi32>
    %814 = tpu.iota {dimensions = array<i32: 1>} : vector<8x4xi32>
    %c2_i32_396 = arith.constant 2 : i32
    %815 = vector.broadcast %c2_i32_396 : i32 to vector<8x4xi32>
    %816 = arith.shrsi %813, %815 : vector<8x4xi32>
    %c3_i32_397 = arith.constant 3 : i32
    %817 = vector.broadcast %c3_i32_397 : i32 to vector<8x4xi32>
    %818 = arith.andi %813, %817 : vector<8x4xi32>
    %c1_i32_398 = arith.constant 1 : i32
    %819 = vector.broadcast %c1_i32_398 : i32 to vector<8x4xi32>
    %820 = arith.shrsi %814, %819 : vector<8x4xi32>
    %c1_i32_399 = arith.constant 1 : i32
    %821 = vector.broadcast %c1_i32_399 : i32 to vector<8x4xi32>
    %822 = arith.andi %814, %821 : vector<8x4xi32>
    %c2_i32_400 = arith.constant 2 : i32
    %823 = vector.broadcast %c2_i32_400 : i32 to vector<8x4xi32>
    %824 = arith.muli %823, %822 : vector<8x4xi32>
    %c1_i32_401 = arith.constant 1 : i32
    %825 = vector.broadcast %c1_i32_401 : i32 to vector<8x4xi32>
    %826 = arith.addi %818, %825 : vector<8x4xi32>
    %c3_i32_402 = arith.constant 3 : i32
    %827 = vector.broadcast %c3_i32_402 : i32 to vector<8x4xi32>
    %828 = arith.subi %826, %827 : vector<8x4xi32>
    %829 = arith.cmpi eq, %824, %828 : vector<8x4xi32>
    %830 = arith.cmpi eq, %816, %820 : vector<8x4xi32>
    %831 = arith.andi %830, %829 : vector<8x4xi1>
    %cst_403 = arith.constant 1.000000e+00 : f32
    %cst_404 = arith.constant 0.000000e+00 : f32
    %832 = vector.broadcast %cst_403 : f32 to vector<8x4xf32>
    %833 = vector.broadcast %cst_404 : f32 to vector<8x4xf32>
    %834 = arith.select %831, %832, %833 : vector<8x4xi1>, vector<8x4xf32>
    %cst_405 = arith.constant dense<0.000000e+00> : vector<8x64xf32>
    %835 = tpu.matmul %834, %732, %cst_405 {dimension_numbers = #tpu.dot_dimension_numbers<[1], [0], [0], [1], [0, 0, 1, 1], [], []>} : vector<8x4xf32>, vector<4x64xf32>, vector<8x64xf32> -> vector<8x64xf32>
    %c3_406 = arith.constant 3 : index
    %c0_407 = arith.constant 0 : index
    %c0_408 = arith.constant 0 : index
    %836 = vector.load %arg6[%c3_406, %c0_407, %c0_408] : memref<4x64x64xf32, #tpu.memory_space<vmem>>, vector<1x64x64xf32>
    %837 = vector.shape_cast %836 : vector<1x64x64xf32> to vector<64x64xf32>
    %cst_409 = arith.constant dense<0.000000e+00> : vector<8x64xf32>
    %838 = tpu.matmul %835, %837, %cst_409 {dimension_numbers = #tpu.dot_dimension_numbers<[1], [0], [0], [1], [0, 0, 1, 1], [], []>} : vector<8x64xf32>, vector<64x64xf32>, vector<8x64xf32> -> vector<8x64xf32>
    %839 = arith.addf %812, %838 : vector<8x64xf32>
    %c0_410 = arith.constant 0 : index
    %c0_411 = arith.constant 0 : index
    %840 = vector.load %arg17[%c0_410, %c0_411] : memref<1x16xf32, #tpu.memory_space<vmem>>, vector<1x16xf32>
    %c0_412 = arith.constant 0 : index
    %c0_413 = arith.constant 0 : index
    %841 = vector.load %arg18[%c0_412, %c0_413] : memref<1x16xf32, #tpu.memory_space<vmem>>, vector<1x16xf32>
    %842 = tpu.iota {dimensions = array<i32: 0>} : vector<64x16xi32>
    %843 = tpu.iota {dimensions = array<i32: 1>} : vector<64x16xi32>
    %c15_i32_414 = arith.constant 15 : i32
    %844 = vector.broadcast %c15_i32_414 : i32 to vector<64x16xi32>
    %845 = arith.andi %842, %844 : vector<64x16xi32>
    %846 = arith.cmpi eq, %845, %843 : vector<64x16xi32>
    %cst_415 = arith.constant 1.000000e+00 : f32
    %cst_416 = arith.constant 0.000000e+00 : f32
    %847 = vector.broadcast %cst_415 : f32 to vector<64x16xf32>
    %848 = vector.broadcast %cst_416 : f32 to vector<64x16xf32>
    %849 = arith.select %846, %847, %848 : vector<64x16xi1>, vector<64x16xf32>
    %850 = tpu.iota {dimensions = array<i32: 1>} : vector<16x64xi32>
    %851 = tpu.iota {dimensions = array<i32: 0>} : vector<16x64xi32>
    %c15_i32_417 = arith.constant 15 : i32
    %852 = vector.broadcast %c15_i32_417 : i32 to vector<16x64xi32>
    %853 = arith.andi %850, %852 : vector<16x64xi32>
    %854 = arith.cmpi eq, %853, %851 : vector<16x64xi32>
    %cst_418 = arith.constant 1.000000e+00 : f32
    %cst_419 = arith.constant 0.000000e+00 : f32
    %855 = vector.broadcast %cst_418 : f32 to vector<16x64xf32>
    %856 = vector.broadcast %cst_419 : f32 to vector<16x64xf32>
    %857 = arith.select %854, %855, %856 : vector<16x64xi1>, vector<16x64xf32>
    %cst_420 = arith.constant dense<0.000000e+00> : vector<64xf32>
    %858 = vector.multi_reduction <add>, %839, %cst_420 [0] : vector<8x64xf32> to vector<64xf32>
    %859 = vector.shape_cast %858 : vector<64xf32> to vector<1x64xf32>
    %860 = arith.mulf %839, %839 : vector<8x64xf32>
    %cst_421 = arith.constant dense<0.000000e+00> : vector<64xf32>
    %861 = vector.multi_reduction <add>, %860, %cst_421 [0] : vector<8x64xf32> to vector<64xf32>
    %862 = vector.shape_cast %861 : vector<64xf32> to vector<1x64xf32>
    %cst_422 = arith.constant dense<0.000000e+00> : vector<1x16xf32>
    %863 = tpu.matmul %859, %849, %cst_422 {dimension_numbers = #tpu.dot_dimension_numbers<[1], [0], [0], [1], [0, 0, 1, 1], [], []>} : vector<1x64xf32>, vector<64x16xf32>, vector<1x16xf32> -> vector<1x16xf32>
    %cst_423 = arith.constant 3.200000e+01 : f32
    %864 = vector.broadcast %cst_423 : f32 to vector<1x16xf32>
    %865 = arith.divf %863, %864 : vector<1x16xf32>
    %cst_424 = arith.constant dense<0.000000e+00> : vector<1x16xf32>
    %866 = tpu.matmul %862, %849, %cst_424 {dimension_numbers = #tpu.dot_dimension_numbers<[1], [0], [0], [1], [0, 0, 1, 1], [], []>} : vector<1x64xf32>, vector<64x16xf32>, vector<1x16xf32> -> vector<1x16xf32>
    %cst_425 = arith.constant 3.200000e+01 : f32
    %867 = vector.broadcast %cst_425 : f32 to vector<1x16xf32>
    %868 = arith.divf %866, %867 : vector<1x16xf32>
    %869 = arith.mulf %865, %865 : vector<1x16xf32>
    %870 = arith.subf %868, %869 : vector<1x16xf32>
    %cst_426 = arith.constant 9.99999974E-6 : f32
    %871 = vector.broadcast %cst_426 : f32 to vector<1x16xf32>
    %872 = arith.addf %870, %871 : vector<1x16xf32>
    %873 = math.rsqrt %872 : vector<1x16xf32>
    %874 = arith.mulf %840, %873 : vector<1x16xf32>
    %875 = arith.mulf %865, %874 : vector<1x16xf32>
    %876 = arith.subf %841, %875 : vector<1x16xf32>
    %cst_427 = arith.constant dense<0.000000e+00> : vector<1x64xf32>
    %877 = tpu.matmul %874, %857, %cst_427 {dimension_numbers = #tpu.dot_dimension_numbers<[1], [0], [0], [1], [0, 0, 1, 1], [], []>} : vector<1x16xf32>, vector<16x64xf32>, vector<1x64xf32> -> vector<1x64xf32>
    %cst_428 = arith.constant dense<0.000000e+00> : vector<1x64xf32>
    %878 = tpu.matmul %876, %857, %cst_428 {dimension_numbers = #tpu.dot_dimension_numbers<[1], [0], [0], [1], [0, 0, 1, 1], [], []>} : vector<1x16xf32>, vector<16x64xf32>, vector<1x64xf32> -> vector<1x64xf32>
    %879 = vector.broadcast %877 : vector<1x64xf32> to vector<8x64xf32>
    %880 = arith.mulf %839, %879 : vector<8x64xf32>
    %881 = vector.broadcast %878 : vector<1x64xf32> to vector<8x64xf32>
    %882 = arith.addf %880, %881 : vector<8x64xf32>
    %cst_429 = arith.constant 0.000000e+00 : f32
    %883 = vector.broadcast %cst_429 : f32 to vector<8x64xf32>
    %884 = arith.cmpf ogt, %882, %883 : vector<8x64xf32>
    %cst_430 = arith.constant 2.000000e-01 : f32
    %885 = vector.broadcast %cst_430 : f32 to vector<8x64xf32>
    %886 = arith.mulf %885, %882 : vector<8x64xf32>
    %887 = arith.select %884, %882, %886 : vector<8x64xi1>, vector<8x64xf32>
    %888 = tpu.iota {dimensions = array<i32: 0>} : vector<16x8xi32>
    %889 = tpu.iota {dimensions = array<i32: 1>} : vector<16x8xi32>
    %c3_i32_431 = arith.constant 3 : i32
    %890 = vector.broadcast %c3_i32_431 : i32 to vector<16x8xi32>
    %891 = arith.shrsi %888, %890 : vector<16x8xi32>
    %c7_i32_432 = arith.constant 7 : i32
    %892 = vector.broadcast %c7_i32_432 : i32 to vector<16x8xi32>
    %893 = arith.andi %888, %892 : vector<16x8xi32>
    %c2_i32_433 = arith.constant 2 : i32
    %894 = vector.broadcast %c2_i32_433 : i32 to vector<16x8xi32>
    %895 = arith.shrsi %889, %894 : vector<16x8xi32>
    %c3_i32_434 = arith.constant 3 : i32
    %896 = vector.broadcast %c3_i32_434 : i32 to vector<16x8xi32>
    %897 = arith.andi %889, %896 : vector<16x8xi32>
    %c2_i32_435 = arith.constant 2 : i32
    %898 = vector.broadcast %c2_i32_435 : i32 to vector<16x8xi32>
    %899 = arith.muli %898, %897 : vector<16x8xi32>
    %c1_i32_436 = arith.constant 1 : i32
    %900 = vector.broadcast %c1_i32_436 : i32 to vector<16x8xi32>
    %901 = arith.addi %893, %900 : vector<16x8xi32>
    %c0_i32_437 = arith.constant 0 : i32
    %902 = vector.broadcast %c0_i32_437 : i32 to vector<16x8xi32>
    %903 = arith.subi %901, %902 : vector<16x8xi32>
    %904 = arith.cmpi eq, %899, %903 : vector<16x8xi32>
    %905 = arith.cmpi eq, %891, %895 : vector<16x8xi32>
    %906 = arith.andi %905, %904 : vector<16x8xi1>
    %cst_438 = arith.constant 1.000000e+00 : f32
    %cst_439 = arith.constant 0.000000e+00 : f32
    %907 = vector.broadcast %cst_438 : f32 to vector<16x8xf32>
    %908 = vector.broadcast %cst_439 : f32 to vector<16x8xf32>
    %909 = arith.select %906, %907, %908 : vector<16x8xi1>, vector<16x8xf32>
    %cst_440 = arith.constant dense<0.000000e+00> : vector<16x64xf32>
    %910 = tpu.matmul %909, %887, %cst_440 {dimension_numbers = #tpu.dot_dimension_numbers<[1], [0], [0], [1], [0, 0, 1, 1], [], []>} : vector<16x8xf32>, vector<8x64xf32>, vector<16x64xf32> -> vector<16x64xf32>
    %c0_441 = arith.constant 0 : index
    %c0_442 = arith.constant 0 : index
    %c0_443 = arith.constant 0 : index
    %911 = vector.load %arg7[%c0_441, %c0_442, %c0_443] : memref<4x64x64xf32, #tpu.memory_space<vmem>>, vector<1x64x64xf32>
    %912 = vector.shape_cast %911 : vector<1x64x64xf32> to vector<64x64xf32>
    %cst_444 = arith.constant dense<0.000000e+00> : vector<16x64xf32>
    %913 = tpu.matmul %910, %912, %cst_444 {dimension_numbers = #tpu.dot_dimension_numbers<[1], [0], [0], [1], [0, 0, 1, 1], [], []>} : vector<16x64xf32>, vector<64x64xf32>, vector<16x64xf32> -> vector<16x64xf32>
    %914 = tpu.iota {dimensions = array<i32: 0>} : vector<16x8xi32>
    %915 = tpu.iota {dimensions = array<i32: 1>} : vector<16x8xi32>
    %c3_i32_445 = arith.constant 3 : i32
    %916 = vector.broadcast %c3_i32_445 : i32 to vector<16x8xi32>
    %917 = arith.shrsi %914, %916 : vector<16x8xi32>
    %c7_i32_446 = arith.constant 7 : i32
    %918 = vector.broadcast %c7_i32_446 : i32 to vector<16x8xi32>
    %919 = arith.andi %914, %918 : vector<16x8xi32>
    %c2_i32_447 = arith.constant 2 : i32
    %920 = vector.broadcast %c2_i32_447 : i32 to vector<16x8xi32>
    %921 = arith.shrsi %915, %920 : vector<16x8xi32>
    %c3_i32_448 = arith.constant 3 : i32
    %922 = vector.broadcast %c3_i32_448 : i32 to vector<16x8xi32>
    %923 = arith.andi %915, %922 : vector<16x8xi32>
    %c2_i32_449 = arith.constant 2 : i32
    %924 = vector.broadcast %c2_i32_449 : i32 to vector<16x8xi32>
    %925 = arith.muli %924, %923 : vector<16x8xi32>
    %c1_i32_450 = arith.constant 1 : i32
    %926 = vector.broadcast %c1_i32_450 : i32 to vector<16x8xi32>
    %927 = arith.addi %919, %926 : vector<16x8xi32>
    %c1_i32_451 = arith.constant 1 : i32
    %928 = vector.broadcast %c1_i32_451 : i32 to vector<16x8xi32>
    %929 = arith.subi %927, %928 : vector<16x8xi32>
    %930 = arith.cmpi eq, %925, %929 : vector<16x8xi32>
    %931 = arith.cmpi eq, %917, %921 : vector<16x8xi32>
    %932 = arith.andi %931, %930 : vector<16x8xi1>
    %cst_452 = arith.constant 1.000000e+00 : f32
    %cst_453 = arith.constant 0.000000e+00 : f32
    %933 = vector.broadcast %cst_452 : f32 to vector<16x8xf32>
    %934 = vector.broadcast %cst_453 : f32 to vector<16x8xf32>
    %935 = arith.select %932, %933, %934 : vector<16x8xi1>, vector<16x8xf32>
    %cst_454 = arith.constant dense<0.000000e+00> : vector<16x64xf32>
    %936 = tpu.matmul %935, %887, %cst_454 {dimension_numbers = #tpu.dot_dimension_numbers<[1], [0], [0], [1], [0, 0, 1, 1], [], []>} : vector<16x8xf32>, vector<8x64xf32>, vector<16x64xf32> -> vector<16x64xf32>
    %c1_455 = arith.constant 1 : index
    %c0_456 = arith.constant 0 : index
    %c0_457 = arith.constant 0 : index
    %937 = vector.load %arg7[%c1_455, %c0_456, %c0_457] : memref<4x64x64xf32, #tpu.memory_space<vmem>>, vector<1x64x64xf32>
    %938 = vector.shape_cast %937 : vector<1x64x64xf32> to vector<64x64xf32>
    %cst_458 = arith.constant dense<0.000000e+00> : vector<16x64xf32>
    %939 = tpu.matmul %936, %938, %cst_458 {dimension_numbers = #tpu.dot_dimension_numbers<[1], [0], [0], [1], [0, 0, 1, 1], [], []>} : vector<16x64xf32>, vector<64x64xf32>, vector<16x64xf32> -> vector<16x64xf32>
    %940 = arith.addf %913, %939 : vector<16x64xf32>
    %941 = tpu.iota {dimensions = array<i32: 0>} : vector<16x8xi32>
    %942 = tpu.iota {dimensions = array<i32: 1>} : vector<16x8xi32>
    %c3_i32_459 = arith.constant 3 : i32
    %943 = vector.broadcast %c3_i32_459 : i32 to vector<16x8xi32>
    %944 = arith.shrsi %941, %943 : vector<16x8xi32>
    %c7_i32_460 = arith.constant 7 : i32
    %945 = vector.broadcast %c7_i32_460 : i32 to vector<16x8xi32>
    %946 = arith.andi %941, %945 : vector<16x8xi32>
    %c2_i32_461 = arith.constant 2 : i32
    %947 = vector.broadcast %c2_i32_461 : i32 to vector<16x8xi32>
    %948 = arith.shrsi %942, %947 : vector<16x8xi32>
    %c3_i32_462 = arith.constant 3 : i32
    %949 = vector.broadcast %c3_i32_462 : i32 to vector<16x8xi32>
    %950 = arith.andi %942, %949 : vector<16x8xi32>
    %c2_i32_463 = arith.constant 2 : i32
    %951 = vector.broadcast %c2_i32_463 : i32 to vector<16x8xi32>
    %952 = arith.muli %951, %950 : vector<16x8xi32>
    %c1_i32_464 = arith.constant 1 : i32
    %953 = vector.broadcast %c1_i32_464 : i32 to vector<16x8xi32>
    %954 = arith.addi %946, %953 : vector<16x8xi32>
    %c2_i32_465 = arith.constant 2 : i32
    %955 = vector.broadcast %c2_i32_465 : i32 to vector<16x8xi32>
    %956 = arith.subi %954, %955 : vector<16x8xi32>
    %957 = arith.cmpi eq, %952, %956 : vector<16x8xi32>
    %958 = arith.cmpi eq, %944, %948 : vector<16x8xi32>
    %959 = arith.andi %958, %957 : vector<16x8xi1>
    %cst_466 = arith.constant 1.000000e+00 : f32
    %cst_467 = arith.constant 0.000000e+00 : f32
    %960 = vector.broadcast %cst_466 : f32 to vector<16x8xf32>
    %961 = vector.broadcast %cst_467 : f32 to vector<16x8xf32>
    %962 = arith.select %959, %960, %961 : vector<16x8xi1>, vector<16x8xf32>
    %cst_468 = arith.constant dense<0.000000e+00> : vector<16x64xf32>
    %963 = tpu.matmul %962, %887, %cst_468 {dimension_numbers = #tpu.dot_dimension_numbers<[1], [0], [0], [1], [0, 0, 1, 1], [], []>} : vector<16x8xf32>, vector<8x64xf32>, vector<16x64xf32> -> vector<16x64xf32>
    %c2_469 = arith.constant 2 : index
    %c0_470 = arith.constant 0 : index
    %c0_471 = arith.constant 0 : index
    %964 = vector.load %arg7[%c2_469, %c0_470, %c0_471] : memref<4x64x64xf32, #tpu.memory_space<vmem>>, vector<1x64x64xf32>
    %965 = vector.shape_cast %964 : vector<1x64x64xf32> to vector<64x64xf32>
    %cst_472 = arith.constant dense<0.000000e+00> : vector<16x64xf32>
    %966 = tpu.matmul %963, %965, %cst_472 {dimension_numbers = #tpu.dot_dimension_numbers<[1], [0], [0], [1], [0, 0, 1, 1], [], []>} : vector<16x64xf32>, vector<64x64xf32>, vector<16x64xf32> -> vector<16x64xf32>
    %967 = arith.addf %940, %966 : vector<16x64xf32>
    %968 = tpu.iota {dimensions = array<i32: 0>} : vector<16x8xi32>
    %969 = tpu.iota {dimensions = array<i32: 1>} : vector<16x8xi32>
    %c3_i32_473 = arith.constant 3 : i32
    %970 = vector.broadcast %c3_i32_473 : i32 to vector<16x8xi32>
    %971 = arith.shrsi %968, %970 : vector<16x8xi32>
    %c7_i32_474 = arith.constant 7 : i32
    %972 = vector.broadcast %c7_i32_474 : i32 to vector<16x8xi32>
    %973 = arith.andi %968, %972 : vector<16x8xi32>
    %c2_i32_475 = arith.constant 2 : i32
    %974 = vector.broadcast %c2_i32_475 : i32 to vector<16x8xi32>
    %975 = arith.shrsi %969, %974 : vector<16x8xi32>
    %c3_i32_476 = arith.constant 3 : i32
    %976 = vector.broadcast %c3_i32_476 : i32 to vector<16x8xi32>
    %977 = arith.andi %969, %976 : vector<16x8xi32>
    %c2_i32_477 = arith.constant 2 : i32
    %978 = vector.broadcast %c2_i32_477 : i32 to vector<16x8xi32>
    %979 = arith.muli %978, %977 : vector<16x8xi32>
    %c1_i32_478 = arith.constant 1 : i32
    %980 = vector.broadcast %c1_i32_478 : i32 to vector<16x8xi32>
    %981 = arith.addi %973, %980 : vector<16x8xi32>
    %c3_i32_479 = arith.constant 3 : i32
    %982 = vector.broadcast %c3_i32_479 : i32 to vector<16x8xi32>
    %983 = arith.subi %981, %982 : vector<16x8xi32>
    %984 = arith.cmpi eq, %979, %983 : vector<16x8xi32>
    %985 = arith.cmpi eq, %971, %975 : vector<16x8xi32>
    %986 = arith.andi %985, %984 : vector<16x8xi1>
    %cst_480 = arith.constant 1.000000e+00 : f32
    %cst_481 = arith.constant 0.000000e+00 : f32
    %987 = vector.broadcast %cst_480 : f32 to vector<16x8xf32>
    %988 = vector.broadcast %cst_481 : f32 to vector<16x8xf32>
    %989 = arith.select %986, %987, %988 : vector<16x8xi1>, vector<16x8xf32>
    %cst_482 = arith.constant dense<0.000000e+00> : vector<16x64xf32>
    %990 = tpu.matmul %989, %887, %cst_482 {dimension_numbers = #tpu.dot_dimension_numbers<[1], [0], [0], [1], [0, 0, 1, 1], [], []>} : vector<16x8xf32>, vector<8x64xf32>, vector<16x64xf32> -> vector<16x64xf32>
    %c3_483 = arith.constant 3 : index
    %c0_484 = arith.constant 0 : index
    %c0_485 = arith.constant 0 : index
    %991 = vector.load %arg7[%c3_483, %c0_484, %c0_485] : memref<4x64x64xf32, #tpu.memory_space<vmem>>, vector<1x64x64xf32>
    %992 = vector.shape_cast %991 : vector<1x64x64xf32> to vector<64x64xf32>
    %cst_486 = arith.constant dense<0.000000e+00> : vector<16x64xf32>
    %993 = tpu.matmul %990, %992, %cst_486 {dimension_numbers = #tpu.dot_dimension_numbers<[1], [0], [0], [1], [0, 0, 1, 1], [], []>} : vector<16x64xf32>, vector<64x64xf32>, vector<16x64xf32> -> vector<16x64xf32>
    %994 = arith.addf %967, %993 : vector<16x64xf32>
    %c0_487 = arith.constant 0 : index
    %c0_488 = arith.constant 0 : index
    %995 = vector.load %arg19[%c0_487, %c0_488] : memref<1x8xf32, #tpu.memory_space<vmem>>, vector<1x8xf32>
    %c0_489 = arith.constant 0 : index
    %c0_490 = arith.constant 0 : index
    %996 = vector.load %arg20[%c0_489, %c0_490] : memref<1x8xf32, #tpu.memory_space<vmem>>, vector<1x8xf32>
    %997 = tpu.iota {dimensions = array<i32: 0>} : vector<64x8xi32>
    %998 = tpu.iota {dimensions = array<i32: 1>} : vector<64x8xi32>
    %c7_i32_491 = arith.constant 7 : i32
    %999 = vector.broadcast %c7_i32_491 : i32 to vector<64x8xi32>
    %1000 = arith.andi %997, %999 : vector<64x8xi32>
    %1001 = arith.cmpi eq, %1000, %998 : vector<64x8xi32>
    %cst_492 = arith.constant 1.000000e+00 : f32
    %cst_493 = arith.constant 0.000000e+00 : f32
    %1002 = vector.broadcast %cst_492 : f32 to vector<64x8xf32>
    %1003 = vector.broadcast %cst_493 : f32 to vector<64x8xf32>
    %1004 = arith.select %1001, %1002, %1003 : vector<64x8xi1>, vector<64x8xf32>
    %1005 = tpu.iota {dimensions = array<i32: 1>} : vector<8x64xi32>
    %1006 = tpu.iota {dimensions = array<i32: 0>} : vector<8x64xi32>
    %c7_i32_494 = arith.constant 7 : i32
    %1007 = vector.broadcast %c7_i32_494 : i32 to vector<8x64xi32>
    %1008 = arith.andi %1005, %1007 : vector<8x64xi32>
    %1009 = arith.cmpi eq, %1008, %1006 : vector<8x64xi32>
    %cst_495 = arith.constant 1.000000e+00 : f32
    %cst_496 = arith.constant 0.000000e+00 : f32
    %1010 = vector.broadcast %cst_495 : f32 to vector<8x64xf32>
    %1011 = vector.broadcast %cst_496 : f32 to vector<8x64xf32>
    %1012 = arith.select %1009, %1010, %1011 : vector<8x64xi1>, vector<8x64xf32>
    %cst_497 = arith.constant dense<0.000000e+00> : vector<64xf32>
    %1013 = vector.multi_reduction <add>, %994, %cst_497 [0] : vector<16x64xf32> to vector<64xf32>
    %1014 = vector.shape_cast %1013 : vector<64xf32> to vector<1x64xf32>
    %1015 = arith.mulf %994, %994 : vector<16x64xf32>
    %cst_498 = arith.constant dense<0.000000e+00> : vector<64xf32>
    %1016 = vector.multi_reduction <add>, %1015, %cst_498 [0] : vector<16x64xf32> to vector<64xf32>
    %1017 = vector.shape_cast %1016 : vector<64xf32> to vector<1x64xf32>
    %cst_499 = arith.constant dense<0.000000e+00> : vector<1x8xf32>
    %1018 = tpu.matmul %1014, %1004, %cst_499 {dimension_numbers = #tpu.dot_dimension_numbers<[1], [0], [0], [1], [0, 0, 1, 1], [], []>} : vector<1x64xf32>, vector<64x8xf32>, vector<1x8xf32> -> vector<1x8xf32>
    %cst_500 = arith.constant 1.280000e+02 : f32
    %1019 = vector.broadcast %cst_500 : f32 to vector<1x8xf32>
    %1020 = arith.divf %1018, %1019 : vector<1x8xf32>
    %cst_501 = arith.constant dense<0.000000e+00> : vector<1x8xf32>
    %1021 = tpu.matmul %1017, %1004, %cst_501 {dimension_numbers = #tpu.dot_dimension_numbers<[1], [0], [0], [1], [0, 0, 1, 1], [], []>} : vector<1x64xf32>, vector<64x8xf32>, vector<1x8xf32> -> vector<1x8xf32>
    %cst_502 = arith.constant 1.280000e+02 : f32
    %1022 = vector.broadcast %cst_502 : f32 to vector<1x8xf32>
    %1023 = arith.divf %1021, %1022 : vector<1x8xf32>
    %1024 = arith.mulf %1020, %1020 : vector<1x8xf32>
    %1025 = arith.subf %1023, %1024 : vector<1x8xf32>
    %cst_503 = arith.constant 9.99999974E-6 : f32
    %1026 = vector.broadcast %cst_503 : f32 to vector<1x8xf32>
    %1027 = arith.addf %1025, %1026 : vector<1x8xf32>
    %1028 = math.rsqrt %1027 : vector<1x8xf32>
    %1029 = arith.mulf %995, %1028 : vector<1x8xf32>
    %1030 = arith.mulf %1020, %1029 : vector<1x8xf32>
    %1031 = arith.subf %996, %1030 : vector<1x8xf32>
    %cst_504 = arith.constant dense<0.000000e+00> : vector<1x64xf32>
    %1032 = tpu.matmul %1029, %1012, %cst_504 {dimension_numbers = #tpu.dot_dimension_numbers<[1], [0], [0], [1], [0, 0, 1, 1], [], []>} : vector<1x8xf32>, vector<8x64xf32>, vector<1x64xf32> -> vector<1x64xf32>
    %cst_505 = arith.constant dense<0.000000e+00> : vector<1x64xf32>
    %1033 = tpu.matmul %1031, %1012, %cst_505 {dimension_numbers = #tpu.dot_dimension_numbers<[1], [0], [0], [1], [0, 0, 1, 1], [], []>} : vector<1x8xf32>, vector<8x64xf32>, vector<1x64xf32> -> vector<1x64xf32>
    %1034 = vector.broadcast %1032 : vector<1x64xf32> to vector<16x64xf32>
    %1035 = arith.mulf %994, %1034 : vector<16x64xf32>
    %1036 = vector.broadcast %1033 : vector<1x64xf32> to vector<16x64xf32>
    %1037 = arith.addf %1035, %1036 : vector<16x64xf32>
    %cst_506 = arith.constant 0.000000e+00 : f32
    %1038 = vector.broadcast %cst_506 : f32 to vector<16x64xf32>
    %1039 = arith.cmpf ogt, %1037, %1038 : vector<16x64xf32>
    %cst_507 = arith.constant 2.000000e-01 : f32
    %1040 = vector.broadcast %cst_507 : f32 to vector<16x64xf32>
    %1041 = arith.mulf %1040, %1037 : vector<16x64xf32>
    %1042 = arith.select %1039, %1037, %1041 : vector<16x64xi1>, vector<16x64xf32>
    %1043 = tpu.iota {dimensions = array<i32: 0>} : vector<32x16xi32>
    %1044 = tpu.iota {dimensions = array<i32: 1>} : vector<32x16xi32>
    %c4_i32_508 = arith.constant 4 : i32
    %1045 = vector.broadcast %c4_i32_508 : i32 to vector<32x16xi32>
    %1046 = arith.shrsi %1043, %1045 : vector<32x16xi32>
    %c15_i32_509 = arith.constant 15 : i32
    %1047 = vector.broadcast %c15_i32_509 : i32 to vector<32x16xi32>
    %1048 = arith.andi %1043, %1047 : vector<32x16xi32>
    %c3_i32_510 = arith.constant 3 : i32
    %1049 = vector.broadcast %c3_i32_510 : i32 to vector<32x16xi32>
    %1050 = arith.shrsi %1044, %1049 : vector<32x16xi32>
    %c7_i32_511 = arith.constant 7 : i32
    %1051 = vector.broadcast %c7_i32_511 : i32 to vector<32x16xi32>
    %1052 = arith.andi %1044, %1051 : vector<32x16xi32>
    %c2_i32_512 = arith.constant 2 : i32
    %1053 = vector.broadcast %c2_i32_512 : i32 to vector<32x16xi32>
    %1054 = arith.muli %1053, %1052 : vector<32x16xi32>
    %c1_i32_513 = arith.constant 1 : i32
    %1055 = vector.broadcast %c1_i32_513 : i32 to vector<32x16xi32>
    %1056 = arith.addi %1048, %1055 : vector<32x16xi32>
    %c0_i32_514 = arith.constant 0 : i32
    %1057 = vector.broadcast %c0_i32_514 : i32 to vector<32x16xi32>
    %1058 = arith.subi %1056, %1057 : vector<32x16xi32>
    %1059 = arith.cmpi eq, %1054, %1058 : vector<32x16xi32>
    %1060 = arith.cmpi eq, %1046, %1050 : vector<32x16xi32>
    %1061 = arith.andi %1060, %1059 : vector<32x16xi1>
    %cst_515 = arith.constant 1.000000e+00 : f32
    %cst_516 = arith.constant 0.000000e+00 : f32
    %1062 = vector.broadcast %cst_515 : f32 to vector<32x16xf32>
    %1063 = vector.broadcast %cst_516 : f32 to vector<32x16xf32>
    %1064 = arith.select %1061, %1062, %1063 : vector<32x16xi1>, vector<32x16xf32>
    %cst_517 = arith.constant dense<0.000000e+00> : vector<32x64xf32>
    %1065 = tpu.matmul %1064, %1042, %cst_517 {dimension_numbers = #tpu.dot_dimension_numbers<[1], [0], [0], [1], [0, 0, 1, 1], [], []>} : vector<32x16xf32>, vector<16x64xf32>, vector<32x64xf32> -> vector<32x64xf32>
    %c0_518 = arith.constant 0 : index
    %c0_519 = arith.constant 0 : index
    %c0_520 = arith.constant 0 : index
    %1066 = vector.load %arg8[%c0_518, %c0_519, %c0_520] : memref<4x64x48xf32, #tpu.memory_space<vmem>>, vector<1x64x48xf32>
    %1067 = vector.shape_cast %1066 : vector<1x64x48xf32> to vector<64x48xf32>
    %cst_521 = arith.constant dense<0.000000e+00> : vector<32x48xf32>
    %1068 = tpu.matmul %1065, %1067, %cst_521 {dimension_numbers = #tpu.dot_dimension_numbers<[1], [0], [0], [1], [0, 0, 1, 1], [], []>} : vector<32x64xf32>, vector<64x48xf32>, vector<32x48xf32> -> vector<32x48xf32>
    %1069 = tpu.iota {dimensions = array<i32: 0>} : vector<32x16xi32>
    %1070 = tpu.iota {dimensions = array<i32: 1>} : vector<32x16xi32>
    %c4_i32_522 = arith.constant 4 : i32
    %1071 = vector.broadcast %c4_i32_522 : i32 to vector<32x16xi32>
    %1072 = arith.shrsi %1069, %1071 : vector<32x16xi32>
    %c15_i32_523 = arith.constant 15 : i32
    %1073 = vector.broadcast %c15_i32_523 : i32 to vector<32x16xi32>
    %1074 = arith.andi %1069, %1073 : vector<32x16xi32>
    %c3_i32_524 = arith.constant 3 : i32
    %1075 = vector.broadcast %c3_i32_524 : i32 to vector<32x16xi32>
    %1076 = arith.shrsi %1070, %1075 : vector<32x16xi32>
    %c7_i32_525 = arith.constant 7 : i32
    %1077 = vector.broadcast %c7_i32_525 : i32 to vector<32x16xi32>
    %1078 = arith.andi %1070, %1077 : vector<32x16xi32>
    %c2_i32_526 = arith.constant 2 : i32
    %1079 = vector.broadcast %c2_i32_526 : i32 to vector<32x16xi32>
    %1080 = arith.muli %1079, %1078 : vector<32x16xi32>
    %c1_i32_527 = arith.constant 1 : i32
    %1081 = vector.broadcast %c1_i32_527 : i32 to vector<32x16xi32>
    %1082 = arith.addi %1074, %1081 : vector<32x16xi32>
    %c1_i32_528 = arith.constant 1 : i32
    %1083 = vector.broadcast %c1_i32_528 : i32 to vector<32x16xi32>
    %1084 = arith.subi %1082, %1083 : vector<32x16xi32>
    %1085 = arith.cmpi eq, %1080, %1084 : vector<32x16xi32>
    %1086 = arith.cmpi eq, %1072, %1076 : vector<32x16xi32>
    %1087 = arith.andi %1086, %1085 : vector<32x16xi1>
    %cst_529 = arith.constant 1.000000e+00 : f32
    %cst_530 = arith.constant 0.000000e+00 : f32
    %1088 = vector.broadcast %cst_529 : f32 to vector<32x16xf32>
    %1089 = vector.broadcast %cst_530 : f32 to vector<32x16xf32>
    %1090 = arith.select %1087, %1088, %1089 : vector<32x16xi1>, vector<32x16xf32>
    %cst_531 = arith.constant dense<0.000000e+00> : vector<32x64xf32>
    %1091 = tpu.matmul %1090, %1042, %cst_531 {dimension_numbers = #tpu.dot_dimension_numbers<[1], [0], [0], [1], [0, 0, 1, 1], [], []>} : vector<32x16xf32>, vector<16x64xf32>, vector<32x64xf32> -> vector<32x64xf32>
    %c1_532 = arith.constant 1 : index
    %c0_533 = arith.constant 0 : index
    %c0_534 = arith.constant 0 : index
    %1092 = vector.load %arg8[%c1_532, %c0_533, %c0_534] : memref<4x64x48xf32, #tpu.memory_space<vmem>>, vector<1x64x48xf32>
    %1093 = vector.shape_cast %1092 : vector<1x64x48xf32> to vector<64x48xf32>
    %cst_535 = arith.constant dense<0.000000e+00> : vector<32x48xf32>
    %1094 = tpu.matmul %1091, %1093, %cst_535 {dimension_numbers = #tpu.dot_dimension_numbers<[1], [0], [0], [1], [0, 0, 1, 1], [], []>} : vector<32x64xf32>, vector<64x48xf32>, vector<32x48xf32> -> vector<32x48xf32>
    %1095 = arith.addf %1068, %1094 : vector<32x48xf32>
    %1096 = tpu.iota {dimensions = array<i32: 0>} : vector<32x16xi32>
    %1097 = tpu.iota {dimensions = array<i32: 1>} : vector<32x16xi32>
    %c4_i32_536 = arith.constant 4 : i32
    %1098 = vector.broadcast %c4_i32_536 : i32 to vector<32x16xi32>
    %1099 = arith.shrsi %1096, %1098 : vector<32x16xi32>
    %c15_i32_537 = arith.constant 15 : i32
    %1100 = vector.broadcast %c15_i32_537 : i32 to vector<32x16xi32>
    %1101 = arith.andi %1096, %1100 : vector<32x16xi32>
    %c3_i32_538 = arith.constant 3 : i32
    %1102 = vector.broadcast %c3_i32_538 : i32 to vector<32x16xi32>
    %1103 = arith.shrsi %1097, %1102 : vector<32x16xi32>
    %c7_i32_539 = arith.constant 7 : i32
    %1104 = vector.broadcast %c7_i32_539 : i32 to vector<32x16xi32>
    %1105 = arith.andi %1097, %1104 : vector<32x16xi32>
    %c2_i32_540 = arith.constant 2 : i32
    %1106 = vector.broadcast %c2_i32_540 : i32 to vector<32x16xi32>
    %1107 = arith.muli %1106, %1105 : vector<32x16xi32>
    %c1_i32_541 = arith.constant 1 : i32
    %1108 = vector.broadcast %c1_i32_541 : i32 to vector<32x16xi32>
    %1109 = arith.addi %1101, %1108 : vector<32x16xi32>
    %c2_i32_542 = arith.constant 2 : i32
    %1110 = vector.broadcast %c2_i32_542 : i32 to vector<32x16xi32>
    %1111 = arith.subi %1109, %1110 : vector<32x16xi32>
    %1112 = arith.cmpi eq, %1107, %1111 : vector<32x16xi32>
    %1113 = arith.cmpi eq, %1099, %1103 : vector<32x16xi32>
    %1114 = arith.andi %1113, %1112 : vector<32x16xi1>
    %cst_543 = arith.constant 1.000000e+00 : f32
    %cst_544 = arith.constant 0.000000e+00 : f32
    %1115 = vector.broadcast %cst_543 : f32 to vector<32x16xf32>
    %1116 = vector.broadcast %cst_544 : f32 to vector<32x16xf32>
    %1117 = arith.select %1114, %1115, %1116 : vector<32x16xi1>, vector<32x16xf32>
    %cst_545 = arith.constant dense<0.000000e+00> : vector<32x64xf32>
    %1118 = tpu.matmul %1117, %1042, %cst_545 {dimension_numbers = #tpu.dot_dimension_numbers<[1], [0], [0], [1], [0, 0, 1, 1], [], []>} : vector<32x16xf32>, vector<16x64xf32>, vector<32x64xf32> -> vector<32x64xf32>
    %c2_546 = arith.constant 2 : index
    %c0_547 = arith.constant 0 : index
    %c0_548 = arith.constant 0 : index
    %1119 = vector.load %arg8[%c2_546, %c0_547, %c0_548] : memref<4x64x48xf32, #tpu.memory_space<vmem>>, vector<1x64x48xf32>
    %1120 = vector.shape_cast %1119 : vector<1x64x48xf32> to vector<64x48xf32>
    %cst_549 = arith.constant dense<0.000000e+00> : vector<32x48xf32>
    %1121 = tpu.matmul %1118, %1120, %cst_549 {dimension_numbers = #tpu.dot_dimension_numbers<[1], [0], [0], [1], [0, 0, 1, 1], [], []>} : vector<32x64xf32>, vector<64x48xf32>, vector<32x48xf32> -> vector<32x48xf32>
    %1122 = arith.addf %1095, %1121 : vector<32x48xf32>
    %1123 = tpu.iota {dimensions = array<i32: 0>} : vector<32x16xi32>
    %1124 = tpu.iota {dimensions = array<i32: 1>} : vector<32x16xi32>
    %c4_i32_550 = arith.constant 4 : i32
    %1125 = vector.broadcast %c4_i32_550 : i32 to vector<32x16xi32>
    %1126 = arith.shrsi %1123, %1125 : vector<32x16xi32>
    %c15_i32_551 = arith.constant 15 : i32
    %1127 = vector.broadcast %c15_i32_551 : i32 to vector<32x16xi32>
    %1128 = arith.andi %1123, %1127 : vector<32x16xi32>
    %c3_i32_552 = arith.constant 3 : i32
    %1129 = vector.broadcast %c3_i32_552 : i32 to vector<32x16xi32>
    %1130 = arith.shrsi %1124, %1129 : vector<32x16xi32>
    %c7_i32_553 = arith.constant 7 : i32
    %1131 = vector.broadcast %c7_i32_553 : i32 to vector<32x16xi32>
    %1132 = arith.andi %1124, %1131 : vector<32x16xi32>
    %c2_i32_554 = arith.constant 2 : i32
    %1133 = vector.broadcast %c2_i32_554 : i32 to vector<32x16xi32>
    %1134 = arith.muli %1133, %1132 : vector<32x16xi32>
    %c1_i32_555 = arith.constant 1 : i32
    %1135 = vector.broadcast %c1_i32_555 : i32 to vector<32x16xi32>
    %1136 = arith.addi %1128, %1135 : vector<32x16xi32>
    %c3_i32_556 = arith.constant 3 : i32
    %1137 = vector.broadcast %c3_i32_556 : i32 to vector<32x16xi32>
    %1138 = arith.subi %1136, %1137 : vector<32x16xi32>
    %1139 = arith.cmpi eq, %1134, %1138 : vector<32x16xi32>
    %1140 = arith.cmpi eq, %1126, %1130 : vector<32x16xi32>
    %1141 = arith.andi %1140, %1139 : vector<32x16xi1>
    %cst_557 = arith.constant 1.000000e+00 : f32
    %cst_558 = arith.constant 0.000000e+00 : f32
    %1142 = vector.broadcast %cst_557 : f32 to vector<32x16xf32>
    %1143 = vector.broadcast %cst_558 : f32 to vector<32x16xf32>
    %1144 = arith.select %1141, %1142, %1143 : vector<32x16xi1>, vector<32x16xf32>
    %cst_559 = arith.constant dense<0.000000e+00> : vector<32x64xf32>
    %1145 = tpu.matmul %1144, %1042, %cst_559 {dimension_numbers = #tpu.dot_dimension_numbers<[1], [0], [0], [1], [0, 0, 1, 1], [], []>} : vector<32x16xf32>, vector<16x64xf32>, vector<32x64xf32> -> vector<32x64xf32>
    %c3_560 = arith.constant 3 : index
    %c0_561 = arith.constant 0 : index
    %c0_562 = arith.constant 0 : index
    %1146 = vector.load %arg8[%c3_560, %c0_561, %c0_562] : memref<4x64x48xf32, #tpu.memory_space<vmem>>, vector<1x64x48xf32>
    %1147 = vector.shape_cast %1146 : vector<1x64x48xf32> to vector<64x48xf32>
    %cst_563 = arith.constant dense<0.000000e+00> : vector<32x48xf32>
    %1148 = tpu.matmul %1145, %1147, %cst_563 {dimension_numbers = #tpu.dot_dimension_numbers<[1], [0], [0], [1], [0, 0, 1, 1], [], []>} : vector<32x64xf32>, vector<64x48xf32>, vector<32x48xf32> -> vector<32x48xf32>
    %1149 = arith.addf %1122, %1148 : vector<32x48xf32>
    %c0_564 = arith.constant 0 : index
    %c0_565 = arith.constant 0 : index
    %1150 = vector.load %arg21[%c0_564, %c0_565] : memref<32x48xf32, #tpu.memory_space<vmem>>, vector<32x48xf32>
    tpu.vector_store %arg21[%c0_564, %c0_565], %1149 {strides = array<i32>} : memref<32x48xf32, #tpu.memory_space<vmem>>, vector<32x48xf32>,
    return
  }
}

</mosaic_0001>

<llo_original>
// kernel: netD_forward.1
$region0: #{netD_forward.1}
  #allocation0 [shape = 'u32[]', space=smem, size = 0x4, offset = 0x4, fixed_abs, tag = 'smem constant byte address 0x4 - core index']
  #allocation1 [shape = 'u32[144,128]{1,0:T(1,128)}', space=vmem, size = 0x12000, scoped, tag = 'internal scratch']
  %s0 = inlined_call_operand.vmem [shape: f32[32,48], index: 0, kind: input, shape index: {}]
  %s1 = inlined_call_operand.vmem [shape: f32[4,48,64], index: 1, kind: input, shape index: {}]
  %s2 = inlined_call_operand.vmem [shape: f32[4,64,64], index: 2, kind: input, shape index: {}]
  %s3 = inlined_call_operand.vmem [shape: f32[4,64,64], index: 3, kind: input, shape index: {}]
  %s4 = inlined_call_operand.vmem [shape: f32[4,64,64], index: 4, kind: input, shape index: {}]
  %s5 = inlined_call_operand.vmem [shape: f32[4,64,64], index: 5, kind: input, shape index: {}]
  %s6 = inlined_call_operand.vmem [shape: f32[4,64,64], index: 6, kind: input, shape index: {}]
  %s7 = inlined_call_operand.vmem [shape: f32[4,64,64], index: 7, kind: input, shape index: {}]
  %s8 = inlined_call_operand.vmem [shape: f32[4,64,48], index: 8, kind: input, shape index: {}]
  %s9 = inlined_call_operand.vmem [shape: f32[1,16], index: 9, kind: input, shape index: {}]
  %s10 = inlined_call_operand.vmem [shape: f32[1,16], index: 10, kind: input, shape index: {}]
  %s11 = inlined_call_operand.vmem [shape: f32[1,32], index: 11, kind: input, shape index: {}]
  %s12 = inlined_call_operand.vmem [shape: f32[1,32], index: 12, kind: input, shape index: {}]
  %s13 = inlined_call_operand.vmem [shape: f32[1,64], index: 13, kind: input, shape index: {}]
  %s14 = inlined_call_operand.vmem [shape: f32[1,64], index: 14, kind: input, shape index: {}]
  %s15 = inlined_call_operand.vmem [shape: f32[1,32], index: 15, kind: input, shape index: {}]
  %s16 = inlined_call_operand.vmem [shape: f32[1,32], index: 16, kind: input, shape index: {}]
  %s17 = inlined_call_operand.vmem [shape: f32[1,16], index: 17, kind: input, shape index: {}]
  %s18 = inlined_call_operand.vmem [shape: f32[1,16], index: 18, kind: input, shape index: {}]
  %s19 = inlined_call_operand.vmem [shape: f32[1,8], index: 19, kind: input, shape index: {}]
  %s20 = inlined_call_operand.vmem [shape: f32[1,8], index: 20, kind: input, shape index: {}]
  %s21 = inlined_call_operand.vmem [shape: f32[32,48], index: 21, kind: output, shape index: {}]
  %s22 = sld [smem:[#allocation0]]
  $region94: #{netD_forward.1} parent=0
    _
  %s24 = ssub.s32 1, %s22
  %s25 = scalar_select 0, %s24, %s22
  // Predicated region
  $region2: #{netD_forward.1} parent=0 // pred_check
    _
  $region3: #{netD_forward.1} parent=0 // pred_check_branch
    %27 = sbr.rel (0) target = $region5
  $region4: #{netD_forward.1} parent=0 // pred_region
    _
  $region5: #{netD_forward.1} parent=0 // pred_fallthru
    _
  // Predicated region
  $region6: #{netD_forward.1} parent=0 // pred_check
    _
  $region7: #{netD_forward.1} parent=0 // pred_check_branch
    %29 = sbr.rel (0) target = $region9
  $region8: #{netD_forward.1} parent=0 // pred_region
    _
  $region9: #{netD_forward.1} parent=0 // pred_fallthru
    _
  // Predicated region
  $region10: #{netD_forward.1} parent=0 // pred_check
    _
  $region11: #{netD_forward.1} parent=0 // pred_check_branch
    %31 = sbr.rel (0) target = $region13
  $region12: #{netD_forward.1} parent=0 // pred_region
    _
  $region13: #{netD_forward.1} parent=0 // pred_fallthru
    _
  // Predicated region
  $region14: #{netD_forward.1} parent=0 // pred_check
    _
  $region15: #{netD_forward.1} parent=0 // pred_check_branch
    %33 = sbr.rel (0) target = $region17
  $region16: #{netD_forward.1} parent=0 // pred_region
    _
  $region17: #{netD_forward.1} parent=0 // pred_fallthru
    _
  // Predicated region
  $region18: #{netD_forward.1} parent=0 // pred_check
    _
  $region19: #{netD_forward.1} parent=0 // pred_check_branch
    %35 = sbr.rel (0) target = $region21
  $region20: #{netD_forward.1} parent=0 // pred_region
    _
  $region21: #{netD_forward.1} parent=0 // pred_fallthru
    _
  // Predicated region
  $region22: #{netD_forward.1} parent=0 // pred_check
    _
  $region23: #{netD_forward.1} parent=0 // pred_check_branch
    %37 = sbr.rel (0) target = $region25
  $region24: #{netD_forward.1} parent=0 // pred_region
    _
  $region25: #{netD_forward.1} parent=0 // pred_fallthru
    _
  // Predicated region
  $region26: #{netD_forward.1} parent=0 // pred_check
    _
  $region27: #{netD_forward.1} parent=0 // pred_check_branch
    %39 = sbr.rel (0) target = $region29
  $region28: #{netD_forward.1} parent=0 // pred_region
    _
  $region29: #{netD_forward.1} parent=0 // pred_fallthru
    _
  // Predicated region
  $region30: #{netD_forward.1} parent=0 // pred_check
    _
  $region31: #{netD_forward.1} parent=0 // pred_check_branch
    %41 = sbr.rel (0) target = $region33
  $region32: #{netD_forward.1} parent=0 // pred_region
    _
  $region33: #{netD_forward.1} parent=0 // pred_fallthru
    _
  // Predicated region
  $region34: #{netD_forward.1} parent=0 // pred_check
    _
  $region35: #{netD_forward.1} parent=0 // pred_check_branch
    %43 = sbr.rel (0) target = $region37
  $region36: #{netD_forward.1} parent=0 // pred_region
    _
  $region37: #{netD_forward.1} parent=0 // pred_fallthru
    _
  // Predicated region
  $region38: #{netD_forward.1} parent=0 // pred_check
    _
  $region39: #{netD_forward.1} parent=0 // pred_check_branch
    %45 = sbr.rel (0) target = $region41
  $region40: #{netD_forward.1} parent=0 // pred_region
    _
  $region41: #{netD_forward.1} parent=0 // pred_fallthru
    _
  // Predicated region
  $region42: #{netD_forward.1} parent=0 // pred_check
    _
  $region43: #{netD_forward.1} parent=0 // pred_check_branch
    %47 = sbr.rel (0) target = $region45
  $region44: #{netD_forward.1} parent=0 // pred_region
    _
  $region45: #{netD_forward.1} parent=0 // pred_fallthru
    _
  // Predicated region
  $region46: #{netD_forward.1} parent=0 // pred_check
    _
  $region47: #{netD_forward.1} parent=0 // pred_check_branch
    %49 = sbr.rel (0) target = $region49
  $region48: #{netD_forward.1} parent=0 // pred_region
    _
  $region49: #{netD_forward.1} parent=0 // pred_fallthru
    _
  // Predicated region
  $region50: #{netD_forward.1} parent=0 // pred_check
    _
  $region51: #{netD_forward.1} parent=0 // pred_check_branch
    %51 = sbr.rel (0) target = $region53
  $region52: #{netD_forward.1} parent=0 // pred_region
    _
  $region53: #{netD_forward.1} parent=0 // pred_fallthru
    _
  // Predicated region
  $region54: #{netD_forward.1} parent=0 // pred_check
    _
  $region55: #{netD_forward.1} parent=0 // pred_check_branch
    %53 = sbr.rel (0) target = $region57
  $region56: #{netD_forward.1} parent=0 // pred_region
    _
  $region57: #{netD_forward.1} parent=0 // pred_fallthru
    _
  // Predicated region
  $region58: #{netD_forward.1} parent=0 // pred_check
    _
  $region59: #{netD_forward.1} parent=0 // pred_check_branch
    %55 = sbr.rel (0) target = $region61
  $region60: #{netD_forward.1} parent=0 // pred_region
    _
  $region61: #{netD_forward.1} parent=0 // pred_fallthru
    _
  // Predicated region
  $region62: #{netD_forward.1} parent=0 // pred_check
    _
  $region63: #{netD_forward.1} parent=0 // pred_check_branch
    %57 = sbr.rel (0) target = $region65
  $region64: #{netD_forward.1} parent=0 // pred_region
    _
  $region65: #{netD_forward.1} parent=0 // pred_fallthru
    _
  // Predicated region
  $region66: #{netD_forward.1} parent=0 // pred_check
    _
  $region67: #{netD_forward.1} parent=0 // pred_check_branch
    %59 = sbr.rel (0) target = $region69
  $region68: #{netD_forward.1} parent=0 // pred_region
    _
  $region69: #{netD_forward.1} parent=0 // pred_fallthru
    _
  // Predicated region
  $region70: #{netD_forward.1} parent=0 // pred_check
    _
  $region71: #{netD_forward.1} parent=0 // pred_check_branch
    %61 = sbr.rel (0) target = $region73
  $region72: #{netD_forward.1} parent=0 // pred_region
    _
  $region73: #{netD_forward.1} parent=0 // pred_fallthru
    _
  // Predicated region
  $region74: #{netD_forward.1} parent=0 // pred_check
    _
  $region75: #{netD_forward.1} parent=0 // pred_check_branch
    %63 = sbr.rel (0) target = $region77
  $region76: #{netD_forward.1} parent=0 // pred_region
    _
  $region77: #{netD_forward.1} parent=0 // pred_fallthru
    _
  // Predicated region
  $region78: #{netD_forward.1} parent=0 // pred_check
    _
  $region79: #{netD_forward.1} parent=0 // pred_check_branch
    %65 = sbr.rel (0) target = $region81
  $region80: #{netD_forward.1} parent=0 // pred_region
    _
  $region81: #{netD_forward.1} parent=0 // pred_fallthru
    _
  // Predicated region
  $region82: #{netD_forward.1} parent=0 // pred_check
    _
  $region83: #{netD_forward.1} parent=0 // pred_check_branch
    %67 = sbr.rel (0) target = $region85
  $region84: #{netD_forward.1} parent=0 // pred_region
    _
  $region85: #{netD_forward.1} parent=0 // pred_fallthru
    _
  %v68 = vld [vmem:[%s0] sm:$0xff]
  %v69 = vld [vmem:[%s0 + $0x8] sm:$0xff]
  %v70 = vld [vmem:[%s0 + $0x10] sm:$0xff]
  %v71 = vld [vmem:[%s0 + $0x18] sm:$0xff]
  %v72 = vlaneseq
  %v73 = vshrl.u32 %v72, 7
  %v74 = vadd.s32 %v73, 8
  %v75 = vlaneseq
  %v76 = vand.u32 %v75, 127
  %v77 = vshra.s32 %v73, 3
  %v78 = vshra.s32 %v74, 3
  %v79 = vand.u32 %v73, 7
  %v80 = vand.u32 %v74, 7
  %v81 = vshra.s32 %v76, 4
  %v82 = vand.u32 %v76, 15
  %v83 = vmul.u32 %v79, 2
  %v84 = vmul.u32 %v80, 2
  %v85 = vsub.s32 %v83, 1
  %v86 = vsub.s32 %v84, 1
  %vm87 = vcmp.eq.s32.totalorder %v82, %v85
  %vm88 = vcmp.eq.s32.totalorder %v82, %v86
  %vm89 = vcmp.eq.s32.totalorder %v77, %v81
  %vm90 = vcmp.eq.s32.totalorder %v78, %v81
  %vm91 = vmand %vm89, %vm87
  %vm92 = vmand %vm90, %vm88
  %v93 = vsel %vm91, 1.0, 0.0
  %v94 = vsel %vm92, 1.0, 0.0
  %vm95 = vcmask 261120
  %v97 = vsel %vm95, %v93, 0
  %v100 = vsel %vm95, %v94, 0
  %102 = vmatprep.subr.mxu0 0.0
  %103 = vmatpush1.msra.mxu0 %v68
  %104 = vmatprep.subr.mxu0 0.0
  %105 = vmatpush1.msra.mxu0 %v69
  %106 = vmatprep.subr.mxu0 0.0
  %107 = vmatpush1.msra.mxu0 %v70
  %108 = vmatprep.subr.mxu0 0.0
  %109 = vmatpush1.msra.mxu0 %v71
  %110 = vmatprep.subr.mxu0 0.0
  %111 = vmatpush1.msra.mxu0 0.0
  %112 = vmatprep.subr.mxu0 0.0
  %113 = vmatpush1.msra.mxu0 0.0
  %114 = vmatprep.subr.mxu0 0.0
  %115 = vmatpush1.msra.mxu0 0.0
  %116 = vmatprep.subr.mxu0 0.0
  %117 = vmatpush1.msra.mxu0 0.0
  %118 = vmatprep.subr.mxu0 0.0
  %119 = vmatpush1.msra.mxu0 0.0
  %120 = vmatprep.subr.mxu0 0.0
  %121 = vmatpush1.msra.mxu0 0.0
  %122 = vmatprep.subr.mxu0 0.0
  %123 = vmatpush1.msra.mxu0 0.0
  %124 = vmatprep.subr.mxu0 0.0
  %125 = vmatpush1.msra.mxu0 0.0
  %126 = vmatprep.subr.mxu0 0.0
  %127 = vmatpush1.msra.mxu0 0.0
  %128 = vmatprep.subr.mxu0 0.0
  %129 = vmatpush1.msra.mxu0 0.0
  %130 = vmatprep.subr.mxu0 0.0
  %131 = vmatpush1.msra.mxu0 0.0
  %132 = vmatprep.subr.mxu0 0.0
  %133 = vmatpush1.msra.mxu0 0.0
  %134 = vmatprep.subr.mxu0 0.0
  %135 = vmatpush1.msra.mxu0 0.0
  %136 = vmatprep.subr.mxu0 0.0
  %137 = vmatpush1.msra.mxu0 0.0
  %138 = vmatprep.subr.mxu0 0.0
  %139 = vmatpush1.msra.mxu0 0.0
  %140 = vmatprep.subr.mxu0 0.0
  %141 = vmatpush1.msra.mxu0 0.0
  %142 = vmatprep.subr.mxu0 0.0
  %143 = vmatpush1.msra.mxu0 0.0
  %144 = vmatprep.subr.mxu0 0.0
  %145 = vmatpush1.msra.mxu0 0.0
  %146 = vmatprep.subr.mxu0 0.0
  %147 = vmatpush1.msra.mxu0 0.0
  %148 = vmatprep.subr.mxu0 0.0
  %149 = vmatpush1.msra.mxu0 0.0
  %150 = vmatprep.subr.mxu0 0.0
  %151 = vmatpush1.msra.mxu0 0.0
  %152 = vmatprep.subr.mxu0 0.0
  %153 = vmatpush1.msra.mxu0 0.0
  %154 = vmatprep.subr.mxu0 0.0
  %155 = vmatpush1.msra.mxu0 0.0
  %156 = vmatprep.subr.mxu0 0.0
  %157 = vmatpush1.msra.mxu0 0.0
  %158 = vmatprep.subr.mxu0 0.0
  %159 = vmatpush1.msra.mxu0 0.0
  %160 = vmatprep.subr.mxu0 0.0
  %161 = vmatpush1.msra.mxu0 0.0
  %162 = vmatprep.subr.mxu0 0.0
  %163 = vmatpush1.msra.mxu0 0.0
  %164 = vmatprep.subr.mxu0 0.0
  %165 = vmatpush1.msra.mxu0 0.0
  %166 = vmatprep.mubr.f32.mxu0 0.0
  %167 = vmatmul.mubr.f32.gmra.mrb[0].mxu0 %v97
  %v168 = vpop.f32.mrb[0].mxu0
  %v169 = vadd.f32 0.0, %v168
  %v170 = vpop.f32.mrb[0].mxu0
  %171 = vmatprep.mubr.f32.mxu0 0.0
  %172 = vmatmul.mubr.f32.gmra.mrb[0].mxu0 %v100
  %v173 = vpop.f32.mrb[0].mxu0
  %v174 = vadd.f32 0.0, %v173
  %v175 = vpop.f32.mrb[0].mxu0
  %176 = vdwg.mxu0
  %v177 = vld [vmem:[%s1] sm:$0xff]
  %v178 = vld [vmem:[%s1 + $0x8] sm:$0xff]
  %v179 = vld [vmem:[%s1 + $0x10] sm:$0xff]
  %v180 = vld [vmem:[%s1 + $0x18] sm:$0xff]
  %v181 = vld [vmem:[%s1 + $0x20] sm:$0xff]
  %v182 = vld [vmem:[%s1 + $0x28] sm:$0xff]
  %vm183 = vcmp.eq.s32.totalorder %v82, %v83
  %vm184 = vcmp.eq.s32.totalorder %v82, %v84
  %vm185 = vmand %vm89, %vm183
  %vm186 = vmand %vm90, %vm184
  %v187 = vsel %vm185, 1.0, 0.0
  %v188 = vsel %vm186, 1.0, 0.0
  %v190 = vsel %vm95, %v187, 0
  %v193 = vsel %vm95, %v188, 0
  %195 = vmatprep.subr.mxu0 0.0
  %196 = vmatpush1.msra.mxu0 %v68
  %197 = vmatprep.subr.mxu0 0.0
  %198 = vmatpush1.msra.mxu0 %v69
  %199 = vmatprep.subr.mxu0 0.0
  %200 = vmatpush1.msra.mxu0 %v70
  %201 = vmatprep.subr.mxu0 0.0
  %202 = vmatpush1.msra.mxu0 %v71
  %203 = vmatprep.subr.mxu0 0.0
  %204 = vmatpush1.msra.mxu0 0.0
  %205 = vmatprep.subr.mxu0 0.0
  %206 = vmatpush1.msra.mxu0 0.0
  %207 = vmatprep.subr.mxu0 0.0
  %208 = vmatpush1.msra.mxu0 0.0
  %209 = vmatprep.subr.mxu0 0.0
  %210 = vmatpush1.msra.mxu0 0.0
  %211 = vmatprep.subr.mxu0 0.0
  %212 = vmatpush1.msra.mxu0 0.0
  %213 = vmatprep.subr.mxu0 0.0
  %214 = vmatpush1.msra.mxu0 0.0
  %215 = vmatprep.subr.mxu0 0.0
  %216 = vmatpush1.msra.mxu0 0.0
  %217 = vmatprep.subr.mxu0 0.0
  %218 = vmatpush1.msra.mxu0 0.0
  %219 = vmatprep.subr.mxu0 0.0
  %220 = vmatpush1.msra.mxu0 0.0
  %221 = vmatprep.subr.mxu0 0.0
  %222 = vmatpush1.msra.mxu0 0.0
  %223 = vmatprep.subr.mxu0 0.0
  %224 = vmatpush1.msra.mxu0 0.0
  %225 = vmatprep.subr.mxu0 0.0
  %226 = vmatpush1.msra.mxu0 0.0
  %227 = vmatprep.subr.mxu0 0.0
  %228 = vmatpush1.msra.mxu0 0.0
  %229 = vmatprep.subr.mxu0 0.0
  %230 = vmatpush1.msra.mxu0 0.0
  %231 = vmatprep.subr.mxu0 0.0
  %232 = vmatpush1.msra.mxu0 0.0
  %233 = vmatprep.subr.mxu0 0.0
  %234 = vmatpush1.msra.mxu0 0.0
  %235 = vmatprep.subr.mxu0 0.0
  %236 = vmatpush1.msra.mxu0 0.0
  %237 = vmatprep.subr.mxu0 0.0
  %238 = vmatpush1.msra.mxu0 0.0
  %239 = vmatprep.subr.mxu0 0.0
  %240 = vmatpush1.msra.mxu0 0.0
  %241 = vmatprep.subr.mxu0 0.0
  %242 = vmatpush1.msra.mxu0 0.0
  %243 = vmatprep.subr.mxu0 0.0
  %244 = vmatpush1.msra.mxu0 0.0
  %245 = vmatprep.subr.mxu0 0.0
  %246 = vmatpush1.msra.mxu0 0.0
  %247 = vmatprep.subr.mxu0 0.0
  %248 = vmatpush1.msra.mxu0 0.0
  %249 = vmatprep.subr.mxu0 0.0
  %250 = vmatpush1.msra.mxu0 0.0
  %251 = vmatprep.subr.mxu0 0.0
  %252 = vmatpush1.msra.mxu0 0.0
  %253 = vmatprep.subr.mxu0 0.0
  %254 = vmatpush1.msra.mxu0 0.0
  %255 = vmatprep.subr.mxu0 0.0
  %256 = vmatpush1.msra.mxu0 0.0
  %257 = vmatprep.subr.mxu0 0.0
  %258 = vmatpush1.msra.mxu0 0.0
  %259 = vmatprep.mubr.f32.mxu0 0.0
  %260 = vmatmul.mubr.f32.gmra.mrb[0].mxu0 %v190
  %v261 = vpop.f32.mrb[0].mxu0
  %v262 = vadd.f32 0.0, %v261
  %v263 = vpop.f32.mrb[0].mxu0
  %264 = vmatprep.mubr.f32.mxu0 0.0
  %265 = vmatmul.mubr.f32.gmra.mrb[0].mxu0 %v193
  %v266 = vpop.f32.mrb[0].mxu0
  %v267 = vadd.f32 0.0, %v266
  %v268 = vpop.f32.mrb[0].mxu0
  %269 = vdwg.mxu0
  %s270 = scalar_lea.vmem %s1, 48
  %v271 = vld [vmem:[%s270] sm:$0xff]
  %v272 = vld [vmem:[%s270 + $0x8] sm:$0xff]
  %v273 = vld [vmem:[%s270 + $0x10] sm:$0xff]
  %v274 = vld [vmem:[%s270 + $0x18] sm:$0xff]
  %v275 = vld [vmem:[%s270 + $0x20] sm:$0xff]
  %v276 = vld [vmem:[%s270 + $0x28] sm:$0xff]
  %vm277 = vcmask 392192
  %v279 = vsel %vm277, %v262, 0
  %v282 = vsel %vm277, %v267, 0
  %284 = vmatprep.subr.mxu0 0.0
  %285 = vmatpush1.msra.mxu0 %v271
  %286 = vmatprep.subr.mxu0 0.0
  %287 = vmatpush1.msra.mxu0 %v272
  %288 = vmatprep.subr.mxu0 0.0
  %289 = vmatpush1.msra.mxu0 %v273
  %290 = vmatprep.subr.mxu0 0.0
  %291 = vmatpush1.msra.mxu0 %v274
  %292 = vmatprep.subr.mxu0 0.0
  %293 = vmatpush1.msra.mxu0 %v275
  %294 = vmatprep.subr.mxu0 0.0
  %295 = vmatpush1.msra.mxu0 %v276
  %296 = vmatprep.subr.mxu0 0.0
  %297 = vmatpush1.msra.mxu0 0.0
  %298 = vmatprep.subr.mxu0 0.0
  %299 = vmatpush1.msra.mxu0 0.0
  %300 = vmatprep.subr.mxu0 0.0
  %301 = vmatpush1.msra.mxu0 0.0
  %302 = vmatprep.subr.mxu0 0.0
  %303 = vmatpush1.msra.mxu0 0.0
  %304 = vmatprep.subr.mxu0 0.0
  %305 = vmatpush1.msra.mxu0 0.0
  %306 = vmatprep.subr.mxu0 0.0
  %307 = vmatpush1.msra.mxu0 0.0
  %308 = vmatprep.subr.mxu0 0.0
  %309 = vmatpush1.msra.mxu0 0.0
  %310 = vmatprep.subr.mxu0 0.0
  %311 = vmatpush1.msra.mxu0 0.0
  %312 = vmatprep.subr.mxu0 0.0
  %313 = vmatpush1.msra.mxu0 0.0
  %314 = vmatprep.subr.mxu0 0.0
  %315 = vmatpush1.msra.mxu0 0.0
  %316 = vmatprep.subr.mxu0 0.0
  %317 = vmatpush1.msra.mxu0 0.0
  %318 = vmatprep.subr.mxu0 0.0
  %319 = vmatpush1.msra.mxu0 0.0
  %320 = vmatprep.subr.mxu0 0.0
  %321 = vmatpush1.msra.mxu0 0.0
  %322 = vmatprep.subr.mxu0 0.0
  %323 = vmatpush1.msra.mxu0 0.0
  %324 = vmatprep.subr.mxu0 0.0
  %325 = vmatpush1.msra.mxu0 0.0
  %326 = vmatprep.subr.mxu0 0.0
  %327 = vmatpush1.msra.mxu0 0.0
  %328 = vmatprep.subr.mxu0 0.0
  %329 = vmatpush1.msra.mxu0 0.0
  %330 = vmatprep.subr.mxu0 0.0
  %331 = vmatpush1.msra.mxu0 0.0
  %332 = vmatprep.subr.mxu0 0.0
  %333 = vmatpush1.msra.mxu0 0.0
  %334 = vmatprep.subr.mxu0 0.0
  %335 = vmatpush1.msra.mxu0 0.0
  %336 = vmatprep.subr.mxu0 0.0
  %337 = vmatpush1.msra.mxu0 0.0
  %338 = vmatprep.subr.mxu0 0.0
  %339 = vmatpush1.msra.mxu0 0.0
  %340 = vmatprep.subr.mxu0 0.0
  %341 = vmatpush1.msra.mxu0 0.0
  %342 = vmatprep.subr.mxu0 0.0
  %343 = vmatpush1.msra.mxu0 0.0
  %344 = vmatprep.subr.mxu0 0.0
  %345 = vmatpush1.msra.mxu0 0.0
  %346 = vmatprep.subr.mxu0 0.0
  %347 = vmatpush1.msra.mxu0 0.0
  %348 = vmatprep.mubr.f32.mxu0 0.0
  %349 = vmatmul.mubr.f32.gmra.mrb[0].mxu0 %v279
  %v350 = vpop.f32.mrb[0].mxu0
  %v351 = vadd.f32 0.0, %v350
  %v352 = vpop.f32.mrb[0].mxu0
  %353 = vmatprep.mubr.f32.mxu0 0.0
  %354 = vmatmul.mubr.f32.gmra.mrb[0].mxu0 %v282
  %v355 = vpop.f32.mrb[0].mxu0
  %v356 = vadd.f32 0.0, %v355
  %v357 = vpop.f32.mrb[0].mxu0
  %358 = vdwg.mxu0
  %v360 = vsel %vm277, %v169, 0
  %v363 = vsel %vm277, %v174, 0
  %365 = vmatprep.subr.mxu0 0.0
  %366 = vmatpush1.msra.mxu0 %v177
  %367 = vmatprep.subr.mxu0 0.0
  %368 = vmatpush1.msra.mxu0 %v178
  %369 = vmatprep.subr.mxu0 0.0
  %370 = vmatpush1.msra.mxu0 %v179
  %371 = vmatprep.subr.mxu0 0.0
  %372 = vmatpush1.msra.mxu0 %v180
  %373 = vmatprep.subr.mxu0 0.0
  %374 = vmatpush1.msra.mxu0 %v181
  %375 = vmatprep.subr.mxu0 0.0
  %376 = vmatpush1.msra.mxu0 %v182
  %377 = vmatprep.subr.mxu0 0.0
  %378 = vmatpush1.msra.mxu0 0.0
  %379 = vmatprep.subr.mxu0 0.0
  %380 = vmatpush1.msra.mxu0 0.0
  %381 = vmatprep.subr.mxu0 0.0
  %382 = vmatpush1.msra.mxu0 0.0
  %383 = vmatprep.subr.mxu0 0.0
  %384 = vmatpush1.msra.mxu0 0.0
  %385 = vmatprep.subr.mxu0 0.0
  %386 = vmatpush1.msra.mxu0 0.0
  %387 = vmatprep.subr.mxu0 0.0
  %388 = vmatpush1.msra.mxu0 0.0
  %389 = vmatprep.subr.mxu0 0.0
  %390 = vmatpush1.msra.mxu0 0.0
  %391 = vmatprep.subr.mxu0 0.0
  %392 = vmatpush1.msra.mxu0 0.0
  %393 = vmatprep.subr.mxu0 0.0
  %394 = vmatpush1.msra.mxu0 0.0
  %395 = vmatprep.subr.mxu0 0.0
  %396 = vmatpush1.msra.mxu0 0.0
  %397 = vmatprep.subr.mxu0 0.0
  %398 = vmatpush1.msra.mxu0 0.0
  %399 = vmatprep.subr.mxu0 0.0
  %400 = vmatpush1.msra.mxu0 0.0
  %401 = vmatprep.subr.mxu0 0.0
  %402 = vmatpush1.msra.mxu0 0.0
  %403 = vmatprep.subr.mxu0 0.0
  %404 = vmatpush1.msra.mxu0 0.0
  %405 = vmatprep.subr.mxu0 0.0
  %406 = vmatpush1.msra.mxu0 0.0
  %407 = vmatprep.subr.mxu0 0.0
  %408 = vmatpush1.msra.mxu0 0.0
  %409 = vmatprep.subr.mxu0 0.0
  %410 = vmatpush1.msra.mxu0 0.0
  %411 = vmatprep.subr.mxu0 0.0
  %412 = vmatpush1.msra.mxu0 0.0
  %413 = vmatprep.subr.mxu0 0.0
  %414 = vmatpush1.msra.mxu0 0.0
  %415 = vmatprep.subr.mxu0 0.0
  %416 = vmatpush1.msra.mxu0 0.0
  %417 = vmatprep.subr.mxu0 0.0
  %418 = vmatpush1.msra.mxu0 0.0
  %419 = vmatprep.subr.mxu0 0.0
  %420 = vmatpush1.msra.mxu0 0.0
  %421 = vmatprep.subr.mxu0 0.0
  %422 = vmatpush1.msra.mxu0 0.0
  %423 = vmatprep.subr.mxu0 0.0
  %424 = vmatpush1.msra.mxu0 0.0
  %425 = vmatprep.subr.mxu0 0.0
  %426 = vmatpush1.msra.mxu0 0.0
  %427 = vmatprep.subr.mxu0 0.0
  %428 = vmatpush1.msra.mxu0 0.0
  %429 = vmatprep.mubr.f32.mxu0 0.0
  %430 = vmatmul.mubr.f32.gmra.mrb[0].mxu0 %v360
  %v431 = vpop.f32.mrb[0].mxu0
  %v432 = vadd.f32 %v351, %v431
  %v433 = vpop.f32.mrb[0].mxu0
  %434 = vmatprep.mubr.f32.mxu0 0.0
  %435 = vmatmul.mubr.f32.gmra.mrb[0].mxu0 %v363
  %v436 = vpop.f32.mrb[0].mxu0
  %v437 = vadd.f32 %v356, %v436
  %v438 = vpop.f32.mrb[0].mxu0
  %439 = vdwg.mxu0
  %v440 = vadd.s32 %v83, 2
  %v441 = vadd.s32 %v84, 2
  %v442 = vsub.s32 %v440, 1
  %v443 = vsub.s32 %v441, 1
  %vm444 = vcmp.eq.s32.totalorder %v82, %v442
  %vm445 = vcmp.eq.s32.totalorder %v82, %v443
  %vm446 = vmand %vm89, %vm444
  %vm447 = vmand %vm90, %vm445
  %v448 = vsel %vm446, 1.0, 0.0
  %v449 = vsel %vm447, 1.0, 0.0
  %v451 = vsel %vm95, %v448, 0
  %v454 = vsel %vm95, %v449, 0
  %456 = vmatprep.subr.mxu0 0.0
  %457 = vmatpush1.msra.mxu0 %v68
  %458 = vmatprep.subr.mxu0 0.0
  %459 = vmatpush1.msra.mxu0 %v69
  %460 = vmatprep.subr.mxu0 0.0
  %461 = vmatpush1.msra.mxu0 %v70
  %462 = vmatprep.subr.mxu0 0.0
  %463 = vmatpush1.msra.mxu0 %v71
  %464 = vmatprep.subr.mxu0 0.0
  %465 = vmatpush1.msra.mxu0 0.0
  %466 = vmatprep.subr.mxu0 0.0
  %467 = vmatpush1.msra.mxu0 0.0
  %468 = vmatprep.subr.mxu0 0.0
  %469 = vmatpush1.msra.mxu0 0.0
  %470 = vmatprep.subr.mxu0 0.0
  %471 = vmatpush1.msra.mxu0 0.0
  %472 = vmatprep.subr.mxu0 0.0
  %473 = vmatpush1.msra.mxu0 0.0
  %474 = vmatprep.subr.mxu0 0.0
  %475 = vmatpush1.msra.mxu0 0.0
  %476 = vmatprep.subr.mxu0 0.0
  %477 = vmatpush1.msra.mxu0 0.0
  %478 = vmatprep.subr.mxu0 0.0
  %479 = vmatpush1.msra.mxu0 0.0
  %480 = vmatprep.subr.mxu0 0.0
  %481 = vmatpush1.msra.mxu0 0.0
  %482 = vmatprep.subr.mxu0 0.0
  %483 = vmatpush1.msra.mxu0 0.0
  %484 = vmatprep.subr.mxu0 0.0
  %485 = vmatpush1.msra.mxu0 0.0
  %486 = vmatprep.subr.mxu0 0.0
  %487 = vmatpush1.msra.mxu0 0.0
  %488 = vmatprep.subr.mxu0 0.0
  %489 = vmatpush1.msra.mxu0 0.0
  %490 = vmatprep.subr.mxu0 0.0
  %491 = vmatpush1.msra.mxu0 0.0
  %492 = vmatprep.subr.mxu0 0.0
  %493 = vmatpush1.msra.mxu0 0.0
  %494 = vmatprep.subr.mxu0 0.0
  %495 = vmatpush1.msra.mxu0 0.0
  %496 = vmatprep.subr.mxu0 0.0
  %497 = vmatpush1.msra.mxu0 0.0
  %498 = vmatprep.subr.mxu0 0.0
  %499 = vmatpush1.msra.mxu0 0.0
  %500 = vmatprep.subr.mxu0 0.0
  %501 = vmatpush1.msra.mxu0 0.0
  %502 = vmatprep.subr.mxu0 0.0
  %503 = vmatpush1.msra.mxu0 0.0
  %504 = vmatprep.subr.mxu0 0.0
  %505 = vmatpush1.msra.mxu0 0.0
  %506 = vmatprep.subr.mxu0 0.0
  %507 = vmatpush1.msra.mxu0 0.0
  %508 = vmatprep.subr.mxu0 0.0
  %509 = vmatpush1.msra.mxu0 0.0
  %510 = vmatprep.subr.mxu0 0.0
  %511 = vmatpush1.msra.mxu0 0.0
  %512 = vmatprep.subr.mxu0 0.0
  %513 = vmatpush1.msra.mxu0 0.0
  %514 = vmatprep.subr.mxu0 0.0
  %515 = vmatpush1.msra.mxu0 0.0
  %516 = vmatprep.subr.mxu0 0.0
  %517 = vmatpush1.msra.mxu0 0.0
  %518 = vmatprep.subr.mxu0 0.0
  %519 = vmatpush1.msra.mxu0 0.0
  %520 = vmatprep.mubr.f32.mxu0 0.0
  %521 = vmatmul.mubr.f32.gmra.mrb[0].mxu0 %v451
  %v522 = vpop.f32.mrb[0].mxu0
  %v523 = vadd.f32 0.0, %v522
  %v524 = vpop.f32.mrb[0].mxu0
  %525 = vmatprep.mubr.f32.mxu0 0.0
  %526 = vmatmul.mubr.f32.gmra.mrb[0].mxu0 %v454
  %v527 = vpop.f32.mrb[0].mxu0
  %v528 = vadd.f32 0.0, %v527
  %v529 = vpop.f32.mrb[0].mxu0
  %530 = vdwg.mxu0
  %s531 = scalar_lea.vmem %s1, 96
  %v532 = vld [vmem:[%s531] sm:$0xff]
  %v533 = vld [vmem:[%s531 + $0x8] sm:$0xff]
  %v534 = vld [vmem:[%s531 + $0x10] sm:$0xff]
  %v535 = vld [vmem:[%s531 + $0x18] sm:$0xff]
  %v536 = vld [vmem:[%s531 + $0x20] sm:$0xff]
  %v537 = vld [vmem:[%s531 + $0x28] sm:$0xff]
  %v539 = vsel %vm277, %v523, 0
  %v542 = vsel %vm277, %v528, 0
  %544 = vmatprep.subr.mxu0 0.0
  %545 = vmatpush1.msra.mxu0 %v532
  %546 = vmatprep.subr.mxu0 0.0
  %547 = vmatpush1.msra.mxu0 %v533
  %548 = vmatprep.subr.mxu0 0.0
  %549 = vmatpush1.msra.mxu0 %v534
  %550 = vmatprep.subr.mxu0 0.0
  %551 = vmatpush1.msra.mxu0 %v535
  %552 = vmatprep.subr.mxu0 0.0
  %553 = vmatpush1.msra.mxu0 %v536
  %554 = vmatprep.subr.mxu0 0.0
  %555 = vmatpush1.msra.mxu0 %v537
  %556 = vmatprep.subr.mxu0 0.0
  %557 = vmatpush1.msra.mxu0 0.0
  %558 = vmatprep.subr.mxu0 0.0
  %559 = vmatpush1.msra.mxu0 0.0
  %560 = vmatprep.subr.mxu0 0.0
  %561 = vmatpush1.msra.mxu0 0.0
  %562 = vmatprep.subr.mxu0 0.0
  %563 = vmatpush1.msra.mxu0 0.0
  %564 = vmatprep.subr.mxu0 0.0
  %565 = vmatpush1.msra.mxu0 0.0
  %566 = vmatprep.subr.mxu0 0.0
  %567 = vmatpush1.msra.mxu0 0.0
  %568 = vmatprep.subr.mxu0 0.0
  %569 = vmatpush1.msra.mxu0 0.0
  %570 = vmatprep.subr.mxu0 0.0
  %571 = vmatpush1.msra.mxu0 0.0
  %572 = vmatprep.subr.mxu0 0.0
  %573 = vmatpush1.msra.mxu0 0.0
  %574 = vmatprep.subr.mxu0 0.0
  %575 = vmatpush1.msra.mxu0 0.0
  %576 = vmatprep.subr.mxu0 0.0
  %577 = vmatpush1.msra.mxu0 0.0
  %578 = vmatprep.subr.mxu0 0.0
  %579 = vmatpush1.msra.mxu0 0.0
  %580 = vmatprep.subr.mxu0 0.0
  %581 = vmatpush1.msra.mxu0 0.0
  %582 = vmatprep.subr.mxu0 0.0
  %583 = vmatpush1.msra.mxu0 0.0
  %584 = vmatprep.subr.mxu0 0.0
  %585 = vmatpush1.msra.mxu0 0.0
  %586 = vmatprep.subr.mxu0 0.0
  %587 = vmatpush1.msra.mxu0 0.0
  %588 = vmatprep.subr.mxu0 0.0
  %589 = vmatpush1.msra.mxu0 0.0
  %590 = vmatprep.subr.mxu0 0.0
  %591 = vmatpush1.msra.mxu0 0.0
  %592 = vmatprep.subr.mxu0 0.0
  %593 = vmatpush1.msra.mxu0 0.0
  %594 = vmatprep.subr.mxu0 0.0
  %595 = vmatpush1.msra.mxu0 0.0
  %596 = vmatprep.subr.mxu0 0.0
  %597 = vmatpush1.msra.mxu0 0.0
  %598 = vmatprep.subr.mxu0 0.0
  %599 = vmatpush1.msra.mxu0 0.0
  %600 = vmatprep.subr.mxu0 0.0
  %601 = vmatpush1.msra.mxu0 0.0
  %602 = vmatprep.subr.mxu0 0.0
  %603 = vmatpush1.msra.mxu0 0.0
  %604 = vmatprep.subr.mxu0 0.0
  %605 = vmatpush1.msra.mxu0 0.0
  %606 = vmatprep.subr.mxu0 0.0
  %607 = vmatpush1.msra.mxu0 0.0
  %608 = vmatprep.mubr.f32.mxu0 0.0
  %609 = vmatmul.mubr.f32.gmra.mrb[0].mxu0 %v539
  %v610 = vpop.f32.mrb[0].mxu0
  %v611 = vadd.f32 0.0, %v610
  %v612 = vpop.f32.mrb[0].mxu0
  %613 = vmatprep.mubr.f32.mxu0 0.0
  %614 = vmatmul.mubr.f32.gmra.mrb[0].mxu0 %v542
  %v615 = vpop.f32.mrb[0].mxu0
  %v616 = vadd.f32 0.0, %v615
  %v617 = vpop.f32.mrb[0].mxu0
  %618 = vdwg.mxu0
  %v619 = vadd.f32 %v432, %v611
  %v620 = vadd.f32 %v437, %v616
  %v621 = vadd.s32 %v83, 3
  %v622 = vadd.s32 %v84, 3
  %v623 = vsub.s32 %v621, 1
  %v624 = vsub.s32 %v622, 1
  %vm625 = vcmp.eq.s32.totalorder %v82, %v623
  %vm626 = vcmp.eq.s32.totalorder %v82, %v624
  %vm627 = vmand %vm89, %vm625
  %vm628 = vmand %vm90, %vm626
  %v629 = vsel %vm627, 1.0, 0.0
  %v630 = vsel %vm628, 1.0, 0.0
  %v632 = vsel %vm95, %v629, 0
  %v635 = vsel %vm95, %v630, 0
  %637 = vmatprep.subr.mxu0 0.0
  %638 = vmatpush1.msra.mxu0 %v68
  %639 = vmatprep.subr.mxu0 0.0
  %640 = vmatpush1.msra.mxu0 %v69
  %641 = vmatprep.subr.mxu0 0.0
  %642 = vmatpush1.msra.mxu0 %v70
  %643 = vmatprep.subr.mxu0 0.0
  %644 = vmatpush1.msra.mxu0 %v71
  %645 = vmatprep.subr.mxu0 0.0
  %646 = vmatpush1.msra.mxu0 0.0
  %647 = vmatprep.subr.mxu0 0.0
  %648 = vmatpush1.msra.mxu0 0.0
  %649 = vmatprep.subr.mxu0 0.0
  %650 = vmatpush1.msra.mxu0 0.0
  %651 = vmatprep.subr.mxu0 0.0
  %652 = vmatpush1.msra.mxu0 0.0
  %653 = vmatprep.subr.mxu0 0.0
  %654 = vmatpush1.msra.mxu0 0.0
  %655 = vmatprep.subr.mxu0 0.0
  %656 = vmatpush1.msra.mxu0 0.0
  %657 = vmatprep.subr.mxu0 0.0
  %658 = vmatpush1.msra.mxu0 0.0
  %659 = vmatprep.subr.mxu0 0.0
  %660 = vmatpush1.msra.mxu0 0.0
  %661 = vmatprep.subr.mxu0 0.0
  %662 = vmatpush1.msra.mxu0 0.0
  %663 = vmatprep.subr.mxu0 0.0
  %664 = vmatpush1.msra.mxu0 0.0
  %665 = vmatprep.subr.mxu0 0.0
  %666 = vmatpush1.msra.mxu0 0.0
  %667 = vmatprep.subr.mxu0 0.0
  %668 = vmatpush1.msra.mxu0 0.0
  %669 = vmatprep.subr.mxu0 0.0
  %670 = vmatpush1.msra.mxu0 0.0
  %671 = vmatprep.subr.mxu0 0.0
  %672 = vmatpush1.msra.mxu0 0.0
  %673 = vmatprep.subr.mxu0 0.0
  %674 = vmatpush1.msra.mxu0 0.0
  %675 = vmatprep.subr.mxu0 0.0
  %676 = vmatpush1.msra.mxu0 0.0
  %677 = vmatprep.subr.mxu0 0.0
  %678 = vmatpush1.msra.mxu0 0.0
  %679 = vmatprep.subr.mxu0 0.0
  %680 = vmatpush1.msra.mxu0 0.0
  %681 = vmatprep.subr.mxu0 0.0
  %682 = vmatpush1.msra.mxu0 0.0
  %683 = vmatprep.subr.mxu0 0.0
  %684 = vmatpush1.msra.mxu0 0.0
  %685 = vmatprep.subr.mxu0 0.0
  %686 = vmatpush1.msra.mxu0 0.0
  %687 = vmatprep.subr.mxu0 0.0
  %688 = vmatpush1.msra.mxu0 0.0
  %689 = vmatprep.subr.mxu0 0.0
  %690 = vmatpush1.msra.mxu0 0.0
  %691 = vmatprep.subr.mxu0 0.0
  %692 = vmatpush1.msra.mxu0 0.0
  %693 = vmatprep.subr.mxu0 0.0
  %694 = vmatpush1.msra.mxu0 0.0
  %695 = vmatprep.subr.mxu0 0.0
  %696 = vmatpush1.msra.mxu0 0.0
  %697 = vmatprep.subr.mxu0 0.0
  %698 = vmatpush1.msra.mxu0 0.0
  %699 = vmatprep.subr.mxu0 0.0
  %700 = vmatpush1.msra.mxu0 0.0
  %701 = vmatprep.mubr.f32.mxu0 0.0
  %702 = vmatmul.mubr.f32.gmra.mrb[0].mxu0 %v632
  %v703 = vpop.f32.mrb[0].mxu0
  %v704 = vadd.f32 0.0, %v703
  %v705 = vpop.f32.mrb[0].mxu0
  %706 = vmatprep.mubr.f32.mxu0 0.0
  %707 = vmatmul.mubr.f32.gmra.mrb[0].mxu0 %v635
  %v708 = vpop.f32.mrb[0].mxu0
  %v709 = vadd.f32 0.0, %v708
  %v710 = vpop.f32.mrb[0].mxu0
  %711 = vdwg.mxu0
  %s712 = scalar_lea.vmem %s1, 144
  %v713 = vld [vmem:[%s712] sm:$0xff]
  %v714 = vld [vmem:[%s712 + $0x8] sm:$0xff]
  %v715 = vld [vmem:[%s712 + $0x10] sm:$0xff]
  %v716 = vld [vmem:[%s712 + $0x18] sm:$0xff]
  %v717 = vld [vmem:[%s712 + $0x20] sm:$0xff]
  %v718 = vld [vmem:[%s712 + $0x28] sm:$0xff]
  %v720 = vsel %vm277, %v704, 0
  %v723 = vsel %vm277, %v709, 0
  %725 = vmatprep.subr.mxu0 0.0
  %726 = vmatpush1.msra.mxu0 %v713
  %727 = vmatprep.subr.mxu0 0.0
  %728 = vmatpush1.msra.mxu0 %v714
  %729 = vmatprep.subr.mxu0 0.0
  %730 = vmatpush1.msra.mxu0 %v715
  %731 = vmatprep.subr.mxu0 0.0
  %732 = vmatpush1.msra.mxu0 %v716
  %733 = vmatprep.subr.mxu0 0.0
  %734 = vmatpush1.msra.mxu0 %v717
  %735 = vmatprep.subr.mxu0 0.0
  %736 = vmatpush1.msra.mxu0 %v718
  %737 = vmatprep.subr.mxu0 0.0
  %738 = vmatpush1.msra.mxu0 0.0
  %739 = vmatprep.subr.mxu0 0.0
  %740 = vmatpush1.msra.mxu0 0.0
  %741 = vmatprep.subr.mxu0 0.0
  %742 = vmatpush1.msra.mxu0 0.0
  %743 = vmatprep.subr.mxu0 0.0
  %744 = vmatpush1.msra.mxu0 0.0
  %745 = vmatprep.subr.mxu0 0.0
  %746 = vmatpush1.msra.mxu0 0.0
  %747 = vmatprep.subr.mxu0 0.0
  %748 = vmatpush1.msra.mxu0 0.0
  %749 = vmatprep.subr.mxu0 0.0
  %750 = vmatpush1.msra.mxu0 0.0
  %751 = vmatprep.subr.mxu0 0.0
  %752 = vmatpush1.msra.mxu0 0.0
  %753 = vmatprep.subr.mxu0 0.0
  %754 = vmatpush1.msra.mxu0 0.0
  %755 = vmatprep.subr.mxu0 0.0
  %756 = vmatpush1.msra.mxu0 0.0
  %757 = vmatprep.subr.mxu0 0.0
  %758 = vmatpush1.msra.mxu0 0.0
  %759 = vmatprep.subr.mxu0 0.0
  %760 = vmatpush1.msra.mxu0 0.0
  %761 = vmatprep.subr.mxu0 0.0
  %762 = vmatpush1.msra.mxu0 0.0
  %763 = vmatprep.subr.mxu0 0.0
  %764 = vmatpush1.msra.mxu0 0.0
  %765 = vmatprep.subr.mxu0 0.0
  %766 = vmatpush1.msra.mxu0 0.0
  %767 = vmatprep.subr.mxu0 0.0
  %768 = vmatpush1.msra.mxu0 0.0
  %769 = vmatprep.subr.mxu0 0.0
  %770 = vmatpush1.msra.mxu0 0.0
  %771 = vmatprep.subr.mxu0 0.0
  %772 = vmatpush1.msra.mxu0 0.0
  %773 = vmatprep.subr.mxu0 0.0
  %774 = vmatpush1.msra.mxu0 0.0
  %775 = vmatprep.subr.mxu0 0.0
  %776 = vmatpush1.msra.mxu0 0.0
  %777 = vmatprep.subr.mxu0 0.0
  %778 = vmatpush1.msra.mxu0 0.0
  %779 = vmatprep.subr.mxu0 0.0
  %780 = vmatpush1.msra.mxu0 0.0
  %781 = vmatprep.subr.mxu0 0.0
  %782 = vmatpush1.msra.mxu0 0.0
  %783 = vmatprep.subr.mxu0 0.0
  %784 = vmatpush1.msra.mxu0 0.0
  %785 = vmatprep.subr.mxu0 0.0
  %786 = vmatpush1.msra.mxu0 0.0
  %787 = vmatprep.subr.mxu0 0.0
  %788 = vmatpush1.msra.mxu0 0.0
  %789 = vmatprep.mubr.f32.mxu0 0.0
  %790 = vmatmul.mubr.f32.gmra.mrb[0].mxu0 %v720
  %v791 = vpop.f32.mrb[0].mxu0
  %v792 = vadd.f32 0.0, %v791
  %v793 = vpop.f32.mrb[0].mxu0
  %794 = vmatprep.mubr.f32.mxu0 0.0
  %795 = vmatmul.mubr.f32.gmra.mrb[0].mxu0 %v723
  %v796 = vpop.f32.mrb[0].mxu0
  %v797 = vadd.f32 0.0, %v796
  %v798 = vpop.f32.mrb[0].mxu0
  %799 = vdwg.mxu0
  %v800 = vadd.f32 %v619, %v792
  %v801 = vadd.f32 %v620, %v797
  %vm802 = vcmp.gt.f32.partialorder %v800, 0.0
  %vm803 = vcmp.gt.f32.partialorder %v801, 0.0
  %v804 = vmul.f32 %v800, 0.2
  %v805 = vmul.f32 %v801, 0.2
  %v806 = vsel %vm802, %v800, %v804
  %v807 = vsel %vm803, %v801, %v805
  %v808 = vshra.s32 %v73, 2
  %v809 = vand.u32 %v73, 3
  %v810 = vshra.s32 %v76, 3
  %v811 = vand.u32 %v76, 7
  %v812 = vmul.u32 %v809, 2
  %v813 = vsub.s32 %v812, 1
  %vm814 = vcmp.eq.s32.totalorder %v811, %v813
  %vm815 = vcmp.eq.s32.totalorder %v808, %v810
  %vm816 = vmand %vm815, %vm814
  %v817 = vsel %vm816, 1.0, 0.0
  %vm818 = vcmask 130048
  %v820 = vsel %vm818, %v817, 0
  %822 = vmatprep.subr.mxu0 0.0
  %823 = vmatpush1.msra.mxu0 %v806
  %824 = vmatprep.subr.mxu0 0.0
  %825 = vmatpush1.msra.mxu0 %v807
  %826 = vmatprep.subr.mxu0 0.0
  %827 = vmatpush1.msra.mxu0 0.0
  %828 = vmatprep.subr.mxu0 0.0
  %829 = vmatpush1.msra.mxu0 0.0
  %830 = vmatprep.subr.mxu0 0.0
  %831 = vmatpush1.msra.mxu0 0.0
  %832 = vmatprep.subr.mxu0 0.0
  %833 = vmatpush1.msra.mxu0 0.0
  %834 = vmatprep.subr.mxu0 0.0
  %835 = vmatpush1.msra.mxu0 0.0
  %836 = vmatprep.subr.mxu0 0.0
  %837 = vmatpush1.msra.mxu0 0.0
  %838 = vmatprep.subr.mxu0 0.0
  %839 = vmatpush1.msra.mxu0 0.0
  %840 = vmatprep.subr.mxu0 0.0
  %841 = vmatpush1.msra.mxu0 0.0
  %842 = vmatprep.subr.mxu0 0.0
  %843 = vmatpush1.msra.mxu0 0.0
  %844 = vmatprep.subr.mxu0 0.0
  %845 = vmatpush1.msra.mxu0 0.0
  %846 = vmatprep.subr.mxu0 0.0
  %847 = vmatpush1.msra.mxu0 0.0
  %848 = vmatprep.subr.mxu0 0.0
  %849 = vmatpush1.msra.mxu0 0.0
  %850 = vmatprep.subr.mxu0 0.0
  %851 = vmatpush1.msra.mxu0 0.0
  %852 = vmatprep.subr.mxu0 0.0
  %853 = vmatpush1.msra.mxu0 0.0
  %854 = vmatprep.subr.mxu0 0.0
  %855 = vmatpush1.msra.mxu0 0.0
  %856 = vmatprep.subr.mxu0 0.0
  %857 = vmatpush1.msra.mxu0 0.0
  %858 = vmatprep.subr.mxu0 0.0
  %859 = vmatpush1.msra.mxu0 0.0
  %860 = vmatprep.subr.mxu0 0.0
  %861 = vmatpush1.msra.mxu0 0.0
  %862 = vmatprep.subr.mxu0 0.0
  %863 = vmatpush1.msra.mxu0 0.0
  %864 = vmatprep.subr.mxu0 0.0
  %865 = vmatpush1.msra.mxu0 0.0
  %866 = vmatprep.subr.mxu0 0.0
  %867 = vmatpush1.msra.mxu0 0.0
  %868 = vmatprep.subr.mxu0 0.0
  %869 = vmatpush1.msra.mxu0 0.0
  %870 = vmatprep.subr.mxu0 0.0
  %871 = vmatpush1.msra.mxu0 0.0
  %872 = vmatprep.subr.mxu0 0.0
  %873 = vmatpush1.msra.mxu0 0.0
  %874 = vmatprep.subr.mxu0 0.0
  %875 = vmatpush1.msra.mxu0 0.0
  %876 = vmatprep.subr.mxu0 0.0
  %877 = vmatpush1.msra.mxu0 0.0
  %878 = vmatprep.subr.mxu0 0.0
  %879 = vmatpush1.msra.mxu0 0.0
  %880 = vmatprep.subr.mxu0 0.0
  %881 = vmatpush1.msra.mxu0 0.0
  %882 = vmatprep.subr.mxu0 0.0
  %883 = vmatpush1.msra.mxu0 0.0
  %884 = vmatprep.subr.mxu0 0.0
  %885 = vmatpush1.msra.mxu0 0.0
  %886 = vmatprep.mubr.f32.mxu0 0.0
  %887 = vmatmul.mubr.f32.gmra.mrb[0].mxu0 %v820
  %v888 = vpop.f32.mrb[0].mxu0
  %v889 = vadd.f32 0.0, %v888
  %v890 = vpop.f32.mrb[0].mxu0
  %891 = vdwg.mxu0
  %v892 = vld [vmem:[%s2] sm:$0xff]
  %v893 = vld [vmem:[%s2 + $0x8] sm:$0xff]
  %v894 = vld [vmem:[%s2 + $0x10] sm:$0xff]
  %v895 = vld [vmem:[%s2 + $0x18] sm:$0xff]
  %v896 = vld [vmem:[%s2 + $0x20] sm:$0xff]
  %v897 = vld [vmem:[%s2 + $0x28] sm:$0xff]
  %v898 = vld [vmem:[%s2 + $0x30] sm:$0xff]
  %v899 = vld [vmem:[%s2 + $0x38] sm:$0xff]
  %vm900 = vcmp.eq.s32.totalorder %v811, %v812
  %vm901 = vmand %vm815, %vm900
  %v902 = vsel %vm901, 1.0, 0.0
  %v904 = vsel %vm818, %v902, 0
  %906 = vmatprep.subr.mxu0 0.0
  %907 = vmatpush1.msra.mxu0 %v806
  %908 = vmatprep.subr.mxu0 0.0
  %909 = vmatpush1.msra.mxu0 %v807
  %910 = vmatprep.subr.mxu0 0.0
  %911 = vmatpush1.msra.mxu0 0.0
  %912 = vmatprep.subr.mxu0 0.0
  %913 = vmatpush1.msra.mxu0 0.0
  %914 = vmatprep.subr.mxu0 0.0
  %915 = vmatpush1.msra.mxu0 0.0
  %916 = vmatprep.subr.mxu0 0.0
  %917 = vmatpush1.msra.mxu0 0.0
  %918 = vmatprep.subr.mxu0 0.0
  %919 = vmatpush1.msra.mxu0 0.0
  %920 = vmatprep.subr.mxu0 0.0
  %921 = vmatpush1.msra.mxu0 0.0
  %922 = vmatprep.subr.mxu0 0.0
  %923 = vmatpush1.msra.mxu0 0.0
  %924 = vmatprep.subr.mxu0 0.0
  %925 = vmatpush1.msra.mxu0 0.0
  %926 = vmatprep.subr.mxu0 0.0
  %927 = vmatpush1.msra.mxu0 0.0
  %928 = vmatprep.subr.mxu0 0.0
  %929 = vmatpush1.msra.mxu0 0.0
  %930 = vmatprep.subr.mxu0 0.0
  %931 = vmatpush1.msra.mxu0 0.0
  %932 = vmatprep.subr.mxu0 0.0
  %933 = vmatpush1.msra.mxu0 0.0
  %934 = vmatprep.subr.mxu0 0.0
  %935 = vmatpush1.msra.mxu0 0.0
  %936 = vmatprep.subr.mxu0 0.0
  %937 = vmatpush1.msra.mxu0 0.0
  %938 = vmatprep.subr.mxu0 0.0
  %939 = vmatpush1.msra.mxu0 0.0
  %940 = vmatprep.subr.mxu0 0.0
  %941 = vmatpush1.msra.mxu0 0.0
  %942 = vmatprep.subr.mxu0 0.0
  %943 = vmatpush1.msra.mxu0 0.0
  %944 = vmatprep.subr.mxu0 0.0
  %945 = vmatpush1.msra.mxu0 0.0
  %946 = vmatprep.subr.mxu0 0.0
  %947 = vmatpush1.msra.mxu0 0.0
  %948 = vmatprep.subr.mxu0 0.0
  %949 = vmatpush1.msra.mxu0 0.0
  %950 = vmatprep.subr.mxu0 0.0
  %951 = vmatpush1.msra.mxu0 0.0
  %952 = vmatprep.subr.mxu0 0.0
  %953 = vmatpush1.msra.mxu0 0.0
  %954 = vmatprep.subr.mxu0 0.0
  %955 = vmatpush1.msra.mxu0 0.0
  %956 = vmatprep.subr.mxu0 0.0
  %957 = vmatpush1.msra.mxu0 0.0
  %958 = vmatprep.subr.mxu0 0.0
  %959 = vmatpush1.msra.mxu0 0.0
  %960 = vmatprep.subr.mxu0 0.0
  %961 = vmatpush1.msra.mxu0 0.0
  %962 = vmatprep.subr.mxu0 0.0
  %963 = vmatpush1.msra.mxu0 0.0
  %964 = vmatprep.subr.mxu0 0.0
  %965 = vmatpush1.msra.mxu0 0.0
  %966 = vmatprep.subr.mxu0 0.0
  %967 = vmatpush1.msra.mxu0 0.0
  %968 = vmatprep.subr.mxu0 0.0
  %969 = vmatpush1.msra.mxu0 0.0
  %970 = vmatprep.mubr.f32.mxu0 0.0
  %971 = vmatmul.mubr.f32.gmra.mrb[0].mxu0 %v904
  %v972 = vpop.f32.mrb[0].mxu0
  %v973 = vadd.f32 0.0, %v972
  %v974 = vpop.f32.mrb[0].mxu0
  %975 = vdwg.mxu0
  %s976 = scalar_lea.vmem %s2, 64
  %v977 = vld [vmem:[%s976] sm:$0xff]
  %v978 = vld [vmem:[%s976 + $0x8] sm:$0xff]
  %v979 = vld [vmem:[%s976 + $0x10] sm:$0xff]
  %v980 = vld [vmem:[%s976 + $0x18] sm:$0xff]
  %v981 = vld [vmem:[%s976 + $0x20] sm:$0xff]
  %v982 = vld [vmem:[%s976 + $0x28] sm:$0xff]
  %v983 = vld [vmem:[%s976 + $0x30] sm:$0xff]
  %v984 = vld [vmem:[%s976 + $0x38] sm:$0xff]
  %vm985 = vcmask 523264
  %v987 = vsel %vm985, %v973, 0
  %989 = vmatprep.subr.mxu0 0.0
  %990 = vmatpush1.msra.mxu0 %v977
  %991 = vmatprep.subr.mxu0 0.0
  %992 = vmatpush1.msra.mxu0 %v978
  %993 = vmatprep.subr.mxu0 0.0
  %994 = vmatpush1.msra.mxu0 %v979
  %995 = vmatprep.subr.mxu0 0.0
  %996 = vmatpush1.msra.mxu0 %v980
  %997 = vmatprep.subr.mxu0 0.0
  %998 = vmatpush1.msra.mxu0 %v981
  %999 = vmatprep.subr.mxu0 0.0
  %1000 = vmatpush1.msra.mxu0 %v982
  %1001 = vmatprep.subr.mxu0 0.0
  %1002 = vmatpush1.msra.mxu0 %v983
  %1003 = vmatprep.subr.mxu0 0.0
  %1004 = vmatpush1.msra.mxu0 %v984
  %1005 = vmatprep.subr.mxu0 0.0
  %1006 = vmatpush1.msra.mxu0 0.0
  %1007 = vmatprep.subr.mxu0 0.0
  %1008 = vmatpush1.msra.mxu0 0.0
  %1009 = vmatprep.subr.mxu0 0.0
  %1010 = vmatpush1.msra.mxu0 0.0
  %1011 = vmatprep.subr.mxu0 0.0
  %1012 = vmatpush1.msra.mxu0 0.0
  %1013 = vmatprep.subr.mxu0 0.0
  %1014 = vmatpush1.msra.mxu0 0.0
  %1015 = vmatprep.subr.mxu0 0.0
  %1016 = vmatpush1.msra.mxu0 0.0
  %1017 = vmatprep.subr.mxu0 0.0
  %1018 = vmatpush1.msra.mxu0 0.0
  %1019 = vmatprep.subr.mxu0 0.0
  %1020 = vmatpush1.msra.mxu0 0.0
  %1021 = vmatprep.subr.mxu0 0.0
  %1022 = vmatpush1.msra.mxu0 0.0
  %1023 = vmatprep.subr.mxu0 0.0
  %1024 = vmatpush1.msra.mxu0 0.0
  %1025 = vmatprep.subr.mxu0 0.0
  %1026 = vmatpush1.msra.mxu0 0.0
  %1027 = vmatprep.subr.mxu0 0.0
  %1028 = vmatpush1.msra.mxu0 0.0
  %1029 = vmatprep.subr.mxu0 0.0
  %1030 = vmatpush1.msra.mxu0 0.0
  %1031 = vmatprep.subr.mxu0 0.0
  %1032 = vmatpush1.msra.mxu0 0.0
  %1033 = vmatprep.subr.mxu0 0.0
  %1034 = vmatpush1.msra.mxu0 0.0
  %1035 = vmatprep.subr.mxu0 0.0
  %1036 = vmatpush1.msra.mxu0 0.0
  %1037 = vmatprep.subr.mxu0 0.0
  %1038 = vmatpush1.msra.mxu0 0.0
  %1039 = vmatprep.subr.mxu0 0.0
  %1040 = vmatpush1.msra.mxu0 0.0
  %1041 = vmatprep.subr.mxu0 0.0
  %1042 = vmatpush1.msra.mxu0 0.0
  %1043 = vmatprep.subr.mxu0 0.0
  %1044 = vmatpush1.msra.mxu0 0.0
  %1045 = vmatprep.subr.mxu0 0.0
  %1046 = vmatpush1.msra.mxu0 0.0
  %1047 = vmatprep.subr.mxu0 0.0
  %1048 = vmatpush1.msra.mxu0 0.0
  %1049 = vmatprep.subr.mxu0 0.0
  %1050 = vmatpush1.msra.mxu0 0.0
  %1051 = vmatprep.subr.mxu0 0.0
  %1052 = vmatpush1.msra.mxu0 0.0
  %1053 = vmatprep.mubr.f32.mxu0 0.0
  %1054 = vmatmul.mubr.f32.gmra.mrb[0].mxu0 %v987
  %v1055 = vpop.f32.mrb[0].mxu0
  %v1056 = vadd.f32 0.0, %v1055
  %v1057 = vpop.f32.mrb[0].mxu0
  %1058 = vdwg.mxu0
  %v1060 = vsel %vm985, %v889, 0
  %1062 = vmatprep.subr.mxu0 0.0
  %1063 = vmatpush1.msra.mxu0 %v892
  %1064 = vmatprep.subr.mxu0 0.0
  %1065 = vmatpush1.msra.mxu0 %v893
  %1066 = vmatprep.subr.mxu0 0.0
  %1067 = vmatpush1.msra.mxu0 %v894
  %1068 = vmatprep.subr.mxu0 0.0
  %1069 = vmatpush1.msra.mxu0 %v895
  %1070 = vmatprep.subr.mxu0 0.0
  %1071 = vmatpush1.msra.mxu0 %v896
  %1072 = vmatprep.subr.mxu0 0.0
  %1073 = vmatpush1.msra.mxu0 %v897
  %1074 = vmatprep.subr.mxu0 0.0
  %1075 = vmatpush1.msra.mxu0 %v898
  %1076 = vmatprep.subr.mxu0 0.0
  %1077 = vmatpush1.msra.mxu0 %v899
  %1078 = vmatprep.subr.mxu0 0.0
  %1079 = vmatpush1.msra.mxu0 0.0
  %1080 = vmatprep.subr.mxu0 0.0
  %1081 = vmatpush1.msra.mxu0 0.0
  %1082 = vmatprep.subr.mxu0 0.0
  %1083 = vmatpush1.msra.mxu0 0.0
  %1084 = vmatprep.subr.mxu0 0.0
  %1085 = vmatpush1.msra.mxu0 0.0
  %1086 = vmatprep.subr.mxu0 0.0
  %1087 = vmatpush1.msra.mxu0 0.0
  %1088 = vmatprep.subr.mxu0 0.0
  %1089 = vmatpush1.msra.mxu0 0.0
  %1090 = vmatprep.subr.mxu0 0.0
  %1091 = vmatpush1.msra.mxu0 0.0
  %1092 = vmatprep.subr.mxu0 0.0
  %1093 = vmatpush1.msra.mxu0 0.0
  %1094 = vmatprep.subr.mxu0 0.0
  %1095 = vmatpush1.msra.mxu0 0.0
  %1096 = vmatprep.subr.mxu0 0.0
  %1097 = vmatpush1.msra.mxu0 0.0
  %1098 = vmatprep.subr.mxu0 0.0
  %1099 = vmatpush1.msra.mxu0 0.0
  %1100 = vmatprep.subr.mxu0 0.0
  %1101 = vmatpush1.msra.mxu0 0.0
  %1102 = vmatprep.subr.mxu0 0.0
  %1103 = vmatpush1.msra.mxu0 0.0
  %1104 = vmatprep.subr.mxu0 0.0
  %1105 = vmatpush1.msra.mxu0 0.0
  %1106 = vmatprep.subr.mxu0 0.0
  %1107 = vmatpush1.msra.mxu0 0.0
  %1108 = vmatprep.subr.mxu0 0.0
  %1109 = vmatpush1.msra.mxu0 0.0
  %1110 = vmatprep.subr.mxu0 0.0
  %1111 = vmatpush1.msra.mxu0 0.0
  %1112 = vmatprep.subr.mxu0 0.0
  %1113 = vmatpush1.msra.mxu0 0.0
  %1114 = vmatprep.subr.mxu0 0.0
  %1115 = vmatpush1.msra.mxu0 0.0
  %1116 = vmatprep.subr.mxu0 0.0
  %1117 = vmatpush1.msra.mxu0 0.0
  %1118 = vmatprep.subr.mxu0 0.0
  %1119 = vmatpush1.msra.mxu0 0.0
  %1120 = vmatprep.subr.mxu0 0.0
  %1121 = vmatpush1.msra.mxu0 0.0
  %1122 = vmatprep.subr.mxu0 0.0
  %1123 = vmatpush1.msra.mxu0 0.0
  %1124 = vmatprep.subr.mxu0 0.0
  %1125 = vmatpush1.msra.mxu0 0.0
  %1126 = vmatprep.mubr.f32.mxu0 0.0
  %1127 = vmatmul.mubr.f32.gmra.mrb[0].mxu0 %v1060
  %v1128 = vpop.f32.mrb[0].mxu0
  %v1129 = vadd.f32 %v1056, %v1128
  %v1130 = vpop.f32.mrb[0].mxu0
  %1131 = vdwg.mxu0
  %v1132 = vadd.s32 %v812, 2
  %v1133 = vsub.s32 %v1132, 1
  %vm1134 = vcmp.eq.s32.totalorder %v811, %v1133
  %vm1135 = vmand %vm815, %vm1134
  %v1136 = vsel %vm1135, 1.0, 0.0
  %v1138 = vsel %vm818, %v1136, 0
  %1140 = vmatprep.subr.mxu0 0.0
  %1141 = vmatpush1.msra.mxu0 %v806
  %1142 = vmatprep.subr.mxu0 0.0
  %1143 = vmatpush1.msra.mxu0 %v807
  %1144 = vmatprep.subr.mxu0 0.0
  %1145 = vmatpush1.msra.mxu0 0.0
  %1146 = vmatprep.subr.mxu0 0.0
  %1147 = vmatpush1.msra.mxu0 0.0
  %1148 = vmatprep.subr.mxu0 0.0
  %1149 = vmatpush1.msra.mxu0 0.0
  %1150 = vmatprep.subr.mxu0 0.0
  %1151 = vmatpush1.msra.mxu0 0.0
  %1152 = vmatprep.subr.mxu0 0.0
  %1153 = vmatpush1.msra.mxu0 0.0
  %1154 = vmatprep.subr.mxu0 0.0
  %1155 = vmatpush1.msra.mxu0 0.0
  %1156 = vmatprep.subr.mxu0 0.0
  %1157 = vmatpush1.msra.mxu0 0.0
  %1158 = vmatprep.subr.mxu0 0.0
  %1159 = vmatpush1.msra.mxu0 0.0
  %1160 = vmatprep.subr.mxu0 0.0
  %1161 = vmatpush1.msra.mxu0 0.0
  %1162 = vmatprep.subr.mxu0 0.0
  %1163 = vmatpush1.msra.mxu0 0.0
  %1164 = vmatprep.subr.mxu0 0.0
  %1165 = vmatpush1.msra.mxu0 0.0
  %1166 = vmatprep.subr.mxu0 0.0
  %1167 = vmatpush1.msra.mxu0 0.0
  %1168 = vmatprep.subr.mxu0 0.0
  %1169 = vmatpush1.msra.mxu0 0.0
  %1170 = vmatprep.subr.mxu0 0.0
  %1171 = vmatpush1.msra.mxu0 0.0
  %1172 = vmatprep.subr.mxu0 0.0
  %1173 = vmatpush1.msra.mxu0 0.0
  %1174 = vmatprep.subr.mxu0 0.0
  %1175 = vmatpush1.msra.mxu0 0.0
  %1176 = vmatprep.subr.mxu0 0.0
  %1177 = vmatpush1.msra.mxu0 0.0
  %1178 = vmatprep.subr.mxu0 0.0
  %1179 = vmatpush1.msra.mxu0 0.0
  %1180 = vmatprep.subr.mxu0 0.0
  %1181 = vmatpush1.msra.mxu0 0.0
  %1182 = vmatprep.subr.mxu0 0.0
  %1183 = vmatpush1.msra.mxu0 0.0
  %1184 = vmatprep.subr.mxu0 0.0
  %1185 = vmatpush1.msra.mxu0 0.0
  %1186 = vmatprep.subr.mxu0 0.0
  %1187 = vmatpush1.msra.mxu0 0.0
  %1188 = vmatprep.subr.mxu0 0.0
  %1189 = vmatpush1.msra.mxu0 0.0
  %1190 = vmatprep.subr.mxu0 0.0
  %1191 = vmatpush1.msra.mxu0 0.0
  %1192 = vmatprep.subr.mxu0 0.0
  %1193 = vmatpush1.msra.mxu0 0.0
  %1194 = vmatprep.subr.mxu0 0.0
  %1195 = vmatpush1.msra.mxu0 0.0
  %1196 = vmatprep.subr.mxu0 0.0
  %1197 = vmatpush1.msra.mxu0 0.0
  %1198 = vmatprep.subr.mxu0 0.0
  %1199 = vmatpush1.msra.mxu0 0.0
  %1200 = vmatprep.subr.mxu0 0.0
  %1201 = vmatpush1.msra.mxu0 0.0
  %1202 = vmatprep.subr.mxu0 0.0
  %1203 = vmatpush1.msra.mxu0 0.0
  %1204 = vmatprep.mubr.f32.mxu0 0.0
  %1205 = vmatmul.mubr.f32.gmra.mrb[0].mxu0 %v1138
  %v1206 = vpop.f32.mrb[0].mxu0
  %v1207 = vadd.f32 0.0, %v1206
  %v1208 = vpop.f32.mrb[0].mxu0
  %1209 = vdwg.mxu0
  %s1210 = scalar_lea.vmem %s2, 128
  %v1211 = vld [vmem:[%s1210] sm:$0xff]
  %v1212 = vld [vmem:[%s1210 + $0x8] sm:$0xff]
  %v1213 = vld [vmem:[%s1210 + $0x10] sm:$0xff]
  %v1214 = vld [vmem:[%s1210 + $0x18] sm:$0xff]
  %v1215 = vld [vmem:[%s1210 + $0x20] sm:$0xff]
  %v1216 = vld [vmem:[%s1210 + $0x28] sm:$0xff]
  %v1217 = vld [vmem:[%s1210 + $0x30] sm:$0xff]
  %v1218 = vld [vmem:[%s1210 + $0x38] sm:$0xff]
  %v1220 = vsel %vm985, %v1207, 0
  %1222 = vmatprep.subr.mxu0 0.0
  %1223 = vmatpush1.msra.mxu0 %v1211
  %1224 = vmatprep.subr.mxu0 0.0
  %1225 = vmatpush1.msra.mxu0 %v1212
  %1226 = vmatprep.subr.mxu0 0.0
  %1227 = vmatpush1.msra.mxu0 %v1213
  %1228 = vmatprep.subr.mxu0 0.0
  %1229 = vmatpush1.msra.mxu0 %v1214
  %1230 = vmatprep.subr.mxu0 0.0
  %1231 = vmatpush1.msra.mxu0 %v1215
  %1232 = vmatprep.subr.mxu0 0.0
  %1233 = vmatpush1.msra.mxu0 %v1216
  %1234 = vmatprep.subr.mxu0 0.0
  %1235 = vmatpush1.msra.mxu0 %v1217
  %1236 = vmatprep.subr.mxu0 0.0
  %1237 = vmatpush1.msra.mxu0 %v1218
  %1238 = vmatprep.subr.mxu0 0.0
  %1239 = vmatpush1.msra.mxu0 0.0
  %1240 = vmatprep.subr.mxu0 0.0
  %1241 = vmatpush1.msra.mxu0 0.0
  %1242 = vmatprep.subr.mxu0 0.0
  %1243 = vmatpush1.msra.mxu0 0.0
  %1244 = vmatprep.subr.mxu0 0.0
  %1245 = vmatpush1.msra.mxu0 0.0
  %1246 = vmatprep.subr.mxu0 0.0
  %1247 = vmatpush1.msra.mxu0 0.0
  %1248 = vmatprep.subr.mxu0 0.0
  %1249 = vmatpush1.msra.mxu0 0.0
  %1250 = vmatprep.subr.mxu0 0.0
  %1251 = vmatpush1.msra.mxu0 0.0
  %1252 = vmatprep.subr.mxu0 0.0
  %1253 = vmatpush1.msra.mxu0 0.0
  %1254 = vmatprep.subr.mxu0 0.0
  %1255 = vmatpush1.msra.mxu0 0.0
  %1256 = vmatprep.subr.mxu0 0.0
  %1257 = vmatpush1.msra.mxu0 0.0
  %1258 = vmatprep.subr.mxu0 0.0
  %1259 = vmatpush1.msra.mxu0 0.0
  %1260 = vmatprep.subr.mxu0 0.0
  %1261 = vmatpush1.msra.mxu0 0.0
  %1262 = vmatprep.subr.mxu0 0.0
  %1263 = vmatpush1.msra.mxu0 0.0
  %1264 = vmatprep.subr.mxu0 0.0
  %1265 = vmatpush1.msra.mxu0 0.0
  %1266 = vmatprep.subr.mxu0 0.0
  %1267 = vmatpush1.msra.mxu0 0.0
  %1268 = vmatprep.subr.mxu0 0.0
  %1269 = vmatpush1.msra.mxu0 0.0
  %1270 = vmatprep.subr.mxu0 0.0
  %1271 = vmatpush1.msra.mxu0 0.0
  %1272 = vmatprep.subr.mxu0 0.0
  %1273 = vmatpush1.msra.mxu0 0.0
  %1274 = vmatprep.subr.mxu0 0.0
  %1275 = vmatpush1.msra.mxu0 0.0
  %1276 = vmatprep.subr.mxu0 0.0
  %1277 = vmatpush1.msra.mxu0 0.0
  %1278 = vmatprep.subr.mxu0 0.0
  %1279 = vmatpush1.msra.mxu0 0.0
  %1280 = vmatprep.subr.mxu0 0.0
  %1281 = vmatpush1.msra.mxu0 0.0
  %1282 = vmatprep.subr.mxu0 0.0
  %1283 = vmatpush1.msra.mxu0 0.0
  %1284 = vmatprep.subr.mxu0 0.0
  %1285 = vmatpush1.msra.mxu0 0.0
  %1286 = vmatprep.mubr.f32.mxu0 0.0
  %1287 = vmatmul.mubr.f32.gmra.mrb[0].mxu0 %v1220
  %v1288 = vpop.f32.mrb[0].mxu0
  %v1289 = vadd.f32 0.0, %v1288
  %v1290 = vpop.f32.mrb[0].mxu0
  %1291 = vdwg.mxu0
  %v1292 = vadd.f32 %v1129, %v1289
  %v1293 = vadd.s32 %v812, 3
  %v1294 = vsub.s32 %v1293, 1
  %vm1295 = vcmp.eq.s32.totalorder %v811, %v1294
  %vm1296 = vmand %vm815, %vm1295
  %v1297 = vsel %vm1296, 1.0, 0.0
  %v1299 = vsel %vm818, %v1297, 0
  %1301 = vmatprep.subr.mxu0 0.0
  %1302 = vmatpush1.msra.mxu0 %v806
  %1303 = vmatprep.subr.mxu0 0.0
  %1304 = vmatpush1.msra.mxu0 %v807
  %1305 = vmatprep.subr.mxu0 0.0
  %1306 = vmatpush1.msra.mxu0 0.0
  %1307 = vmatprep.subr.mxu0 0.0
  %1308 = vmatpush1.msra.mxu0 0.0
  %1309 = vmatprep.subr.mxu0 0.0
  %1310 = vmatpush1.msra.mxu0 0.0
  %1311 = vmatprep.subr.mxu0 0.0
  %1312 = vmatpush1.msra.mxu0 0.0
  %1313 = vmatprep.subr.mxu0 0.0
  %1314 = vmatpush1.msra.mxu0 0.0
  %1315 = vmatprep.subr.mxu0 0.0
  %1316 = vmatpush1.msra.mxu0 0.0
  %1317 = vmatprep.subr.mxu0 0.0
  %1318 = vmatpush1.msra.mxu0 0.0
  %1319 = vmatprep.subr.mxu0 0.0
  %1320 = vmatpush1.msra.mxu0 0.0
  %1321 = vmatprep.subr.mxu0 0.0
  %1322 = vmatpush1.msra.mxu0 0.0
  %1323 = vmatprep.subr.mxu0 0.0
  %1324 = vmatpush1.msra.mxu0 0.0
  %1325 = vmatprep.subr.mxu0 0.0
  %1326 = vmatpush1.msra.mxu0 0.0
  %1327 = vmatprep.subr.mxu0 0.0
  %1328 = vmatpush1.msra.mxu0 0.0
  %1329 = vmatprep.subr.mxu0 0.0
  %1330 = vmatpush1.msra.mxu0 0.0
  %1331 = vmatprep.subr.mxu0 0.0
  %1332 = vmatpush1.msra.mxu0 0.0
  %1333 = vmatprep.subr.mxu0 0.0
  %1334 = vmatpush1.msra.mxu0 0.0
  %1335 = vmatprep.subr.mxu0 0.0
  %1336 = vmatpush1.msra.mxu0 0.0
  %1337 = vmatprep.subr.mxu0 0.0
  %1338 = vmatpush1.msra.mxu0 0.0
  %1339 = vmatprep.subr.mxu0 0.0
  %1340 = vmatpush1.msra.mxu0 0.0
  %1341 = vmatprep.subr.mxu0 0.0
  %1342 = vmatpush1.msra.mxu0 0.0
  %1343 = vmatprep.subr.mxu0 0.0
  %1344 = vmatpush1.msra.mxu0 0.0
  %1345 = vmatprep.subr.mxu0 0.0
  %1346 = vmatpush1.msra.mxu0 0.0
  %1347 = vmatprep.subr.mxu0 0.0
  %1348 = vmatpush1.msra.mxu0 0.0
  %1349 = vmatprep.subr.mxu0 0.0
  %1350 = vmatpush1.msra.mxu0 0.0
  %1351 = vmatprep.subr.mxu0 0.0
  %1352 = vmatpush1.msra.mxu0 0.0
  %1353 = vmatprep.subr.mxu0 0.0
  %1354 = vmatpush1.msra.mxu0 0.0
  %1355 = vmatprep.subr.mxu0 0.0
  %1356 = vmatpush1.msra.mxu0 0.0
  %1357 = vmatprep.subr.mxu0 0.0
  %1358 = vmatpush1.msra.mxu0 0.0
  %1359 = vmatprep.subr.mxu0 0.0
  %1360 = vmatpush1.msra.mxu0 0.0
  %1361 = vmatprep.subr.mxu0 0.0
  %1362 = vmatpush1.msra.mxu0 0.0
  %1363 = vmatprep.subr.mxu0 0.0
  %1364 = vmatpush1.msra.mxu0 0.0
  %1365 = vmatprep.mubr.f32.mxu0 0.0
  %1366 = vmatmul.mubr.f32.gmra.mrb[0].mxu0 %v1299
  %v1367 = vpop.f32.mrb[0].mxu0
  %v1368 = vadd.f32 0.0, %v1367
  %v1369 = vpop.f32.mrb[0].mxu0
  %1370 = vdwg.mxu0
  %s1371 = scalar_lea.vmem %s2, 192
  %v1372 = vld [vmem:[%s1371] sm:$0xff]
  %v1373 = vld [vmem:[%s1371 + $0x8] sm:$0xff]
  %v1374 = vld [vmem:[%s1371 + $0x10] sm:$0xff]
  %v1375 = vld [vmem:[%s1371 + $0x18] sm:$0xff]
  %v1376 = vld [vmem:[%s1371 + $0x20] sm:$0xff]
  %v1377 = vld [vmem:[%s1371 + $0x28] sm:$0xff]
  %v1378 = vld [vmem:[%s1371 + $0x30] sm:$0xff]
  %v1379 = vld [vmem:[%s1371 + $0x38] sm:$0xff]
  %v1381 = vsel %vm985, %v1368, 0
  %1383 = vmatprep.subr.mxu0 0.0
  %1384 = vmatpush1.msra.mxu0 %v1372
  %1385 = vmatprep.subr.mxu0 0.0
  %1386 = vmatpush1.msra.mxu0 %v1373
  %1387 = vmatprep.subr.mxu0 0.0
  %1388 = vmatpush1.msra.mxu0 %v1374
  %1389 = vmatprep.subr.mxu0 0.0
  %1390 = vmatpush1.msra.mxu0 %v1375
  %1391 = vmatprep.subr.mxu0 0.0
  %1392 = vmatpush1.msra.mxu0 %v1376
  %1393 = vmatprep.subr.mxu0 0.0
  %1394 = vmatpush1.msra.mxu0 %v1377
  %1395 = vmatprep.subr.mxu0 0.0
  %1396 = vmatpush1.msra.mxu0 %v1378
  %1397 = vmatprep.subr.mxu0 0.0
  %1398 = vmatpush1.msra.mxu0 %v1379
  %1399 = vmatprep.subr.mxu0 0.0
  %1400 = vmatpush1.msra.mxu0 0.0
  %1401 = vmatprep.subr.mxu0 0.0
  %1402 = vmatpush1.msra.mxu0 0.0
  %1403 = vmatprep.subr.mxu0 0.0
  %1404 = vmatpush1.msra.mxu0 0.0
  %1405 = vmatprep.subr.mxu0 0.0
  %1406 = vmatpush1.msra.mxu0 0.0
  %1407 = vmatprep.subr.mxu0 0.0
  %1408 = vmatpush1.msra.mxu0 0.0
  %1409 = vmatprep.subr.mxu0 0.0
  %1410 = vmatpush1.msra.mxu0 0.0
  %1411 = vmatprep.subr.mxu0 0.0
  %1412 = vmatpush1.msra.mxu0 0.0
  %1413 = vmatprep.subr.mxu0 0.0
  %1414 = vmatpush1.msra.mxu0 0.0
  %1415 = vmatprep.subr.mxu0 0.0
  %1416 = vmatpush1.msra.mxu0 0.0
  %1417 = vmatprep.subr.mxu0 0.0
  %1418 = vmatpush1.msra.mxu0 0.0
  %1419 = vmatprep.subr.mxu0 0.0
  %1420 = vmatpush1.msra.mxu0 0.0
  %1421 = vmatprep.subr.mxu0 0.0
  %1422 = vmatpush1.msra.mxu0 0.0
  %1423 = vmatprep.subr.mxu0 0.0
  %1424 = vmatpush1.msra.mxu0 0.0
  %1425 = vmatprep.subr.mxu0 0.0
  %1426 = vmatpush1.msra.mxu0 0.0
  %1427 = vmatprep.subr.mxu0 0.0
  %1428 = vmatpush1.msra.mxu0 0.0
  %1429 = vmatprep.subr.mxu0 0.0
  %1430 = vmatpush1.msra.mxu0 0.0
  %1431 = vmatprep.subr.mxu0 0.0
  %1432 = vmatpush1.msra.mxu0 0.0
  %1433 = vmatprep.subr.mxu0 0.0
  %1434 = vmatpush1.msra.mxu0 0.0
  %1435 = vmatprep.subr.mxu0 0.0
  %1436 = vmatpush1.msra.mxu0 0.0
  %1437 = vmatprep.subr.mxu0 0.0
  %1438 = vmatpush1.msra.mxu0 0.0
  %1439 = vmatprep.subr.mxu0 0.0
  %1440 = vmatpush1.msra.mxu0 0.0
  %1441 = vmatprep.subr.mxu0 0.0
  %1442 = vmatpush1.msra.mxu0 0.0
  %1443 = vmatprep.subr.mxu0 0.0
  %1444 = vmatpush1.msra.mxu0 0.0
  %1445 = vmatprep.subr.mxu0 0.0
  %1446 = vmatpush1.msra.mxu0 0.0
  %1447 = vmatprep.mubr.f32.mxu0 0.0
  %1448 = vmatmul.mubr.f32.gmra.mrb[0].mxu0 %v1381
  %v1449 = vpop.f32.mrb[0].mxu0
  %v1450 = vadd.f32 0.0, %v1449
  %v1451 = vpop.f32.mrb[0].mxu0
  %1452 = vdwg.mxu0
  %v1453 = vadd.f32 %v1292, %v1450
  %v1454 = vld [vmem:[%s9] sm:$0x1]
  %v1455 = vld [vmem:[%s10] sm:$0x1]
  %v1456 = vadd.s32 %v73, 16
  %v1457 = vadd.s32 %v73, 24
  %v1458 = vadd.s32 %v73, 32
  %v1459 = vadd.s32 %v73, 40
  %v1460 = vadd.s32 %v73, 48
  %v1461 = vadd.s32 %v73, 56
  %v1462 = vand.u32 %v73, 15
  %v1463 = vand.u32 %v74, 15
  %v1464 = vand.u32 %v1456, 15
  %v1465 = vand.u32 %v1457, 15
  %v1466 = vand.u32 %v1458, 15
  %v1467 = vand.u32 %v1459, 15
  %v1468 = vand.u32 %v1460, 15
  %v1469 = vand.u32 %v1461, 15
  %vm1470 = vcmp.eq.s32.totalorder %v1462, %v76
  %vm1471 = vcmp.eq.s32.totalorder %v1463, %v76
  %vm1472 = vcmp.eq.s32.totalorder %v1464, %v76
  %vm1473 = vcmp.eq.s32.totalorder %v1465, %v76
  %vm1474 = vcmp.eq.s32.totalorder %v1466, %v76
  %vm1475 = vcmp.eq.s32.totalorder %v1467, %v76
  %vm1476 = vcmp.eq.s32.totalorder %v1468, %v76
  %vm1477 = vcmp.eq.s32.totalorder %v1469, %v76
  %v1478 = vsel %vm1470, 1.0, 0.0
  %v1479 = vsel %vm1471, 1.0, 0.0
  %v1480 = vsel %vm1472, 1.0, 0.0
  %v1481 = vsel %vm1473, 1.0, 0.0
  %v1482 = vsel %vm1474, 1.0, 0.0
  %v1483 = vsel %vm1475, 1.0, 0.0
  %v1484 = vsel %vm1476, 1.0, 0.0
  %v1485 = vsel %vm1477, 1.0, 0.0
  %vm1486 = vcmp.eq.s32.totalorder %v82, %v73
  %vm1487 = vcmp.eq.s32.totalorder %v82, %v74
  %v1488 = vsel %vm1486, 1.0, 0.0
  %v1489 = vsel %vm1487, 1.0, 0.0
  %v1490 = vsel %vm985, %v1453, 0.0
  %v1491 = vrot.slane %v1490, 4
  %v1492 = vadd.f32 %v1490, %v1491
  %v1493 = vrot.slane %v1492, 2
  %v1494 = vadd.f32 %v1492, %v1493
  %v1495 = vrot.slane %v1494, 1
  %v1496 = vadd.f32 %v1494, %v1495
  %v1497 = vmul.f32 %v1453, %v1453
  %v1498 = vsel %vm985, %v1497, 0.0
  %v1499 = vrot.slane %v1498, 4
  %v1500 = vadd.f32 %v1498, %v1499
  %v1501 = vrot.slane %v1500, 2
  %v1502 = vadd.f32 %v1500, %v1501
  %v1503 = vrot.slane %v1502, 1
  %v1504 = vadd.f32 %v1502, %v1503
  %v1506 = vsel %vm985, %v1496, 0
  %1508 = vmatprep.subr.mxu0 0.0
  %1509 = vmatpush1.msra.mxu0 %v1478
  %1510 = vmatprep.subr.mxu0 0.0
  %1511 = vmatpush1.msra.mxu0 %v1479
  %1512 = vmatprep.subr.mxu0 0.0
  %1513 = vmatpush1.msra.mxu0 %v1480
  %1514 = vmatprep.subr.mxu0 0.0
  %1515 = vmatpush1.msra.mxu0 %v1481
  %1516 = vmatprep.subr.mxu0 0.0
  %1517 = vmatpush1.msra.mxu0 %v1482
  %1518 = vmatprep.subr.mxu0 0.0
  %1519 = vmatpush1.msra.mxu0 %v1483
  %1520 = vmatprep.subr.mxu0 0.0
  %1521 = vmatpush1.msra.mxu0 %v1484
  %1522 = vmatprep.subr.mxu0 0.0
  %1523 = vmatpush1.msra.mxu0 %v1485
  %1524 = vmatprep.subr.mxu0 0.0
  %1525 = vmatpush1.msra.mxu0 0.0
  %1526 = vmatprep.subr.mxu0 0.0
  %1527 = vmatpush1.msra.mxu0 0.0
  %1528 = vmatprep.subr.mxu0 0.0
  %1529 = vmatpush1.msra.mxu0 0.0
  %1530 = vmatprep.subr.mxu0 0.0
  %1531 = vmatpush1.msra.mxu0 0.0
  %1532 = vmatprep.subr.mxu0 0.0
  %1533 = vmatpush1.msra.mxu0 0.0
  %1534 = vmatprep.subr.mxu0 0.0
  %1535 = vmatpush1.msra.mxu0 0.0
  %1536 = vmatprep.subr.mxu0 0.0
  %1537 = vmatpush1.msra.mxu0 0.0
  %1538 = vmatprep.subr.mxu0 0.0
  %1539 = vmatpush1.msra.mxu0 0.0
  %1540 = vmatprep.subr.mxu0 0.0
  %1541 = vmatpush1.msra.mxu0 0.0
  %1542 = vmatprep.subr.mxu0 0.0
  %1543 = vmatpush1.msra.mxu0 0.0
  %1544 = vmatprep.subr.mxu0 0.0
  %1545 = vmatpush1.msra.mxu0 0.0
  %1546 = vmatprep.subr.mxu0 0.0
  %1547 = vmatpush1.msra.mxu0 0.0
  %1548 = vmatprep.subr.mxu0 0.0
  %1549 = vmatpush1.msra.mxu0 0.0
  %1550 = vmatprep.subr.mxu0 0.0
  %1551 = vmatpush1.msra.mxu0 0.0
  %1552 = vmatprep.subr.mxu0 0.0
  %1553 = vmatpush1.msra.mxu0 0.0
  %1554 = vmatprep.subr.mxu0 0.0
  %1555 = vmatpush1.msra.mxu0 0.0
  %1556 = vmatprep.subr.mxu0 0.0
  %1557 = vmatpush1.msra.mxu0 0.0
  %1558 = vmatprep.subr.mxu0 0.0
  %1559 = vmatpush1.msra.mxu0 0.0
  %1560 = vmatprep.subr.mxu0 0.0
  %1561 = vmatpush1.msra.mxu0 0.0
  %1562 = vmatprep.subr.mxu0 0.0
  %1563 = vmatpush1.msra.mxu0 0.0
  %1564 = vmatprep.subr.mxu0 0.0
  %1565 = vmatpush1.msra.mxu0 0.0
  %1566 = vmatprep.subr.mxu0 0.0
  %1567 = vmatpush1.msra.mxu0 0.0
  %1568 = vmatprep.subr.mxu0 0.0
  %1569 = vmatpush1.msra.mxu0 0.0
  %1570 = vmatprep.subr.mxu0 0.0
  %1571 = vmatpush1.msra.mxu0 0.0
  %1572 = vmatprep.mubr.f32.mxu0 0.0
  %1573 = vmatmul.mubr.f32.gmra.mrb[0].mxu0 %v1506
  %v1574 = vpop.f32.mrb[0].mxu0
  %v1575 = vadd.f32 0.0, %v1574
  %v1576 = vpop.f32.mrb[0].mxu0
  %1577 = vdwg.mxu0
  %v1578 = vrcp.pop 32.0
  %v1579 = vmul.f32 %v1575, %v1578
  %v1581 = vsel %vm985, %v1504, 0
  %1583 = vmatprep.subr.mxu0 0.0
  %1584 = vmatpush1.msra.mxu0 %v1478
  %1585 = vmatprep.subr.mxu0 0.0
  %1586 = vmatpush1.msra.mxu0 %v1479
  %1587 = vmatprep.subr.mxu0 0.0
  %1588 = vmatpush1.msra.mxu0 %v1480
  %1589 = vmatprep.subr.mxu0 0.0
  %1590 = vmatpush1.msra.mxu0 %v1481
  %1591 = vmatprep.subr.mxu0 0.0
  %1592 = vmatpush1.msra.mxu0 %v1482
  %1593 = vmatprep.subr.mxu0 0.0
  %1594 = vmatpush1.msra.mxu0 %v1483
  %1595 = vmatprep.subr.mxu0 0.0
  %1596 = vmatpush1.msra.mxu0 %v1484
  %1597 = vmatprep.subr.mxu0 0.0
  %1598 = vmatpush1.msra.mxu0 %v1485
  %1599 = vmatprep.subr.mxu0 0.0
  %1600 = vmatpush1.msra.mxu0 0.0
  %1601 = vmatprep.subr.mxu0 0.0
  %1602 = vmatpush1.msra.mxu0 0.0
  %1603 = vmatprep.subr.mxu0 0.0
  %1604 = vmatpush1.msra.mxu0 0.0
  %1605 = vmatprep.subr.mxu0 0.0
  %1606 = vmatpush1.msra.mxu0 0.0
  %1607 = vmatprep.subr.mxu0 0.0
  %1608 = vmatpush1.msra.mxu0 0.0
  %1609 = vmatprep.subr.mxu0 0.0
  %1610 = vmatpush1.msra.mxu0 0.0
  %1611 = vmatprep.subr.mxu0 0.0
  %1612 = vmatpush1.msra.mxu0 0.0
  %1613 = vmatprep.subr.mxu0 0.0
  %1614 = vmatpush1.msra.mxu0 0.0
  %1615 = vmatprep.subr.mxu0 0.0
  %1616 = vmatpush1.msra.mxu0 0.0
  %1617 = vmatprep.subr.mxu0 0.0
  %1618 = vmatpush1.msra.mxu0 0.0
  %1619 = vmatprep.subr.mxu0 0.0
  %1620 = vmatpush1.msra.mxu0 0.0
  %1621 = vmatprep.subr.mxu0 0.0
  %1622 = vmatpush1.msra.mxu0 0.0
  %1623 = vmatprep.subr.mxu0 0.0
  %1624 = vmatpush1.msra.mxu0 0.0
  %1625 = vmatprep.subr.mxu0 0.0
  %1626 = vmatpush1.msra.mxu0 0.0
  %1627 = vmatprep.subr.mxu0 0.0
  %1628 = vmatpush1.msra.mxu0 0.0
  %1629 = vmatprep.subr.mxu0 0.0
  %1630 = vmatpush1.msra.mxu0 0.0
  %1631 = vmatprep.subr.mxu0 0.0
  %1632 = vmatpush1.msra.mxu0 0.0
  %1633 = vmatprep.subr.mxu0 0.0
  %1634 = vmatpush1.msra.mxu0 0.0
  %1635 = vmatprep.subr.mxu0 0.0
  %1636 = vmatpush1.msra.mxu0 0.0
  %1637 = vmatprep.subr.mxu0 0.0
  %1638 = vmatpush1.msra.mxu0 0.0
  %1639 = vmatprep.subr.mxu0 0.0
  %1640 = vmatpush1.msra.mxu0 0.0
  %1641 = vmatprep.subr.mxu0 0.0
  %1642 = vmatpush1.msra.mxu0 0.0
  %1643 = vmatprep.subr.mxu0 0.0
  %1644 = vmatpush1.msra.mxu0 0.0
  %1645 = vmatprep.subr.mxu0 0.0
  %1646 = vmatpush1.msra.mxu0 0.0
  %1647 = vmatprep.mubr.f32.mxu0 0.0
  %1648 = vmatmul.mubr.f32.gmra.mrb[0].mxu0 %v1581
  %v1649 = vpop.f32.mrb[0].mxu0
  %v1650 = vadd.f32 0.0, %v1649
  %v1651 = vpop.f32.mrb[0].mxu0
  %1652 = vdwg.mxu0
  %v1653 = vmul.f32 %v1650, %v1578
  %v1654 = vmul.f32 %v1579, %v1579
  %v1655 = vsub.f32 %v1653, %v1654
  %v1656 = vadd.f32 %v1655, 1e-05
  %v1657 = vrsqrt.pop %v1656
  %v1658 = vmul.f32 %v1454, %v1657
  %v1659 = vmul.f32 %v1579, %v1658
  %v1660 = vsub.f32 %v1455, %v1659
  %v1662 = vsel %vm818, %v1658, 0
  %1664 = vmatprep.subr.mxu0 0.0
  %1665 = vmatpush1.msra.mxu0 %v1488
  %1666 = vmatprep.subr.mxu0 0.0
  %1667 = vmatpush1.msra.mxu0 %v1489
  %1668 = vmatprep.subr.mxu0 0.0
  %1669 = vmatpush1.msra.mxu0 0.0
  %1670 = vmatprep.subr.mxu0 0.0
  %1671 = vmatpush1.msra.mxu0 0.0
  %1672 = vmatprep.subr.mxu0 0.0
  %1673 = vmatpush1.msra.mxu0 0.0
  %1674 = vmatprep.subr.mxu0 0.0
  %1675 = vmatpush1.msra.mxu0 0.0
  %1676 = vmatprep.subr.mxu0 0.0
  %1677 = vmatpush1.msra.mxu0 0.0
  %1678 = vmatprep.subr.mxu0 0.0
  %1679 = vmatpush1.msra.mxu0 0.0
  %1680 = vmatprep.subr.mxu0 0.0
  %1681 = vmatpush1.msra.mxu0 0.0
  %1682 = vmatprep.subr.mxu0 0.0
  %1683 = vmatpush1.msra.mxu0 0.0
  %1684 = vmatprep.subr.mxu0 0.0
  %1685 = vmatpush1.msra.mxu0 0.0
  %1686 = vmatprep.subr.mxu0 0.0
  %1687 = vmatpush1.msra.mxu0 0.0
  %1688 = vmatprep.subr.mxu0 0.0
  %1689 = vmatpush1.msra.mxu0 0.0
  %1690 = vmatprep.subr.mxu0 0.0
  %1691 = vmatpush1.msra.mxu0 0.0
  %1692 = vmatprep.subr.mxu0 0.0
  %1693 = vmatpush1.msra.mxu0 0.0
  %1694 = vmatprep.subr.mxu0 0.0
  %1695 = vmatpush1.msra.mxu0 0.0
  %1696 = vmatprep.subr.mxu0 0.0
  %1697 = vmatpush1.msra.mxu0 0.0
  %1698 = vmatprep.subr.mxu0 0.0
  %1699 = vmatpush1.msra.mxu0 0.0
  %1700 = vmatprep.subr.mxu0 0.0
  %1701 = vmatpush1.msra.mxu0 0.0
  %1702 = vmatprep.subr.mxu0 0.0
  %1703 = vmatpush1.msra.mxu0 0.0
  %1704 = vmatprep.subr.mxu0 0.0
  %1705 = vmatpush1.msra.mxu0 0.0
  %1706 = vmatprep.subr.mxu0 0.0
  %1707 = vmatpush1.msra.mxu0 0.0
  %1708 = vmatprep.subr.mxu0 0.0
  %1709 = vmatpush1.msra.mxu0 0.0
  %1710 = vmatprep.subr.mxu0 0.0
  %1711 = vmatpush1.msra.mxu0 0.0
  %1712 = vmatprep.subr.mxu0 0.0
  %1713 = vmatpush1.msra.mxu0 0.0
  %1714 = vmatprep.subr.mxu0 0.0
  %1715 = vmatpush1.msra.mxu0 0.0
  %1716 = vmatprep.subr.mxu0 0.0
  %1717 = vmatpush1.msra.mxu0 0.0
  %1718 = vmatprep.subr.mxu0 0.0
  %1719 = vmatpush1.msra.mxu0 0.0
  %1720 = vmatprep.subr.mxu0 0.0
  %1721 = vmatpush1.msra.mxu0 0.0
  %1722 = vmatprep.subr.mxu0 0.0
  %1723 = vmatpush1.msra.mxu0 0.0
  %1724 = vmatprep.subr.mxu0 0.0
  %1725 = vmatpush1.msra.mxu0 0.0
  %1726 = vmatprep.subr.mxu0 0.0
  %1727 = vmatpush1.msra.mxu0 0.0
  %1728 = vmatprep.mubr.f32.mxu0 0.0
  %1729 = vmatmul.mubr.f32.gmra.mrb[0].mxu0 %v1662
  %v1730 = vpop.f32.mrb[0].mxu0
  %v1731 = vadd.f32 0.0, %v1730
  %v1732 = vpop.f32.mrb[0].mxu0
  %1733 = vdwg.mxu0
  %v1735 = vsel %vm818, %v1660, 0
  %1737 = vmatprep.subr.mxu0 0.0
  %1738 = vmatpush1.msra.mxu0 %v1488
  %1739 = vmatprep.subr.mxu0 0.0
  %1740 = vmatpush1.msra.mxu0 %v1489
  %1741 = vmatprep.subr.mxu0 0.0
  %1742 = vmatpush1.msra.mxu0 0.0
  %1743 = vmatprep.subr.mxu0 0.0
  %1744 = vmatpush1.msra.mxu0 0.0
  %1745 = vmatprep.subr.mxu0 0.0
  %1746 = vmatpush1.msra.mxu0 0.0
  %1747 = vmatprep.subr.mxu0 0.0
  %1748 = vmatpush1.msra.mxu0 0.0
  %1749 = vmatprep.subr.mxu0 0.0
  %1750 = vmatpush1.msra.mxu0 0.0
  %1751 = vmatprep.subr.mxu0 0.0
  %1752 = vmatpush1.msra.mxu0 0.0
  %1753 = vmatprep.subr.mxu0 0.0
  %1754 = vmatpush1.msra.mxu0 0.0
  %1755 = vmatprep.subr.mxu0 0.0
  %1756 = vmatpush1.msra.mxu0 0.0
  %1757 = vmatprep.subr.mxu0 0.0
  %1758 = vmatpush1.msra.mxu0 0.0
  %1759 = vmatprep.subr.mxu0 0.0
  %1760 = vmatpush1.msra.mxu0 0.0
  %1761 = vmatprep.subr.mxu0 0.0
  %1762 = vmatpush1.msra.mxu0 0.0
  %1763 = vmatprep.subr.mxu0 0.0
  %1764 = vmatpush1.msra.mxu0 0.0
  %1765 = vmatprep.subr.mxu0 0.0
  %1766 = vmatpush1.msra.mxu0 0.0
  %1767 = vmatprep.subr.mxu0 0.0
  %1768 = vmatpush1.msra.mxu0 0.0
  %1769 = vmatprep.subr.mxu0 0.0
  %1770 = vmatpush1.msra.mxu0 0.0
  %1771 = vmatprep.subr.mxu0 0.0
  %1772 = vmatpush1.msra.mxu0 0.0
  %1773 = vmatprep.subr.mxu0 0.0
  %1774 = vmatpush1.msra.mxu0 0.0
  %1775 = vmatprep.subr.mxu0 0.0
  %1776 = vmatpush1.msra.mxu0 0.0
  %1777 = vmatprep.subr.mxu0 0.0
  %1778 = vmatpush1.msra.mxu0 0.0
  %1779 = vmatprep.subr.mxu0 0.0
  %1780 = vmatpush1.msra.mxu0 0.0
  %1781 = vmatprep.subr.mxu0 0.0
  %1782 = vmatpush1.msra.mxu0 0.0
  %1783 = vmatprep.subr.mxu0 0.0
  %1784 = vmatpush1.msra.mxu0 0.0
  %1785 = vmatprep.subr.mxu0 0.0
  %1786 = vmatpush1.msra.mxu0 0.0
  %1787 = vmatprep.subr.mxu0 0.0
  %1788 = vmatpush1.msra.mxu0 0.0
  %1789 = vmatprep.subr.mxu0 0.0
  %1790 = vmatpush1.msra.mxu0 0.0
  %1791 = vmatprep.subr.mxu0 0.0
  %1792 = vmatpush1.msra.mxu0 0.0
  %1793 = vmatprep.subr.mxu0 0.0
  %1794 = vmatpush1.msra.mxu0 0.0
  %1795 = vmatprep.subr.mxu0 0.0
  %1796 = vmatpush1.msra.mxu0 0.0
  %1797 = vmatprep.subr.mxu0 0.0
  %1798 = vmatpush1.msra.mxu0 0.0
  %1799 = vmatprep.subr.mxu0 0.0
  %1800 = vmatpush1.msra.mxu0 0.0
  %1801 = vmatprep.mubr.f32.mxu0 0.0
  %1802 = vmatmul.mubr.f32.gmra.mrb[0].mxu0 %v1735
  %v1803 = vpop.f32.mrb[0].mxu0
  %v1804 = vadd.f32 0.0, %v1803
  %v1805 = vpop.f32.mrb[0].mxu0
  %1806 = vdwg.mxu0
  %v1807 = vlaneseq
  %v1808 = vshrl.u32 %v1807, 7
  %v1809 = vsub.s32 0, %v1808
  %v1810 = vrot.slane %v1731, %v1809
  %v1811 = vmul.f32 %v1453, %v1810
  %v1812 = vlaneseq
  %v1813 = vshrl.u32 %v1812, 7
  %v1814 = vsub.s32 0, %v1813
  %v1815 = vrot.slane %v1804, %v1814
  %v1816 = vadd.f32 %v1811, %v1815
  %vm1817 = vcmp.gt.f32.partialorder %v1816, 0.0
  %v1818 = vmul.f32 %v1816, 0.2
  %v1819 = vsel %vm1817, %v1816, %v1818
  %v1820 = vshra.s32 %v73, 1
  %v1821 = vand.u32 %v73, 1
  %v1822 = vshra.s32 %v76, 2
  %v1823 = vand.u32 %v76, 3
  %v1824 = vmul.u32 %v1821, 2
  %v1825 = vsub.s32 %v1824, 1
  %vm1826 = vcmp.eq.s32.totalorder %v1823, %v1825
  %vm1827 = vcmp.eq.s32.totalorder %v1820, %v1822
  %vm1828 = vmand %vm1827, %vm1826
  %v1829 = vsel %vm1828, 1.0, 0.0
  %vm1830 = vcmask 64512
  %v1832 = vsel %vm1830, %v1829, 0
  %1834 = vmatprep.subr.mxu0 0.0
  %1835 = vmatpush1.msra.mxu0 %v1819
  %1836 = vmatprep.subr.mxu0 0.0
  %1837 = vmatpush1.msra.mxu0 0.0
  %1838 = vmatprep.subr.mxu0 0.0
  %1839 = vmatpush1.msra.mxu0 0.0
  %1840 = vmatprep.subr.mxu0 0.0
  %1841 = vmatpush1.msra.mxu0 0.0
  %1842 = vmatprep.subr.mxu0 0.0
  %1843 = vmatpush1.msra.mxu0 0.0
  %1844 = vmatprep.subr.mxu0 0.0
  %1845 = vmatpush1.msra.mxu0 0.0
  %1846 = vmatprep.subr.mxu0 0.0
  %1847 = vmatpush1.msra.mxu0 0.0
  %1848 = vmatprep.subr.mxu0 0.0
  %1849 = vmatpush1.msra.mxu0 0.0
  %1850 = vmatprep.subr.mxu0 0.0
  %1851 = vmatpush1.msra.mxu0 0.0
  %1852 = vmatprep.subr.mxu0 0.0
  %1853 = vmatpush1.msra.mxu0 0.0
  %1854 = vmatprep.subr.mxu0 0.0
  %1855 = vmatpush1.msra.mxu0 0.0
  %1856 = vmatprep.subr.mxu0 0.0
  %1857 = vmatpush1.msra.mxu0 0.0
  %1858 = vmatprep.subr.mxu0 0.0
  %1859 = vmatpush1.msra.mxu0 0.0
  %1860 = vmatprep.subr.mxu0 0.0
  %1861 = vmatpush1.msra.mxu0 0.0
  %1862 = vmatprep.subr.mxu0 0.0
  %1863 = vmatpush1.msra.mxu0 0.0
  %1864 = vmatprep.subr.mxu0 0.0
  %1865 = vmatpush1.msra.mxu0 0.0
  %1866 = vmatprep.subr.mxu0 0.0
  %1867 = vmatpush1.msra.mxu0 0.0
  %1868 = vmatprep.subr.mxu0 0.0
  %1869 = vmatpush1.msra.mxu0 0.0
  %1870 = vmatprep.subr.mxu0 0.0
  %1871 = vmatpush1.msra.mxu0 0.0
  %1872 = vmatprep.subr.mxu0 0.0
  %1873 = vmatpush1.msra.mxu0 0.0
  %1874 = vmatprep.subr.mxu0 0.0
  %1875 = vmatpush1.msra.mxu0 0.0
  %1876 = vmatprep.subr.mxu0 0.0
  %1877 = vmatpush1.msra.mxu0 0.0
  %1878 = vmatprep.subr.mxu0 0.0
  %1879 = vmatpush1.msra.mxu0 0.0
  %1880 = vmatprep.subr.mxu0 0.0
  %1881 = vmatpush1.msra.mxu0 0.0
  %1882 = vmatprep.subr.mxu0 0.0
  %1883 = vmatpush1.msra.mxu0 0.0
  %1884 = vmatprep.subr.mxu0 0.0
  %1885 = vmatpush1.msra.mxu0 0.0
  %1886 = vmatprep.subr.mxu0 0.0
  %1887 = vmatpush1.msra.mxu0 0.0
  %1888 = vmatprep.subr.mxu0 0.0
  %1889 = vmatpush1.msra.mxu0 0.0
  %1890 = vmatprep.subr.mxu0 0.0
  %1891 = vmatpush1.msra.mxu0 0.0
  %1892 = vmatprep.subr.mxu0 0.0
  %1893 = vmatpush1.msra.mxu0 0.0
  %1894 = vmatprep.subr.mxu0 0.0
  %1895 = vmatpush1.msra.mxu0 0.0
  %1896 = vmatprep.subr.mxu0 0.0
  %1897 = vmatpush1.msra.mxu0 0.0
  %1898 = vmatprep.mubr.f32.mxu0 0.0
  %1899 = vmatmul.mubr.f32.gmra.mrb[0].mxu0 %v1832
  %v1900 = vpop.f32.mrb[0].mxu0
  %v1901 = vadd.f32 0.0, %v1900
  %v1902 = vpop.f32.mrb[0].mxu0
  %1903 = vdwg.mxu0
  %v1904 = vld [vmem:[%s3] sm:$0xff]
  %v1905 = vld [vmem:[%s3 + $0x8] sm:$0xff]
  %v1906 = vld [vmem:[%s3 + $0x10] sm:$0xff]
  %v1907 = vld [vmem:[%s3 + $0x18] sm:$0xff]
  %v1908 = vld [vmem:[%s3 + $0x20] sm:$0xff]
  %v1909 = vld [vmem:[%s3 + $0x28] sm:$0xff]
  %v1910 = vld [vmem:[%s3 + $0x30] sm:$0xff]
  %v1911 = vld [vmem:[%s3 + $0x38] sm:$0xff]
  %vm1912 = vcmp.eq.s32.totalorder %v1823, %v1824
  %vm1913 = vmand %vm1827, %vm1912
  %v1914 = vsel %vm1913, 1.0, 0.0
  %v1916 = vsel %vm1830, %v1914, 0
  %1918 = vmatprep.subr.mxu0 0.0
  %1919 = vmatpush1.msra.mxu0 %v1819
  %1920 = vmatprep.subr.mxu0 0.0
  %1921 = vmatpush1.msra.mxu0 0.0
  %1922 = vmatprep.subr.mxu0 0.0
  %1923 = vmatpush1.msra.mxu0 0.0
  %1924 = vmatprep.subr.mxu0 0.0
  %1925 = vmatpush1.msra.mxu0 0.0
  %1926 = vmatprep.subr.mxu0 0.0
  %1927 = vmatpush1.msra.mxu0 0.0
  %1928 = vmatprep.subr.mxu0 0.0
  %1929 = vmatpush1.msra.mxu0 0.0
  %1930 = vmatprep.subr.mxu0 0.0
  %1931 = vmatpush1.msra.mxu0 0.0
  %1932 = vmatprep.subr.mxu0 0.0
  %1933 = vmatpush1.msra.mxu0 0.0
  %1934 = vmatprep.subr.mxu0 0.0
  %1935 = vmatpush1.msra.mxu0 0.0
  %1936 = vmatprep.subr.mxu0 0.0
  %1937 = vmatpush1.msra.mxu0 0.0
  %1938 = vmatprep.subr.mxu0 0.0
  %1939 = vmatpush1.msra.mxu0 0.0
  %1940 = vmatprep.subr.mxu0 0.0
  %1941 = vmatpush1.msra.mxu0 0.0
  %1942 = vmatprep.subr.mxu0 0.0
  %1943 = vmatpush1.msra.mxu0 0.0
  %1944 = vmatprep.subr.mxu0 0.0
  %1945 = vmatpush1.msra.mxu0 0.0
  %1946 = vmatprep.subr.mxu0 0.0
  %1947 = vmatpush1.msra.mxu0 0.0
  %1948 = vmatprep.subr.mxu0 0.0
  %1949 = vmatpush1.msra.mxu0 0.0
  %1950 = vmatprep.subr.mxu0 0.0
  %1951 = vmatpush1.msra.mxu0 0.0
  %1952 = vmatprep.subr.mxu0 0.0
  %1953 = vmatpush1.msra.mxu0 0.0
  %1954 = vmatprep.subr.mxu0 0.0
  %1955 = vmatpush1.msra.mxu0 0.0
  %1956 = vmatprep.subr.mxu0 0.0
  %1957 = vmatpush1.msra.mxu0 0.0
  %1958 = vmatprep.subr.mxu0 0.0
  %1959 = vmatpush1.msra.mxu0 0.0
  %1960 = vmatprep.subr.mxu0 0.0
  %1961 = vmatpush1.msra.mxu0 0.0
  %1962 = vmatprep.subr.mxu0 0.0
  %1963 = vmatpush1.msra.mxu0 0.0
  %1964 = vmatprep.subr.mxu0 0.0
  %1965 = vmatpush1.msra.mxu0 0.0
  %1966 = vmatprep.subr.mxu0 0.0
  %1967 = vmatpush1.msra.mxu0 0.0
  %1968 = vmatprep.subr.mxu0 0.0
  %1969 = vmatpush1.msra.mxu0 0.0
  %1970 = vmatprep.subr.mxu0 0.0
  %1971 = vmatpush1.msra.mxu0 0.0
  %1972 = vmatprep.subr.mxu0 0.0
  %1973 = vmatpush1.msra.mxu0 0.0
  %1974 = vmatprep.subr.mxu0 0.0
  %1975 = vmatpush1.msra.mxu0 0.0
  %1976 = vmatprep.subr.mxu0 0.0
  %1977 = vmatpush1.msra.mxu0 0.0
  %1978 = vmatprep.subr.mxu0 0.0
  %1979 = vmatpush1.msra.mxu0 0.0
  %1980 = vmatprep.subr.mxu0 0.0
  %1981 = vmatpush1.msra.mxu0 0.0
  %1982 = vmatprep.mubr.f32.mxu0 0.0
  %1983 = vmatmul.mubr.f32.gmra.mrb[0].mxu0 %v1916
  %v1984 = vpop.f32.mrb[0].mxu0
  %v1985 = vadd.f32 0.0, %v1984
  %v1986 = vpop.f32.mrb[0].mxu0
  %1987 = vdwg.mxu0
  %s1988 = scalar_lea.vmem %s3, 64
  %v1989 = vld [vmem:[%s1988] sm:$0xff]
  %v1990 = vld [vmem:[%s1988 + $0x8] sm:$0xff]
  %v1991 = vld [vmem:[%s1988 + $0x10] sm:$0xff]
  %v1992 = vld [vmem:[%s1988 + $0x18] sm:$0xff]
  %v1993 = vld [vmem:[%s1988 + $0x20] sm:$0xff]
  %v1994 = vld [vmem:[%s1988 + $0x28] sm:$0xff]
  %v1995 = vld [vmem:[%s1988 + $0x30] sm:$0xff]
  %v1996 = vld [vmem:[%s1988 + $0x38] sm:$0xff]
  %v1998 = vsel %vm985, %v1985, 0
  %2000 = vmatprep.subr.mxu0 0.0
  %2001 = vmatpush1.msra.mxu0 %v1989
  %2002 = vmatprep.subr.mxu0 0.0
  %2003 = vmatpush1.msra.mxu0 %v1990
  %2004 = vmatprep.subr.mxu0 0.0
  %2005 = vmatpush1.msra.mxu0 %v1991
  %2006 = vmatprep.subr.mxu0 0.0
  %2007 = vmatpush1.msra.mxu0 %v1992
  %2008 = vmatprep.subr.mxu0 0.0
  %2009 = vmatpush1.msra.mxu0 %v1993
  %2010 = vmatprep.subr.mxu0 0.0
  %2011 = vmatpush1.msra.mxu0 %v1994
  %2012 = vmatprep.subr.mxu0 0.0
  %2013 = vmatpush1.msra.mxu0 %v1995
  %2014 = vmatprep.subr.mxu0 0.0
  %2015 = vmatpush1.msra.mxu0 %v1996
  %2016 = vmatprep.subr.mxu0 0.0
  %2017 = vmatpush1.msra.mxu0 0.0
  %2018 = vmatprep.subr.mxu0 0.0
  %2019 = vmatpush1.msra.mxu0 0.0
  %2020 = vmatprep.subr.mxu0 0.0
  %2021 = vmatpush1.msra.mxu0 0.0
  %2022 = vmatprep.subr.mxu0 0.0
  %2023 = vmatpush1.msra.mxu0 0.0
  %2024 = vmatprep.subr.mxu0 0.0
  %2025 = vmatpush1.msra.mxu0 0.0
  %2026 = vmatprep.subr.mxu0 0.0
  %2027 = vmatpush1.msra.mxu0 0.0
  %2028 = vmatprep.subr.mxu0 0.0
  %2029 = vmatpush1.msra.mxu0 0.0
  %2030 = vmatprep.subr.mxu0 0.0
  %2031 = vmatpush1.msra.mxu0 0.0
  %2032 = vmatprep.subr.mxu0 0.0
  %2033 = vmatpush1.msra.mxu0 0.0
  %2034 = vmatprep.subr.mxu0 0.0
  %2035 = vmatpush1.msra.mxu0 0.0
  %2036 = vmatprep.subr.mxu0 0.0
  %2037 = vmatpush1.msra.mxu0 0.0
  %2038 = vmatprep.subr.mxu0 0.0
  %2039 = vmatpush1.msra.mxu0 0.0
  %2040 = vmatprep.subr.mxu0 0.0
  %2041 = vmatpush1.msra.mxu0 0.0
  %2042 = vmatprep.subr.mxu0 0.0
  %2043 = vmatpush1.msra.mxu0 0.0
  %2044 = vmatprep.subr.mxu0 0.0
  %2045 = vmatpush1.msra.mxu0 0.0
  %2046 = vmatprep.subr.mxu0 0.0
  %2047 = vmatpush1.msra.mxu0 0.0
  %2048 = vmatprep.subr.mxu0 0.0
  %2049 = vmatpush1.msra.mxu0 0.0
  %2050 = vmatprep.subr.mxu0 0.0
  %2051 = vmatpush1.msra.mxu0 0.0
  %2052 = vmatprep.subr.mxu0 0.0
  %2053 = vmatpush1.msra.mxu0 0.0
  %2054 = vmatprep.subr.mxu0 0.0
  %2055 = vmatpush1.msra.mxu0 0.0
  %2056 = vmatprep.subr.mxu0 0.0
  %2057 = vmatpush1.msra.mxu0 0.0
  %2058 = vmatprep.subr.mxu0 0.0
  %2059 = vmatpush1.msra.mxu0 0.0
  %2060 = vmatprep.subr.mxu0 0.0
  %2061 = vmatpush1.msra.mxu0 0.0
  %2062 = vmatprep.subr.mxu0 0.0
  %2063 = vmatpush1.msra.mxu0 0.0
  %2064 = vmatprep.mubr.f32.mxu0 0.0
  %2065 = vmatmul.mubr.f32.gmra.mrb[0].mxu0 %v1998
  %v2066 = vpop.f32.mrb[0].mxu0
  %v2067 = vadd.f32 0.0, %v2066
  %v2068 = vpop.f32.mrb[0].mxu0
  %2069 = vdwg.mxu0
  %v2071 = vsel %vm985, %v1901, 0
  %2073 = vmatprep.subr.mxu0 0.0
  %2074 = vmatpush1.msra.mxu0 %v1904
  %2075 = vmatprep.subr.mxu0 0.0
  %2076 = vmatpush1.msra.mxu0 %v1905
  %2077 = vmatprep.subr.mxu0 0.0
  %2078 = vmatpush1.msra.mxu0 %v1906
  %2079 = vmatprep.subr.mxu0 0.0
  %2080 = vmatpush1.msra.mxu0 %v1907
  %2081 = vmatprep.subr.mxu0 0.0
  %2082 = vmatpush1.msra.mxu0 %v1908
  %2083 = vmatprep.subr.mxu0 0.0
  %2084 = vmatpush1.msra.mxu0 %v1909
  %2085 = vmatprep.subr.mxu0 0.0
  %2086 = vmatpush1.msra.mxu0 %v1910
  %2087 = vmatprep.subr.mxu0 0.0
  %2088 = vmatpush1.msra.mxu0 %v1911
  %2089 = vmatprep.subr.mxu0 0.0
  %2090 = vmatpush1.msra.mxu0 0.0
  %2091 = vmatprep.subr.mxu0 0.0
  %2092 = vmatpush1.msra.mxu0 0.0
  %2093 = vmatprep.subr.mxu0 0.0
  %2094 = vmatpush1.msra.mxu0 0.0
  %2095 = vmatprep.subr.mxu0 0.0
  %2096 = vmatpush1.msra.mxu0 0.0
  %2097 = vmatprep.subr.mxu0 0.0
  %2098 = vmatpush1.msra.mxu0 0.0
  %2099 = vmatprep.subr.mxu0 0.0
  %2100 = vmatpush1.msra.mxu0 0.0
  %2101 = vmatprep.subr.mxu0 0.0
  %2102 = vmatpush1.msra.mxu0 0.0
  %2103 = vmatprep.subr.mxu0 0.0
  %2104 = vmatpush1.msra.mxu0 0.0
  %2105 = vmatprep.subr.mxu0 0.0
  %2106 = vmatpush1.msra.mxu0 0.0
  %2107 = vmatprep.subr.mxu0 0.0
  %2108 = vmatpush1.msra.mxu0 0.0
  %2109 = vmatprep.subr.mxu0 0.0
  %2110 = vmatpush1.msra.mxu0 0.0
  %2111 = vmatprep.subr.mxu0 0.0
  %2112 = vmatpush1.msra.mxu0 0.0
  %2113 = vmatprep.subr.mxu0 0.0
  %2114 = vmatpush1.msra.mxu0 0.0
  %2115 = vmatprep.subr.mxu0 0.0
  %2116 = vmatpush1.msra.mxu0 0.0
  %2117 = vmatprep.subr.mxu0 0.0
  %2118 = vmatpush1.msra.mxu0 0.0
  %2119 = vmatprep.subr.mxu0 0.0
  %2120 = vmatpush1.msra.mxu0 0.0
  %2121 = vmatprep.subr.mxu0 0.0
  %2122 = vmatpush1.msra.mxu0 0.0
  %2123 = vmatprep.subr.mxu0 0.0
  %2124 = vmatpush1.msra.mxu0 0.0
  %2125 = vmatprep.subr.mxu0 0.0
  %2126 = vmatpush1.msra.mxu0 0.0
  %2127 = vmatprep.subr.mxu0 0.0
  %2128 = vmatpush1.msra.mxu0 0.0
  %2129 = vmatprep.subr.mxu0 0.0
  %2130 = vmatpush1.msra.mxu0 0.0
  %2131 = vmatprep.subr.mxu0 0.0
  %2132 = vmatpush1.msra.mxu0 0.0
  %2133 = vmatprep.subr.mxu0 0.0
  %2134 = vmatpush1.msra.mxu0 0.0
  %2135 = vmatprep.subr.mxu0 0.0
  %2136 = vmatpush1.msra.mxu0 0.0
  %2137 = vmatprep.mubr.f32.mxu0 0.0
  %2138 = vmatmul.mubr.f32.gmra.mrb[0].mxu0 %v2071
  %v2139 = vpop.f32.mrb[0].mxu0
  %v2140 = vadd.f32 %v2067, %v2139
  %v2141 = vpop.f32.mrb[0].mxu0
  %2142 = vdwg.mxu0
  %v2143 = vadd.s32 %v1824, 2
  %v2144 = vsub.s32 %v2143, 1
  %vm2145 = vcmp.eq.s32.totalorder %v1823, %v2144
  %vm2146 = vmand %vm1827, %vm2145
  %v2147 = vsel %vm2146, 1.0, 0.0
  %v2149 = vsel %vm1830, %v2147, 0
  %2151 = vmatprep.subr.mxu0 0.0
  %2152 = vmatpush1.msra.mxu0 %v1819
  %2153 = vmatprep.subr.mxu0 0.0
  %2154 = vmatpush1.msra.mxu0 0.0
  %2155 = vmatprep.subr.mxu0 0.0
  %2156 = vmatpush1.msra.mxu0 0.0
  %2157 = vmatprep.subr.mxu0 0.0
  %2158 = vmatpush1.msra.mxu0 0.0
  %2159 = vmatprep.subr.mxu0 0.0
  %2160 = vmatpush1.msra.mxu0 0.0
  %2161 = vmatprep.subr.mxu0 0.0
  %2162 = vmatpush1.msra.mxu0 0.0
  %2163 = vmatprep.subr.mxu0 0.0
  %2164 = vmatpush1.msra.mxu0 0.0
  %2165 = vmatprep.subr.mxu0 0.0
  %2166 = vmatpush1.msra.mxu0 0.0
  %2167 = vmatprep.subr.mxu0 0.0
  %2168 = vmatpush1.msra.mxu0 0.0
  %2169 = vmatprep.subr.mxu0 0.0
  %2170 = vmatpush1.msra.mxu0 0.0
  %2171 = vmatprep.subr.mxu0 0.0
  %2172 = vmatpush1.msra.mxu0 0.0
  %2173 = vmatprep.subr.mxu0 0.0
  %2174 = vmatpush1.msra.mxu0 0.0
  %2175 = vmatprep.subr.mxu0 0.0
  %2176 = vmatpush1.msra.mxu0 0.0
  %2177 = vmatprep.subr.mxu0 0.0
  %2178 = vmatpush1.msra.mxu0 0.0
  %2179 = vmatprep.subr.mxu0 0.0
  %2180 = vmatpush1.msra.mxu0 0.0
  %2181 = vmatprep.subr.mxu0 0.0
  %2182 = vmatpush1.msra.mxu0 0.0
  %2183 = vmatprep.subr.mxu0 0.0
  %2184 = vmatpush1.msra.mxu0 0.0
  %2185 = vmatprep.subr.mxu0 0.0
  %2186 = vmatpush1.msra.mxu0 0.0
  %2187 = vmatprep.subr.mxu0 0.0
  %2188 = vmatpush1.msra.mxu0 0.0
  %2189 = vmatprep.subr.mxu0 0.0
  %2190 = vmatpush1.msra.mxu0 0.0
  %2191 = vmatprep.subr.mxu0 0.0
  %2192 = vmatpush1.msra.mxu0 0.0
  %2193 = vmatprep.subr.mxu0 0.0
  %2194 = vmatpush1.msra.mxu0 0.0
  %2195 = vmatprep.subr.mxu0 0.0
  %2196 = vmatpush1.msra.mxu0 0.0
  %2197 = vmatprep.subr.mxu0 0.0
  %2198 = vmatpush1.msra.mxu0 0.0
  %2199 = vmatprep.subr.mxu0 0.0
  %2200 = vmatpush1.msra.mxu0 0.0
  %2201 = vmatprep.subr.mxu0 0.0
  %2202 = vmatpush1.msra.mxu0 0.0
  %2203 = vmatprep.subr.mxu0 0.0
  %2204 = vmatpush1.msra.mxu0 0.0
  %2205 = vmatprep.subr.mxu0 0.0
  %2206 = vmatpush1.msra.mxu0 0.0
  %2207 = vmatprep.subr.mxu0 0.0
  %2208 = vmatpush1.msra.mxu0 0.0
  %2209 = vmatprep.subr.mxu0 0.0
  %2210 = vmatpush1.msra.mxu0 0.0
  %2211 = vmatprep.subr.mxu0 0.0
  %2212 = vmatpush1.msra.mxu0 0.0
  %2213 = vmatprep.subr.mxu0 0.0
  %2214 = vmatpush1.msra.mxu0 0.0
  %2215 = vmatprep.mubr.f32.mxu0 0.0
  %2216 = vmatmul.mubr.f32.gmra.mrb[0].mxu0 %v2149
  %v2217 = vpop.f32.mrb[0].mxu0
  %v2218 = vadd.f32 0.0, %v2217
  %v2219 = vpop.f32.mrb[0].mxu0
  %2220 = vdwg.mxu0
  %s2221 = scalar_lea.vmem %s3, 128
  %v2222 = vld [vmem:[%s2221] sm:$0xff]
  %v2223 = vld [vmem:[%s2221 + $0x8] sm:$0xff]
  %v2224 = vld [vmem:[%s2221 + $0x10] sm:$0xff]
  %v2225 = vld [vmem:[%s2221 + $0x18] sm:$0xff]
  %v2226 = vld [vmem:[%s2221 + $0x20] sm:$0xff]
  %v2227 = vld [vmem:[%s2221 + $0x28] sm:$0xff]
  %v2228 = vld [vmem:[%s2221 + $0x30] sm:$0xff]
  %v2229 = vld [vmem:[%s2221 + $0x38] sm:$0xff]
  %v2231 = vsel %vm985, %v2218, 0
  %2233 = vmatprep.subr.mxu0 0.0
  %2234 = vmatpush1.msra.mxu0 %v2222
  %2235 = vmatprep.subr.mxu0 0.0
  %2236 = vmatpush1.msra.mxu0 %v2223
  %2237 = vmatprep.subr.mxu0 0.0
  %2238 = vmatpush1.msra.mxu0 %v2224
  %2239 = vmatprep.subr.mxu0 0.0
  %2240 = vmatpush1.msra.mxu0 %v2225
  %2241 = vmatprep.subr.mxu0 0.0
  %2242 = vmatpush1.msra.mxu0 %v2226
  %2243 = vmatprep.subr.mxu0 0.0
  %2244 = vmatpush1.msra.mxu0 %v2227
  %2245 = vmatprep.subr.mxu0 0.0
  %2246 = vmatpush1.msra.mxu0 %v2228
  %2247 = vmatprep.subr.mxu0 0.0
  %2248 = vmatpush1.msra.mxu0 %v2229
  %2249 = vmatprep.subr.mxu0 0.0
  %2250 = vmatpush1.msra.mxu0 0.0
  %2251 = vmatprep.subr.mxu0 0.0
  %2252 = vmatpush1.msra.mxu0 0.0
  %2253 = vmatprep.subr.mxu0 0.0
  %2254 = vmatpush1.msra.mxu0 0.0
  %2255 = vmatprep.subr.mxu0 0.0
  %2256 = vmatpush1.msra.mxu0 0.0
  %2257 = vmatprep.subr.mxu0 0.0
  %2258 = vmatpush1.msra.mxu0 0.0
  %2259 = vmatprep.subr.mxu0 0.0
  %2260 = vmatpush1.msra.mxu0 0.0
  %2261 = vmatprep.subr.mxu0 0.0
  %2262 = vmatpush1.msra.mxu0 0.0
  %2263 = vmatprep.subr.mxu0 0.0
  %2264 = vmatpush1.msra.mxu0 0.0
  %2265 = vmatprep.subr.mxu0 0.0
  %2266 = vmatpush1.msra.mxu0 0.0
  %2267 = vmatprep.subr.mxu0 0.0
  %2268 = vmatpush1.msra.mxu0 0.0
  %2269 = vmatprep.subr.mxu0 0.0
  %2270 = vmatpush1.msra.mxu0 0.0
  %2271 = vmatprep.subr.mxu0 0.0
  %2272 = vmatpush1.msra.mxu0 0.0
  %2273 = vmatprep.subr.mxu0 0.0
  %2274 = vmatpush1.msra.mxu0 0.0
  %2275 = vmatprep.subr.mxu0 0.0
  %2276 = vmatpush1.msra.mxu0 0.0
  %2277 = vmatprep.subr.mxu0 0.0
  %2278 = vmatpush1.msra.mxu0 0.0
  %2279 = vmatprep.subr.mxu0 0.0
  %2280 = vmatpush1.msra.mxu0 0.0
  %2281 = vmatprep.subr.mxu0 0.0
  %2282 = vmatpush1.msra.mxu0 0.0
  %2283 = vmatprep.subr.mxu0 0.0
  %2284 = vmatpush1.msra.mxu0 0.0
  %2285 = vmatprep.subr.mxu0 0.0
  %2286 = vmatpush1.msra.mxu0 0.0
  %2287 = vmatprep.subr.mxu0 0.0
  %2288 = vmatpush1.msra.mxu0 0.0
  %2289 = vmatprep.subr.mxu0 0.0
  %2290 = vmatpush1.msra.mxu0 0.0
  %2291 = vmatprep.subr.mxu0 0.0
  %2292 = vmatpush1.msra.mxu0 0.0
  %2293 = vmatprep.subr.mxu0 0.0
  %2294 = vmatpush1.msra.mxu0 0.0
  %2295 = vmatprep.subr.mxu0 0.0
  %2296 = vmatpush1.msra.mxu0 0.0
  %2297 = vmatprep.mubr.f32.mxu0 0.0
  %2298 = vmatmul.mubr.f32.gmra.mrb[0].mxu0 %v2231
  %v2299 = vpop.f32.mrb[0].mxu0
  %v2300 = vadd.f32 0.0, %v2299
  %v2301 = vpop.f32.mrb[0].mxu0
  %2302 = vdwg.mxu0
  %v2303 = vadd.f32 %v2140, %v2300
  %v2304 = vadd.s32 %v1824, 3
  %v2305 = vsub.s32 %v2304, 1
  %vm2306 = vcmp.eq.s32.totalorder %v1823, %v2305
  %vm2307 = vmand %vm1827, %vm2306
  %v2308 = vsel %vm2307, 1.0, 0.0
  %v2310 = vsel %vm1830, %v2308, 0
  %2312 = vmatprep.subr.mxu0 0.0
  %2313 = vmatpush1.msra.mxu0 %v1819
  %2314 = vmatprep.subr.mxu0 0.0
  %2315 = vmatpush1.msra.mxu0 0.0
  %2316 = vmatprep.subr.mxu0 0.0
  %2317 = vmatpush1.msra.mxu0 0.0
  %2318 = vmatprep.subr.mxu0 0.0
  %2319 = vmatpush1.msra.mxu0 0.0
  %2320 = vmatprep.subr.mxu0 0.0
  %2321 = vmatpush1.msra.mxu0 0.0
  %2322 = vmatprep.subr.mxu0 0.0
  %2323 = vmatpush1.msra.mxu0 0.0
  %2324 = vmatprep.subr.mxu0 0.0
  %2325 = vmatpush1.msra.mxu0 0.0
  %2326 = vmatprep.subr.mxu0 0.0
  %2327 = vmatpush1.msra.mxu0 0.0
  %2328 = vmatprep.subr.mxu0 0.0
  %2329 = vmatpush1.msra.mxu0 0.0
  %2330 = vmatprep.subr.mxu0 0.0
  %2331 = vmatpush1.msra.mxu0 0.0
  %2332 = vmatprep.subr.mxu0 0.0
  %2333 = vmatpush1.msra.mxu0 0.0
  %2334 = vmatprep.subr.mxu0 0.0
  %2335 = vmatpush1.msra.mxu0 0.0
  %2336 = vmatprep.subr.mxu0 0.0
  %2337 = vmatpush1.msra.mxu0 0.0
  %2338 = vmatprep.subr.mxu0 0.0
  %2339 = vmatpush1.msra.mxu0 0.0
  %2340 = vmatprep.subr.mxu0 0.0
  %2341 = vmatpush1.msra.mxu0 0.0
  %2342 = vmatprep.subr.mxu0 0.0
  %2343 = vmatpush1.msra.mxu0 0.0
  %2344 = vmatprep.subr.mxu0 0.0
  %2345 = vmatpush1.msra.mxu0 0.0
  %2346 = vmatprep.subr.mxu0 0.0
  %2347 = vmatpush1.msra.mxu0 0.0
  %2348 = vmatprep.subr.mxu0 0.0
  %2349 = vmatpush1.msra.mxu0 0.0
  %2350 = vmatprep.subr.mxu0 0.0
  %2351 = vmatpush1.msra.mxu0 0.0
  %2352 = vmatprep.subr.mxu0 0.0
  %2353 = vmatpush1.msra.mxu0 0.0
  %2354 = vmatprep.subr.mxu0 0.0
  %2355 = vmatpush1.msra.mxu0 0.0
  %2356 = vmatprep.subr.mxu0 0.0
  %2357 = vmatpush1.msra.mxu0 0.0
  %2358 = vmatprep.subr.mxu0 0.0
  %2359 = vmatpush1.msra.mxu0 0.0
  %2360 = vmatprep.subr.mxu0 0.0
  %2361 = vmatpush1.msra.mxu0 0.0
  %2362 = vmatprep.subr.mxu0 0.0
  %2363 = vmatpush1.msra.mxu0 0.0
  %2364 = vmatprep.subr.mxu0 0.0
  %2365 = vmatpush1.msra.mxu0 0.0
  %2366 = vmatprep.subr.mxu0 0.0
  %2367 = vmatpush1.msra.mxu0 0.0
  %2368 = vmatprep.subr.mxu0 0.0
  %2369 = vmatpush1.msra.mxu0 0.0
  %2370 = vmatprep.subr.mxu0 0.0
  %2371 = vmatpush1.msra.mxu0 0.0
  %2372 = vmatprep.subr.mxu0 0.0
  %2373 = vmatpush1.msra.mxu0 0.0
  %2374 = vmatprep.subr.mxu0 0.0
  %2375 = vmatpush1.msra.mxu0 0.0
  %2376 = vmatprep.mubr.f32.mxu0 0.0
  %2377 = vmatmul.mubr.f32.gmra.mrb[0].mxu0 %v2310
  %v2378 = vpop.f32.mrb[0].mxu0
  %v2379 = vadd.f32 0.0, %v2378
  %v2380 = vpop.f32.mrb[0].mxu0
  %2381 = vdwg.mxu0
  %s2382 = scalar_lea.vmem %s3, 192
  %v2383 = vld [vmem:[%s2382] sm:$0xff]
  %v2384 = vld [vmem:[%s2382 + $0x8] sm:$0xff]
  %v2385 = vld [vmem:[%s2382 + $0x10] sm:$0xff]
  %v2386 = vld [vmem:[%s2382 + $0x18] sm:$0xff]
  %v2387 = vld [vmem:[%s2382 + $0x20] sm:$0xff]
  %v2388 = vld [vmem:[%s2382 + $0x28] sm:$0xff]
  %v2389 = vld [vmem:[%s2382 + $0x30] sm:$0xff]
  %v2390 = vld [vmem:[%s2382 + $0x38] sm:$0xff]
  %v2392 = vsel %vm985, %v2379, 0
  %2394 = vmatprep.subr.mxu0 0.0
  %2395 = vmatpush1.msra.mxu0 %v2383
  %2396 = vmatprep.subr.mxu0 0.0
  %2397 = vmatpush1.msra.mxu0 %v2384
  %2398 = vmatprep.subr.mxu0 0.0
  %2399 = vmatpush1.msra.mxu0 %v2385
  %2400 = vmatprep.subr.mxu0 0.0
  %2401 = vmatpush1.msra.mxu0 %v2386
  %2402 = vmatprep.subr.mxu0 0.0
  %2403 = vmatpush1.msra.mxu0 %v2387
  %2404 = vmatprep.subr.mxu0 0.0
  %2405 = vmatpush1.msra.mxu0 %v2388
  %2406 = vmatprep.subr.mxu0 0.0
  %2407 = vmatpush1.msra.mxu0 %v2389
  %2408 = vmatprep.subr.mxu0 0.0
  %2409 = vmatpush1.msra.mxu0 %v2390
  %2410 = vmatprep.subr.mxu0 0.0
  %2411 = vmatpush1.msra.mxu0 0.0
  %2412 = vmatprep.subr.mxu0 0.0
  %2413 = vmatpush1.msra.mxu0 0.0
  %2414 = vmatprep.subr.mxu0 0.0
  %2415 = vmatpush1.msra.mxu0 0.0
  %2416 = vmatprep.subr.mxu0 0.0
  %2417 = vmatpush1.msra.mxu0 0.0
  %2418 = vmatprep.subr.mxu0 0.0
  %2419 = vmatpush1.msra.mxu0 0.0
  %2420 = vmatprep.subr.mxu0 0.0
  %2421 = vmatpush1.msra.mxu0 0.0
  %2422 = vmatprep.subr.mxu0 0.0
  %2423 = vmatpush1.msra.mxu0 0.0
  %2424 = vmatprep.subr.mxu0 0.0
  %2425 = vmatpush1.msra.mxu0 0.0
  %2426 = vmatprep.subr.mxu0 0.0
  %2427 = vmatpush1.msra.mxu0 0.0
  %2428 = vmatprep.subr.mxu0 0.0
  %2429 = vmatpush1.msra.mxu0 0.0
  %2430 = vmatprep.subr.mxu0 0.0
  %2431 = vmatpush1.msra.mxu0 0.0
  %2432 = vmatprep.subr.mxu0 0.0
  %2433 = vmatpush1.msra.mxu0 0.0
  %2434 = vmatprep.subr.mxu0 0.0
  %2435 = vmatpush1.msra.mxu0 0.0
  %2436 = vmatprep.subr.mxu0 0.0
  %2437 = vmatpush1.msra.mxu0 0.0
  %2438 = vmatprep.subr.mxu0 0.0
  %2439 = vmatpush1.msra.mxu0 0.0
  %2440 = vmatprep.subr.mxu0 0.0
  %2441 = vmatpush1.msra.mxu0 0.0
  %2442 = vmatprep.subr.mxu0 0.0
  %2443 = vmatpush1.msra.mxu0 0.0
  %2444 = vmatprep.subr.mxu0 0.0
  %2445 = vmatpush1.msra.mxu0 0.0
  %2446 = vmatprep.subr.mxu0 0.0
  %2447 = vmatpush1.msra.mxu0 0.0
  %2448 = vmatprep.subr.mxu0 0.0
  %2449 = vmatpush1.msra.mxu0 0.0
  %2450 = vmatprep.subr.mxu0 0.0
  %2451 = vmatpush1.msra.mxu0 0.0
  %2452 = vmatprep.subr.mxu0 0.0
  %2453 = vmatpush1.msra.mxu0 0.0
  %2454 = vmatprep.subr.mxu0 0.0
  %2455 = vmatpush1.msra.mxu0 0.0
  %2456 = vmatprep.subr.mxu0 0.0
  %2457 = vmatpush1.msra.mxu0 0.0
  %2458 = vmatprep.mubr.f32.mxu0 0.0
  %2459 = vmatmul.mubr.f32.gmra.mrb[0].mxu0 %v2392
  %v2460 = vpop.f32.mrb[0].mxu0
  %v2461 = vadd.f32 0.0, %v2460
  %v2462 = vpop.f32.mrb[0].mxu0
  %2463 = vdwg.mxu0
  %v2464 = vadd.f32 %v2303, %v2461
  %v2465 = vld [vmem:[%s11] sm:$0x1]
  %v2466 = vld [vmem:[%s12] sm:$0x1]
  %v2467 = vand.u32 %v73, 31
  %v2468 = vand.u32 %v74, 31
  %v2469 = vand.u32 %v1456, 31
  %v2470 = vand.u32 %v1457, 31
  %v2471 = vand.u32 %v1458, 31
  %v2472 = vand.u32 %v1459, 31
  %v2473 = vand.u32 %v1460, 31
  %v2474 = vand.u32 %v1461, 31
  %vm2475 = vcmp.eq.s32.totalorder %v2467, %v76
  %vm2476 = vcmp.eq.s32.totalorder %v2468, %v76
  %vm2477 = vcmp.eq.s32.totalorder %v2469, %v76
  %vm2478 = vcmp.eq.s32.totalorder %v2470, %v76
  %vm2479 = vcmp.eq.s32.totalorder %v2471, %v76
  %vm2480 = vcmp.eq.s32.totalorder %v2472, %v76
  %vm2481 = vcmp.eq.s32.totalorder %v2473, %v76
  %vm2482 = vcmp.eq.s32.totalorder %v2474, %v76
  %v2483 = vsel %vm2475, 1.0, 0.0
  %v2484 = vsel %vm2476, 1.0, 0.0
  %v2485 = vsel %vm2477, 1.0, 0.0
  %v2486 = vsel %vm2478, 1.0, 0.0
  %v2487 = vsel %vm2479, 1.0, 0.0
  %v2488 = vsel %vm2480, 1.0, 0.0
  %v2489 = vsel %vm2481, 1.0, 0.0
  %v2490 = vsel %vm2482, 1.0, 0.0
  %v2491 = vand.u32 %v76, 31
  %vm2492 = vcmp.eq.s32.totalorder %v2491, %v73
  %vm2493 = vcmp.eq.s32.totalorder %v2491, %v74
  %vm2494 = vcmp.eq.s32.totalorder %v2491, %v1456
  %vm2495 = vcmp.eq.s32.totalorder %v2491, %v1457
  %v2496 = vsel %vm2492, 1.0, 0.0
  %v2497 = vsel %vm2493, 1.0, 0.0
  %v2498 = vsel %vm2494, 1.0, 0.0
  %v2499 = vsel %vm2495, 1.0, 0.0
  %vm2500 = vcmask 519168
  %v2501 = vsel %vm2500, %v2464, 0.0
  %v2502 = vrot.slane %v2501, 4
  %v2503 = vadd.f32 %v2501, %v2502
  %v2504 = vrot.slane %v2503, 2
  %v2505 = vadd.f32 %v2503, %v2504
  %v2506 = vrot.slane %v2505, 1
  %v2507 = vadd.f32 %v2505, %v2506
  %v2508 = vmul.f32 %v2464, %v2464
  %v2509 = vsel %vm2500, %v2508, 0.0
  %v2510 = vrot.slane %v2509, 4
  %v2511 = vadd.f32 %v2509, %v2510
  %v2512 = vrot.slane %v2511, 2
  %v2513 = vadd.f32 %v2511, %v2512
  %v2514 = vrot.slane %v2513, 1
  %v2515 = vadd.f32 %v2513, %v2514
  %v2517 = vsel %vm985, %v2507, 0
  %2519 = vmatprep.subr.mxu0 0.0
  %2520 = vmatpush1.msra.mxu0 %v2483
  %2521 = vmatprep.subr.mxu0 0.0
  %2522 = vmatpush1.msra.mxu0 %v2484
  %2523 = vmatprep.subr.mxu0 0.0
  %2524 = vmatpush1.msra.mxu0 %v2485
  %2525 = vmatprep.subr.mxu0 0.0
  %2526 = vmatpush1.msra.mxu0 %v2486
  %2527 = vmatprep.subr.mxu0 0.0
  %2528 = vmatpush1.msra.mxu0 %v2487
  %2529 = vmatprep.subr.mxu0 0.0
  %2530 = vmatpush1.msra.mxu0 %v2488
  %2531 = vmatprep.subr.mxu0 0.0
  %2532 = vmatpush1.msra.mxu0 %v2489
  %2533 = vmatprep.subr.mxu0 0.0
  %2534 = vmatpush1.msra.mxu0 %v2490
  %2535 = vmatprep.subr.mxu0 0.0
  %2536 = vmatpush1.msra.mxu0 0.0
  %2537 = vmatprep.subr.mxu0 0.0
  %2538 = vmatpush1.msra.mxu0 0.0
  %2539 = vmatprep.subr.mxu0 0.0
  %2540 = vmatpush1.msra.mxu0 0.0
  %2541 = vmatprep.subr.mxu0 0.0
  %2542 = vmatpush1.msra.mxu0 0.0
  %2543 = vmatprep.subr.mxu0 0.0
  %2544 = vmatpush1.msra.mxu0 0.0
  %2545 = vmatprep.subr.mxu0 0.0
  %2546 = vmatpush1.msra.mxu0 0.0
  %2547 = vmatprep.subr.mxu0 0.0
  %2548 = vmatpush1.msra.mxu0 0.0
  %2549 = vmatprep.subr.mxu0 0.0
  %2550 = vmatpush1.msra.mxu0 0.0
  %2551 = vmatprep.subr.mxu0 0.0
  %2552 = vmatpush1.msra.mxu0 0.0
  %2553 = vmatprep.subr.mxu0 0.0
  %2554 = vmatpush1.msra.mxu0 0.0
  %2555 = vmatprep.subr.mxu0 0.0
  %2556 = vmatpush1.msra.mxu0 0.0
  %2557 = vmatprep.subr.mxu0 0.0
  %2558 = vmatpush1.msra.mxu0 0.0
  %2559 = vmatprep.subr.mxu0 0.0
  %2560 = vmatpush1.msra.mxu0 0.0
  %2561 = vmatprep.subr.mxu0 0.0
  %2562 = vmatpush1.msra.mxu0 0.0
  %2563 = vmatprep.subr.mxu0 0.0
  %2564 = vmatpush1.msra.mxu0 0.0
  %2565 = vmatprep.subr.mxu0 0.0
  %2566 = vmatpush1.msra.mxu0 0.0
  %2567 = vmatprep.subr.mxu0 0.0
  %2568 = vmatpush1.msra.mxu0 0.0
  %2569 = vmatprep.subr.mxu0 0.0
  %2570 = vmatpush1.msra.mxu0 0.0
  %2571 = vmatprep.subr.mxu0 0.0
  %2572 = vmatpush1.msra.mxu0 0.0
  %2573 = vmatprep.subr.mxu0 0.0
  %2574 = vmatpush1.msra.mxu0 0.0
  %2575 = vmatprep.subr.mxu0 0.0
  %2576 = vmatpush1.msra.mxu0 0.0
  %2577 = vmatprep.subr.mxu0 0.0
  %2578 = vmatpush1.msra.mxu0 0.0
  %2579 = vmatprep.subr.mxu0 0.0
  %2580 = vmatpush1.msra.mxu0 0.0
  %2581 = vmatprep.subr.mxu0 0.0
  %2582 = vmatpush1.msra.mxu0 0.0
  %2583 = vmatprep.mubr.f32.mxu0 0.0
  %2584 = vmatmul.mubr.f32.gmra.mrb[0].mxu0 %v2517
  %v2585 = vpop.f32.mrb[0].mxu0
  %v2586 = vadd.f32 0.0, %v2585
  %v2587 = vpop.f32.mrb[0].mxu0
  %2588 = vdwg.mxu0
  %v2589 = vrcp.pop 8.0
  %v2590 = vmul.f32 %v2586, %v2589
  %v2592 = vsel %vm985, %v2515, 0
  %2594 = vmatprep.subr.mxu0 0.0
  %2595 = vmatpush1.msra.mxu0 %v2483
  %2596 = vmatprep.subr.mxu0 0.0
  %2597 = vmatpush1.msra.mxu0 %v2484
  %2598 = vmatprep.subr.mxu0 0.0
  %2599 = vmatpush1.msra.mxu0 %v2485
  %2600 = vmatprep.subr.mxu0 0.0
  %2601 = vmatpush1.msra.mxu0 %v2486
  %2602 = vmatprep.subr.mxu0 0.0
  %2603 = vmatpush1.msra.mxu0 %v2487
  %2604 = vmatprep.subr.mxu0 0.0
  %2605 = vmatpush1.msra.mxu0 %v2488
  %2606 = vmatprep.subr.mxu0 0.0
  %2607 = vmatpush1.msra.mxu0 %v2489
  %2608 = vmatprep.subr.mxu0 0.0
  %2609 = vmatpush1.msra.mxu0 %v2490
  %2610 = vmatprep.subr.mxu0 0.0
  %2611 = vmatpush1.msra.mxu0 0.0
  %2612 = vmatprep.subr.mxu0 0.0
  %2613 = vmatpush1.msra.mxu0 0.0
  %2614 = vmatprep.subr.mxu0 0.0
  %2615 = vmatpush1.msra.mxu0 0.0
  %2616 = vmatprep.subr.mxu0 0.0
  %2617 = vmatpush1.msra.mxu0 0.0
  %2618 = vmatprep.subr.mxu0 0.0
  %2619 = vmatpush1.msra.mxu0 0.0
  %2620 = vmatprep.subr.mxu0 0.0
  %2621 = vmatpush1.msra.mxu0 0.0
  %2622 = vmatprep.subr.mxu0 0.0
  %2623 = vmatpush1.msra.mxu0 0.0
  %2624 = vmatprep.subr.mxu0 0.0
  %2625 = vmatpush1.msra.mxu0 0.0
  %2626 = vmatprep.subr.mxu0 0.0
  %2627 = vmatpush1.msra.mxu0 0.0
  %2628 = vmatprep.subr.mxu0 0.0
  %2629 = vmatpush1.msra.mxu0 0.0
  %2630 = vmatprep.subr.mxu0 0.0
  %2631 = vmatpush1.msra.mxu0 0.0
  %2632 = vmatprep.subr.mxu0 0.0
  %2633 = vmatpush1.msra.mxu0 0.0
  %2634 = vmatprep.subr.mxu0 0.0
  %2635 = vmatpush1.msra.mxu0 0.0
  %2636 = vmatprep.subr.mxu0 0.0
  %2637 = vmatpush1.msra.mxu0 0.0
  %2638 = vmatprep.subr.mxu0 0.0
  %2639 = vmatpush1.msra.mxu0 0.0
  %2640 = vmatprep.subr.mxu0 0.0
  %2641 = vmatpush1.msra.mxu0 0.0
  %2642 = vmatprep.subr.mxu0 0.0
  %2643 = vmatpush1.msra.mxu0 0.0
  %2644 = vmatprep.subr.mxu0 0.0
  %2645 = vmatpush1.msra.mxu0 0.0
  %2646 = vmatprep.subr.mxu0 0.0
  %2647 = vmatpush1.msra.mxu0 0.0
  %2648 = vmatprep.subr.mxu0 0.0
  %2649 = vmatpush1.msra.mxu0 0.0
  %2650 = vmatprep.subr.mxu0 0.0
  %2651 = vmatpush1.msra.mxu0 0.0
  %2652 = vmatprep.subr.mxu0 0.0
  %2653 = vmatpush1.msra.mxu0 0.0
  %2654 = vmatprep.subr.mxu0 0.0
  %2655 = vmatpush1.msra.mxu0 0.0
  %2656 = vmatprep.subr.mxu0 0.0
  %2657 = vmatpush1.msra.mxu0 0.0
  %2658 = vmatprep.mubr.f32.mxu0 0.0
  %2659 = vmatmul.mubr.f32.gmra.mrb[0].mxu0 %v2592
  %v2660 = vpop.f32.mrb[0].mxu0
  %v2661 = vadd.f32 0.0, %v2660
  %v2662 = vpop.f32.mrb[0].mxu0
  %2663 = vdwg.mxu0
  %v2664 = vmul.f32 %v2661, %v2589
  %v2665 = vmul.f32 %v2590, %v2590
  %v2666 = vsub.f32 %v2664, %v2665
  %v2667 = vadd.f32 %v2666, 1e-05
  %v2668 = vrsqrt.pop %v2667
  %v2669 = vmul.f32 %v2465, %v2668
  %v2670 = vmul.f32 %v2590, %v2669
  %v2671 = vsub.f32 %v2466, %v2670
  %v2673 = vsel %vm95, %v2669, 0
  %2675 = vmatprep.subr.mxu0 0.0
  %2676 = vmatpush1.msra.mxu0 %v2496
  %2677 = vmatprep.subr.mxu0 0.0
  %2678 = vmatpush1.msra.mxu0 %v2497
  %2679 = vmatprep.subr.mxu0 0.0
  %2680 = vmatpush1.msra.mxu0 %v2498
  %2681 = vmatprep.subr.mxu0 0.0
  %2682 = vmatpush1.msra.mxu0 %v2499
  %2683 = vmatprep.subr.mxu0 0.0
  %2684 = vmatpush1.msra.mxu0 0.0
  %2685 = vmatprep.subr.mxu0 0.0
  %2686 = vmatpush1.msra.mxu0 0.0
  %2687 = vmatprep.subr.mxu0 0.0
  %2688 = vmatpush1.msra.mxu0 0.0
  %2689 = vmatprep.subr.mxu0 0.0
  %2690 = vmatpush1.msra.mxu0 0.0
  %2691 = vmatprep.subr.mxu0 0.0
  %2692 = vmatpush1.msra.mxu0 0.0
  %2693 = vmatprep.subr.mxu0 0.0
  %2694 = vmatpush1.msra.mxu0 0.0
  %2695 = vmatprep.subr.mxu0 0.0
  %2696 = vmatpush1.msra.mxu0 0.0
  %2697 = vmatprep.subr.mxu0 0.0
  %2698 = vmatpush1.msra.mxu0 0.0
  %2699 = vmatprep.subr.mxu0 0.0
  %2700 = vmatpush1.msra.mxu0 0.0
  %2701 = vmatprep.subr.mxu0 0.0
  %2702 = vmatpush1.msra.mxu0 0.0
  %2703 = vmatprep.subr.mxu0 0.0
  %2704 = vmatpush1.msra.mxu0 0.0
  %2705 = vmatprep.subr.mxu0 0.0
  %2706 = vmatpush1.msra.mxu0 0.0
  %2707 = vmatprep.subr.mxu0 0.0
  %2708 = vmatpush1.msra.mxu0 0.0
  %2709 = vmatprep.subr.mxu0 0.0
  %2710 = vmatpush1.msra.mxu0 0.0
  %2711 = vmatprep.subr.mxu0 0.0
  %2712 = vmatpush1.msra.mxu0 0.0
  %2713 = vmatprep.subr.mxu0 0.0
  %2714 = vmatpush1.msra.mxu0 0.0
  %2715 = vmatprep.subr.mxu0 0.0
  %2716 = vmatpush1.msra.mxu0 0.0
  %2717 = vmatprep.subr.mxu0 0.0
  %2718 = vmatpush1.msra.mxu0 0.0
  %2719 = vmatprep.subr.mxu0 0.0
  %2720 = vmatpush1.msra.mxu0 0.0
  %2721 = vmatprep.subr.mxu0 0.0
  %2722 = vmatpush1.msra.mxu0 0.0
  %2723 = vmatprep.subr.mxu0 0.0
  %2724 = vmatpush1.msra.mxu0 0.0
  %2725 = vmatprep.subr.mxu0 0.0
  %2726 = vmatpush1.msra.mxu0 0.0
  %2727 = vmatprep.subr.mxu0 0.0
  %2728 = vmatpush1.msra.mxu0 0.0
  %2729 = vmatprep.subr.mxu0 0.0
  %2730 = vmatpush1.msra.mxu0 0.0
  %2731 = vmatprep.subr.mxu0 0.0
  %2732 = vmatpush1.msra.mxu0 0.0
  %2733 = vmatprep.subr.mxu0 0.0
  %2734 = vmatpush1.msra.mxu0 0.0
  %2735 = vmatprep.subr.mxu0 0.0
  %2736 = vmatpush1.msra.mxu0 0.0
  %2737 = vmatprep.subr.mxu0 0.0
  %2738 = vmatpush1.msra.mxu0 0.0
  %2739 = vmatprep.mubr.f32.mxu0 0.0
  %2740 = vmatmul.mubr.f32.gmra.mrb[0].mxu0 %v2673
  %v2741 = vpop.f32.mrb[0].mxu0
  %v2742 = vadd.f32 0.0, %v2741
  %v2743 = vpop.f32.mrb[0].mxu0
  %2744 = vdwg.mxu0
  %v2746 = vsel %vm95, %v2671, 0
  %2748 = vmatprep.subr.mxu0 0.0
  %2749 = vmatpush1.msra.mxu0 %v2496
  %2750 = vmatprep.subr.mxu0 0.0
  %2751 = vmatpush1.msra.mxu0 %v2497
  %2752 = vmatprep.subr.mxu0 0.0
  %2753 = vmatpush1.msra.mxu0 %v2498
  %2754 = vmatprep.subr.mxu0 0.0
  %2755 = vmatpush1.msra.mxu0 %v2499
  %2756 = vmatprep.subr.mxu0 0.0
  %2757 = vmatpush1.msra.mxu0 0.0
  %2758 = vmatprep.subr.mxu0 0.0
  %2759 = vmatpush1.msra.mxu0 0.0
  %2760 = vmatprep.subr.mxu0 0.0
  %2761 = vmatpush1.msra.mxu0 0.0
  %2762 = vmatprep.subr.mxu0 0.0
  %2763 = vmatpush1.msra.mxu0 0.0
  %2764 = vmatprep.subr.mxu0 0.0
  %2765 = vmatpush1.msra.mxu0 0.0
  %2766 = vmatprep.subr.mxu0 0.0
  %2767 = vmatpush1.msra.mxu0 0.0
  %2768 = vmatprep.subr.mxu0 0.0
  %2769 = vmatpush1.msra.mxu0 0.0
  %2770 = vmatprep.subr.mxu0 0.0
  %2771 = vmatpush1.msra.mxu0 0.0
  %2772 = vmatprep.subr.mxu0 0.0
  %2773 = vmatpush1.msra.mxu0 0.0
  %2774 = vmatprep.subr.mxu0 0.0
  %2775 = vmatpush1.msra.mxu0 0.0
  %2776 = vmatprep.subr.mxu0 0.0
  %2777 = vmatpush1.msra.mxu0 0.0
  %2778 = vmatprep.subr.mxu0 0.0
  %2779 = vmatpush1.msra.mxu0 0.0
  %2780 = vmatprep.subr.mxu0 0.0
  %2781 = vmatpush1.msra.mxu0 0.0
  %2782 = vmatprep.subr.mxu0 0.0
  %2783 = vmatpush1.msra.mxu0 0.0
  %2784 = vmatprep.subr.mxu0 0.0
  %2785 = vmatpush1.msra.mxu0 0.0
  %2786 = vmatprep.subr.mxu0 0.0
  %2787 = vmatpush1.msra.mxu0 0.0
  %2788 = vmatprep.subr.mxu0 0.0
  %2789 = vmatpush1.msra.mxu0 0.0
  %2790 = vmatprep.subr.mxu0 0.0
  %2791 = vmatpush1.msra.mxu0 0.0
  %2792 = vmatprep.subr.mxu0 0.0
  %2793 = vmatpush1.msra.mxu0 0.0
  %2794 = vmatprep.subr.mxu0 0.0
  %2795 = vmatpush1.msra.mxu0 0.0
  %2796 = vmatprep.subr.mxu0 0.0
  %2797 = vmatpush1.msra.mxu0 0.0
  %2798 = vmatprep.subr.mxu0 0.0
  %2799 = vmatpush1.msra.mxu0 0.0
  %2800 = vmatprep.subr.mxu0 0.0
  %2801 = vmatpush1.msra.mxu0 0.0
  %2802 = vmatprep.subr.mxu0 0.0
  %2803 = vmatpush1.msra.mxu0 0.0
  %2804 = vmatprep.subr.mxu0 0.0
  %2805 = vmatpush1.msra.mxu0 0.0
  %2806 = vmatprep.subr.mxu0 0.0
  %2807 = vmatpush1.msra.mxu0 0.0
  %2808 = vmatprep.subr.mxu0 0.0
  %2809 = vmatpush1.msra.mxu0 0.0
  %2810 = vmatprep.subr.mxu0 0.0
  %2811 = vmatpush1.msra.mxu0 0.0
  %2812 = vmatprep.mubr.f32.mxu0 0.0
  %2813 = vmatmul.mubr.f32.gmra.mrb[0].mxu0 %v2746
  %v2814 = vpop.f32.mrb[0].mxu0
  %v2815 = vadd.f32 0.0, %v2814
  %v2816 = vpop.f32.mrb[0].mxu0
  %2817 = vdwg.mxu0
  %v2818 = vlaneseq
  %v2819 = vshrl.u32 %v2818, 7
  %v2820 = vsub.s32 0, %v2819
  %v2821 = vrot.slane %v2742, %v2820
  %v2822 = vmul.f32 %v2464, %v2821
  %v2823 = vlaneseq
  %v2824 = vshrl.u32 %v2823, 7
  %v2825 = vsub.s32 0, %v2824
  %v2826 = vrot.slane %v2815, %v2825
  %v2827 = vadd.f32 %v2822, %v2826
  %vm2828 = vcmp.gt.f32.partialorder %v2827, 0.0
  %v2829 = vmul.f32 %v2827, 0.2
  %v2830 = vsel %vm2828, %v2827, %v2829
  %v2831 = vshra.s32 %v76, 1
  %v2832 = vand.u32 %v76, 1
  %vm2833 = vcmp.eq.s32.totalorder %v2832, 4294967295
  %vm2834 = vcmp.eq.s32.totalorder %v73, %v2831
  %vm2835 = vmand %vm2834, %vm2833
  %v2836 = vsel %vm2835, 1.0, 0.0
  %vm2837 = vcmask 31744
  %v2839 = vsel %vm2837, %v2836, 0
  %vm2841 = vcmask 1043456
  %v2843 = vsel %vm2841, %v2830, 0
  %2845 = vmatprep.subr.mxu0 0.0
  %2846 = vmatpush1.msra.mxu0 %v2843
  %2847 = vmatprep.subr.mxu0 0.0
  %2848 = vmatpush1.msra.mxu0 0.0
  %2849 = vmatprep.subr.mxu0 0.0
  %2850 = vmatpush1.msra.mxu0 0.0
  %2851 = vmatprep.subr.mxu0 0.0
  %2852 = vmatpush1.msra.mxu0 0.0
  %2853 = vmatprep.subr.mxu0 0.0
  %2854 = vmatpush1.msra.mxu0 0.0
  %2855 = vmatprep.subr.mxu0 0.0
  %2856 = vmatpush1.msra.mxu0 0.0
  %2857 = vmatprep.subr.mxu0 0.0
  %2858 = vmatpush1.msra.mxu0 0.0
  %2859 = vmatprep.subr.mxu0 0.0
  %2860 = vmatpush1.msra.mxu0 0.0
  %2861 = vmatprep.subr.mxu0 0.0
  %2862 = vmatpush1.msra.mxu0 0.0
  %2863 = vmatprep.subr.mxu0 0.0
  %2864 = vmatpush1.msra.mxu0 0.0
  %2865 = vmatprep.subr.mxu0 0.0
  %2866 = vmatpush1.msra.mxu0 0.0
  %2867 = vmatprep.subr.mxu0 0.0
  %2868 = vmatpush1.msra.mxu0 0.0
  %2869 = vmatprep.subr.mxu0 0.0
  %2870 = vmatpush1.msra.mxu0 0.0
  %2871 = vmatprep.subr.mxu0 0.0
  %2872 = vmatpush1.msra.mxu0 0.0
  %2873 = vmatprep.subr.mxu0 0.0
  %2874 = vmatpush1.msra.mxu0 0.0
  %2875 = vmatprep.subr.mxu0 0.0
  %2876 = vmatpush1.msra.mxu0 0.0
  %2877 = vmatprep.subr.mxu0 0.0
  %2878 = vmatpush1.msra.mxu0 0.0
  %2879 = vmatprep.subr.mxu0 0.0
  %2880 = vmatpush1.msra.mxu0 0.0
  %2881 = vmatprep.subr.mxu0 0.0
  %2882 = vmatpush1.msra.mxu0 0.0
  %2883 = vmatprep.subr.mxu0 0.0
  %2884 = vmatpush1.msra.mxu0 0.0
  %2885 = vmatprep.subr.mxu0 0.0
  %2886 = vmatpush1.msra.mxu0 0.0
  %2887 = vmatprep.subr.mxu0 0.0
  %2888 = vmatpush1.msra.mxu0 0.0
  %2889 = vmatprep.subr.mxu0 0.0
  %2890 = vmatpush1.msra.mxu0 0.0
  %2891 = vmatprep.subr.mxu0 0.0
  %2892 = vmatpush1.msra.mxu0 0.0
  %2893 = vmatprep.subr.mxu0 0.0
  %2894 = vmatpush1.msra.mxu0 0.0
  %2895 = vmatprep.subr.mxu0 0.0
  %2896 = vmatpush1.msra.mxu0 0.0
  %2897 = vmatprep.subr.mxu0 0.0
  %2898 = vmatpush1.msra.mxu0 0.0
  %2899 = vmatprep.subr.mxu0 0.0
  %2900 = vmatpush1.msra.mxu0 0.0
  %2901 = vmatprep.subr.mxu0 0.0
  %2902 = vmatpush1.msra.mxu0 0.0
  %2903 = vmatprep.subr.mxu0 0.0
  %2904 = vmatpush1.msra.mxu0 0.0
  %2905 = vmatprep.subr.mxu0 0.0
  %2906 = vmatpush1.msra.mxu0 0.0
  %2907 = vmatprep.subr.mxu0 0.0
  %2908 = vmatpush1.msra.mxu0 0.0
  %2909 = vmatprep.mubr.f32.mxu0 0.0
  %2910 = vmatmul.mubr.f32.gmra.mrb[0].mxu0 %v2839
  %v2911 = vpop.f32.mrb[0].mxu0
  %v2912 = vadd.f32 0.0, %v2911
  %v2913 = vpop.f32.mrb[0].mxu0
  %2914 = vdwg.mxu0
  %v2915 = vld [vmem:[%s4] sm:$0xff]
  %v2916 = vld [vmem:[%s4 + $0x8] sm:$0xff]
  %v2917 = vld [vmem:[%s4 + $0x10] sm:$0xff]
  %v2918 = vld [vmem:[%s4 + $0x18] sm:$0xff]
  %v2919 = vld [vmem:[%s4 + $0x20] sm:$0xff]
  %v2920 = vld [vmem:[%s4 + $0x28] sm:$0xff]
  %v2921 = vld [vmem:[%s4 + $0x30] sm:$0xff]
  %v2922 = vld [vmem:[%s4 + $0x38] sm:$0xff]
  %vm2923 = vcmp.eq.s32.totalorder %v2832, 0
  %vm2924 = vmand %vm2834, %vm2923
  %v2925 = vsel %vm2924, 1.0, 0.0
  %v2927 = vsel %vm2837, %v2925, 0
  %2929 = vmatprep.subr.mxu0 0.0
  %2930 = vmatpush1.msra.mxu0 %v2843
  %2931 = vmatprep.subr.mxu0 0.0
  %2932 = vmatpush1.msra.mxu0 0.0
  %2933 = vmatprep.subr.mxu0 0.0
  %2934 = vmatpush1.msra.mxu0 0.0
  %2935 = vmatprep.subr.mxu0 0.0
  %2936 = vmatpush1.msra.mxu0 0.0
  %2937 = vmatprep.subr.mxu0 0.0
  %2938 = vmatpush1.msra.mxu0 0.0
  %2939 = vmatprep.subr.mxu0 0.0
  %2940 = vmatpush1.msra.mxu0 0.0
  %2941 = vmatprep.subr.mxu0 0.0
  %2942 = vmatpush1.msra.mxu0 0.0
  %2943 = vmatprep.subr.mxu0 0.0
  %2944 = vmatpush1.msra.mxu0 0.0
  %2945 = vmatprep.subr.mxu0 0.0
  %2946 = vmatpush1.msra.mxu0 0.0
  %2947 = vmatprep.subr.mxu0 0.0
  %2948 = vmatpush1.msra.mxu0 0.0
  %2949 = vmatprep.subr.mxu0 0.0
  %2950 = vmatpush1.msra.mxu0 0.0
  %2951 = vmatprep.subr.mxu0 0.0
  %2952 = vmatpush1.msra.mxu0 0.0
  %2953 = vmatprep.subr.mxu0 0.0
  %2954 = vmatpush1.msra.mxu0 0.0
  %2955 = vmatprep.subr.mxu0 0.0
  %2956 = vmatpush1.msra.mxu0 0.0
  %2957 = vmatprep.subr.mxu0 0.0
  %2958 = vmatpush1.msra.mxu0 0.0
  %2959 = vmatprep.subr.mxu0 0.0
  %2960 = vmatpush1.msra.mxu0 0.0
  %2961 = vmatprep.subr.mxu0 0.0
  %2962 = vmatpush1.msra.mxu0 0.0
  %2963 = vmatprep.subr.mxu0 0.0
  %2964 = vmatpush1.msra.mxu0 0.0
  %2965 = vmatprep.subr.mxu0 0.0
  %2966 = vmatpush1.msra.mxu0 0.0
  %2967 = vmatprep.subr.mxu0 0.0
  %2968 = vmatpush1.msra.mxu0 0.0
  %2969 = vmatprep.subr.mxu0 0.0
  %2970 = vmatpush1.msra.mxu0 0.0
  %2971 = vmatprep.subr.mxu0 0.0
  %2972 = vmatpush1.msra.mxu0 0.0
  %2973 = vmatprep.subr.mxu0 0.0
  %2974 = vmatpush1.msra.mxu0 0.0
  %2975 = vmatprep.subr.mxu0 0.0
  %2976 = vmatpush1.msra.mxu0 0.0
  %2977 = vmatprep.subr.mxu0 0.0
  %2978 = vmatpush1.msra.mxu0 0.0
  %2979 = vmatprep.subr.mxu0 0.0
  %2980 = vmatpush1.msra.mxu0 0.0
  %2981 = vmatprep.subr.mxu0 0.0
  %2982 = vmatpush1.msra.mxu0 0.0
  %2983 = vmatprep.subr.mxu0 0.0
  %2984 = vmatpush1.msra.mxu0 0.0
  %2985 = vmatprep.subr.mxu0 0.0
  %2986 = vmatpush1.msra.mxu0 0.0
  %2987 = vmatprep.subr.mxu0 0.0
  %2988 = vmatpush1.msra.mxu0 0.0
  %2989 = vmatprep.subr.mxu0 0.0
  %2990 = vmatpush1.msra.mxu0 0.0
  %2991 = vmatprep.subr.mxu0 0.0
  %2992 = vmatpush1.msra.mxu0 0.0
  %2993 = vmatprep.mubr.f32.mxu0 0.0
  %2994 = vmatmul.mubr.f32.gmra.mrb[0].mxu0 %v2927
  %v2995 = vpop.f32.mrb[0].mxu0
  %v2996 = vadd.f32 0.0, %v2995
  %v2997 = vpop.f32.mrb[0].mxu0
  %2998 = vdwg.mxu0
  %s2999 = scalar_lea.vmem %s4, 64
  %v3000 = vld [vmem:[%s2999] sm:$0xff]
  %v3001 = vld [vmem:[%s2999 + $0x8] sm:$0xff]
  %v3002 = vld [vmem:[%s2999 + $0x10] sm:$0xff]
  %v3003 = vld [vmem:[%s2999 + $0x18] sm:$0xff]
  %v3004 = vld [vmem:[%s2999 + $0x20] sm:$0xff]
  %v3005 = vld [vmem:[%s2999 + $0x28] sm:$0xff]
  %v3006 = vld [vmem:[%s2999 + $0x30] sm:$0xff]
  %v3007 = vld [vmem:[%s2999 + $0x38] sm:$0xff]
  %v3009 = vsel %vm985, %v2996, 0
  %3011 = vmatprep.subr.mxu0 0.0
  %3012 = vmatpush1.msra.mxu0 %v3000
  %3013 = vmatprep.subr.mxu0 0.0
  %3014 = vmatpush1.msra.mxu0 %v3001
  %3015 = vmatprep.subr.mxu0 0.0
  %3016 = vmatpush1.msra.mxu0 %v3002
  %3017 = vmatprep.subr.mxu0 0.0
  %3018 = vmatpush1.msra.mxu0 %v3003
  %3019 = vmatprep.subr.mxu0 0.0
  %3020 = vmatpush1.msra.mxu0 %v3004
  %3021 = vmatprep.subr.mxu0 0.0
  %3022 = vmatpush1.msra.mxu0 %v3005
  %3023 = vmatprep.subr.mxu0 0.0
  %3024 = vmatpush1.msra.mxu0 %v3006
  %3025 = vmatprep.subr.mxu0 0.0
  %3026 = vmatpush1.msra.mxu0 %v3007
  %3027 = vmatprep.subr.mxu0 0.0
  %3028 = vmatpush1.msra.mxu0 0.0
  %3029 = vmatprep.subr.mxu0 0.0
  %3030 = vmatpush1.msra.mxu0 0.0
  %3031 = vmatprep.subr.mxu0 0.0
  %3032 = vmatpush1.msra.mxu0 0.0
  %3033 = vmatprep.subr.mxu0 0.0
  %3034 = vmatpush1.msra.mxu0 0.0
  %3035 = vmatprep.subr.mxu0 0.0
  %3036 = vmatpush1.msra.mxu0 0.0
  %3037 = vmatprep.subr.mxu0 0.0
  %3038 = vmatpush1.msra.mxu0 0.0
  %3039 = vmatprep.subr.mxu0 0.0
  %3040 = vmatpush1.msra.mxu0 0.0
  %3041 = vmatprep.subr.mxu0 0.0
  %3042 = vmatpush1.msra.mxu0 0.0
  %3043 = vmatprep.subr.mxu0 0.0
  %3044 = vmatpush1.msra.mxu0 0.0
  %3045 = vmatprep.subr.mxu0 0.0
  %3046 = vmatpush1.msra.mxu0 0.0
  %3047 = vmatprep.subr.mxu0 0.0
  %3048 = vmatpush1.msra.mxu0 0.0
  %3049 = vmatprep.subr.mxu0 0.0
  %3050 = vmatpush1.msra.mxu0 0.0
  %3051 = vmatprep.subr.mxu0 0.0
  %3052 = vmatpush1.msra.mxu0 0.0
  %3053 = vmatprep.subr.mxu0 0.0
  %3054 = vmatpush1.msra.mxu0 0.0
  %3055 = vmatprep.subr.mxu0 0.0
  %3056 = vmatpush1.msra.mxu0 0.0
  %3057 = vmatprep.subr.mxu0 0.0
  %3058 = vmatpush1.msra.mxu0 0.0
  %3059 = vmatprep.subr.mxu0 0.0
  %3060 = vmatpush1.msra.mxu0 0.0
  %3061 = vmatprep.subr.mxu0 0.0
  %3062 = vmatpush1.msra.mxu0 0.0
  %3063 = vmatprep.subr.mxu0 0.0
  %3064 = vmatpush1.msra.mxu0 0.0
  %3065 = vmatprep.subr.mxu0 0.0
  %3066 = vmatpush1.msra.mxu0 0.0
  %3067 = vmatprep.subr.mxu0 0.0
  %3068 = vmatpush1.msra.mxu0 0.0
  %3069 = vmatprep.subr.mxu0 0.0
  %3070 = vmatpush1.msra.mxu0 0.0
  %3071 = vmatprep.subr.mxu0 0.0
  %3072 = vmatpush1.msra.mxu0 0.0
  %3073 = vmatprep.subr.mxu0 0.0
  %3074 = vmatpush1.msra.mxu0 0.0
  %3075 = vmatprep.mubr.f32.mxu0 0.0
  %3076 = vmatmul.mubr.f32.gmra.mrb[0].mxu0 %v3009
  %v3077 = vpop.f32.mrb[0].mxu0
  %v3078 = vadd.f32 0.0, %v3077
  %v3079 = vpop.f32.mrb[0].mxu0
  %3080 = vdwg.mxu0
  %v3082 = vsel %vm985, %v2912, 0
  %3084 = vmatprep.subr.mxu0 0.0
  %3085 = vmatpush1.msra.mxu0 %v2915
  %3086 = vmatprep.subr.mxu0 0.0
  %3087 = vmatpush1.msra.mxu0 %v2916
  %3088 = vmatprep.subr.mxu0 0.0
  %3089 = vmatpush1.msra.mxu0 %v2917
  %3090 = vmatprep.subr.mxu0 0.0
  %3091 = vmatpush1.msra.mxu0 %v2918
  %3092 = vmatprep.subr.mxu0 0.0
  %3093 = vmatpush1.msra.mxu0 %v2919
  %3094 = vmatprep.subr.mxu0 0.0
  %3095 = vmatpush1.msra.mxu0 %v2920
  %3096 = vmatprep.subr.mxu0 0.0
  %3097 = vmatpush1.msra.mxu0 %v2921
  %3098 = vmatprep.subr.mxu0 0.0
  %3099 = vmatpush1.msra.mxu0 %v2922
  %3100 = vmatprep.subr.mxu0 0.0
  %3101 = vmatpush1.msra.mxu0 0.0
  %3102 = vmatprep.subr.mxu0 0.0
  %3103 = vmatpush1.msra.mxu0 0.0
  %3104 = vmatprep.subr.mxu0 0.0
  %3105 = vmatpush1.msra.mxu0 0.0
  %3106 = vmatprep.subr.mxu0 0.0
  %3107 = vmatpush1.msra.mxu0 0.0
  %3108 = vmatprep.subr.mxu0 0.0
  %3109 = vmatpush1.msra.mxu0 0.0
  %3110 = vmatprep.subr.mxu0 0.0
  %3111 = vmatpush1.msra.mxu0 0.0
  %3112 = vmatprep.subr.mxu0 0.0
  %3113 = vmatpush1.msra.mxu0 0.0
  %3114 = vmatprep.subr.mxu0 0.0
  %3115 = vmatpush1.msra.mxu0 0.0
  %3116 = vmatprep.subr.mxu0 0.0
  %3117 = vmatpush1.msra.mxu0 0.0
  %3118 = vmatprep.subr.mxu0 0.0
  %3119 = vmatpush1.msra.mxu0 0.0
  %3120 = vmatprep.subr.mxu0 0.0
  %3121 = vmatpush1.msra.mxu0 0.0
  %3122 = vmatprep.subr.mxu0 0.0
  %3123 = vmatpush1.msra.mxu0 0.0
  %3124 = vmatprep.subr.mxu0 0.0
  %3125 = vmatpush1.msra.mxu0 0.0
  %3126 = vmatprep.subr.mxu0 0.0
  %3127 = vmatpush1.msra.mxu0 0.0
  %3128 = vmatprep.subr.mxu0 0.0
  %3129 = vmatpush1.msra.mxu0 0.0
  %3130 = vmatprep.subr.mxu0 0.0
  %3131 = vmatpush1.msra.mxu0 0.0
  %3132 = vmatprep.subr.mxu0 0.0
  %3133 = vmatpush1.msra.mxu0 0.0
  %3134 = vmatprep.subr.mxu0 0.0
  %3135 = vmatpush1.msra.mxu0 0.0
  %3136 = vmatprep.subr.mxu0 0.0
  %3137 = vmatpush1.msra.mxu0 0.0
  %3138 = vmatprep.subr.mxu0 0.0
  %3139 = vmatpush1.msra.mxu0 0.0
  %3140 = vmatprep.subr.mxu0 0.0
  %3141 = vmatpush1.msra.mxu0 0.0
  %3142 = vmatprep.subr.mxu0 0.0
  %3143 = vmatpush1.msra.mxu0 0.0
  %3144 = vmatprep.subr.mxu0 0.0
  %3145 = vmatpush1.msra.mxu0 0.0
  %3146 = vmatprep.subr.mxu0 0.0
  %3147 = vmatpush1.msra.mxu0 0.0
  %3148 = vmatprep.mubr.f32.mxu0 0.0
  %3149 = vmatmul.mubr.f32.gmra.mrb[0].mxu0 %v3082
  %v3150 = vpop.f32.mrb[0].mxu0
  %v3151 = vadd.f32 %v3078, %v3150
  %v3152 = vpop.f32.mrb[0].mxu0
  %3153 = vdwg.mxu0
  %vm3154 = vcmp.eq.s32.totalorder %v2832, 1
  %vm3155 = vmand %vm2834, %vm3154
  %v3156 = vsel %vm3155, 1.0, 0.0
  %v3158 = vsel %vm2837, %v3156, 0
  %3160 = vmatprep.subr.mxu0 0.0
  %3161 = vmatpush1.msra.mxu0 %v2843
  %3162 = vmatprep.subr.mxu0 0.0
  %3163 = vmatpush1.msra.mxu0 0.0
  %3164 = vmatprep.subr.mxu0 0.0
  %3165 = vmatpush1.msra.mxu0 0.0
  %3166 = vmatprep.subr.mxu0 0.0
  %3167 = vmatpush1.msra.mxu0 0.0
  %3168 = vmatprep.subr.mxu0 0.0
  %3169 = vmatpush1.msra.mxu0 0.0
  %3170 = vmatprep.subr.mxu0 0.0
  %3171 = vmatpush1.msra.mxu0 0.0
  %3172 = vmatprep.subr.mxu0 0.0
  %3173 = vmatpush1.msra.mxu0 0.0
  %3174 = vmatprep.subr.mxu0 0.0
  %3175 = vmatpush1.msra.mxu0 0.0
  %3176 = vmatprep.subr.mxu0 0.0
  %3177 = vmatpush1.msra.mxu0 0.0
  %3178 = vmatprep.subr.mxu0 0.0
  %3179 = vmatpush1.msra.mxu0 0.0
  %3180 = vmatprep.subr.mxu0 0.0
  %3181 = vmatpush1.msra.mxu0 0.0
  %3182 = vmatprep.subr.mxu0 0.0
  %3183 = vmatpush1.msra.mxu0 0.0
  %3184 = vmatprep.subr.mxu0 0.0
  %3185 = vmatpush1.msra.mxu0 0.0
  %3186 = vmatprep.subr.mxu0 0.0
  %3187 = vmatpush1.msra.mxu0 0.0
  %3188 = vmatprep.subr.mxu0 0.0
  %3189 = vmatpush1.msra.mxu0 0.0
  %3190 = vmatprep.subr.mxu0 0.0
  %3191 = vmatpush1.msra.mxu0 0.0
  %3192 = vmatprep.subr.mxu0 0.0
  %3193 = vmatpush1.msra.mxu0 0.0
  %3194 = vmatprep.subr.mxu0 0.0
  %3195 = vmatpush1.msra.mxu0 0.0
  %3196 = vmatprep.subr.mxu0 0.0
  %3197 = vmatpush1.msra.mxu0 0.0
  %3198 = vmatprep.subr.mxu0 0.0
  %3199 = vmatpush1.msra.mxu0 0.0
  %3200 = vmatprep.subr.mxu0 0.0
  %3201 = vmatpush1.msra.mxu0 0.0
  %3202 = vmatprep.subr.mxu0 0.0
  %3203 = vmatpush1.msra.mxu0 0.0
  %3204 = vmatprep.subr.mxu0 0.0
  %3205 = vmatpush1.msra.mxu0 0.0
  %3206 = vmatprep.subr.mxu0 0.0
  %3207 = vmatpush1.msra.mxu0 0.0
  %3208 = vmatprep.subr.mxu0 0.0
  %3209 = vmatpush1.msra.mxu0 0.0
  %3210 = vmatprep.subr.mxu0 0.0
  %3211 = vmatpush1.msra.mxu0 0.0
  %3212 = vmatprep.subr.mxu0 0.0
  %3213 = vmatpush1.msra.mxu0 0.0
  %3214 = vmatprep.subr.mxu0 0.0
  %3215 = vmatpush1.msra.mxu0 0.0
  %3216 = vmatprep.subr.mxu0 0.0
  %3217 = vmatpush1.msra.mxu0 0.0
  %3218 = vmatprep.subr.mxu0 0.0
  %3219 = vmatpush1.msra.mxu0 0.0
  %3220 = vmatprep.subr.mxu0 0.0
  %3221 = vmatpush1.msra.mxu0 0.0
  %3222 = vmatprep.subr.mxu0 0.0
  %3223 = vmatpush1.msra.mxu0 0.0
  %3224 = vmatprep.mubr.f32.mxu0 0.0
  %3225 = vmatmul.mubr.f32.gmra.mrb[0].mxu0 %v3158
  %v3226 = vpop.f32.mrb[0].mxu0
  %v3227 = vadd.f32 0.0, %v3226
  %v3228 = vpop.f32.mrb[0].mxu0
  %3229 = vdwg.mxu0
  %s3230 = scalar_lea.vmem %s4, 128
  %v3231 = vld [vmem:[%s3230] sm:$0xff]
  %v3232 = vld [vmem:[%s3230 + $0x8] sm:$0xff]
  %v3233 = vld [vmem:[%s3230 + $0x10] sm:$0xff]
  %v3234 = vld [vmem:[%s3230 + $0x18] sm:$0xff]
  %v3235 = vld [vmem:[%s3230 + $0x20] sm:$0xff]
  %v3236 = vld [vmem:[%s3230 + $0x28] sm:$0xff]
  %v3237 = vld [vmem:[%s3230 + $0x30] sm:$0xff]
  %v3238 = vld [vmem:[%s3230 + $0x38] sm:$0xff]
  %v3240 = vsel %vm985, %v3227, 0
  %3242 = vmatprep.subr.mxu0 0.0
  %3243 = vmatpush1.msra.mxu0 %v3231
  %3244 = vmatprep.subr.mxu0 0.0
  %3245 = vmatpush1.msra.mxu0 %v3232
  %3246 = vmatprep.subr.mxu0 0.0
  %3247 = vmatpush1.msra.mxu0 %v3233
  %3248 = vmatprep.subr.mxu0 0.0
  %3249 = vmatpush1.msra.mxu0 %v3234
  %3250 = vmatprep.subr.mxu0 0.0
  %3251 = vmatpush1.msra.mxu0 %v3235
  %3252 = vmatprep.subr.mxu0 0.0
  %3253 = vmatpush1.msra.mxu0 %v3236
  %3254 = vmatprep.subr.mxu0 0.0
  %3255 = vmatpush1.msra.mxu0 %v3237
  %3256 = vmatprep.subr.mxu0 0.0
  %3257 = vmatpush1.msra.mxu0 %v3238
  %3258 = vmatprep.subr.mxu0 0.0
  %3259 = vmatpush1.msra.mxu0 0.0
  %3260 = vmatprep.subr.mxu0 0.0
  %3261 = vmatpush1.msra.mxu0 0.0
  %3262 = vmatprep.subr.mxu0 0.0
  %3263 = vmatpush1.msra.mxu0 0.0
  %3264 = vmatprep.subr.mxu0 0.0
  %3265 = vmatpush1.msra.mxu0 0.0
  %3266 = vmatprep.subr.mxu0 0.0
  %3267 = vmatpush1.msra.mxu0 0.0
  %3268 = vmatprep.subr.mxu0 0.0
  %3269 = vmatpush1.msra.mxu0 0.0
  %3270 = vmatprep.subr.mxu0 0.0
  %3271 = vmatpush1.msra.mxu0 0.0
  %3272 = vmatprep.subr.mxu0 0.0
  %3273 = vmatpush1.msra.mxu0 0.0
  %3274 = vmatprep.subr.mxu0 0.0
  %3275 = vmatpush1.msra.mxu0 0.0
  %3276 = vmatprep.subr.mxu0 0.0
  %3277 = vmatpush1.msra.mxu0 0.0
  %3278 = vmatprep.subr.mxu0 0.0
  %3279 = vmatpush1.msra.mxu0 0.0
  %3280 = vmatprep.subr.mxu0 0.0
  %3281 = vmatpush1.msra.mxu0 0.0
  %3282 = vmatprep.subr.mxu0 0.0
  %3283 = vmatpush1.msra.mxu0 0.0
  %3284 = vmatprep.subr.mxu0 0.0
  %3285 = vmatpush1.msra.mxu0 0.0
  %3286 = vmatprep.subr.mxu0 0.0
  %3287 = vmatpush1.msra.mxu0 0.0
  %3288 = vmatprep.subr.mxu0 0.0
  %3289 = vmatpush1.msra.mxu0 0.0
  %3290 = vmatprep.subr.mxu0 0.0
  %3291 = vmatpush1.msra.mxu0 0.0
  %3292 = vmatprep.subr.mxu0 0.0
  %3293 = vmatpush1.msra.mxu0 0.0
  %3294 = vmatprep.subr.mxu0 0.0
  %3295 = vmatpush1.msra.mxu0 0.0
  %3296 = vmatprep.subr.mxu0 0.0
  %3297 = vmatpush1.msra.mxu0 0.0
  %3298 = vmatprep.subr.mxu0 0.0
  %3299 = vmatpush1.msra.mxu0 0.0
  %3300 = vmatprep.subr.mxu0 0.0
  %3301 = vmatpush1.msra.mxu0 0.0
  %3302 = vmatprep.subr.mxu0 0.0
  %3303 = vmatpush1.msra.mxu0 0.0
  %3304 = vmatprep.subr.mxu0 0.0
  %3305 = vmatpush1.msra.mxu0 0.0
  %3306 = vmatprep.mubr.f32.mxu0 0.0
  %3307 = vmatmul.mubr.f32.gmra.mrb[0].mxu0 %v3240
  %v3308 = vpop.f32.mrb[0].mxu0
  %v3309 = vadd.f32 0.0, %v3308
  %v3310 = vpop.f32.mrb[0].mxu0
  %3311 = vdwg.mxu0
  %v3312 = vadd.f32 %v3151, %v3309
  %vm3313 = vcmp.eq.s32.totalorder %v2832, 2
  %vm3314 = vmand %vm2834, %vm3313
  %v3315 = vsel %vm3314, 1.0, 0.0
  %v3317 = vsel %vm2837, %v3315, 0
  %3319 = vmatprep.subr.mxu0 0.0
  %3320 = vmatpush1.msra.mxu0 %v2843
  %3321 = vmatprep.subr.mxu0 0.0
  %3322 = vmatpush1.msra.mxu0 0.0
  %3323 = vmatprep.subr.mxu0 0.0
  %3324 = vmatpush1.msra.mxu0 0.0
  %3325 = vmatprep.subr.mxu0 0.0
  %3326 = vmatpush1.msra.mxu0 0.0
  %3327 = vmatprep.subr.mxu0 0.0
  %3328 = vmatpush1.msra.mxu0 0.0
  %3329 = vmatprep.subr.mxu0 0.0
  %3330 = vmatpush1.msra.mxu0 0.0
  %3331 = vmatprep.subr.mxu0 0.0
  %3332 = vmatpush1.msra.mxu0 0.0
  %3333 = vmatprep.subr.mxu0 0.0
  %3334 = vmatpush1.msra.mxu0 0.0
  %3335 = vmatprep.subr.mxu0 0.0
  %3336 = vmatpush1.msra.mxu0 0.0
  %3337 = vmatprep.subr.mxu0 0.0
  %3338 = vmatpush1.msra.mxu0 0.0
  %3339 = vmatprep.subr.mxu0 0.0
  %3340 = vmatpush1.msra.mxu0 0.0
  %3341 = vmatprep.subr.mxu0 0.0
  %3342 = vmatpush1.msra.mxu0 0.0
  %3343 = vmatprep.subr.mxu0 0.0
  %3344 = vmatpush1.msra.mxu0 0.0
  %3345 = vmatprep.subr.mxu0 0.0
  %3346 = vmatpush1.msra.mxu0 0.0
  %3347 = vmatprep.subr.mxu0 0.0
  %3348 = vmatpush1.msra.mxu0 0.0
  %3349 = vmatprep.subr.mxu0 0.0
  %3350 = vmatpush1.msra.mxu0 0.0
  %3351 = vmatprep.subr.mxu0 0.0
  %3352 = vmatpush1.msra.mxu0 0.0
  %3353 = vmatprep.subr.mxu0 0.0
  %3354 = vmatpush1.msra.mxu0 0.0
  %3355 = vmatprep.subr.mxu0 0.0
  %3356 = vmatpush1.msra.mxu0 0.0
  %3357 = vmatprep.subr.mxu0 0.0
  %3358 = vmatpush1.msra.mxu0 0.0
  %3359 = vmatprep.subr.mxu0 0.0
  %3360 = vmatpush1.msra.mxu0 0.0
  %3361 = vmatprep.subr.mxu0 0.0
  %3362 = vmatpush1.msra.mxu0 0.0
  %3363 = vmatprep.subr.mxu0 0.0
  %3364 = vmatpush1.msra.mxu0 0.0
  %3365 = vmatprep.subr.mxu0 0.0
  %3366 = vmatpush1.msra.mxu0 0.0
  %3367 = vmatprep.subr.mxu0 0.0
  %3368 = vmatpush1.msra.mxu0 0.0
  %3369 = vmatprep.subr.mxu0 0.0
  %3370 = vmatpush1.msra.mxu0 0.0
  %3371 = vmatprep.subr.mxu0 0.0
  %3372 = vmatpush1.msra.mxu0 0.0
  %3373 = vmatprep.subr.mxu0 0.0
  %3374 = vmatpush1.msra.mxu0 0.0
  %3375 = vmatprep.subr.mxu0 0.0
  %3376 = vmatpush1.msra.mxu0 0.0
  %3377 = vmatprep.subr.mxu0 0.0
  %3378 = vmatpush1.msra.mxu0 0.0
  %3379 = vmatprep.subr.mxu0 0.0
  %3380 = vmatpush1.msra.mxu0 0.0
  %3381 = vmatprep.subr.mxu0 0.0
  %3382 = vmatpush1.msra.mxu0 0.0
  %3383 = vmatprep.mubr.f32.mxu0 0.0
  %3384 = vmatmul.mubr.f32.gmra.mrb[0].mxu0 %v3317
  %v3385 = vpop.f32.mrb[0].mxu0
  %v3386 = vadd.f32 0.0, %v3385
  %v3387 = vpop.f32.mrb[0].mxu0
  %3388 = vdwg.mxu0
  %s3389 = scalar_lea.vmem %s4, 192
  %v3390 = vld [vmem:[%s3389] sm:$0xff]
  %v3391 = vld [vmem:[%s3389 + $0x8] sm:$0xff]
  %v3392 = vld [vmem:[%s3389 + $0x10] sm:$0xff]
  %v3393 = vld [vmem:[%s3389 + $0x18] sm:$0xff]
  %v3394 = vld [vmem:[%s3389 + $0x20] sm:$0xff]
  %v3395 = vld [vmem:[%s3389 + $0x28] sm:$0xff]
  %v3396 = vld [vmem:[%s3389 + $0x30] sm:$0xff]
  %v3397 = vld [vmem:[%s3389 + $0x38] sm:$0xff]
  %v3399 = vsel %vm985, %v3386, 0
  %3401 = vmatprep.subr.mxu0 0.0
  %3402 = vmatpush1.msra.mxu0 %v3390
  %3403 = vmatprep.subr.mxu0 0.0
  %3404 = vmatpush1.msra.mxu0 %v3391
  %3405 = vmatprep.subr.mxu0 0.0
  %3406 = vmatpush1.msra.mxu0 %v3392
  %3407 = vmatprep.subr.mxu0 0.0
  %3408 = vmatpush1.msra.mxu0 %v3393
  %3409 = vmatprep.subr.mxu0 0.0
  %3410 = vmatpush1.msra.mxu0 %v3394
  %3411 = vmatprep.subr.mxu0 0.0
  %3412 = vmatpush1.msra.mxu0 %v3395
  %3413 = vmatprep.subr.mxu0 0.0
  %3414 = vmatpush1.msra.mxu0 %v3396
  %3415 = vmatprep.subr.mxu0 0.0
  %3416 = vmatpush1.msra.mxu0 %v3397
  %3417 = vmatprep.subr.mxu0 0.0
  %3418 = vmatpush1.msra.mxu0 0.0
  %3419 = vmatprep.subr.mxu0 0.0
  %3420 = vmatpush1.msra.mxu0 0.0
  %3421 = vmatprep.subr.mxu0 0.0
  %3422 = vmatpush1.msra.mxu0 0.0
  %3423 = vmatprep.subr.mxu0 0.0
  %3424 = vmatpush1.msra.mxu0 0.0
  %3425 = vmatprep.subr.mxu0 0.0
  %3426 = vmatpush1.msra.mxu0 0.0
  %3427 = vmatprep.subr.mxu0 0.0
  %3428 = vmatpush1.msra.mxu0 0.0
  %3429 = vmatprep.subr.mxu0 0.0
  %3430 = vmatpush1.msra.mxu0 0.0
  %3431 = vmatprep.subr.mxu0 0.0
  %3432 = vmatpush1.msra.mxu0 0.0
  %3433 = vmatprep.subr.mxu0 0.0
  %3434 = vmatpush1.msra.mxu0 0.0
  %3435 = vmatprep.subr.mxu0 0.0
  %3436 = vmatpush1.msra.mxu0 0.0
  %3437 = vmatprep.subr.mxu0 0.0
  %3438 = vmatpush1.msra.mxu0 0.0
  %3439 = vmatprep.subr.mxu0 0.0
  %3440 = vmatpush1.msra.mxu0 0.0
  %3441 = vmatprep.subr.mxu0 0.0
  %3442 = vmatpush1.msra.mxu0 0.0
  %3443 = vmatprep.subr.mxu0 0.0
  %3444 = vmatpush1.msra.mxu0 0.0
  %3445 = vmatprep.subr.mxu0 0.0
  %3446 = vmatpush1.msra.mxu0 0.0
  %3447 = vmatprep.subr.mxu0 0.0
  %3448 = vmatpush1.msra.mxu0 0.0
  %3449 = vmatprep.subr.mxu0 0.0
  %3450 = vmatpush1.msra.mxu0 0.0
  %3451 = vmatprep.subr.mxu0 0.0
  %3452 = vmatpush1.msra.mxu0 0.0
  %3453 = vmatprep.subr.mxu0 0.0
  %3454 = vmatpush1.msra.mxu0 0.0
  %3455 = vmatprep.subr.mxu0 0.0
  %3456 = vmatpush1.msra.mxu0 0.0
  %3457 = vmatprep.subr.mxu0 0.0
  %3458 = vmatpush1.msra.mxu0 0.0
  %3459 = vmatprep.subr.mxu0 0.0
  %3460 = vmatpush1.msra.mxu0 0.0
  %3461 = vmatprep.subr.mxu0 0.0
  %3462 = vmatpush1.msra.mxu0 0.0
  %3463 = vmatprep.subr.mxu0 0.0
  %3464 = vmatpush1.msra.mxu0 0.0
  %3465 = vmatprep.mubr.f32.mxu0 0.0
  %3466 = vmatmul.mubr.f32.gmra.mrb[0].mxu0 %v3399
  %v3467 = vpop.f32.mrb[0].mxu0
  %v3468 = vadd.f32 0.0, %v3467
  %v3469 = vpop.f32.mrb[0].mxu0
  %3470 = vdwg.mxu0
  %v3471 = vadd.f32 %v3312, %v3468
  %v3472 = vld [vmem:[%s13] sm:$0x1]
  %v3473 = vld [vmem:[%s14] sm:$0x1]
  %v3474 = vand.u32 %v73, 63
  %v3475 = vand.u32 %v74, 63
  %v3476 = vand.u32 %v1456, 63
  %v3477 = vand.u32 %v1457, 63
  %v3478 = vand.u32 %v1458, 63
  %v3479 = vand.u32 %v1459, 63
  %v3480 = vand.u32 %v1460, 63
  %v3481 = vand.u32 %v1461, 63
  %vm3482 = vcmp.eq.s32.totalorder %v3474, %v76
  %vm3483 = vcmp.eq.s32.totalorder %v3475, %v76
  %vm3484 = vcmp.eq.s32.totalorder %v3476, %v76
  %vm3485 = vcmp.eq.s32.totalorder %v3477, %v76
  %vm3486 = vcmp.eq.s32.totalorder %v3478, %v76
  %vm3487 = vcmp.eq.s32.totalorder %v3479, %v76
  %vm3488 = vcmp.eq.s32.totalorder %v3480, %v76
  %vm3489 = vcmp.eq.s32.totalorder %v3481, %v76
  %v3490 = vsel %vm3482, 1.0, 0.0
  %v3491 = vsel %vm3483, 1.0, 0.0
  %v3492 = vsel %vm3484, 1.0, 0.0
  %v3493 = vsel %vm3485, 1.0, 0.0
  %v3494 = vsel %vm3486, 1.0, 0.0
  %v3495 = vsel %vm3487, 1.0, 0.0
  %v3496 = vsel %vm3488, 1.0, 0.0
  %v3497 = vsel %vm3489, 1.0, 0.0
  %v3498 = vand.u32 %v76, 63
  %vm3499 = vcmp.eq.s32.totalorder %v3498, %v73
  %vm3500 = vcmp.eq.s32.totalorder %v3498, %v74
  %vm3501 = vcmp.eq.s32.totalorder %v3498, %v1456
  %vm3502 = vcmp.eq.s32.totalorder %v3498, %v1457
  %vm3503 = vcmp.eq.s32.totalorder %v3498, %v1458
  %vm3504 = vcmp.eq.s32.totalorder %v3498, %v1459
  %vm3505 = vcmp.eq.s32.totalorder %v3498, %v1460
  %vm3506 = vcmp.eq.s32.totalorder %v3498, %v1461
  %v3507 = vsel %vm3499, 1.0, 0.0
  %v3508 = vsel %vm3500, 1.0, 0.0
  %v3509 = vsel %vm3501, 1.0, 0.0
  %v3510 = vsel %vm3502, 1.0, 0.0
  %v3511 = vsel %vm3503, 1.0, 0.0
  %v3512 = vsel %vm3504, 1.0, 0.0
  %v3513 = vsel %vm3505, 1.0, 0.0
  %v3514 = vsel %vm3506, 1.0, 0.0
  %vm3515 = vcmask 517120
  %v3516 = vsel %vm3515, %v3471, 0.0
  %v3517 = vrot.slane %v3516, 4
  %v3518 = vadd.f32 %v3516, %v3517
  %v3519 = vrot.slane %v3518, 2
  %v3520 = vadd.f32 %v3518, %v3519
  %v3521 = vrot.slane %v3520, 1
  %v3522 = vadd.f32 %v3520, %v3521
  %v3523 = vmul.f32 %v3471, %v3471
  %v3524 = vsel %vm3515, %v3523, 0.0
  %v3525 = vrot.slane %v3524, 4
  %v3526 = vadd.f32 %v3524, %v3525
  %v3527 = vrot.slane %v3526, 2
  %v3528 = vadd.f32 %v3526, %v3527
  %v3529 = vrot.slane %v3528, 1
  %v3530 = vadd.f32 %v3528, %v3529
  %v3532 = vsel %vm985, %v3522, 0
  %3534 = vmatprep.subr.mxu0 0.0
  %3535 = vmatpush1.msra.mxu0 %v3490
  %3536 = vmatprep.subr.mxu0 0.0
  %3537 = vmatpush1.msra.mxu0 %v3491
  %3538 = vmatprep.subr.mxu0 0.0
  %3539 = vmatpush1.msra.mxu0 %v3492
  %3540 = vmatprep.subr.mxu0 0.0
  %3541 = vmatpush1.msra.mxu0 %v3493
  %3542 = vmatprep.subr.mxu0 0.0
  %3543 = vmatpush1.msra.mxu0 %v3494
  %3544 = vmatprep.subr.mxu0 0.0
  %3545 = vmatpush1.msra.mxu0 %v3495
  %3546 = vmatprep.subr.mxu0 0.0
  %3547 = vmatpush1.msra.mxu0 %v3496
  %3548 = vmatprep.subr.mxu0 0.0
  %3549 = vmatpush1.msra.mxu0 %v3497
  %3550 = vmatprep.subr.mxu0 0.0
  %3551 = vmatpush1.msra.mxu0 0.0
  %3552 = vmatprep.subr.mxu0 0.0
  %3553 = vmatpush1.msra.mxu0 0.0
  %3554 = vmatprep.subr.mxu0 0.0
  %3555 = vmatpush1.msra.mxu0 0.0
  %3556 = vmatprep.subr.mxu0 0.0
  %3557 = vmatpush1.msra.mxu0 0.0
  %3558 = vmatprep.subr.mxu0 0.0
  %3559 = vmatpush1.msra.mxu0 0.0
  %3560 = vmatprep.subr.mxu0 0.0
  %3561 = vmatpush1.msra.mxu0 0.0
  %3562 = vmatprep.subr.mxu0 0.0
  %3563 = vmatpush1.msra.mxu0 0.0
  %3564 = vmatprep.subr.mxu0 0.0
  %3565 = vmatpush1.msra.mxu0 0.0
  %3566 = vmatprep.subr.mxu0 0.0
  %3567 = vmatpush1.msra.mxu0 0.0
  %3568 = vmatprep.subr.mxu0 0.0
  %3569 = vmatpush1.msra.mxu0 0.0
  %3570 = vmatprep.subr.mxu0 0.0
  %3571 = vmatpush1.msra.mxu0 0.0
  %3572 = vmatprep.subr.mxu0 0.0
  %3573 = vmatpush1.msra.mxu0 0.0
  %3574 = vmatprep.subr.mxu0 0.0
  %3575 = vmatpush1.msra.mxu0 0.0
  %3576 = vmatprep.subr.mxu0 0.0
  %3577 = vmatpush1.msra.mxu0 0.0
  %3578 = vmatprep.subr.mxu0 0.0
  %3579 = vmatpush1.msra.mxu0 0.0
  %3580 = vmatprep.subr.mxu0 0.0
  %3581 = vmatpush1.msra.mxu0 0.0
  %3582 = vmatprep.subr.mxu0 0.0
  %3583 = vmatpush1.msra.mxu0 0.0
  %3584 = vmatprep.subr.mxu0 0.0
  %3585 = vmatpush1.msra.mxu0 0.0
  %3586 = vmatprep.subr.mxu0 0.0
  %3587 = vmatpush1.msra.mxu0 0.0
  %3588 = vmatprep.subr.mxu0 0.0
  %3589 = vmatpush1.msra.mxu0 0.0
  %3590 = vmatprep.subr.mxu0 0.0
  %3591 = vmatpush1.msra.mxu0 0.0
  %3592 = vmatprep.subr.mxu0 0.0
  %3593 = vmatpush1.msra.mxu0 0.0
  %3594 = vmatprep.subr.mxu0 0.0
  %3595 = vmatpush1.msra.mxu0 0.0
  %3596 = vmatprep.subr.mxu0 0.0
  %3597 = vmatpush1.msra.mxu0 0.0
  %3598 = vmatprep.mubr.f32.mxu0 0.0
  %3599 = vmatmul.mubr.f32.gmra.mrb[0].mxu0 %v3532
  %v3600 = vpop.f32.mrb[0].mxu0
  %v3601 = vadd.f32 0.0, %v3600
  %v3602 = vpop.f32.mrb[0].mxu0
  %3603 = vdwg.mxu0
  %v3604 = vrcp.pop 2.0
  %v3605 = vmul.f32 %v3601, %v3604
  %v3607 = vsel %vm985, %v3530, 0
  %3609 = vmatprep.subr.mxu0 0.0
  %3610 = vmatpush1.msra.mxu0 %v3490
  %3611 = vmatprep.subr.mxu0 0.0
  %3612 = vmatpush1.msra.mxu0 %v3491
  %3613 = vmatprep.subr.mxu0 0.0
  %3614 = vmatpush1.msra.mxu0 %v3492
  %3615 = vmatprep.subr.mxu0 0.0
  %3616 = vmatpush1.msra.mxu0 %v3493
  %3617 = vmatprep.subr.mxu0 0.0
  %3618 = vmatpush1.msra.mxu0 %v3494
  %3619 = vmatprep.subr.mxu0 0.0
  %3620 = vmatpush1.msra.mxu0 %v3495
  %3621 = vmatprep.subr.mxu0 0.0
  %3622 = vmatpush1.msra.mxu0 %v3496
  %3623 = vmatprep.subr.mxu0 0.0
  %3624 = vmatpush1.msra.mxu0 %v3497
  %3625 = vmatprep.subr.mxu0 0.0
  %3626 = vmatpush1.msra.mxu0 0.0
  %3627 = vmatprep.subr.mxu0 0.0
  %3628 = vmatpush1.msra.mxu0 0.0
  %3629 = vmatprep.subr.mxu0 0.0
  %3630 = vmatpush1.msra.mxu0 0.0
  %3631 = vmatprep.subr.mxu0 0.0
  %3632 = vmatpush1.msra.mxu0 0.0
  %3633 = vmatprep.subr.mxu0 0.0
  %3634 = vmatpush1.msra.mxu0 0.0
  %3635 = vmatprep.subr.mxu0 0.0
  %3636 = vmatpush1.msra.mxu0 0.0
  %3637 = vmatprep.subr.mxu0 0.0
  %3638 = vmatpush1.msra.mxu0 0.0
  %3639 = vmatprep.subr.mxu0 0.0
  %3640 = vmatpush1.msra.mxu0 0.0
  %3641 = vmatprep.subr.mxu0 0.0
  %3642 = vmatpush1.msra.mxu0 0.0
  %3643 = vmatprep.subr.mxu0 0.0
  %3644 = vmatpush1.msra.mxu0 0.0
  %3645 = vmatprep.subr.mxu0 0.0
  %3646 = vmatpush1.msra.mxu0 0.0
  %3647 = vmatprep.subr.mxu0 0.0
  %3648 = vmatpush1.msra.mxu0 0.0
  %3649 = vmatprep.subr.mxu0 0.0
  %3650 = vmatpush1.msra.mxu0 0.0
  %3651 = vmatprep.subr.mxu0 0.0
  %3652 = vmatpush1.msra.mxu0 0.0
  %3653 = vmatprep.subr.mxu0 0.0
  %3654 = vmatpush1.msra.mxu0 0.0
  %3655 = vmatprep.subr.mxu0 0.0
  %3656 = vmatpush1.msra.mxu0 0.0
  %3657 = vmatprep.subr.mxu0 0.0
  %3658 = vmatpush1.msra.mxu0 0.0
  %3659 = vmatprep.subr.mxu0 0.0
  %3660 = vmatpush1.msra.mxu0 0.0
  %3661 = vmatprep.subr.mxu0 0.0
  %3662 = vmatpush1.msra.mxu0 0.0
  %3663 = vmatprep.subr.mxu0 0.0
  %3664 = vmatpush1.msra.mxu0 0.0
  %3665 = vmatprep.subr.mxu0 0.0
  %3666 = vmatpush1.msra.mxu0 0.0
  %3667 = vmatprep.subr.mxu0 0.0
  %3668 = vmatpush1.msra.mxu0 0.0
  %3669 = vmatprep.subr.mxu0 0.0
  %3670 = vmatpush1.msra.mxu0 0.0
  %3671 = vmatprep.subr.mxu0 0.0
  %3672 = vmatpush1.msra.mxu0 0.0
  %3673 = vmatprep.mubr.f32.mxu0 0.0
  %3674 = vmatmul.mubr.f32.gmra.mrb[0].mxu0 %v3607
  %v3675 = vpop.f32.mrb[0].mxu0
  %v3676 = vadd.f32 0.0, %v3675
  %v3677 = vpop.f32.mrb[0].mxu0
  %3678 = vdwg.mxu0
  %v3679 = vmul.f32 %v3676, %v3604
  %v3680 = vmul.f32 %v3605, %v3605
  %v3681 = vsub.f32 %v3679, %v3680
  %v3682 = vadd.f32 %v3681, 1e-05
  %v3683 = vrsqrt.pop %v3682
  %v3684 = vmul.f32 %v3472, %v3683
  %v3685 = vmul.f32 %v3605, %v3684
  %v3686 = vsub.f32 %v3473, %v3685
  %v3688 = vsel %vm985, %v3684, 0
  %3690 = vmatprep.subr.mxu0 0.0
  %3691 = vmatpush1.msra.mxu0 %v3507
  %3692 = vmatprep.subr.mxu0 0.0
  %3693 = vmatpush1.msra.mxu0 %v3508
  %3694 = vmatprep.subr.mxu0 0.0
  %3695 = vmatpush1.msra.mxu0 %v3509
  %3696 = vmatprep.subr.mxu0 0.0
  %3697 = vmatpush1.msra.mxu0 %v3510
  %3698 = vmatprep.subr.mxu0 0.0
  %3699 = vmatpush1.msra.mxu0 %v3511
  %3700 = vmatprep.subr.mxu0 0.0
  %3701 = vmatpush1.msra.mxu0 %v3512
  %3702 = vmatprep.subr.mxu0 0.0
  %3703 = vmatpush1.msra.mxu0 %v3513
  %3704 = vmatprep.subr.mxu0 0.0
  %3705 = vmatpush1.msra.mxu0 %v3514
  %3706 = vmatprep.subr.mxu0 0.0
  %3707 = vmatpush1.msra.mxu0 0.0
  %3708 = vmatprep.subr.mxu0 0.0
  %3709 = vmatpush1.msra.mxu0 0.0
  %3710 = vmatprep.subr.mxu0 0.0
  %3711 = vmatpush1.msra.mxu0 0.0
  %3712 = vmatprep.subr.mxu0 0.0
  %3713 = vmatpush1.msra.mxu0 0.0
  %3714 = vmatprep.subr.mxu0 0.0
  %3715 = vmatpush1.msra.mxu0 0.0
  %3716 = vmatprep.subr.mxu0 0.0
  %3717 = vmatpush1.msra.mxu0 0.0
  %3718 = vmatprep.subr.mxu0 0.0
  %3719 = vmatpush1.msra.mxu0 0.0
  %3720 = vmatprep.subr.mxu0 0.0
  %3721 = vmatpush1.msra.mxu0 0.0
  %3722 = vmatprep.subr.mxu0 0.0
  %3723 = vmatpush1.msra.mxu0 0.0
  %3724 = vmatprep.subr.mxu0 0.0
  %3725 = vmatpush1.msra.mxu0 0.0
  %3726 = vmatprep.subr.mxu0 0.0
  %3727 = vmatpush1.msra.mxu0 0.0
  %3728 = vmatprep.subr.mxu0 0.0
  %3729 = vmatpush1.msra.mxu0 0.0
  %3730 = vmatprep.subr.mxu0 0.0
  %3731 = vmatpush1.msra.mxu0 0.0
  %3732 = vmatprep.subr.mxu0 0.0
  %3733 = vmatpush1.msra.mxu0 0.0
  %3734 = vmatprep.subr.mxu0 0.0
  %3735 = vmatpush1.msra.mxu0 0.0
  %3736 = vmatprep.subr.mxu0 0.0
  %3737 = vmatpush1.msra.mxu0 0.0
  %3738 = vmatprep.subr.mxu0 0.0
  %3739 = vmatpush1.msra.mxu0 0.0
  %3740 = vmatprep.subr.mxu0 0.0
  %3741 = vmatpush1.msra.mxu0 0.0
  %3742 = vmatprep.subr.mxu0 0.0
  %3743 = vmatpush1.msra.mxu0 0.0
  %3744 = vmatprep.subr.mxu0 0.0
  %3745 = vmatpush1.msra.mxu0 0.0
  %3746 = vmatprep.subr.mxu0 0.0
  %3747 = vmatpush1.msra.mxu0 0.0
  %3748 = vmatprep.subr.mxu0 0.0
  %3749 = vmatpush1.msra.mxu0 0.0
  %3750 = vmatprep.subr.mxu0 0.0
  %3751 = vmatpush1.msra.mxu0 0.0
  %3752 = vmatprep.subr.mxu0 0.0
  %3753 = vmatpush1.msra.mxu0 0.0
  %3754 = vmatprep.mubr.f32.mxu0 0.0
  %3755 = vmatmul.mubr.f32.gmra.mrb[0].mxu0 %v3688
  %v3756 = vpop.f32.mrb[0].mxu0
  %v3757 = vadd.f32 0.0, %v3756
  %v3758 = vpop.f32.mrb[0].mxu0
  %3759 = vdwg.mxu0
  %v3761 = vsel %vm985, %v3686, 0
  %3763 = vmatprep.subr.mxu0 0.0
  %3764 = vmatpush1.msra.mxu0 %v3507
  %3765 = vmatprep.subr.mxu0 0.0
  %3766 = vmatpush1.msra.mxu0 %v3508
  %3767 = vmatprep.subr.mxu0 0.0
  %3768 = vmatpush1.msra.mxu0 %v3509
  %3769 = vmatprep.subr.mxu0 0.0
  %3770 = vmatpush1.msra.mxu0 %v3510
  %3771 = vmatprep.subr.mxu0 0.0
  %3772 = vmatpush1.msra.mxu0 %v3511
  %3773 = vmatprep.subr.mxu0 0.0
  %3774 = vmatpush1.msra.mxu0 %v3512
  %3775 = vmatprep.subr.mxu0 0.0
  %3776 = vmatpush1.msra.mxu0 %v3513
  %3777 = vmatprep.subr.mxu0 0.0
  %3778 = vmatpush1.msra.mxu0 %v3514
  %3779 = vmatprep.subr.mxu0 0.0
  %3780 = vmatpush1.msra.mxu0 0.0
  %3781 = vmatprep.subr.mxu0 0.0
  %3782 = vmatpush1.msra.mxu0 0.0
  %3783 = vmatprep.subr.mxu0 0.0
  %3784 = vmatpush1.msra.mxu0 0.0
  %3785 = vmatprep.subr.mxu0 0.0
  %3786 = vmatpush1.msra.mxu0 0.0
  %3787 = vmatprep.subr.mxu0 0.0
  %3788 = vmatpush1.msra.mxu0 0.0
  %3789 = vmatprep.subr.mxu0 0.0
  %3790 = vmatpush1.msra.mxu0 0.0
  %3791 = vmatprep.subr.mxu0 0.0
  %3792 = vmatpush1.msra.mxu0 0.0
  %3793 = vmatprep.subr.mxu0 0.0
  %3794 = vmatpush1.msra.mxu0 0.0
  %3795 = vmatprep.subr.mxu0 0.0
  %3796 = vmatpush1.msra.mxu0 0.0
  %3797 = vmatprep.subr.mxu0 0.0
  %3798 = vmatpush1.msra.mxu0 0.0
  %3799 = vmatprep.subr.mxu0 0.0
  %3800 = vmatpush1.msra.mxu0 0.0
  %3801 = vmatprep.subr.mxu0 0.0
  %3802 = vmatpush1.msra.mxu0 0.0
  %3803 = vmatprep.subr.mxu0 0.0
  %3804 = vmatpush1.msra.mxu0 0.0
  %3805 = vmatprep.subr.mxu0 0.0
  %3806 = vmatpush1.msra.mxu0 0.0
  %3807 = vmatprep.subr.mxu0 0.0
  %3808 = vmatpush1.msra.mxu0 0.0
  %3809 = vmatprep.subr.mxu0 0.0
  %3810 = vmatpush1.msra.mxu0 0.0
  %3811 = vmatprep.subr.mxu0 0.0
  %3812 = vmatpush1.msra.mxu0 0.0
  %3813 = vmatprep.subr.mxu0 0.0
  %3814 = vmatpush1.msra.mxu0 0.0
  %3815 = vmatprep.subr.mxu0 0.0
  %3816 = vmatpush1.msra.mxu0 0.0
  %3817 = vmatprep.subr.mxu0 0.0
  %3818 = vmatpush1.msra.mxu0 0.0
  %3819 = vmatprep.subr.mxu0 0.0
  %3820 = vmatpush1.msra.mxu0 0.0
  %3821 = vmatprep.subr.mxu0 0.0
  %3822 = vmatpush1.msra.mxu0 0.0
  %3823 = vmatprep.subr.mxu0 0.0
  %3824 = vmatpush1.msra.mxu0 0.0
  %3825 = vmatprep.subr.mxu0 0.0
  %3826 = vmatpush1.msra.mxu0 0.0
  %3827 = vmatprep.mubr.f32.mxu0 0.0
  %3828 = vmatmul.mubr.f32.gmra.mrb[0].mxu0 %v3761
  %v3829 = vpop.f32.mrb[0].mxu0
  %v3830 = vadd.f32 0.0, %v3829
  %v3831 = vpop.f32.mrb[0].mxu0
  %3832 = vdwg.mxu0
  %v3833 = vlaneseq
  %v3834 = vshrl.u32 %v3833, 7
  %v3835 = vsub.s32 0, %v3834
  %v3836 = vrot.slane %v3757, %v3835
  %v3837 = vmul.f32 %v3471, %v3836
  %v3838 = vlaneseq
  %v3839 = vshrl.u32 %v3838, 7
  %v3840 = vsub.s32 0, %v3839
  %v3841 = vrot.slane %v3830, %v3840
  %v3842 = vadd.f32 %v3837, %v3841
  %vm3843 = vcmp.gt.f32.partialorder %v3842, 0.0
  %v3844 = vmul.f32 %v3842, 0.2
  %v3845 = vsel %vm3843, %v3842, %v3844
  %v3846 = vadd.s32 %v1821, 1
  %vm3847 = vcmp.eq.s32.totalorder %v3846, 0
  %vm3848 = vcmp.eq.s32.totalorder %v1820, %v76
  %vm3849 = vmand %vm3848, %vm3847
  %v3850 = vsel %vm3849, 1.0, 0.0
  %vm3851 = vcmask 15360
  %v3853 = vsel %vm3851, %v3850, 0
  %vm3855 = vcmask 1041408
  %v3857 = vsel %vm3855, %v3845, 0
  %3859 = vmatprep.subr.mxu0 0.0
  %3860 = vmatpush1.msra.mxu0 %v3857
  %3861 = vmatprep.subr.mxu0 0.0
  %3862 = vmatpush1.msra.mxu0 0.0
  %3863 = vmatprep.subr.mxu0 0.0
  %3864 = vmatpush1.msra.mxu0 0.0
  %3865 = vmatprep.subr.mxu0 0.0
  %3866 = vmatpush1.msra.mxu0 0.0
  %3867 = vmatprep.subr.mxu0 0.0
  %3868 = vmatpush1.msra.mxu0 0.0
  %3869 = vmatprep.subr.mxu0 0.0
  %3870 = vmatpush1.msra.mxu0 0.0
  %3871 = vmatprep.subr.mxu0 0.0
  %3872 = vmatpush1.msra.mxu0 0.0
  %3873 = vmatprep.subr.mxu0 0.0
  %3874 = vmatpush1.msra.mxu0 0.0
  %3875 = vmatprep.subr.mxu0 0.0
  %3876 = vmatpush1.msra.mxu0 0.0
  %3877 = vmatprep.subr.mxu0 0.0
  %3878 = vmatpush1.msra.mxu0 0.0
  %3879 = vmatprep.subr.mxu0 0.0
  %3880 = vmatpush1.msra.mxu0 0.0
  %3881 = vmatprep.subr.mxu0 0.0
  %3882 = vmatpush1.msra.mxu0 0.0
  %3883 = vmatprep.subr.mxu0 0.0
  %3884 = vmatpush1.msra.mxu0 0.0
  %3885 = vmatprep.subr.mxu0 0.0
  %3886 = vmatpush1.msra.mxu0 0.0
  %3887 = vmatprep.subr.mxu0 0.0
  %3888 = vmatpush1.msra.mxu0 0.0
  %3889 = vmatprep.subr.mxu0 0.0
  %3890 = vmatpush1.msra.mxu0 0.0
  %3891 = vmatprep.subr.mxu0 0.0
  %3892 = vmatpush1.msra.mxu0 0.0
  %3893 = vmatprep.subr.mxu0 0.0
  %3894 = vmatpush1.msra.mxu0 0.0
  %3895 = vmatprep.subr.mxu0 0.0
  %3896 = vmatpush1.msra.mxu0 0.0
  %3897 = vmatprep.subr.mxu0 0.0
  %3898 = vmatpush1.msra.mxu0 0.0
  %3899 = vmatprep.subr.mxu0 0.0
  %3900 = vmatpush1.msra.mxu0 0.0
  %3901 = vmatprep.subr.mxu0 0.0
  %3902 = vmatpush1.msra.mxu0 0.0
  %3903 = vmatprep.subr.mxu0 0.0
  %3904 = vmatpush1.msra.mxu0 0.0
  %3905 = vmatprep.subr.mxu0 0.0
  %3906 = vmatpush1.msra.mxu0 0.0
  %3907 = vmatprep.subr.mxu0 0.0
  %3908 = vmatpush1.msra.mxu0 0.0
  %3909 = vmatprep.subr.mxu0 0.0
  %3910 = vmatpush1.msra.mxu0 0.0
  %3911 = vmatprep.subr.mxu0 0.0
  %3912 = vmatpush1.msra.mxu0 0.0
  %3913 = vmatprep.subr.mxu0 0.0
  %3914 = vmatpush1.msra.mxu0 0.0
  %3915 = vmatprep.subr.mxu0 0.0
  %3916 = vmatpush1.msra.mxu0 0.0
  %3917 = vmatprep.subr.mxu0 0.0
  %3918 = vmatpush1.msra.mxu0 0.0
  %3919 = vmatprep.subr.mxu0 0.0
  %3920 = vmatpush1.msra.mxu0 0.0
  %3921 = vmatprep.subr.mxu0 0.0
  %3922 = vmatpush1.msra.mxu0 0.0
  %3923 = vmatprep.mubr.f32.mxu0 0.0
  %3924 = vmatmul.mubr.f32.gmra.mrb[0].mxu0 %v3853
  %v3925 = vpop.f32.mrb[0].mxu0
  %v3926 = vadd.f32 0.0, %v3925
  %v3927 = vpop.f32.mrb[0].mxu0
  %3928 = vdwg.mxu0
  %v3929 = vld [vmem:[%s5] sm:$0xff]
  %v3930 = vld [vmem:[%s5 + $0x8] sm:$0xff]
  %v3931 = vld [vmem:[%s5 + $0x10] sm:$0xff]
  %v3932 = vld [vmem:[%s5 + $0x18] sm:$0xff]
  %v3933 = vld [vmem:[%s5 + $0x20] sm:$0xff]
  %v3934 = vld [vmem:[%s5 + $0x28] sm:$0xff]
  %v3935 = vld [vmem:[%s5 + $0x30] sm:$0xff]
  %v3936 = vld [vmem:[%s5 + $0x38] sm:$0xff]
  %vm3937 = vcmp.eq.s32.totalorder %v1821, 0
  %vm3938 = vmand %vm3848, %vm3937
  %v3939 = vsel %vm3938, 1.0, 0.0
  %v3941 = vsel %vm3851, %v3939, 0
  %3943 = vmatprep.subr.mxu0 0.0
  %3944 = vmatpush1.msra.mxu0 %v3857
  %3945 = vmatprep.subr.mxu0 0.0
  %3946 = vmatpush1.msra.mxu0 0.0
  %3947 = vmatprep.subr.mxu0 0.0
  %3948 = vmatpush1.msra.mxu0 0.0
  %3949 = vmatprep.subr.mxu0 0.0
  %3950 = vmatpush1.msra.mxu0 0.0
  %3951 = vmatprep.subr.mxu0 0.0
  %3952 = vmatpush1.msra.mxu0 0.0
  %3953 = vmatprep.subr.mxu0 0.0
  %3954 = vmatpush1.msra.mxu0 0.0
  %3955 = vmatprep.subr.mxu0 0.0
  %3956 = vmatpush1.msra.mxu0 0.0
  %3957 = vmatprep.subr.mxu0 0.0
  %3958 = vmatpush1.msra.mxu0 0.0
  %3959 = vmatprep.subr.mxu0 0.0
  %3960 = vmatpush1.msra.mxu0 0.0
  %3961 = vmatprep.subr.mxu0 0.0
  %3962 = vmatpush1.msra.mxu0 0.0
  %3963 = vmatprep.subr.mxu0 0.0
  %3964 = vmatpush1.msra.mxu0 0.0
  %3965 = vmatprep.subr.mxu0 0.0
  %3966 = vmatpush1.msra.mxu0 0.0
  %3967 = vmatprep.subr.mxu0 0.0
  %3968 = vmatpush1.msra.mxu0 0.0
  %3969 = vmatprep.subr.mxu0 0.0
  %3970 = vmatpush1.msra.mxu0 0.0
  %3971 = vmatprep.subr.mxu0 0.0
  %3972 = vmatpush1.msra.mxu0 0.0
  %3973 = vmatprep.subr.mxu0 0.0
  %3974 = vmatpush1.msra.mxu0 0.0
  %3975 = vmatprep.subr.mxu0 0.0
  %3976 = vmatpush1.msra.mxu0 0.0
  %3977 = vmatprep.subr.mxu0 0.0
  %3978 = vmatpush1.msra.mxu0 0.0
  %3979 = vmatprep.subr.mxu0 0.0
  %3980 = vmatpush1.msra.mxu0 0.0
  %3981 = vmatprep.subr.mxu0 0.0
  %3982 = vmatpush1.msra.mxu0 0.0
  %3983 = vmatprep.subr.mxu0 0.0
  %3984 = vmatpush1.msra.mxu0 0.0
  %3985 = vmatprep.subr.mxu0 0.0
  %3986 = vmatpush1.msra.mxu0 0.0
  %3987 = vmatprep.subr.mxu0 0.0
  %3988 = vmatpush1.msra.mxu0 0.0
  %3989 = vmatprep.subr.mxu0 0.0
  %3990 = vmatpush1.msra.mxu0 0.0
  %3991 = vmatprep.subr.mxu0 0.0
  %3992 = vmatpush1.msra.mxu0 0.0
  %3993 = vmatprep.subr.mxu0 0.0
  %3994 = vmatpush1.msra.mxu0 0.0
  %3995 = vmatprep.subr.mxu0 0.0
  %3996 = vmatpush1.msra.mxu0 0.0
  %3997 = vmatprep.subr.mxu0 0.0
  %3998 = vmatpush1.msra.mxu0 0.0
  %3999 = vmatprep.subr.mxu0 0.0
  %4000 = vmatpush1.msra.mxu0 0.0
  %4001 = vmatprep.subr.mxu0 0.0
  %4002 = vmatpush1.msra.mxu0 0.0
  %4003 = vmatprep.subr.mxu0 0.0
  %4004 = vmatpush1.msra.mxu0 0.0
  %4005 = vmatprep.subr.mxu0 0.0
  %4006 = vmatpush1.msra.mxu0 0.0
  %4007 = vmatprep.mubr.f32.mxu0 0.0
  %4008 = vmatmul.mubr.f32.gmra.mrb[0].mxu0 %v3941
  %v4009 = vpop.f32.mrb[0].mxu0
  %v4010 = vadd.f32 0.0, %v4009
  %v4011 = vpop.f32.mrb[0].mxu0
  %4012 = vdwg.mxu0
  %s4013 = scalar_lea.vmem %s5, 64
  %v4014 = vld [vmem:[%s4013] sm:$0xff]
  %v4015 = vld [vmem:[%s4013 + $0x8] sm:$0xff]
  %v4016 = vld [vmem:[%s4013 + $0x10] sm:$0xff]
  %v4017 = vld [vmem:[%s4013 + $0x18] sm:$0xff]
  %v4018 = vld [vmem:[%s4013 + $0x20] sm:$0xff]
  %v4019 = vld [vmem:[%s4013 + $0x28] sm:$0xff]
  %v4020 = vld [vmem:[%s4013 + $0x30] sm:$0xff]
  %v4021 = vld [vmem:[%s4013 + $0x38] sm:$0xff]
  %v4023 = vsel %vm985, %v4010, 0
  %4025 = vmatprep.subr.mxu0 0.0
  %4026 = vmatpush1.msra.mxu0 %v4014
  %4027 = vmatprep.subr.mxu0 0.0
  %4028 = vmatpush1.msra.mxu0 %v4015
  %4029 = vmatprep.subr.mxu0 0.0
  %4030 = vmatpush1.msra.mxu0 %v4016
  %4031 = vmatprep.subr.mxu0 0.0
  %4032 = vmatpush1.msra.mxu0 %v4017
  %4033 = vmatprep.subr.mxu0 0.0
  %4034 = vmatpush1.msra.mxu0 %v4018
  %4035 = vmatprep.subr.mxu0 0.0
  %4036 = vmatpush1.msra.mxu0 %v4019
  %4037 = vmatprep.subr.mxu0 0.0
  %4038 = vmatpush1.msra.mxu0 %v4020
  %4039 = vmatprep.subr.mxu0 0.0
  %4040 = vmatpush1.msra.mxu0 %v4021
  %4041 = vmatprep.subr.mxu0 0.0
  %4042 = vmatpush1.msra.mxu0 0.0
  %4043 = vmatprep.subr.mxu0 0.0
  %4044 = vmatpush1.msra.mxu0 0.0
  %4045 = vmatprep.subr.mxu0 0.0
  %4046 = vmatpush1.msra.mxu0 0.0
  %4047 = vmatprep.subr.mxu0 0.0
  %4048 = vmatpush1.msra.mxu0 0.0
  %4049 = vmatprep.subr.mxu0 0.0
  %4050 = vmatpush1.msra.mxu0 0.0
  %4051 = vmatprep.subr.mxu0 0.0
  %4052 = vmatpush1.msra.mxu0 0.0
  %4053 = vmatprep.subr.mxu0 0.0
  %4054 = vmatpush1.msra.mxu0 0.0
  %4055 = vmatprep.subr.mxu0 0.0
  %4056 = vmatpush1.msra.mxu0 0.0
  %4057 = vmatprep.subr.mxu0 0.0
  %4058 = vmatpush1.msra.mxu0 0.0
  %4059 = vmatprep.subr.mxu0 0.0
  %4060 = vmatpush1.msra.mxu0 0.0
  %4061 = vmatprep.subr.mxu0 0.0
  %4062 = vmatpush1.msra.mxu0 0.0
  %4063 = vmatprep.subr.mxu0 0.0
  %4064 = vmatpush1.msra.mxu0 0.0
  %4065 = vmatprep.subr.mxu0 0.0
  %4066 = vmatpush1.msra.mxu0 0.0
  %4067 = vmatprep.subr.mxu0 0.0
  %4068 = vmatpush1.msra.mxu0 0.0
  %4069 = vmatprep.subr.mxu0 0.0
  %4070 = vmatpush1.msra.mxu0 0.0
  %4071 = vmatprep.subr.mxu0 0.0
  %4072 = vmatpush1.msra.mxu0 0.0
  %4073 = vmatprep.subr.mxu0 0.0
  %4074 = vmatpush1.msra.mxu0 0.0
  %4075 = vmatprep.subr.mxu0 0.0
  %4076 = vmatpush1.msra.mxu0 0.0
  %4077 = vmatprep.subr.mxu0 0.0
  %4078 = vmatpush1.msra.mxu0 0.0
  %4079 = vmatprep.subr.mxu0 0.0
  %4080 = vmatpush1.msra.mxu0 0.0
  %4081 = vmatprep.subr.mxu0 0.0
  %4082 = vmatpush1.msra.mxu0 0.0
  %4083 = vmatprep.subr.mxu0 0.0
  %4084 = vmatpush1.msra.mxu0 0.0
  %4085 = vmatprep.subr.mxu0 0.0
  %4086 = vmatpush1.msra.mxu0 0.0
  %4087 = vmatprep.subr.mxu0 0.0
  %4088 = vmatpush1.msra.mxu0 0.0
  %4089 = vmatprep.mubr.f32.mxu0 0.0
  %4090 = vmatmul.mubr.f32.gmra.mrb[0].mxu0 %v4023
  %v4091 = vpop.f32.mrb[0].mxu0
  %v4092 = vadd.f32 0.0, %v4091
  %v4093 = vpop.f32.mrb[0].mxu0
  %4094 = vdwg.mxu0
  %v4096 = vsel %vm985, %v3926, 0
  %4098 = vmatprep.subr.mxu0 0.0
  %4099 = vmatpush1.msra.mxu0 %v3929
  %4100 = vmatprep.subr.mxu0 0.0
  %4101 = vmatpush1.msra.mxu0 %v3930
  %4102 = vmatprep.subr.mxu0 0.0
  %4103 = vmatpush1.msra.mxu0 %v3931
  %4104 = vmatprep.subr.mxu0 0.0
  %4105 = vmatpush1.msra.mxu0 %v3932
  %4106 = vmatprep.subr.mxu0 0.0
  %4107 = vmatpush1.msra.mxu0 %v3933
  %4108 = vmatprep.subr.mxu0 0.0
  %4109 = vmatpush1.msra.mxu0 %v3934
  %4110 = vmatprep.subr.mxu0 0.0
  %4111 = vmatpush1.msra.mxu0 %v3935
  %4112 = vmatprep.subr.mxu0 0.0
  %4113 = vmatpush1.msra.mxu0 %v3936
  %4114 = vmatprep.subr.mxu0 0.0
  %4115 = vmatpush1.msra.mxu0 0.0
  %4116 = vmatprep.subr.mxu0 0.0
  %4117 = vmatpush1.msra.mxu0 0.0
  %4118 = vmatprep.subr.mxu0 0.0
  %4119 = vmatpush1.msra.mxu0 0.0
  %4120 = vmatprep.subr.mxu0 0.0
  %4121 = vmatpush1.msra.mxu0 0.0
  %4122 = vmatprep.subr.mxu0 0.0
  %4123 = vmatpush1.msra.mxu0 0.0
  %4124 = vmatprep.subr.mxu0 0.0
  %4125 = vmatpush1.msra.mxu0 0.0
  %4126 = vmatprep.subr.mxu0 0.0
  %4127 = vmatpush1.msra.mxu0 0.0
  %4128 = vmatprep.subr.mxu0 0.0
  %4129 = vmatpush1.msra.mxu0 0.0
  %4130 = vmatprep.subr.mxu0 0.0
  %4131 = vmatpush1.msra.mxu0 0.0
  %4132 = vmatprep.subr.mxu0 0.0
  %4133 = vmatpush1.msra.mxu0 0.0
  %4134 = vmatprep.subr.mxu0 0.0
  %4135 = vmatpush1.msra.mxu0 0.0
  %4136 = vmatprep.subr.mxu0 0.0
  %4137 = vmatpush1.msra.mxu0 0.0
  %4138 = vmatprep.subr.mxu0 0.0
  %4139 = vmatpush1.msra.mxu0 0.0
  %4140 = vmatprep.subr.mxu0 0.0
  %4141 = vmatpush1.msra.mxu0 0.0
  %4142 = vmatprep.subr.mxu0 0.0
  %4143 = vmatpush1.msra.mxu0 0.0
  %4144 = vmatprep.subr.mxu0 0.0
  %4145 = vmatpush1.msra.mxu0 0.0
  %4146 = vmatprep.subr.mxu0 0.0
  %4147 = vmatpush1.msra.mxu0 0.0
  %4148 = vmatprep.subr.mxu0 0.0
  %4149 = vmatpush1.msra.mxu0 0.0
  %4150 = vmatprep.subr.mxu0 0.0
  %4151 = vmatpush1.msra.mxu0 0.0
  %4152 = vmatprep.subr.mxu0 0.0
  %4153 = vmatpush1.msra.mxu0 0.0
  %4154 = vmatprep.subr.mxu0 0.0
  %4155 = vmatpush1.msra.mxu0 0.0
  %4156 = vmatprep.subr.mxu0 0.0
  %4157 = vmatpush1.msra.mxu0 0.0
  %4158 = vmatprep.subr.mxu0 0.0
  %4159 = vmatpush1.msra.mxu0 0.0
  %4160 = vmatprep.subr.mxu0 0.0
  %4161 = vmatpush1.msra.mxu0 0.0
  %4162 = vmatprep.mubr.f32.mxu0 0.0
  %4163 = vmatmul.mubr.f32.gmra.mrb[0].mxu0 %v4096
  %v4164 = vpop.f32.mrb[0].mxu0
  %v4165 = vadd.f32 %v4092, %v4164
  %v4166 = vpop.f32.mrb[0].mxu0
  %4167 = vdwg.mxu0
  %v4168 = vsub.s32 %v3846, 2
  %vm4169 = vcmp.eq.s32.totalorder %v4168, 0
  %vm4170 = vmand %vm3848, %vm4169
  %v4171 = vsel %vm4170, 1.0, 0.0
  %v4173 = vsel %vm3851, %v4171, 0
  %4175 = vmatprep.subr.mxu0 0.0
  %4176 = vmatpush1.msra.mxu0 %v3857
  %4177 = vmatprep.subr.mxu0 0.0
  %4178 = vmatpush1.msra.mxu0 0.0
  %4179 = vmatprep.subr.mxu0 0.0
  %4180 = vmatpush1.msra.mxu0 0.0
  %4181 = vmatprep.subr.mxu0 0.0
  %4182 = vmatpush1.msra.mxu0 0.0
  %4183 = vmatprep.subr.mxu0 0.0
  %4184 = vmatpush1.msra.mxu0 0.0
  %4185 = vmatprep.subr.mxu0 0.0
  %4186 = vmatpush1.msra.mxu0 0.0
  %4187 = vmatprep.subr.mxu0 0.0
  %4188 = vmatpush1.msra.mxu0 0.0
  %4189 = vmatprep.subr.mxu0 0.0
  %4190 = vmatpush1.msra.mxu0 0.0
  %4191 = vmatprep.subr.mxu0 0.0
  %4192 = vmatpush1.msra.mxu0 0.0
  %4193 = vmatprep.subr.mxu0 0.0
  %4194 = vmatpush1.msra.mxu0 0.0
  %4195 = vmatprep.subr.mxu0 0.0
  %4196 = vmatpush1.msra.mxu0 0.0
  %4197 = vmatprep.subr.mxu0 0.0
  %4198 = vmatpush1.msra.mxu0 0.0
  %4199 = vmatprep.subr.mxu0 0.0
  %4200 = vmatpush1.msra.mxu0 0.0
  %4201 = vmatprep.subr.mxu0 0.0
  %4202 = vmatpush1.msra.mxu0 0.0
  %4203 = vmatprep.subr.mxu0 0.0
  %4204 = vmatpush1.msra.mxu0 0.0
  %4205 = vmatprep.subr.mxu0 0.0
  %4206 = vmatpush1.msra.mxu0 0.0
  %4207 = vmatprep.subr.mxu0 0.0
  %4208 = vmatpush1.msra.mxu0 0.0
  %4209 = vmatprep.subr.mxu0 0.0
  %4210 = vmatpush1.msra.mxu0 0.0
  %4211 = vmatprep.subr.mxu0 0.0
  %4212 = vmatpush1.msra.mxu0 0.0
  %4213 = vmatprep.subr.mxu0 0.0
  %4214 = vmatpush1.msra.mxu0 0.0
  %4215 = vmatprep.subr.mxu0 0.0
  %4216 = vmatpush1.msra.mxu0 0.0
  %4217 = vmatprep.subr.mxu0 0.0
  %4218 = vmatpush1.msra.mxu0 0.0
  %4219 = vmatprep.subr.mxu0 0.0
  %4220 = vmatpush1.msra.mxu0 0.0
  %4221 = vmatprep.subr.mxu0 0.0
  %4222 = vmatpush1.msra.mxu0 0.0
  %4223 = vmatprep.subr.mxu0 0.0
  %4224 = vmatpush1.msra.mxu0 0.0
  %4225 = vmatprep.subr.mxu0 0.0
  %4226 = vmatpush1.msra.mxu0 0.0
  %4227 = vmatprep.subr.mxu0 0.0
  %4228 = vmatpush1.msra.mxu0 0.0
  %4229 = vmatprep.subr.mxu0 0.0
  %4230 = vmatpush1.msra.mxu0 0.0
  %4231 = vmatprep.subr.mxu0 0.0
  %4232 = vmatpush1.msra.mxu0 0.0
  %4233 = vmatprep.subr.mxu0 0.0
  %4234 = vmatpush1.msra.mxu0 0.0
  %4235 = vmatprep.subr.mxu0 0.0
  %4236 = vmatpush1.msra.mxu0 0.0
  %4237 = vmatprep.subr.mxu0 0.0
  %4238 = vmatpush1.msra.mxu0 0.0
  %4239 = vmatprep.mubr.f32.mxu0 0.0
  %4240 = vmatmul.mubr.f32.gmra.mrb[0].mxu0 %v4173
  %v4241 = vpop.f32.mrb[0].mxu0
  %v4242 = vadd.f32 0.0, %v4241
  %v4243 = vpop.f32.mrb[0].mxu0
  %4244 = vdwg.mxu0
  %s4245 = scalar_lea.vmem %s5, 128
  %v4246 = vld [vmem:[%s4245] sm:$0xff]
  %v4247 = vld [vmem:[%s4245 + $0x8] sm:$0xff]
  %v4248 = vld [vmem:[%s4245 + $0x10] sm:$0xff]
  %v4249 = vld [vmem:[%s4245 + $0x18] sm:$0xff]
  %v4250 = vld [vmem:[%s4245 + $0x20] sm:$0xff]
  %v4251 = vld [vmem:[%s4245 + $0x28] sm:$0xff]
  %v4252 = vld [vmem:[%s4245 + $0x30] sm:$0xff]
  %v4253 = vld [vmem:[%s4245 + $0x38] sm:$0xff]
  %v4255 = vsel %vm985, %v4242, 0
  %4257 = vmatprep.subr.mxu0 0.0
  %4258 = vmatpush1.msra.mxu0 %v4246
  %4259 = vmatprep.subr.mxu0 0.0
  %4260 = vmatpush1.msra.mxu0 %v4247
  %4261 = vmatprep.subr.mxu0 0.0
  %4262 = vmatpush1.msra.mxu0 %v4248
  %4263 = vmatprep.subr.mxu0 0.0
  %4264 = vmatpush1.msra.mxu0 %v4249
  %4265 = vmatprep.subr.mxu0 0.0
  %4266 = vmatpush1.msra.mxu0 %v4250
  %4267 = vmatprep.subr.mxu0 0.0
  %4268 = vmatpush1.msra.mxu0 %v4251
  %4269 = vmatprep.subr.mxu0 0.0
  %4270 = vmatpush1.msra.mxu0 %v4252
  %4271 = vmatprep.subr.mxu0 0.0
  %4272 = vmatpush1.msra.mxu0 %v4253
  %4273 = vmatprep.subr.mxu0 0.0
  %4274 = vmatpush1.msra.mxu0 0.0
  %4275 = vmatprep.subr.mxu0 0.0
  %4276 = vmatpush1.msra.mxu0 0.0
  %4277 = vmatprep.subr.mxu0 0.0
  %4278 = vmatpush1.msra.mxu0 0.0
  %4279 = vmatprep.subr.mxu0 0.0
  %4280 = vmatpush1.msra.mxu0 0.0
  %4281 = vmatprep.subr.mxu0 0.0
  %4282 = vmatpush1.msra.mxu0 0.0
  %4283 = vmatprep.subr.mxu0 0.0
  %4284 = vmatpush1.msra.mxu0 0.0
  %4285 = vmatprep.subr.mxu0 0.0
  %4286 = vmatpush1.msra.mxu0 0.0
  %4287 = vmatprep.subr.mxu0 0.0
  %4288 = vmatpush1.msra.mxu0 0.0
  %4289 = vmatprep.subr.mxu0 0.0
  %4290 = vmatpush1.msra.mxu0 0.0
  %4291 = vmatprep.subr.mxu0 0.0
  %4292 = vmatpush1.msra.mxu0 0.0
  %4293 = vmatprep.subr.mxu0 0.0
  %4294 = vmatpush1.msra.mxu0 0.0
  %4295 = vmatprep.subr.mxu0 0.0
  %4296 = vmatpush1.msra.mxu0 0.0
  %4297 = vmatprep.subr.mxu0 0.0
  %4298 = vmatpush1.msra.mxu0 0.0
  %4299 = vmatprep.subr.mxu0 0.0
  %4300 = vmatpush1.msra.mxu0 0.0
  %4301 = vmatprep.subr.mxu0 0.0
  %4302 = vmatpush1.msra.mxu0 0.0
  %4303 = vmatprep.subr.mxu0 0.0
  %4304 = vmatpush1.msra.mxu0 0.0
  %4305 = vmatprep.subr.mxu0 0.0
  %4306 = vmatpush1.msra.mxu0 0.0
  %4307 = vmatprep.subr.mxu0 0.0
  %4308 = vmatpush1.msra.mxu0 0.0
  %4309 = vmatprep.subr.mxu0 0.0
  %4310 = vmatpush1.msra.mxu0 0.0
  %4311 = vmatprep.subr.mxu0 0.0
  %4312 = vmatpush1.msra.mxu0 0.0
  %4313 = vmatprep.subr.mxu0 0.0
  %4314 = vmatpush1.msra.mxu0 0.0
  %4315 = vmatprep.subr.mxu0 0.0
  %4316 = vmatpush1.msra.mxu0 0.0
  %4317 = vmatprep.subr.mxu0 0.0
  %4318 = vmatpush1.msra.mxu0 0.0
  %4319 = vmatprep.subr.mxu0 0.0
  %4320 = vmatpush1.msra.mxu0 0.0
  %4321 = vmatprep.mubr.f32.mxu0 0.0
  %4322 = vmatmul.mubr.f32.gmra.mrb[0].mxu0 %v4255
  %v4323 = vpop.f32.mrb[0].mxu0
  %v4324 = vadd.f32 0.0, %v4323
  %v4325 = vpop.f32.mrb[0].mxu0
  %4326 = vdwg.mxu0
  %v4327 = vadd.f32 %v4165, %v4324
  %v4328 = vsub.s32 %v3846, 3
  %vm4329 = vcmp.eq.s32.totalorder %v4328, 0
  %vm4330 = vmand %vm3848, %vm4329
  %v4331 = vsel %vm4330, 1.0, 0.0
  %v4333 = vsel %vm3851, %v4331, 0
  %4335 = vmatprep.subr.mxu0 0.0
  %4336 = vmatpush1.msra.mxu0 %v3857
  %4337 = vmatprep.subr.mxu0 0.0
  %4338 = vmatpush1.msra.mxu0 0.0
  %4339 = vmatprep.subr.mxu0 0.0
  %4340 = vmatpush1.msra.mxu0 0.0
  %4341 = vmatprep.subr.mxu0 0.0
  %4342 = vmatpush1.msra.mxu0 0.0
  %4343 = vmatprep.subr.mxu0 0.0
  %4344 = vmatpush1.msra.mxu0 0.0
  %4345 = vmatprep.subr.mxu0 0.0
  %4346 = vmatpush1.msra.mxu0 0.0
  %4347 = vmatprep.subr.mxu0 0.0
  %4348 = vmatpush1.msra.mxu0 0.0
  %4349 = vmatprep.subr.mxu0 0.0
  %4350 = vmatpush1.msra.mxu0 0.0
  %4351 = vmatprep.subr.mxu0 0.0
  %4352 = vmatpush1.msra.mxu0 0.0
  %4353 = vmatprep.subr.mxu0 0.0
  %4354 = vmatpush1.msra.mxu0 0.0
  %4355 = vmatprep.subr.mxu0 0.0
  %4356 = vmatpush1.msra.mxu0 0.0
  %4357 = vmatprep.subr.mxu0 0.0
  %4358 = vmatpush1.msra.mxu0 0.0
  %4359 = vmatprep.subr.mxu0 0.0
  %4360 = vmatpush1.msra.mxu0 0.0
  %4361 = vmatprep.subr.mxu0 0.0
  %4362 = vmatpush1.msra.mxu0 0.0
  %4363 = vmatprep.subr.mxu0 0.0
  %4364 = vmatpush1.msra.mxu0 0.0
  %4365 = vmatprep.subr.mxu0 0.0
  %4366 = vmatpush1.msra.mxu0 0.0
  %4367 = vmatprep.subr.mxu0 0.0
  %4368 = vmatpush1.msra.mxu0 0.0
  %4369 = vmatprep.subr.mxu0 0.0
  %4370 = vmatpush1.msra.mxu0 0.0
  %4371 = vmatprep.subr.mxu0 0.0
  %4372 = vmatpush1.msra.mxu0 0.0
  %4373 = vmatprep.subr.mxu0 0.0
  %4374 = vmatpush1.msra.mxu0 0.0
  %4375 = vmatprep.subr.mxu0 0.0
  %4376 = vmatpush1.msra.mxu0 0.0
  %4377 = vmatprep.subr.mxu0 0.0
  %4378 = vmatpush1.msra.mxu0 0.0
  %4379 = vmatprep.subr.mxu0 0.0
  %4380 = vmatpush1.msra.mxu0 0.0
  %4381 = vmatprep.subr.mxu0 0.0
  %4382 = vmatpush1.msra.mxu0 0.0
  %4383 = vmatprep.subr.mxu0 0.0
  %4384 = vmatpush1.msra.mxu0 0.0
  %4385 = vmatprep.subr.mxu0 0.0
  %4386 = vmatpush1.msra.mxu0 0.0
  %4387 = vmatprep.subr.mxu0 0.0
  %4388 = vmatpush1.msra.mxu0 0.0
  %4389 = vmatprep.subr.mxu0 0.0
  %4390 = vmatpush1.msra.mxu0 0.0
  %4391 = vmatprep.subr.mxu0 0.0
  %4392 = vmatpush1.msra.mxu0 0.0
  %4393 = vmatprep.subr.mxu0 0.0
  %4394 = vmatpush1.msra.mxu0 0.0
  %4395 = vmatprep.subr.mxu0 0.0
  %4396 = vmatpush1.msra.mxu0 0.0
  %4397 = vmatprep.subr.mxu0 0.0
  %4398 = vmatpush1.msra.mxu0 0.0
  %4399 = vmatprep.mubr.f32.mxu0 0.0
  %4400 = vmatmul.mubr.f32.gmra.mrb[0].mxu0 %v4333
  %v4401 = vpop.f32.mrb[0].mxu0
  %v4402 = vadd.f32 0.0, %v4401
  %v4403 = vpop.f32.mrb[0].mxu0
  %4404 = vdwg.mxu0
  %s4405 = scalar_lea.vmem %s5, 192
  %v4406 = vld [vmem:[%s4405] sm:$0xff]
  %v4407 = vld [vmem:[%s4405 + $0x8] sm:$0xff]
  %v4408 = vld [vmem:[%s4405 + $0x10] sm:$0xff]
  %v4409 = vld [vmem:[%s4405 + $0x18] sm:$0xff]
  %v4410 = vld [vmem:[%s4405 + $0x20] sm:$0xff]
  %v4411 = vld [vmem:[%s4405 + $0x28] sm:$0xff]
  %v4412 = vld [vmem:[%s4405 + $0x30] sm:$0xff]
  %v4413 = vld [vmem:[%s4405 + $0x38] sm:$0xff]
  %v4415 = vsel %vm985, %v4402, 0
  %4417 = vmatprep.subr.mxu0 0.0
  %4418 = vmatpush1.msra.mxu0 %v4406
  %4419 = vmatprep.subr.mxu0 0.0
  %4420 = vmatpush1.msra.mxu0 %v4407
  %4421 = vmatprep.subr.mxu0 0.0
  %4422 = vmatpush1.msra.mxu0 %v4408
  %4423 = vmatprep.subr.mxu0 0.0
  %4424 = vmatpush1.msra.mxu0 %v4409
  %4425 = vmatprep.subr.mxu0 0.0
  %4426 = vmatpush1.msra.mxu0 %v4410
  %4427 = vmatprep.subr.mxu0 0.0
  %4428 = vmatpush1.msra.mxu0 %v4411
  %4429 = vmatprep.subr.mxu0 0.0
  %4430 = vmatpush1.msra.mxu0 %v4412
  %4431 = vmatprep.subr.mxu0 0.0
  %4432 = vmatpush1.msra.mxu0 %v4413
  %4433 = vmatprep.subr.mxu0 0.0
  %4434 = vmatpush1.msra.mxu0 0.0
  %4435 = vmatprep.subr.mxu0 0.0
  %4436 = vmatpush1.msra.mxu0 0.0
  %4437 = vmatprep.subr.mxu0 0.0
  %4438 = vmatpush1.msra.mxu0 0.0
  %4439 = vmatprep.subr.mxu0 0.0
  %4440 = vmatpush1.msra.mxu0 0.0
  %4441 = vmatprep.subr.mxu0 0.0
  %4442 = vmatpush1.msra.mxu0 0.0
  %4443 = vmatprep.subr.mxu0 0.0
  %4444 = vmatpush1.msra.mxu0 0.0
  %4445 = vmatprep.subr.mxu0 0.0
  %4446 = vmatpush1.msra.mxu0 0.0
  %4447 = vmatprep.subr.mxu0 0.0
  %4448 = vmatpush1.msra.mxu0 0.0
  %4449 = vmatprep.subr.mxu0 0.0
  %4450 = vmatpush1.msra.mxu0 0.0
  %4451 = vmatprep.subr.mxu0 0.0
  %4452 = vmatpush1.msra.mxu0 0.0
  %4453 = vmatprep.subr.mxu0 0.0
  %4454 = vmatpush1.msra.mxu0 0.0
  %4455 = vmatprep.subr.mxu0 0.0
  %4456 = vmatpush1.msra.mxu0 0.0
  %4457 = vmatprep.subr.mxu0 0.0
  %4458 = vmatpush1.msra.mxu0 0.0
  %4459 = vmatprep.subr.mxu0 0.0
  %4460 = vmatpush1.msra.mxu0 0.0
  %4461 = vmatprep.subr.mxu0 0.0
  %4462 = vmatpush1.msra.mxu0 0.0
  %4463 = vmatprep.subr.mxu0 0.0
  %4464 = vmatpush1.msra.mxu0 0.0
  %4465 = vmatprep.subr.mxu0 0.0
  %4466 = vmatpush1.msra.mxu0 0.0
  %4467 = vmatprep.subr.mxu0 0.0
  %4468 = vmatpush1.msra.mxu0 0.0
  %4469 = vmatprep.subr.mxu0 0.0
  %4470 = vmatpush1.msra.mxu0 0.0
  %4471 = vmatprep.subr.mxu0 0.0
  %4472 = vmatpush1.msra.mxu0 0.0
  %4473 = vmatprep.subr.mxu0 0.0
  %4474 = vmatpush1.msra.mxu0 0.0
  %4475 = vmatprep.subr.mxu0 0.0
  %4476 = vmatpush1.msra.mxu0 0.0
  %4477 = vmatprep.subr.mxu0 0.0
  %4478 = vmatpush1.msra.mxu0 0.0
  %4479 = vmatprep.subr.mxu0 0.0
  %4480 = vmatpush1.msra.mxu0 0.0
  %4481 = vmatprep.mubr.f32.mxu0 0.0
  %4482 = vmatmul.mubr.f32.gmra.mrb[0].mxu0 %v4415
  %v4483 = vpop.f32.mrb[0].mxu0
  %v4484 = vadd.f32 0.0, %v4483
  %v4485 = vpop.f32.mrb[0].mxu0
  %4486 = vdwg.mxu0
  %v4487 = vadd.f32 %v4327, %v4484
  %v4488 = vld [vmem:[%s15] sm:$0x1]
  %v4489 = vld [vmem:[%s16] sm:$0x1]
  %v4490 = vsel %vm2500, %v4487, 0.0
  %v4491 = vrot.slane %v4490, 4
  %v4492 = vadd.f32 %v4490, %v4491
  %v4493 = vrot.slane %v4492, 2
  %v4494 = vadd.f32 %v4492, %v4493
  %v4495 = vrot.slane %v4494, 1
  %v4496 = vadd.f32 %v4494, %v4495
  %v4497 = vmul.f32 %v4487, %v4487
  %v4498 = vsel %vm2500, %v4497, 0.0
  %v4499 = vrot.slane %v4498, 4
  %v4500 = vadd.f32 %v4498, %v4499
  %v4501 = vrot.slane %v4500, 2
  %v4502 = vadd.f32 %v4500, %v4501
  %v4503 = vrot.slane %v4502, 1
  %v4504 = vadd.f32 %v4502, %v4503
  %v4506 = vsel %vm985, %v4496, 0
  %4508 = vmatprep.subr.mxu0 0.0
  %4509 = vmatpush1.msra.mxu0 %v2483
  %4510 = vmatprep.subr.mxu0 0.0
  %4511 = vmatpush1.msra.mxu0 %v2484
  %4512 = vmatprep.subr.mxu0 0.0
  %4513 = vmatpush1.msra.mxu0 %v2485
  %4514 = vmatprep.subr.mxu0 0.0
  %4515 = vmatpush1.msra.mxu0 %v2486
  %4516 = vmatprep.subr.mxu0 0.0
  %4517 = vmatpush1.msra.mxu0 %v2487
  %4518 = vmatprep.subr.mxu0 0.0
  %4519 = vmatpush1.msra.mxu0 %v2488
  %4520 = vmatprep.subr.mxu0 0.0
  %4521 = vmatpush1.msra.mxu0 %v2489
  %4522 = vmatprep.subr.mxu0 0.0
  %4523 = vmatpush1.msra.mxu0 %v2490
  %4524 = vmatprep.subr.mxu0 0.0
  %4525 = vmatpush1.msra.mxu0 0.0
  %4526 = vmatprep.subr.mxu0 0.0
  %4527 = vmatpush1.msra.mxu0 0.0
  %4528 = vmatprep.subr.mxu0 0.0
  %4529 = vmatpush1.msra.mxu0 0.0
  %4530 = vmatprep.subr.mxu0 0.0
  %4531 = vmatpush1.msra.mxu0 0.0
  %4532 = vmatprep.subr.mxu0 0.0
  %4533 = vmatpush1.msra.mxu0 0.0
  %4534 = vmatprep.subr.mxu0 0.0
  %4535 = vmatpush1.msra.mxu0 0.0
  %4536 = vmatprep.subr.mxu0 0.0
  %4537 = vmatpush1.msra.mxu0 0.0
  %4538 = vmatprep.subr.mxu0 0.0
  %4539 = vmatpush1.msra.mxu0 0.0
  %4540 = vmatprep.subr.mxu0 0.0
  %4541 = vmatpush1.msra.mxu0 0.0
  %4542 = vmatprep.subr.mxu0 0.0
  %4543 = vmatpush1.msra.mxu0 0.0
  %4544 = vmatprep.subr.mxu0 0.0
  %4545 = vmatpush1.msra.mxu0 0.0
  %4546 = vmatprep.subr.mxu0 0.0
  %4547 = vmatpush1.msra.mxu0 0.0
  %4548 = vmatprep.subr.mxu0 0.0
  %4549 = vmatpush1.msra.mxu0 0.0
  %4550 = vmatprep.subr.mxu0 0.0
  %4551 = vmatpush1.msra.mxu0 0.0
  %4552 = vmatprep.subr.mxu0 0.0
  %4553 = vmatpush1.msra.mxu0 0.0
  %4554 = vmatprep.subr.mxu0 0.0
  %4555 = vmatpush1.msra.mxu0 0.0
  %4556 = vmatprep.subr.mxu0 0.0
  %4557 = vmatpush1.msra.mxu0 0.0
  %4558 = vmatprep.subr.mxu0 0.0
  %4559 = vmatpush1.msra.mxu0 0.0
  %4560 = vmatprep.subr.mxu0 0.0
  %4561 = vmatpush1.msra.mxu0 0.0
  %4562 = vmatprep.subr.mxu0 0.0
  %4563 = vmatpush1.msra.mxu0 0.0
  %4564 = vmatprep.subr.mxu0 0.0
  %4565 = vmatpush1.msra.mxu0 0.0
  %4566 = vmatprep.subr.mxu0 0.0
  %4567 = vmatpush1.msra.mxu0 0.0
  %4568 = vmatprep.subr.mxu0 0.0
  %4569 = vmatpush1.msra.mxu0 0.0
  %4570 = vmatprep.subr.mxu0 0.0
  %4571 = vmatpush1.msra.mxu0 0.0
  %4572 = vmatprep.mubr.f32.mxu0 0.0
  %4573 = vmatmul.mubr.f32.gmra.mrb[0].mxu0 %v4506
  %v4574 = vpop.f32.mrb[0].mxu0
  %v4575 = vadd.f32 0.0, %v4574
  %v4576 = vpop.f32.mrb[0].mxu0
  %4577 = vdwg.mxu0
  %v4578 = vmul.f32 %v4575, %v2589
  %v4580 = vsel %vm985, %v4504, 0
  %4582 = vmatprep.subr.mxu0 0.0
  %4583 = vmatpush1.msra.mxu0 %v2483
  %4584 = vmatprep.subr.mxu0 0.0
  %4585 = vmatpush1.msra.mxu0 %v2484
  %4586 = vmatprep.subr.mxu0 0.0
  %4587 = vmatpush1.msra.mxu0 %v2485
  %4588 = vmatprep.subr.mxu0 0.0
  %4589 = vmatpush1.msra.mxu0 %v2486
  %4590 = vmatprep.subr.mxu0 0.0
  %4591 = vmatpush1.msra.mxu0 %v2487
  %4592 = vmatprep.subr.mxu0 0.0
  %4593 = vmatpush1.msra.mxu0 %v2488
  %4594 = vmatprep.subr.mxu0 0.0
  %4595 = vmatpush1.msra.mxu0 %v2489
  %4596 = vmatprep.subr.mxu0 0.0
  %4597 = vmatpush1.msra.mxu0 %v2490
  %4598 = vmatprep.subr.mxu0 0.0
  %4599 = vmatpush1.msra.mxu0 0.0
  %4600 = vmatprep.subr.mxu0 0.0
  %4601 = vmatpush1.msra.mxu0 0.0
  %4602 = vmatprep.subr.mxu0 0.0
  %4603 = vmatpush1.msra.mxu0 0.0
  %4604 = vmatprep.subr.mxu0 0.0
  %4605 = vmatpush1.msra.mxu0 0.0
  %4606 = vmatprep.subr.mxu0 0.0
  %4607 = vmatpush1.msra.mxu0 0.0
  %4608 = vmatprep.subr.mxu0 0.0
  %4609 = vmatpush1.msra.mxu0 0.0
  %4610 = vmatprep.subr.mxu0 0.0
  %4611 = vmatpush1.msra.mxu0 0.0
  %4612 = vmatprep.subr.mxu0 0.0
  %4613 = vmatpush1.msra.mxu0 0.0
  %4614 = vmatprep.subr.mxu0 0.0
  %4615 = vmatpush1.msra.mxu0 0.0
  %4616 = vmatprep.subr.mxu0 0.0
  %4617 = vmatpush1.msra.mxu0 0.0
  %4618 = vmatprep.subr.mxu0 0.0
  %4619 = vmatpush1.msra.mxu0 0.0
  %4620 = vmatprep.subr.mxu0 0.0
  %4621 = vmatpush1.msra.mxu0 0.0
  %4622 = vmatprep.subr.mxu0 0.0
  %4623 = vmatpush1.msra.mxu0 0.0
  %4624 = vmatprep.subr.mxu0 0.0
  %4625 = vmatpush1.msra.mxu0 0.0
  %4626 = vmatprep.subr.mxu0 0.0
  %4627 = vmatpush1.msra.mxu0 0.0
  %4628 = vmatprep.subr.mxu0 0.0
  %4629 = vmatpush1.msra.mxu0 0.0
  %4630 = vmatprep.subr.mxu0 0.0
  %4631 = vmatpush1.msra.mxu0 0.0
  %4632 = vmatprep.subr.mxu0 0.0
  %4633 = vmatpush1.msra.mxu0 0.0
  %4634 = vmatprep.subr.mxu0 0.0
  %4635 = vmatpush1.msra.mxu0 0.0
  %4636 = vmatprep.subr.mxu0 0.0
  %4637 = vmatpush1.msra.mxu0 0.0
  %4638 = vmatprep.subr.mxu0 0.0
  %4639 = vmatpush1.msra.mxu0 0.0
  %4640 = vmatprep.subr.mxu0 0.0
  %4641 = vmatpush1.msra.mxu0 0.0
  %4642 = vmatprep.subr.mxu0 0.0
  %4643 = vmatpush1.msra.mxu0 0.0
  %4644 = vmatprep.subr.mxu0 0.0
  %4645 = vmatpush1.msra.mxu0 0.0
  %4646 = vmatprep.mubr.f32.mxu0 0.0
  %4647 = vmatmul.mubr.f32.gmra.mrb[0].mxu0 %v4580
  %v4648 = vpop.f32.mrb[0].mxu0
  %v4649 = vadd.f32 0.0, %v4648
  %v4650 = vpop.f32.mrb[0].mxu0
  %4651 = vdwg.mxu0
  %v4652 = vmul.f32 %v4649, %v2589
  %v4653 = vmul.f32 %v4578, %v4578
  %v4654 = vsub.f32 %v4652, %v4653
  %v4655 = vadd.f32 %v4654, 1e-05
  %v4656 = vrsqrt.pop %v4655
  %v4657 = vmul.f32 %v4488, %v4656
  %v4658 = vmul.f32 %v4578, %v4657
  %v4659 = vsub.f32 %v4489, %v4658
  %v4661 = vsel %vm95, %v4657, 0
  %4663 = vmatprep.subr.mxu0 0.0
  %4664 = vmatpush1.msra.mxu0 %v2496
  %4665 = vmatprep.subr.mxu0 0.0
  %4666 = vmatpush1.msra.mxu0 %v2497
  %4667 = vmatprep.subr.mxu0 0.0
  %4668 = vmatpush1.msra.mxu0 %v2498
  %4669 = vmatprep.subr.mxu0 0.0
  %4670 = vmatpush1.msra.mxu0 %v2499
  %4671 = vmatprep.subr.mxu0 0.0
  %4672 = vmatpush1.msra.mxu0 0.0
  %4673 = vmatprep.subr.mxu0 0.0
  %4674 = vmatpush1.msra.mxu0 0.0
  %4675 = vmatprep.subr.mxu0 0.0
  %4676 = vmatpush1.msra.mxu0 0.0
  %4677 = vmatprep.subr.mxu0 0.0
  %4678 = vmatpush1.msra.mxu0 0.0
  %4679 = vmatprep.subr.mxu0 0.0
  %4680 = vmatpush1.msra.mxu0 0.0
  %4681 = vmatprep.subr.mxu0 0.0
  %4682 = vmatpush1.msra.mxu0 0.0
  %4683 = vmatprep.subr.mxu0 0.0
  %4684 = vmatpush1.msra.mxu0 0.0
  %4685 = vmatprep.subr.mxu0 0.0
  %4686 = vmatpush1.msra.mxu0 0.0
  %4687 = vmatprep.subr.mxu0 0.0
  %4688 = vmatpush1.msra.mxu0 0.0
  %4689 = vmatprep.subr.mxu0 0.0
  %4690 = vmatpush1.msra.mxu0 0.0
  %4691 = vmatprep.subr.mxu0 0.0
  %4692 = vmatpush1.msra.mxu0 0.0
  %4693 = vmatprep.subr.mxu0 0.0
  %4694 = vmatpush1.msra.mxu0 0.0
  %4695 = vmatprep.subr.mxu0 0.0
  %4696 = vmatpush1.msra.mxu0 0.0
  %4697 = vmatprep.subr.mxu0 0.0
  %4698 = vmatpush1.msra.mxu0 0.0
  %4699 = vmatprep.subr.mxu0 0.0
  %4700 = vmatpush1.msra.mxu0 0.0
  %4701 = vmatprep.subr.mxu0 0.0
  %4702 = vmatpush1.msra.mxu0 0.0
  %4703 = vmatprep.subr.mxu0 0.0
  %4704 = vmatpush1.msra.mxu0 0.0
  %4705 = vmatprep.subr.mxu0 0.0
  %4706 = vmatpush1.msra.mxu0 0.0
  %4707 = vmatprep.subr.mxu0 0.0
  %4708 = vmatpush1.msra.mxu0 0.0
  %4709 = vmatprep.subr.mxu0 0.0
  %4710 = vmatpush1.msra.mxu0 0.0
  %4711 = vmatprep.subr.mxu0 0.0
  %4712 = vmatpush1.msra.mxu0 0.0
  %4713 = vmatprep.subr.mxu0 0.0
  %4714 = vmatpush1.msra.mxu0 0.0
  %4715 = vmatprep.subr.mxu0 0.0
  %4716 = vmatpush1.msra.mxu0 0.0
  %4717 = vmatprep.subr.mxu0 0.0
  %4718 = vmatpush1.msra.mxu0 0.0
  %4719 = vmatprep.subr.mxu0 0.0
  %4720 = vmatpush1.msra.mxu0 0.0
  %4721 = vmatprep.subr.mxu0 0.0
  %4722 = vmatpush1.msra.mxu0 0.0
  %4723 = vmatprep.subr.mxu0 0.0
  %4724 = vmatpush1.msra.mxu0 0.0
  %4725 = vmatprep.subr.mxu0 0.0
  %4726 = vmatpush1.msra.mxu0 0.0
  %4727 = vmatprep.mubr.f32.mxu0 0.0
  %4728 = vmatmul.mubr.f32.gmra.mrb[0].mxu0 %v4661
  %v4729 = vpop.f32.mrb[0].mxu0
  %v4730 = vadd.f32 0.0, %v4729
  %v4731 = vpop.f32.mrb[0].mxu0
  %4732 = vdwg.mxu0
  %v4734 = vsel %vm95, %v4659, 0
  %4736 = vmatprep.subr.mxu0 0.0
  %4737 = vmatpush1.msra.mxu0 %v2496
  %4738 = vmatprep.subr.mxu0 0.0
  %4739 = vmatpush1.msra.mxu0 %v2497
  %4740 = vmatprep.subr.mxu0 0.0
  %4741 = vmatpush1.msra.mxu0 %v2498
  %4742 = vmatprep.subr.mxu0 0.0
  %4743 = vmatpush1.msra.mxu0 %v2499
  %4744 = vmatprep.subr.mxu0 0.0
  %4745 = vmatpush1.msra.mxu0 0.0
  %4746 = vmatprep.subr.mxu0 0.0
  %4747 = vmatpush1.msra.mxu0 0.0
  %4748 = vmatprep.subr.mxu0 0.0
  %4749 = vmatpush1.msra.mxu0 0.0
  %4750 = vmatprep.subr.mxu0 0.0
  %4751 = vmatpush1.msra.mxu0 0.0
  %4752 = vmatprep.subr.mxu0 0.0
  %4753 = vmatpush1.msra.mxu0 0.0
  %4754 = vmatprep.subr.mxu0 0.0
  %4755 = vmatpush1.msra.mxu0 0.0
  %4756 = vmatprep.subr.mxu0 0.0
  %4757 = vmatpush1.msra.mxu0 0.0
  %4758 = vmatprep.subr.mxu0 0.0
  %4759 = vmatpush1.msra.mxu0 0.0
  %4760 = vmatprep.subr.mxu0 0.0
  %4761 = vmatpush1.msra.mxu0 0.0
  %4762 = vmatprep.subr.mxu0 0.0
  %4763 = vmatpush1.msra.mxu0 0.0
  %4764 = vmatprep.subr.mxu0 0.0
  %4765 = vmatpush1.msra.mxu0 0.0
  %4766 = vmatprep.subr.mxu0 0.0
  %4767 = vmatpush1.msra.mxu0 0.0
  %4768 = vmatprep.subr.mxu0 0.0
  %4769 = vmatpush1.msra.mxu0 0.0
  %4770 = vmatprep.subr.mxu0 0.0
  %4771 = vmatpush1.msra.mxu0 0.0
  %4772 = vmatprep.subr.mxu0 0.0
  %4773 = vmatpush1.msra.mxu0 0.0
  %4774 = vmatprep.subr.mxu0 0.0
  %4775 = vmatpush1.msra.mxu0 0.0
  %4776 = vmatprep.subr.mxu0 0.0
  %4777 = vmatpush1.msra.mxu0 0.0
  %4778 = vmatprep.subr.mxu0 0.0
  %4779 = vmatpush1.msra.mxu0 0.0
  %4780 = vmatprep.subr.mxu0 0.0
  %4781 = vmatpush1.msra.mxu0 0.0
  %4782 = vmatprep.subr.mxu0 0.0
  %4783 = vmatpush1.msra.mxu0 0.0
  %4784 = vmatprep.subr.mxu0 0.0
  %4785 = vmatpush1.msra.mxu0 0.0
  %4786 = vmatprep.subr.mxu0 0.0
  %4787 = vmatpush1.msra.mxu0 0.0
  %4788 = vmatprep.subr.mxu0 0.0
  %4789 = vmatpush1.msra.mxu0 0.0
  %4790 = vmatprep.subr.mxu0 0.0
  %4791 = vmatpush1.msra.mxu0 0.0
  %4792 = vmatprep.subr.mxu0 0.0
  %4793 = vmatpush1.msra.mxu0 0.0
  %4794 = vmatprep.subr.mxu0 0.0
  %4795 = vmatpush1.msra.mxu0 0.0
  %4796 = vmatprep.subr.mxu0 0.0
  %4797 = vmatpush1.msra.mxu0 0.0
  %4798 = vmatprep.subr.mxu0 0.0
  %4799 = vmatpush1.msra.mxu0 0.0
  %4800 = vmatprep.mubr.f32.mxu0 0.0
  %4801 = vmatmul.mubr.f32.gmra.mrb[0].mxu0 %v4734
  %v4802 = vpop.f32.mrb[0].mxu0
  %v4803 = vadd.f32 0.0, %v4802
  %v4804 = vpop.f32.mrb[0].mxu0
  %4805 = vdwg.mxu0
  %v4806 = vlaneseq
  %v4807 = vshrl.u32 %v4806, 7
  %v4808 = vsub.s32 0, %v4807
  %v4809 = vrot.slane %v4730, %v4808
  %v4810 = vmul.f32 %v4487, %v4809
  %v4811 = vlaneseq
  %v4812 = vshrl.u32 %v4811, 7
  %v4813 = vsub.s32 0, %v4812
  %v4814 = vrot.slane %v4803, %v4813
  %v4815 = vadd.f32 %v4810, %v4814
  %vm4816 = vcmp.gt.f32.partialorder %v4815, 0.0
  %v4817 = vmul.f32 %v4815, 0.2
  %v4818 = vsel %vm4816, %v4815, %v4817
  %v4819 = vmul.u32 %v2832, 2
  %v4820 = vadd.s32 %v809, 1
  %vm4821 = vcmp.eq.s32.totalorder %v4819, %v4820
  %vm4822 = vcmp.eq.s32.totalorder %v808, %v2831
  %vm4823 = vmand %vm4822, %vm4821
  %v4824 = vsel %vm4823, 1.0, 0.0
  %v4826 = vsel %vm2837, %v4824, 0
  %v4829 = vsel %vm2841, %v4818, 0
  %4831 = vmatprep.subr.mxu0 0.0
  %4832 = vmatpush1.msra.mxu0 %v4829
  %4833 = vmatprep.subr.mxu0 0.0
  %4834 = vmatpush1.msra.mxu0 0.0
  %4835 = vmatprep.subr.mxu0 0.0
  %4836 = vmatpush1.msra.mxu0 0.0
  %4837 = vmatprep.subr.mxu0 0.0
  %4838 = vmatpush1.msra.mxu0 0.0
  %4839 = vmatprep.subr.mxu0 0.0
  %4840 = vmatpush1.msra.mxu0 0.0
  %4841 = vmatprep.subr.mxu0 0.0
  %4842 = vmatpush1.msra.mxu0 0.0
  %4843 = vmatprep.subr.mxu0 0.0
  %4844 = vmatpush1.msra.mxu0 0.0
  %4845 = vmatprep.subr.mxu0 0.0
  %4846 = vmatpush1.msra.mxu0 0.0
  %4847 = vmatprep.subr.mxu0 0.0
  %4848 = vmatpush1.msra.mxu0 0.0
  %4849 = vmatprep.subr.mxu0 0.0
  %4850 = vmatpush1.msra.mxu0 0.0
  %4851 = vmatprep.subr.mxu0 0.0
  %4852 = vmatpush1.msra.mxu0 0.0
  %4853 = vmatprep.subr.mxu0 0.0
  %4854 = vmatpush1.msra.mxu0 0.0
  %4855 = vmatprep.subr.mxu0 0.0
  %4856 = vmatpush1.msra.mxu0 0.0
  %4857 = vmatprep.subr.mxu0 0.0
  %4858 = vmatpush1.msra.mxu0 0.0
  %4859 = vmatprep.subr.mxu0 0.0
  %4860 = vmatpush1.msra.mxu0 0.0
  %4861 = vmatprep.subr.mxu0 0.0
  %4862 = vmatpush1.msra.mxu0 0.0
  %4863 = vmatprep.subr.mxu0 0.0
  %4864 = vmatpush1.msra.mxu0 0.0
  %4865 = vmatprep.subr.mxu0 0.0
  %4866 = vmatpush1.msra.mxu0 0.0
  %4867 = vmatprep.subr.mxu0 0.0
  %4868 = vmatpush1.msra.mxu0 0.0
  %4869 = vmatprep.subr.mxu0 0.0
  %4870 = vmatpush1.msra.mxu0 0.0
  %4871 = vmatprep.subr.mxu0 0.0
  %4872 = vmatpush1.msra.mxu0 0.0
  %4873 = vmatprep.subr.mxu0 0.0
  %4874 = vmatpush1.msra.mxu0 0.0
  %4875 = vmatprep.subr.mxu0 0.0
  %4876 = vmatpush1.msra.mxu0 0.0
  %4877 = vmatprep.subr.mxu0 0.0
  %4878 = vmatpush1.msra.mxu0 0.0
  %4879 = vmatprep.subr.mxu0 0.0
  %4880 = vmatpush1.msra.mxu0 0.0
  %4881 = vmatprep.subr.mxu0 0.0
  %4882 = vmatpush1.msra.mxu0 0.0
  %4883 = vmatprep.subr.mxu0 0.0
  %4884 = vmatpush1.msra.mxu0 0.0
  %4885 = vmatprep.subr.mxu0 0.0
  %4886 = vmatpush1.msra.mxu0 0.0
  %4887 = vmatprep.subr.mxu0 0.0
  %4888 = vmatpush1.msra.mxu0 0.0
  %4889 = vmatprep.subr.mxu0 0.0
  %4890 = vmatpush1.msra.mxu0 0.0
  %4891 = vmatprep.subr.mxu0 0.0
  %4892 = vmatpush1.msra.mxu0 0.0
  %4893 = vmatprep.subr.mxu0 0.0
  %4894 = vmatpush1.msra.mxu0 0.0
  %4895 = vmatprep.mubr.f32.mxu0 0.0
  %4896 = vmatmul.mubr.f32.gmra.mrb[0].mxu0 %v4826
  %v4897 = vpop.f32.mrb[0].mxu0
  %v4898 = vadd.f32 0.0, %v4897
  %v4899 = vpop.f32.mrb[0].mxu0
  %4900 = vdwg.mxu0
  %v4901 = vld [vmem:[%s6] sm:$0xff]
  %v4902 = vld [vmem:[%s6 + $0x8] sm:$0xff]
  %v4903 = vld [vmem:[%s6 + $0x10] sm:$0xff]
  %v4904 = vld [vmem:[%s6 + $0x18] sm:$0xff]
  %v4905 = vld [vmem:[%s6 + $0x20] sm:$0xff]
  %v4906 = vld [vmem:[%s6 + $0x28] sm:$0xff]
  %v4907 = vld [vmem:[%s6 + $0x30] sm:$0xff]
  %v4908 = vld [vmem:[%s6 + $0x38] sm:$0xff]
  %vm4909 = vcmp.eq.s32.totalorder %v4819, %v809
  %vm4910 = vmand %vm4822, %vm4909
  %v4911 = vsel %vm4910, 1.0, 0.0
  %v4913 = vsel %vm2837, %v4911, 0
  %4915 = vmatprep.subr.mxu0 0.0
  %4916 = vmatpush1.msra.mxu0 %v4829
  %4917 = vmatprep.subr.mxu0 0.0
  %4918 = vmatpush1.msra.mxu0 0.0
  %4919 = vmatprep.subr.mxu0 0.0
  %4920 = vmatpush1.msra.mxu0 0.0
  %4921 = vmatprep.subr.mxu0 0.0
  %4922 = vmatpush1.msra.mxu0 0.0
  %4923 = vmatprep.subr.mxu0 0.0
  %4924 = vmatpush1.msra.mxu0 0.0
  %4925 = vmatprep.subr.mxu0 0.0
  %4926 = vmatpush1.msra.mxu0 0.0
  %4927 = vmatprep.subr.mxu0 0.0
  %4928 = vmatpush1.msra.mxu0 0.0
  %4929 = vmatprep.subr.mxu0 0.0
  %4930 = vmatpush1.msra.mxu0 0.0
  %4931 = vmatprep.subr.mxu0 0.0
  %4932 = vmatpush1.msra.mxu0 0.0
  %4933 = vmatprep.subr.mxu0 0.0
  %4934 = vmatpush1.msra.mxu0 0.0
  %4935 = vmatprep.subr.mxu0 0.0
  %4936 = vmatpush1.msra.mxu0 0.0
  %4937 = vmatprep.subr.mxu0 0.0
  %4938 = vmatpush1.msra.mxu0 0.0
  %4939 = vmatprep.subr.mxu0 0.0
  %4940 = vmatpush1.msra.mxu0 0.0
  %4941 = vmatprep.subr.mxu0 0.0
  %4942 = vmatpush1.msra.mxu0 0.0
  %4943 = vmatprep.subr.mxu0 0.0
  %4944 = vmatpush1.msra.mxu0 0.0
  %4945 = vmatprep.subr.mxu0 0.0
  %4946 = vmatpush1.msra.mxu0 0.0
  %4947 = vmatprep.subr.mxu0 0.0
  %4948 = vmatpush1.msra.mxu0 0.0
  %4949 = vmatprep.subr.mxu0 0.0
  %4950 = vmatpush1.msra.mxu0 0.0
  %4951 = vmatprep.subr.mxu0 0.0
  %4952 = vmatpush1.msra.mxu0 0.0
  %4953 = vmatprep.subr.mxu0 0.0
  %4954 = vmatpush1.msra.mxu0 0.0
  %4955 = vmatprep.subr.mxu0 0.0
  %4956 = vmatpush1.msra.mxu0 0.0
  %4957 = vmatprep.subr.mxu0 0.0
  %4958 = vmatpush1.msra.mxu0 0.0
  %4959 = vmatprep.subr.mxu0 0.0
  %4960 = vmatpush1.msra.mxu0 0.0
  %4961 = vmatprep.subr.mxu0 0.0
  %4962 = vmatpush1.msra.mxu0 0.0
  %4963 = vmatprep.subr.mxu0 0.0
  %4964 = vmatpush1.msra.mxu0 0.0
  %4965 = vmatprep.subr.mxu0 0.0
  %4966 = vmatpush1.msra.mxu0 0.0
  %4967 = vmatprep.subr.mxu0 0.0
  %4968 = vmatpush1.msra.mxu0 0.0
  %4969 = vmatprep.subr.mxu0 0.0
  %4970 = vmatpush1.msra.mxu0 0.0
  %4971 = vmatprep.subr.mxu0 0.0
  %4972 = vmatpush1.msra.mxu0 0.0
  %4973 = vmatprep.subr.mxu0 0.0
  %4974 = vmatpush1.msra.mxu0 0.0
  %4975 = vmatprep.subr.mxu0 0.0
  %4976 = vmatpush1.msra.mxu0 0.0
  %4977 = vmatprep.subr.mxu0 0.0
  %4978 = vmatpush1.msra.mxu0 0.0
  %4979 = vmatprep.mubr.f32.mxu0 0.0
  %4980 = vmatmul.mubr.f32.gmra.mrb[0].mxu0 %v4913
  %v4981 = vpop.f32.mrb[0].mxu0
  %v4982 = vadd.f32 0.0, %v4981
  %v4983 = vpop.f32.mrb[0].mxu0
  %4984 = vdwg.mxu0
  %s4985 = scalar_lea.vmem %s6, 64
  %v4986 = vld [vmem:[%s4985] sm:$0xff]
  %v4987 = vld [vmem:[%s4985 + $0x8] sm:$0xff]
  %v4988 = vld [vmem:[%s4985 + $0x10] sm:$0xff]
  %v4989 = vld [vmem:[%s4985 + $0x18] sm:$0xff]
  %v4990 = vld [vmem:[%s4985 + $0x20] sm:$0xff]
  %v4991 = vld [vmem:[%s4985 + $0x28] sm:$0xff]
  %v4992 = vld [vmem:[%s4985 + $0x30] sm:$0xff]
  %v4993 = vld [vmem:[%s4985 + $0x38] sm:$0xff]
  %v4995 = vsel %vm985, %v4982, 0
  %4997 = vmatprep.subr.mxu0 0.0
  %4998 = vmatpush1.msra.mxu0 %v4986
  %4999 = vmatprep.subr.mxu0 0.0
  %5000 = vmatpush1.msra.mxu0 %v4987
  %5001 = vmatprep.subr.mxu0 0.0
  %5002 = vmatpush1.msra.mxu0 %v4988
  %5003 = vmatprep.subr.mxu0 0.0
  %5004 = vmatpush1.msra.mxu0 %v4989
  %5005 = vmatprep.subr.mxu0 0.0
  %5006 = vmatpush1.msra.mxu0 %v4990
  %5007 = vmatprep.subr.mxu0 0.0
  %5008 = vmatpush1.msra.mxu0 %v4991
  %5009 = vmatprep.subr.mxu0 0.0
  %5010 = vmatpush1.msra.mxu0 %v4992
  %5011 = vmatprep.subr.mxu0 0.0
  %5012 = vmatpush1.msra.mxu0 %v4993
  %5013 = vmatprep.subr.mxu0 0.0
  %5014 = vmatpush1.msra.mxu0 0.0
  %5015 = vmatprep.subr.mxu0 0.0
  %5016 = vmatpush1.msra.mxu0 0.0
  %5017 = vmatprep.subr.mxu0 0.0
  %5018 = vmatpush1.msra.mxu0 0.0
  %5019 = vmatprep.subr.mxu0 0.0
  %5020 = vmatpush1.msra.mxu0 0.0
  %5021 = vmatprep.subr.mxu0 0.0
  %5022 = vmatpush1.msra.mxu0 0.0
  %5023 = vmatprep.subr.mxu0 0.0
  %5024 = vmatpush1.msra.mxu0 0.0
  %5025 = vmatprep.subr.mxu0 0.0
  %5026 = vmatpush1.msra.mxu0 0.0
  %5027 = vmatprep.subr.mxu0 0.0
  %5028 = vmatpush1.msra.mxu0 0.0
  %5029 = vmatprep.subr.mxu0 0.0
  %5030 = vmatpush1.msra.mxu0 0.0
  %5031 = vmatprep.subr.mxu0 0.0
  %5032 = vmatpush1.msra.mxu0 0.0
  %5033 = vmatprep.subr.mxu0 0.0
  %5034 = vmatpush1.msra.mxu0 0.0
  %5035 = vmatprep.subr.mxu0 0.0
  %5036 = vmatpush1.msra.mxu0 0.0
  %5037 = vmatprep.subr.mxu0 0.0
  %5038 = vmatpush1.msra.mxu0 0.0
  %5039 = vmatprep.subr.mxu0 0.0
  %5040 = vmatpush1.msra.mxu0 0.0
  %5041 = vmatprep.subr.mxu0 0.0
  %5042 = vmatpush1.msra.mxu0 0.0
  %5043 = vmatprep.subr.mxu0 0.0
  %5044 = vmatpush1.msra.mxu0 0.0
  %5045 = vmatprep.subr.mxu0 0.0
  %5046 = vmatpush1.msra.mxu0 0.0
  %5047 = vmatprep.subr.mxu0 0.0
  %5048 = vmatpush1.msra.mxu0 0.0
  %5049 = vmatprep.subr.mxu0 0.0
  %5050 = vmatpush1.msra.mxu0 0.0
  %5051 = vmatprep.subr.mxu0 0.0
  %5052 = vmatpush1.msra.mxu0 0.0
  %5053 = vmatprep.subr.mxu0 0.0
  %5054 = vmatpush1.msra.mxu0 0.0
  %5055 = vmatprep.subr.mxu0 0.0
  %5056 = vmatpush1.msra.mxu0 0.0
  %5057 = vmatprep.subr.mxu0 0.0
  %5058 = vmatpush1.msra.mxu0 0.0
  %5059 = vmatprep.subr.mxu0 0.0
  %5060 = vmatpush1.msra.mxu0 0.0
  %5061 = vmatprep.mubr.f32.mxu0 0.0
  %5062 = vmatmul.mubr.f32.gmra.mrb[0].mxu0 %v4995
  %v5063 = vpop.f32.mrb[0].mxu0
  %v5064 = vadd.f32 0.0, %v5063
  %v5065 = vpop.f32.mrb[0].mxu0
  %5066 = vdwg.mxu0
  %v5068 = vsel %vm985, %v4898, 0
  %5070 = vmatprep.subr.mxu0 0.0
  %5071 = vmatpush1.msra.mxu0 %v4901
  %5072 = vmatprep.subr.mxu0 0.0
  %5073 = vmatpush1.msra.mxu0 %v4902
  %5074 = vmatprep.subr.mxu0 0.0
  %5075 = vmatpush1.msra.mxu0 %v4903
  %5076 = vmatprep.subr.mxu0 0.0
  %5077 = vmatpush1.msra.mxu0 %v4904
  %5078 = vmatprep.subr.mxu0 0.0
  %5079 = vmatpush1.msra.mxu0 %v4905
  %5080 = vmatprep.subr.mxu0 0.0
  %5081 = vmatpush1.msra.mxu0 %v4906
  %5082 = vmatprep.subr.mxu0 0.0
  %5083 = vmatpush1.msra.mxu0 %v4907
  %5084 = vmatprep.subr.mxu0 0.0
  %5085 = vmatpush1.msra.mxu0 %v4908
  %5086 = vmatprep.subr.mxu0 0.0
  %5087 = vmatpush1.msra.mxu0 0.0
  %5088 = vmatprep.subr.mxu0 0.0
  %5089 = vmatpush1.msra.mxu0 0.0
  %5090 = vmatprep.subr.mxu0 0.0
  %5091 = vmatpush1.msra.mxu0 0.0
  %5092 = vmatprep.subr.mxu0 0.0
  %5093 = vmatpush1.msra.mxu0 0.0
  %5094 = vmatprep.subr.mxu0 0.0
  %5095 = vmatpush1.msra.mxu0 0.0
  %5096 = vmatprep.subr.mxu0 0.0
  %5097 = vmatpush1.msra.mxu0 0.0
  %5098 = vmatprep.subr.mxu0 0.0
  %5099 = vmatpush1.msra.mxu0 0.0
  %5100 = vmatprep.subr.mxu0 0.0
  %5101 = vmatpush1.msra.mxu0 0.0
  %5102 = vmatprep.subr.mxu0 0.0
  %5103 = vmatpush1.msra.mxu0 0.0
  %5104 = vmatprep.subr.mxu0 0.0
  %5105 = vmatpush1.msra.mxu0 0.0
  %5106 = vmatprep.subr.mxu0 0.0
  %5107 = vmatpush1.msra.mxu0 0.0
  %5108 = vmatprep.subr.mxu0 0.0
  %5109 = vmatpush1.msra.mxu0 0.0
  %5110 = vmatprep.subr.mxu0 0.0
  %5111 = vmatpush1.msra.mxu0 0.0
  %5112 = vmatprep.subr.mxu0 0.0
  %5113 = vmatpush1.msra.mxu0 0.0
  %5114 = vmatprep.subr.mxu0 0.0
  %5115 = vmatpush1.msra.mxu0 0.0
  %5116 = vmatprep.subr.mxu0 0.0
  %5117 = vmatpush1.msra.mxu0 0.0
  %5118 = vmatprep.subr.mxu0 0.0
  %5119 = vmatpush1.msra.mxu0 0.0
  %5120 = vmatprep.subr.mxu0 0.0
  %5121 = vmatpush1.msra.mxu0 0.0
  %5122 = vmatprep.subr.mxu0 0.0
  %5123 = vmatpush1.msra.mxu0 0.0
  %5124 = vmatprep.subr.mxu0 0.0
  %5125 = vmatpush1.msra.mxu0 0.0
  %5126 = vmatprep.subr.mxu0 0.0
  %5127 = vmatpush1.msra.mxu0 0.0
  %5128 = vmatprep.subr.mxu0 0.0
  %5129 = vmatpush1.msra.mxu0 0.0
  %5130 = vmatprep.subr.mxu0 0.0
  %5131 = vmatpush1.msra.mxu0 0.0
  %5132 = vmatprep.subr.mxu0 0.0
  %5133 = vmatpush1.msra.mxu0 0.0
  %5134 = vmatprep.mubr.f32.mxu0 0.0
  %5135 = vmatmul.mubr.f32.gmra.mrb[0].mxu0 %v5068
  %v5136 = vpop.f32.mrb[0].mxu0
  %v5137 = vadd.f32 %v5064, %v5136
  %v5138 = vpop.f32.mrb[0].mxu0
  %5139 = vdwg.mxu0
  %v5140 = vsub.s32 %v4820, 2
  %vm5141 = vcmp.eq.s32.totalorder %v4819, %v5140
  %vm5142 = vmand %vm4822, %vm5141
  %v5143 = vsel %vm5142, 1.0, 0.0
  %v5145 = vsel %vm2837, %v5143, 0
  %5147 = vmatprep.subr.mxu0 0.0
  %5148 = vmatpush1.msra.mxu0 %v4829
  %5149 = vmatprep.subr.mxu0 0.0
  %5150 = vmatpush1.msra.mxu0 0.0
  %5151 = vmatprep.subr.mxu0 0.0
  %5152 = vmatpush1.msra.mxu0 0.0
  %5153 = vmatprep.subr.mxu0 0.0
  %5154 = vmatpush1.msra.mxu0 0.0
  %5155 = vmatprep.subr.mxu0 0.0
  %5156 = vmatpush1.msra.mxu0 0.0
  %5157 = vmatprep.subr.mxu0 0.0
  %5158 = vmatpush1.msra.mxu0 0.0
  %5159 = vmatprep.subr.mxu0 0.0
  %5160 = vmatpush1.msra.mxu0 0.0
  %5161 = vmatprep.subr.mxu0 0.0
  %5162 = vmatpush1.msra.mxu0 0.0
  %5163 = vmatprep.subr.mxu0 0.0
  %5164 = vmatpush1.msra.mxu0 0.0
  %5165 = vmatprep.subr.mxu0 0.0
  %5166 = vmatpush1.msra.mxu0 0.0
  %5167 = vmatprep.subr.mxu0 0.0
  %5168 = vmatpush1.msra.mxu0 0.0
  %5169 = vmatprep.subr.mxu0 0.0
  %5170 = vmatpush1.msra.mxu0 0.0
  %5171 = vmatprep.subr.mxu0 0.0
  %5172 = vmatpush1.msra.mxu0 0.0
  %5173 = vmatprep.subr.mxu0 0.0
  %5174 = vmatpush1.msra.mxu0 0.0
  %5175 = vmatprep.subr.mxu0 0.0
  %5176 = vmatpush1.msra.mxu0 0.0
  %5177 = vmatprep.subr.mxu0 0.0
  %5178 = vmatpush1.msra.mxu0 0.0
  %5179 = vmatprep.subr.mxu0 0.0
  %5180 = vmatpush1.msra.mxu0 0.0
  %5181 = vmatprep.subr.mxu0 0.0
  %5182 = vmatpush1.msra.mxu0 0.0
  %5183 = vmatprep.subr.mxu0 0.0
  %5184 = vmatpush1.msra.mxu0 0.0
  %5185 = vmatprep.subr.mxu0 0.0
  %5186 = vmatpush1.msra.mxu0 0.0
  %5187 = vmatprep.subr.mxu0 0.0
  %5188 = vmatpush1.msra.mxu0 0.0
  %5189 = vmatprep.subr.mxu0 0.0
  %5190 = vmatpush1.msra.mxu0 0.0
  %5191 = vmatprep.subr.mxu0 0.0
  %5192 = vmatpush1.msra.mxu0 0.0
  %5193 = vmatprep.subr.mxu0 0.0
  %5194 = vmatpush1.msra.mxu0 0.0
  %5195 = vmatprep.subr.mxu0 0.0
  %5196 = vmatpush1.msra.mxu0 0.0
  %5197 = vmatprep.subr.mxu0 0.0
  %5198 = vmatpush1.msra.mxu0 0.0
  %5199 = vmatprep.subr.mxu0 0.0
  %5200 = vmatpush1.msra.mxu0 0.0
  %5201 = vmatprep.subr.mxu0 0.0
  %5202 = vmatpush1.msra.mxu0 0.0
  %5203 = vmatprep.subr.mxu0 0.0
  %5204 = vmatpush1.msra.mxu0 0.0
  %5205 = vmatprep.subr.mxu0 0.0
  %5206 = vmatpush1.msra.mxu0 0.0
  %5207 = vmatprep.subr.mxu0 0.0
  %5208 = vmatpush1.msra.mxu0 0.0
  %5209 = vmatprep.subr.mxu0 0.0
  %5210 = vmatpush1.msra.mxu0 0.0
  %5211 = vmatprep.mubr.f32.mxu0 0.0
  %5212 = vmatmul.mubr.f32.gmra.mrb[0].mxu0 %v5145
  %v5213 = vpop.f32.mrb[0].mxu0
  %v5214 = vadd.f32 0.0, %v5213
  %v5215 = vpop.f32.mrb[0].mxu0
  %5216 = vdwg.mxu0
  %s5217 = scalar_lea.vmem %s6, 128
  %v5218 = vld [vmem:[%s5217] sm:$0xff]
  %v5219 = vld [vmem:[%s5217 + $0x8] sm:$0xff]
  %v5220 = vld [vmem:[%s5217 + $0x10] sm:$0xff]
  %v5221 = vld [vmem:[%s5217 + $0x18] sm:$0xff]
  %v5222 = vld [vmem:[%s5217 + $0x20] sm:$0xff]
  %v5223 = vld [vmem:[%s5217 + $0x28] sm:$0xff]
  %v5224 = vld [vmem:[%s5217 + $0x30] sm:$0xff]
  %v5225 = vld [vmem:[%s5217 + $0x38] sm:$0xff]
  %v5227 = vsel %vm985, %v5214, 0
  %5229 = vmatprep.subr.mxu0 0.0
  %5230 = vmatpush1.msra.mxu0 %v5218
  %5231 = vmatprep.subr.mxu0 0.0
  %5232 = vmatpush1.msra.mxu0 %v5219
  %5233 = vmatprep.subr.mxu0 0.0
  %5234 = vmatpush1.msra.mxu0 %v5220
  %5235 = vmatprep.subr.mxu0 0.0
  %5236 = vmatpush1.msra.mxu0 %v5221
  %5237 = vmatprep.subr.mxu0 0.0
  %5238 = vmatpush1.msra.mxu0 %v5222
  %5239 = vmatprep.subr.mxu0 0.0
  %5240 = vmatpush1.msra.mxu0 %v5223
  %5241 = vmatprep.subr.mxu0 0.0
  %5242 = vmatpush1.msra.mxu0 %v5224
  %5243 = vmatprep.subr.mxu0 0.0
  %5244 = vmatpush1.msra.mxu0 %v5225
  %5245 = vmatprep.subr.mxu0 0.0
  %5246 = vmatpush1.msra.mxu0 0.0
  %5247 = vmatprep.subr.mxu0 0.0
  %5248 = vmatpush1.msra.mxu0 0.0
  %5249 = vmatprep.subr.mxu0 0.0
  %5250 = vmatpush1.msra.mxu0 0.0
  %5251 = vmatprep.subr.mxu0 0.0
  %5252 = vmatpush1.msra.mxu0 0.0
  %5253 = vmatprep.subr.mxu0 0.0
  %5254 = vmatpush1.msra.mxu0 0.0
  %5255 = vmatprep.subr.mxu0 0.0
  %5256 = vmatpush1.msra.mxu0 0.0
  %5257 = vmatprep.subr.mxu0 0.0
  %5258 = vmatpush1.msra.mxu0 0.0
  %5259 = vmatprep.subr.mxu0 0.0
  %5260 = vmatpush1.msra.mxu0 0.0
  %5261 = vmatprep.subr.mxu0 0.0
  %5262 = vmatpush1.msra.mxu0 0.0
  %5263 = vmatprep.subr.mxu0 0.0
  %5264 = vmatpush1.msra.mxu0 0.0
  %5265 = vmatprep.subr.mxu0 0.0
  %5266 = vmatpush1.msra.mxu0 0.0
  %5267 = vmatprep.subr.mxu0 0.0
  %5268 = vmatpush1.msra.mxu0 0.0
  %5269 = vmatprep.subr.mxu0 0.0
  %5270 = vmatpush1.msra.mxu0 0.0
  %5271 = vmatprep.subr.mxu0 0.0
  %5272 = vmatpush1.msra.mxu0 0.0
  %5273 = vmatprep.subr.mxu0 0.0
  %5274 = vmatpush1.msra.mxu0 0.0
  %5275 = vmatprep.subr.mxu0 0.0
  %5276 = vmatpush1.msra.mxu0 0.0
  %5277 = vmatprep.subr.mxu0 0.0
  %5278 = vmatpush1.msra.mxu0 0.0
  %5279 = vmatprep.subr.mxu0 0.0
  %5280 = vmatpush1.msra.mxu0 0.0
  %5281 = vmatprep.subr.mxu0 0.0
  %5282 = vmatpush1.msra.mxu0 0.0
  %5283 = vmatprep.subr.mxu0 0.0
  %5284 = vmatpush1.msra.mxu0 0.0
  %5285 = vmatprep.subr.mxu0 0.0
  %5286 = vmatpush1.msra.mxu0 0.0
  %5287 = vmatprep.subr.mxu0 0.0
  %5288 = vmatpush1.msra.mxu0 0.0
  %5289 = vmatprep.subr.mxu0 0.0
  %5290 = vmatpush1.msra.mxu0 0.0
  %5291 = vmatprep.subr.mxu0 0.0
  %5292 = vmatpush1.msra.mxu0 0.0
  %5293 = vmatprep.mubr.f32.mxu0 0.0
  %5294 = vmatmul.mubr.f32.gmra.mrb[0].mxu0 %v5227
  %v5295 = vpop.f32.mrb[0].mxu0
  %v5296 = vadd.f32 0.0, %v5295
  %v5297 = vpop.f32.mrb[0].mxu0
  %5298 = vdwg.mxu0
  %v5299 = vadd.f32 %v5137, %v5296
  %v5300 = vsub.s32 %v4820, 3
  %vm5301 = vcmp.eq.s32.totalorder %v4819, %v5300
  %vm5302 = vmand %vm4822, %vm5301
  %v5303 = vsel %vm5302, 1.0, 0.0
  %v5305 = vsel %vm2837, %v5303, 0
  %5307 = vmatprep.subr.mxu0 0.0
  %5308 = vmatpush1.msra.mxu0 %v4829
  %5309 = vmatprep.subr.mxu0 0.0
  %5310 = vmatpush1.msra.mxu0 0.0
  %5311 = vmatprep.subr.mxu0 0.0
  %5312 = vmatpush1.msra.mxu0 0.0
  %5313 = vmatprep.subr.mxu0 0.0
  %5314 = vmatpush1.msra.mxu0 0.0
  %5315 = vmatprep.subr.mxu0 0.0
  %5316 = vmatpush1.msra.mxu0 0.0
  %5317 = vmatprep.subr.mxu0 0.0
  %5318 = vmatpush1.msra.mxu0 0.0
  %5319 = vmatprep.subr.mxu0 0.0
  %5320 = vmatpush1.msra.mxu0 0.0
  %5321 = vmatprep.subr.mxu0 0.0
  %5322 = vmatpush1.msra.mxu0 0.0
  %5323 = vmatprep.subr.mxu0 0.0
  %5324 = vmatpush1.msra.mxu0 0.0
  %5325 = vmatprep.subr.mxu0 0.0
  %5326 = vmatpush1.msra.mxu0 0.0
  %5327 = vmatprep.subr.mxu0 0.0
  %5328 = vmatpush1.msra.mxu0 0.0
  %5329 = vmatprep.subr.mxu0 0.0
  %5330 = vmatpush1.msra.mxu0 0.0
  %5331 = vmatprep.subr.mxu0 0.0
  %5332 = vmatpush1.msra.mxu0 0.0
  %5333 = vmatprep.subr.mxu0 0.0
  %5334 = vmatpush1.msra.mxu0 0.0
  %5335 = vmatprep.subr.mxu0 0.0
  %5336 = vmatpush1.msra.mxu0 0.0
  %5337 = vmatprep.subr.mxu0 0.0
  %5338 = vmatpush1.msra.mxu0 0.0
  %5339 = vmatprep.subr.mxu0 0.0
  %5340 = vmatpush1.msra.mxu0 0.0
  %5341 = vmatprep.subr.mxu0 0.0
  %5342 = vmatpush1.msra.mxu0 0.0
  %5343 = vmatprep.subr.mxu0 0.0
  %5344 = vmatpush1.msra.mxu0 0.0
  %5345 = vmatprep.subr.mxu0 0.0
  %5346 = vmatpush1.msra.mxu0 0.0
  %5347 = vmatprep.subr.mxu0 0.0
  %5348 = vmatpush1.msra.mxu0 0.0
  %5349 = vmatprep.subr.mxu0 0.0
  %5350 = vmatpush1.msra.mxu0 0.0
  %5351 = vmatprep.subr.mxu0 0.0
  %5352 = vmatpush1.msra.mxu0 0.0
  %5353 = vmatprep.subr.mxu0 0.0
  %5354 = vmatpush1.msra.mxu0 0.0
  %5355 = vmatprep.subr.mxu0 0.0
  %5356 = vmatpush1.msra.mxu0 0.0
  %5357 = vmatprep.subr.mxu0 0.0
  %5358 = vmatpush1.msra.mxu0 0.0
  %5359 = vmatprep.subr.mxu0 0.0
  %5360 = vmatpush1.msra.mxu0 0.0
  %5361 = vmatprep.subr.mxu0 0.0
  %5362 = vmatpush1.msra.mxu0 0.0
  %5363 = vmatprep.subr.mxu0 0.0
  %5364 = vmatpush1.msra.mxu0 0.0
  %5365 = vmatprep.subr.mxu0 0.0
  %5366 = vmatpush1.msra.mxu0 0.0
  %5367 = vmatprep.subr.mxu0 0.0
  %5368 = vmatpush1.msra.mxu0 0.0
  %5369 = vmatprep.subr.mxu0 0.0
  %5370 = vmatpush1.msra.mxu0 0.0
  %5371 = vmatprep.mubr.f32.mxu0 0.0
  %5372 = vmatmul.mubr.f32.gmra.mrb[0].mxu0 %v5305
  %v5373 = vpop.f32.mrb[0].mxu0
  %v5374 = vadd.f32 0.0, %v5373
  %v5375 = vpop.f32.mrb[0].mxu0
  %5376 = vdwg.mxu0
  %s5377 = scalar_lea.vmem %s6, 192
  %v5378 = vld [vmem:[%s5377] sm:$0xff]
  %v5379 = vld [vmem:[%s5377 + $0x8] sm:$0xff]
  %v5380 = vld [vmem:[%s5377 + $0x10] sm:$0xff]
  %v5381 = vld [vmem:[%s5377 + $0x18] sm:$0xff]
  %v5382 = vld [vmem:[%s5377 + $0x20] sm:$0xff]
  %v5383 = vld [vmem:[%s5377 + $0x28] sm:$0xff]
  %v5384 = vld [vmem:[%s5377 + $0x30] sm:$0xff]
  %v5385 = vld [vmem:[%s5377 + $0x38] sm:$0xff]
  %v5387 = vsel %vm985, %v5374, 0
  %5389 = vmatprep.subr.mxu0 0.0
  %5390 = vmatpush1.msra.mxu0 %v5378
  %5391 = vmatprep.subr.mxu0 0.0
  %5392 = vmatpush1.msra.mxu0 %v5379
  %5393 = vmatprep.subr.mxu0 0.0
  %5394 = vmatpush1.msra.mxu0 %v5380
  %5395 = vmatprep.subr.mxu0 0.0
  %5396 = vmatpush1.msra.mxu0 %v5381
  %5397 = vmatprep.subr.mxu0 0.0
  %5398 = vmatpush1.msra.mxu0 %v5382
  %5399 = vmatprep.subr.mxu0 0.0
  %5400 = vmatpush1.msra.mxu0 %v5383
  %5401 = vmatprep.subr.mxu0 0.0
  %5402 = vmatpush1.msra.mxu0 %v5384
  %5403 = vmatprep.subr.mxu0 0.0
  %5404 = vmatpush1.msra.mxu0 %v5385
  %5405 = vmatprep.subr.mxu0 0.0
  %5406 = vmatpush1.msra.mxu0 0.0
  %5407 = vmatprep.subr.mxu0 0.0
  %5408 = vmatpush1.msra.mxu0 0.0
  %5409 = vmatprep.subr.mxu0 0.0
  %5410 = vmatpush1.msra.mxu0 0.0
  %5411 = vmatprep.subr.mxu0 0.0
  %5412 = vmatpush1.msra.mxu0 0.0
  %5413 = vmatprep.subr.mxu0 0.0
  %5414 = vmatpush1.msra.mxu0 0.0
  %5415 = vmatprep.subr.mxu0 0.0
  %5416 = vmatpush1.msra.mxu0 0.0
  %5417 = vmatprep.subr.mxu0 0.0
  %5418 = vmatpush1.msra.mxu0 0.0
  %5419 = vmatprep.subr.mxu0 0.0
  %5420 = vmatpush1.msra.mxu0 0.0
  %5421 = vmatprep.subr.mxu0 0.0
  %5422 = vmatpush1.msra.mxu0 0.0
  %5423 = vmatprep.subr.mxu0 0.0
  %5424 = vmatpush1.msra.mxu0 0.0
  %5425 = vmatprep.subr.mxu0 0.0
  %5426 = vmatpush1.msra.mxu0 0.0
  %5427 = vmatprep.subr.mxu0 0.0
  %5428 = vmatpush1.msra.mxu0 0.0
  %5429 = vmatprep.subr.mxu0 0.0
  %5430 = vmatpush1.msra.mxu0 0.0
  %5431 = vmatprep.subr.mxu0 0.0
  %5432 = vmatpush1.msra.mxu0 0.0
  %5433 = vmatprep.subr.mxu0 0.0
  %5434 = vmatpush1.msra.mxu0 0.0
  %5435 = vmatprep.subr.mxu0 0.0
  %5436 = vmatpush1.msra.mxu0 0.0
  %5437 = vmatprep.subr.mxu0 0.0
  %5438 = vmatpush1.msra.mxu0 0.0
  %5439 = vmatprep.subr.mxu0 0.0
  %5440 = vmatpush1.msra.mxu0 0.0
  %5441 = vmatprep.subr.mxu0 0.0
  %5442 = vmatpush1.msra.mxu0 0.0
  %5443 = vmatprep.subr.mxu0 0.0
  %5444 = vmatpush1.msra.mxu0 0.0
  %5445 = vmatprep.subr.mxu0 0.0
  %5446 = vmatpush1.msra.mxu0 0.0
  %5447 = vmatprep.subr.mxu0 0.0
  %5448 = vmatpush1.msra.mxu0 0.0
  %5449 = vmatprep.subr.mxu0 0.0
  %5450 = vmatpush1.msra.mxu0 0.0
  %5451 = vmatprep.subr.mxu0 0.0
  %5452 = vmatpush1.msra.mxu0 0.0
  %5453 = vmatprep.mubr.f32.mxu0 0.0
  %5454 = vmatmul.mubr.f32.gmra.mrb[0].mxu0 %v5387
  %v5455 = vpop.f32.mrb[0].mxu0
  %v5456 = vadd.f32 0.0, %v5455
  %v5457 = vpop.f32.mrb[0].mxu0
  %5458 = vdwg.mxu0
  %v5459 = vadd.f32 %v5299, %v5456
  %v5460 = vld [vmem:[%s17] sm:$0x1]
  %v5461 = vld [vmem:[%s18] sm:$0x1]
  %v5462 = vsel %vm985, %v5459, 0.0
  %v5463 = vrot.slane %v5462, 4
  %v5464 = vadd.f32 %v5462, %v5463
  %v5465 = vrot.slane %v5464, 2
  %v5466 = vadd.f32 %v5464, %v5465
  %v5467 = vrot.slane %v5466, 1
  %v5468 = vadd.f32 %v5466, %v5467
  %v5469 = vmul.f32 %v5459, %v5459
  %v5470 = vsel %vm985, %v5469, 0.0
  %v5471 = vrot.slane %v5470, 4
  %v5472 = vadd.f32 %v5470, %v5471
  %v5473 = vrot.slane %v5472, 2
  %v5474 = vadd.f32 %v5472, %v5473
  %v5475 = vrot.slane %v5474, 1
  %v5476 = vadd.f32 %v5474, %v5475
  %v5478 = vsel %vm985, %v5468, 0
  %5480 = vmatprep.subr.mxu0 0.0
  %5481 = vmatpush1.msra.mxu0 %v1478
  %5482 = vmatprep.subr.mxu0 0.0
  %5483 = vmatpush1.msra.mxu0 %v1479
  %5484 = vmatprep.subr.mxu0 0.0
  %5485 = vmatpush1.msra.mxu0 %v1480
  %5486 = vmatprep.subr.mxu0 0.0
  %5487 = vmatpush1.msra.mxu0 %v1481
  %5488 = vmatprep.subr.mxu0 0.0
  %5489 = vmatpush1.msra.mxu0 %v1482
  %5490 = vmatprep.subr.mxu0 0.0
  %5491 = vmatpush1.msra.mxu0 %v1483
  %5492 = vmatprep.subr.mxu0 0.0
  %5493 = vmatpush1.msra.mxu0 %v1484
  %5494 = vmatprep.subr.mxu0 0.0
  %5495 = vmatpush1.msra.mxu0 %v1485
  %5496 = vmatprep.subr.mxu0 0.0
  %5497 = vmatpush1.msra.mxu0 0.0
  %5498 = vmatprep.subr.mxu0 0.0
  %5499 = vmatpush1.msra.mxu0 0.0
  %5500 = vmatprep.subr.mxu0 0.0
  %5501 = vmatpush1.msra.mxu0 0.0
  %5502 = vmatprep.subr.mxu0 0.0
  %5503 = vmatpush1.msra.mxu0 0.0
  %5504 = vmatprep.subr.mxu0 0.0
  %5505 = vmatpush1.msra.mxu0 0.0
  %5506 = vmatprep.subr.mxu0 0.0
  %5507 = vmatpush1.msra.mxu0 0.0
  %5508 = vmatprep.subr.mxu0 0.0
  %5509 = vmatpush1.msra.mxu0 0.0
  %5510 = vmatprep.subr.mxu0 0.0
  %5511 = vmatpush1.msra.mxu0 0.0
  %5512 = vmatprep.subr.mxu0 0.0
  %5513 = vmatpush1.msra.mxu0 0.0
  %5514 = vmatprep.subr.mxu0 0.0
  %5515 = vmatpush1.msra.mxu0 0.0
  %5516 = vmatprep.subr.mxu0 0.0
  %5517 = vmatpush1.msra.mxu0 0.0
  %5518 = vmatprep.subr.mxu0 0.0
  %5519 = vmatpush1.msra.mxu0 0.0
  %5520 = vmatprep.subr.mxu0 0.0
  %5521 = vmatpush1.msra.mxu0 0.0
  %5522 = vmatprep.subr.mxu0 0.0
  %5523 = vmatpush1.msra.mxu0 0.0
  %5524 = vmatprep.subr.mxu0 0.0
  %5525 = vmatpush1.msra.mxu0 0.0
  %5526 = vmatprep.subr.mxu0 0.0
  %5527 = vmatpush1.msra.mxu0 0.0
  %5528 = vmatprep.subr.mxu0 0.0
  %5529 = vmatpush1.msra.mxu0 0.0
  %5530 = vmatprep.subr.mxu0 0.0
  %5531 = vmatpush1.msra.mxu0 0.0
  %5532 = vmatprep.subr.mxu0 0.0
  %5533 = vmatpush1.msra.mxu0 0.0
  %5534 = vmatprep.subr.mxu0 0.0
  %5535 = vmatpush1.msra.mxu0 0.0
  %5536 = vmatprep.subr.mxu0 0.0
  %5537 = vmatpush1.msra.mxu0 0.0
  %5538 = vmatprep.subr.mxu0 0.0
  %5539 = vmatpush1.msra.mxu0 0.0
  %5540 = vmatprep.subr.mxu0 0.0
  %5541 = vmatpush1.msra.mxu0 0.0
  %5542 = vmatprep.subr.mxu0 0.0
  %5543 = vmatpush1.msra.mxu0 0.0
  %5544 = vmatprep.mubr.f32.mxu0 0.0
  %5545 = vmatmul.mubr.f32.gmra.mrb[0].mxu0 %v5478
  %v5546 = vpop.f32.mrb[0].mxu0
  %v5547 = vadd.f32 0.0, %v5546
  %v5548 = vpop.f32.mrb[0].mxu0
  %5549 = vdwg.mxu0
  %v5550 = vmul.f32 %v5547, %v1578
  %v5552 = vsel %vm985, %v5476, 0
  %5554 = vmatprep.subr.mxu0 0.0
  %5555 = vmatpush1.msra.mxu0 %v1478
  %5556 = vmatprep.subr.mxu0 0.0
  %5557 = vmatpush1.msra.mxu0 %v1479
  %5558 = vmatprep.subr.mxu0 0.0
  %5559 = vmatpush1.msra.mxu0 %v1480
  %5560 = vmatprep.subr.mxu0 0.0
  %5561 = vmatpush1.msra.mxu0 %v1481
  %5562 = vmatprep.subr.mxu0 0.0
  %5563 = vmatpush1.msra.mxu0 %v1482
  %5564 = vmatprep.subr.mxu0 0.0
  %5565 = vmatpush1.msra.mxu0 %v1483
  %5566 = vmatprep.subr.mxu0 0.0
  %5567 = vmatpush1.msra.mxu0 %v1484
  %5568 = vmatprep.subr.mxu0 0.0
  %5569 = vmatpush1.msra.mxu0 %v1485
  %5570 = vmatprep.subr.mxu0 0.0
  %5571 = vmatpush1.msra.mxu0 0.0
  %5572 = vmatprep.subr.mxu0 0.0
  %5573 = vmatpush1.msra.mxu0 0.0
  %5574 = vmatprep.subr.mxu0 0.0
  %5575 = vmatpush1.msra.mxu0 0.0
  %5576 = vmatprep.subr.mxu0 0.0
  %5577 = vmatpush1.msra.mxu0 0.0
  %5578 = vmatprep.subr.mxu0 0.0
  %5579 = vmatpush1.msra.mxu0 0.0
  %5580 = vmatprep.subr.mxu0 0.0
  %5581 = vmatpush1.msra.mxu0 0.0
  %5582 = vmatprep.subr.mxu0 0.0
  %5583 = vmatpush1.msra.mxu0 0.0
  %5584 = vmatprep.subr.mxu0 0.0
  %5585 = vmatpush1.msra.mxu0 0.0
  %5586 = vmatprep.subr.mxu0 0.0
  %5587 = vmatpush1.msra.mxu0 0.0
  %5588 = vmatprep.subr.mxu0 0.0
  %5589 = vmatpush1.msra.mxu0 0.0
  %5590 = vmatprep.subr.mxu0 0.0
  %5591 = vmatpush1.msra.mxu0 0.0
  %5592 = vmatprep.subr.mxu0 0.0
  %5593 = vmatpush1.msra.mxu0 0.0
  %5594 = vmatprep.subr.mxu0 0.0
  %5595 = vmatpush1.msra.mxu0 0.0
  %5596 = vmatprep.subr.mxu0 0.0
  %5597 = vmatpush1.msra.mxu0 0.0
  %5598 = vmatprep.subr.mxu0 0.0
  %5599 = vmatpush1.msra.mxu0 0.0
  %5600 = vmatprep.subr.mxu0 0.0
  %5601 = vmatpush1.msra.mxu0 0.0
  %5602 = vmatprep.subr.mxu0 0.0
  %5603 = vmatpush1.msra.mxu0 0.0
  %5604 = vmatprep.subr.mxu0 0.0
  %5605 = vmatpush1.msra.mxu0 0.0
  %5606 = vmatprep.subr.mxu0 0.0
  %5607 = vmatpush1.msra.mxu0 0.0
  %5608 = vmatprep.subr.mxu0 0.0
  %5609 = vmatpush1.msra.mxu0 0.0
  %5610 = vmatprep.subr.mxu0 0.0
  %5611 = vmatpush1.msra.mxu0 0.0
  %5612 = vmatprep.subr.mxu0 0.0
  %5613 = vmatpush1.msra.mxu0 0.0
  %5614 = vmatprep.subr.mxu0 0.0
  %5615 = vmatpush1.msra.mxu0 0.0
  %5616 = vmatprep.subr.mxu0 0.0
  %5617 = vmatpush1.msra.mxu0 0.0
  %5618 = vmatprep.mubr.f32.mxu0 0.0
  %5619 = vmatmul.mubr.f32.gmra.mrb[0].mxu0 %v5552
  %v5620 = vpop.f32.mrb[0].mxu0
  %v5621 = vadd.f32 0.0, %v5620
  %v5622 = vpop.f32.mrb[0].mxu0
  %5623 = vdwg.mxu0
  %v5624 = vmul.f32 %v5621, %v1578
  %v5625 = vmul.f32 %v5550, %v5550
  %v5626 = vsub.f32 %v5624, %v5625
  %v5627 = vadd.f32 %v5626, 1e-05
  %v5628 = vrsqrt.pop %v5627
  %v5629 = vmul.f32 %v5460, %v5628
  %v5630 = vmul.f32 %v5550, %v5629
  %v5631 = vsub.f32 %v5461, %v5630
  %v5633 = vsel %vm818, %v5629, 0
  %5635 = vmatprep.subr.mxu0 0.0
  %5636 = vmatpush1.msra.mxu0 %v1488
  %5637 = vmatprep.subr.mxu0 0.0
  %5638 = vmatpush1.msra.mxu0 %v1489
  %5639 = vmatprep.subr.mxu0 0.0
  %5640 = vmatpush1.msra.mxu0 0.0
  %5641 = vmatprep.subr.mxu0 0.0
  %5642 = vmatpush1.msra.mxu0 0.0
  %5643 = vmatprep.subr.mxu0 0.0
  %5644 = vmatpush1.msra.mxu0 0.0
  %5645 = vmatprep.subr.mxu0 0.0
  %5646 = vmatpush1.msra.mxu0 0.0
  %5647 = vmatprep.subr.mxu0 0.0
  %5648 = vmatpush1.msra.mxu0 0.0
  %5649 = vmatprep.subr.mxu0 0.0
  %5650 = vmatpush1.msra.mxu0 0.0
  %5651 = vmatprep.subr.mxu0 0.0
  %5652 = vmatpush1.msra.mxu0 0.0
  %5653 = vmatprep.subr.mxu0 0.0
  %5654 = vmatpush1.msra.mxu0 0.0
  %5655 = vmatprep.subr.mxu0 0.0
  %5656 = vmatpush1.msra.mxu0 0.0
  %5657 = vmatprep.subr.mxu0 0.0
  %5658 = vmatpush1.msra.mxu0 0.0
  %5659 = vmatprep.subr.mxu0 0.0
  %5660 = vmatpush1.msra.mxu0 0.0
  %5661 = vmatprep.subr.mxu0 0.0
  %5662 = vmatpush1.msra.mxu0 0.0
  %5663 = vmatprep.subr.mxu0 0.0
  %5664 = vmatpush1.msra.mxu0 0.0
  %5665 = vmatprep.subr.mxu0 0.0
  %5666 = vmatpush1.msra.mxu0 0.0
  %5667 = vmatprep.subr.mxu0 0.0
  %5668 = vmatpush1.msra.mxu0 0.0
  %5669 = vmatprep.subr.mxu0 0.0
  %5670 = vmatpush1.msra.mxu0 0.0
  %5671 = vmatprep.subr.mxu0 0.0
  %5672 = vmatpush1.msra.mxu0 0.0
  %5673 = vmatprep.subr.mxu0 0.0
  %5674 = vmatpush1.msra.mxu0 0.0
  %5675 = vmatprep.subr.mxu0 0.0
  %5676 = vmatpush1.msra.mxu0 0.0
  %5677 = vmatprep.subr.mxu0 0.0
  %5678 = vmatpush1.msra.mxu0 0.0
  %5679 = vmatprep.subr.mxu0 0.0
  %5680 = vmatpush1.msra.mxu0 0.0
  %5681 = vmatprep.subr.mxu0 0.0
  %5682 = vmatpush1.msra.mxu0 0.0
  %5683 = vmatprep.subr.mxu0 0.0
  %5684 = vmatpush1.msra.mxu0 0.0
  %5685 = vmatprep.subr.mxu0 0.0
  %5686 = vmatpush1.msra.mxu0 0.0
  %5687 = vmatprep.subr.mxu0 0.0
  %5688 = vmatpush1.msra.mxu0 0.0
  %5689 = vmatprep.subr.mxu0 0.0
  %5690 = vmatpush1.msra.mxu0 0.0
  %5691 = vmatprep.subr.mxu0 0.0
  %5692 = vmatpush1.msra.mxu0 0.0
  %5693 = vmatprep.subr.mxu0 0.0
  %5694 = vmatpush1.msra.mxu0 0.0
  %5695 = vmatprep.subr.mxu0 0.0
  %5696 = vmatpush1.msra.mxu0 0.0
  %5697 = vmatprep.subr.mxu0 0.0
  %5698 = vmatpush1.msra.mxu0 0.0
  %5699 = vmatprep.mubr.f32.mxu0 0.0
  %5700 = vmatmul.mubr.f32.gmra.mrb[0].mxu0 %v5633
  %v5701 = vpop.f32.mrb[0].mxu0
  %v5702 = vadd.f32 0.0, %v5701
  %v5703 = vpop.f32.mrb[0].mxu0
  %5704 = vdwg.mxu0
  %v5706 = vsel %vm818, %v5631, 0
  %5708 = vmatprep.subr.mxu0 0.0
  %5709 = vmatpush1.msra.mxu0 %v1488
  %5710 = vmatprep.subr.mxu0 0.0
  %5711 = vmatpush1.msra.mxu0 %v1489
  %5712 = vmatprep.subr.mxu0 0.0
  %5713 = vmatpush1.msra.mxu0 0.0
  %5714 = vmatprep.subr.mxu0 0.0
  %5715 = vmatpush1.msra.mxu0 0.0
  %5716 = vmatprep.subr.mxu0 0.0
  %5717 = vmatpush1.msra.mxu0 0.0
  %5718 = vmatprep.subr.mxu0 0.0
  %5719 = vmatpush1.msra.mxu0 0.0
  %5720 = vmatprep.subr.mxu0 0.0
  %5721 = vmatpush1.msra.mxu0 0.0
  %5722 = vmatprep.subr.mxu0 0.0
  %5723 = vmatpush1.msra.mxu0 0.0
  %5724 = vmatprep.subr.mxu0 0.0
  %5725 = vmatpush1.msra.mxu0 0.0
  %5726 = vmatprep.subr.mxu0 0.0
  %5727 = vmatpush1.msra.mxu0 0.0
  %5728 = vmatprep.subr.mxu0 0.0
  %5729 = vmatpush1.msra.mxu0 0.0
  %5730 = vmatprep.subr.mxu0 0.0
  %5731 = vmatpush1.msra.mxu0 0.0
  %5732 = vmatprep.subr.mxu0 0.0
  %5733 = vmatpush1.msra.mxu0 0.0
  %5734 = vmatprep.subr.mxu0 0.0
  %5735 = vmatpush1.msra.mxu0 0.0
  %5736 = vmatprep.subr.mxu0 0.0
  %5737 = vmatpush1.msra.mxu0 0.0
  %5738 = vmatprep.subr.mxu0 0.0
  %5739 = vmatpush1.msra.mxu0 0.0
  %5740 = vmatprep.subr.mxu0 0.0
  %5741 = vmatpush1.msra.mxu0 0.0
  %5742 = vmatprep.subr.mxu0 0.0
  %5743 = vmatpush1.msra.mxu0 0.0
  %5744 = vmatprep.subr.mxu0 0.0
  %5745 = vmatpush1.msra.mxu0 0.0
  %5746 = vmatprep.subr.mxu0 0.0
  %5747 = vmatpush1.msra.mxu0 0.0
  %5748 = vmatprep.subr.mxu0 0.0
  %5749 = vmatpush1.msra.mxu0 0.0
  %5750 = vmatprep.subr.mxu0 0.0
  %5751 = vmatpush1.msra.mxu0 0.0
  %5752 = vmatprep.subr.mxu0 0.0
  %5753 = vmatpush1.msra.mxu0 0.0
  %5754 = vmatprep.subr.mxu0 0.0
  %5755 = vmatpush1.msra.mxu0 0.0
  %5756 = vmatprep.subr.mxu0 0.0
  %5757 = vmatpush1.msra.mxu0 0.0
  %5758 = vmatprep.subr.mxu0 0.0
  %5759 = vmatpush1.msra.mxu0 0.0
  %5760 = vmatprep.subr.mxu0 0.0
  %5761 = vmatpush1.msra.mxu0 0.0
  %5762 = vmatprep.subr.mxu0 0.0
  %5763 = vmatpush1.msra.mxu0 0.0
  %5764 = vmatprep.subr.mxu0 0.0
  %5765 = vmatpush1.msra.mxu0 0.0
  %5766 = vmatprep.subr.mxu0 0.0
  %5767 = vmatpush1.msra.mxu0 0.0
  %5768 = vmatprep.subr.mxu0 0.0
  %5769 = vmatpush1.msra.mxu0 0.0
  %5770 = vmatprep.subr.mxu0 0.0
  %5771 = vmatpush1.msra.mxu0 0.0
  %5772 = vmatprep.mubr.f32.mxu0 0.0
  %5773 = vmatmul.mubr.f32.gmra.mrb[0].mxu0 %v5706
  %v5774 = vpop.f32.mrb[0].mxu0
  %v5775 = vadd.f32 0.0, %v5774
  %v5776 = vpop.f32.mrb[0].mxu0
  %5777 = vdwg.mxu0
  %v5778 = vlaneseq
  %v5779 = vshrl.u32 %v5778, 7
  %v5780 = vsub.s32 0, %v5779
  %v5781 = vrot.slane %v5702, %v5780
  %v5782 = vmul.f32 %v5459, %v5781
  %v5783 = vlaneseq
  %v5784 = vshrl.u32 %v5783, 7
  %v5785 = vsub.s32 0, %v5784
  %v5786 = vrot.slane %v5775, %v5785
  %v5787 = vadd.f32 %v5782, %v5786
  %vm5788 = vcmp.gt.f32.partialorder %v5787, 0.0
  %v5789 = vmul.f32 %v5787, 0.2
  %v5790 = vsel %vm5788, %v5787, %v5789
  %v5791 = vmul.u32 %v1823, 2
  %v5792 = vadd.s32 %v79, 1
  %v5793 = vadd.s32 %v80, 1
  %vm5794 = vcmp.eq.s32.totalorder %v5791, %v5792
  %vm5795 = vcmp.eq.s32.totalorder %v5791, %v5793
  %vm5796 = vcmp.eq.s32.totalorder %v77, %v1822
  %vm5797 = vcmp.eq.s32.totalorder %v78, %v1822
  %vm5798 = vmand %vm5796, %vm5794
  %vm5799 = vmand %vm5797, %vm5795
  %v5800 = vsel %vm5798, 1.0, 0.0
  %v5801 = vsel %vm5799, 1.0, 0.0
  %v5803 = vsel %vm1830, %v5800, 0
  %v5806 = vsel %vm1830, %v5801, 0
  %5808 = vmatprep.subr.mxu0 0.0
  %5809 = vmatpush1.msra.mxu0 %v5790
  %5810 = vmatprep.subr.mxu0 0.0
  %5811 = vmatpush1.msra.mxu0 0.0
  %5812 = vmatprep.subr.mxu0 0.0
  %5813 = vmatpush1.msra.mxu0 0.0
  %5814 = vmatprep.subr.mxu0 0.0
  %5815 = vmatpush1.msra.mxu0 0.0
  %5816 = vmatprep.subr.mxu0 0.0
  %5817 = vmatpush1.msra.mxu0 0.0
  %5818 = vmatprep.subr.mxu0 0.0
  %5819 = vmatpush1.msra.mxu0 0.0
  %5820 = vmatprep.subr.mxu0 0.0
  %5821 = vmatpush1.msra.mxu0 0.0
  %5822 = vmatprep.subr.mxu0 0.0
  %5823 = vmatpush1.msra.mxu0 0.0
  %5824 = vmatprep.subr.mxu0 0.0
  %5825 = vmatpush1.msra.mxu0 0.0
  %5826 = vmatprep.subr.mxu0 0.0
  %5827 = vmatpush1.msra.mxu0 0.0
  %5828 = vmatprep.subr.mxu0 0.0
  %5829 = vmatpush1.msra.mxu0 0.0
  %5830 = vmatprep.subr.mxu0 0.0
  %5831 = vmatpush1.msra.mxu0 0.0
  %5832 = vmatprep.subr.mxu0 0.0
  %5833 = vmatpush1.msra.mxu0 0.0
  %5834 = vmatprep.subr.mxu0 0.0
  %5835 = vmatpush1.msra.mxu0 0.0
  %5836 = vmatprep.subr.mxu0 0.0
  %5837 = vmatpush1.msra.mxu0 0.0
  %5838 = vmatprep.subr.mxu0 0.0
  %5839 = vmatpush1.msra.mxu0 0.0
  %5840 = vmatprep.subr.mxu0 0.0
  %5841 = vmatpush1.msra.mxu0 0.0
  %5842 = vmatprep.subr.mxu0 0.0
  %5843 = vmatpush1.msra.mxu0 0.0
  %5844 = vmatprep.subr.mxu0 0.0
  %5845 = vmatpush1.msra.mxu0 0.0
  %5846 = vmatprep.subr.mxu0 0.0
  %5847 = vmatpush1.msra.mxu0 0.0
  %5848 = vmatprep.subr.mxu0 0.0
  %5849 = vmatpush1.msra.mxu0 0.0
  %5850 = vmatprep.subr.mxu0 0.0
  %5851 = vmatpush1.msra.mxu0 0.0
  %5852 = vmatprep.subr.mxu0 0.0
  %5853 = vmatpush1.msra.mxu0 0.0
  %5854 = vmatprep.subr.mxu0 0.0
  %5855 = vmatpush1.msra.mxu0 0.0
  %5856 = vmatprep.subr.mxu0 0.0
  %5857 = vmatpush1.msra.mxu0 0.0
  %5858 = vmatprep.subr.mxu0 0.0
  %5859 = vmatpush1.msra.mxu0 0.0
  %5860 = vmatprep.subr.mxu0 0.0
  %5861 = vmatpush1.msra.mxu0 0.0
  %5862 = vmatprep.subr.mxu0 0.0
  %5863 = vmatpush1.msra.mxu0 0.0
  %5864 = vmatprep.subr.mxu0 0.0
  %5865 = vmatpush1.msra.mxu0 0.0
  %5866 = vmatprep.subr.mxu0 0.0
  %5867 = vmatpush1.msra.mxu0 0.0
  %5868 = vmatprep.subr.mxu0 0.0
  %5869 = vmatpush1.msra.mxu0 0.0
  %5870 = vmatprep.subr.mxu0 0.0
  %5871 = vmatpush1.msra.mxu0 0.0
  %5872 = vmatprep.mubr.f32.mxu0 0.0
  %5873 = vmatmul.mubr.f32.gmra.mrb[0].mxu0 %v5803
  %v5874 = vpop.f32.mrb[0].mxu0
  %v5875 = vadd.f32 0.0, %v5874
  %v5876 = vpop.f32.mrb[0].mxu0
  %5877 = vmatprep.mubr.f32.mxu0 0.0
  %5878 = vmatmul.mubr.f32.gmra.mrb[0].mxu0 %v5806
  %v5879 = vpop.f32.mrb[0].mxu0
  %v5880 = vadd.f32 0.0, %v5879
  %v5881 = vpop.f32.mrb[0].mxu0
  %5882 = vdwg.mxu0
  %v5883 = vld [vmem:[%s7] sm:$0xff]
  %v5884 = vld [vmem:[%s7 + $0x8] sm:$0xff]
  %v5885 = vld [vmem:[%s7 + $0x10] sm:$0xff]
  %v5886 = vld [vmem:[%s7 + $0x18] sm:$0xff]
  %v5887 = vld [vmem:[%s7 + $0x20] sm:$0xff]
  %v5888 = vld [vmem:[%s7 + $0x28] sm:$0xff]
  %v5889 = vld [vmem:[%s7 + $0x30] sm:$0xff]
  %v5890 = vld [vmem:[%s7 + $0x38] sm:$0xff]
  %vm5891 = vcmp.eq.s32.totalorder %v5791, %v79
  %vm5892 = vcmp.eq.s32.totalorder %v5791, %v80
  %vm5893 = vmand %vm5796, %vm5891
  %vm5894 = vmand %vm5797, %vm5892
  %v5895 = vsel %vm5893, 1.0, 0.0
  %v5896 = vsel %vm5894, 1.0, 0.0
  %v5898 = vsel %vm1830, %v5895, 0
  %v5901 = vsel %vm1830, %v5896, 0
  %5903 = vmatprep.subr.mxu0 0.0
  %5904 = vmatpush1.msra.mxu0 %v5790
  %5905 = vmatprep.subr.mxu0 0.0
  %5906 = vmatpush1.msra.mxu0 0.0
  %5907 = vmatprep.subr.mxu0 0.0
  %5908 = vmatpush1.msra.mxu0 0.0
  %5909 = vmatprep.subr.mxu0 0.0
  %5910 = vmatpush1.msra.mxu0 0.0
  %5911 = vmatprep.subr.mxu0 0.0
  %5912 = vmatpush1.msra.mxu0 0.0
  %5913 = vmatprep.subr.mxu0 0.0
  %5914 = vmatpush1.msra.mxu0 0.0
  %5915 = vmatprep.subr.mxu0 0.0
  %5916 = vmatpush1.msra.mxu0 0.0
  %5917 = vmatprep.subr.mxu0 0.0
  %5918 = vmatpush1.msra.mxu0 0.0
  %5919 = vmatprep.subr.mxu0 0.0
  %5920 = vmatpush1.msra.mxu0 0.0
  %5921 = vmatprep.subr.mxu0 0.0
  %5922 = vmatpush1.msra.mxu0 0.0
  %5923 = vmatprep.subr.mxu0 0.0
  %5924 = vmatpush1.msra.mxu0 0.0
  %5925 = vmatprep.subr.mxu0 0.0
  %5926 = vmatpush1.msra.mxu0 0.0
  %5927 = vmatprep.subr.mxu0 0.0
  %5928 = vmatpush1.msra.mxu0 0.0
  %5929 = vmatprep.subr.mxu0 0.0
  %5930 = vmatpush1.msra.mxu0 0.0
  %5931 = vmatprep.subr.mxu0 0.0
  %5932 = vmatpush1.msra.mxu0 0.0
  %5933 = vmatprep.subr.mxu0 0.0
  %5934 = vmatpush1.msra.mxu0 0.0
  %5935 = vmatprep.subr.mxu0 0.0
  %5936 = vmatpush1.msra.mxu0 0.0
  %5937 = vmatprep.subr.mxu0 0.0
  %5938 = vmatpush1.msra.mxu0 0.0
  %5939 = vmatprep.subr.mxu0 0.0
  %5940 = vmatpush1.msra.mxu0 0.0
  %5941 = vmatprep.subr.mxu0 0.0
  %5942 = vmatpush1.msra.mxu0 0.0
  %5943 = vmatprep.subr.mxu0 0.0
  %5944 = vmatpush1.msra.mxu0 0.0
  %5945 = vmatprep.subr.mxu0 0.0
  %5946 = vmatpush1.msra.mxu0 0.0
  %5947 = vmatprep.subr.mxu0 0.0
  %5948 = vmatpush1.msra.mxu0 0.0
  %5949 = vmatprep.subr.mxu0 0.0
  %5950 = vmatpush1.msra.mxu0 0.0
  %5951 = vmatprep.subr.mxu0 0.0
  %5952 = vmatpush1.msra.mxu0 0.0
  %5953 = vmatprep.subr.mxu0 0.0
  %5954 = vmatpush1.msra.mxu0 0.0
  %5955 = vmatprep.subr.mxu0 0.0
  %5956 = vmatpush1.msra.mxu0 0.0
  %5957 = vmatprep.subr.mxu0 0.0
  %5958 = vmatpush1.msra.mxu0 0.0
  %5959 = vmatprep.subr.mxu0 0.0
  %5960 = vmatpush1.msra.mxu0 0.0
  %5961 = vmatprep.subr.mxu0 0.0
  %5962 = vmatpush1.msra.mxu0 0.0
  %5963 = vmatprep.subr.mxu0 0.0
  %5964 = vmatpush1.msra.mxu0 0.0
  %5965 = vmatprep.subr.mxu0 0.0
  %5966 = vmatpush1.msra.mxu0 0.0
  %5967 = vmatprep.mubr.f32.mxu0 0.0
  %5968 = vmatmul.mubr.f32.gmra.mrb[0].mxu0 %v5898
  %v5969 = vpop.f32.mrb[0].mxu0
  %v5970 = vadd.f32 0.0, %v5969
  %v5971 = vpop.f32.mrb[0].mxu0
  %5972 = vmatprep.mubr.f32.mxu0 0.0
  %5973 = vmatmul.mubr.f32.gmra.mrb[0].mxu0 %v5901
  %v5974 = vpop.f32.mrb[0].mxu0
  %v5975 = vadd.f32 0.0, %v5974
  %v5976 = vpop.f32.mrb[0].mxu0
  %5977 = vdwg.mxu0
  %s5978 = scalar_lea.vmem %s7, 64
  %v5979 = vld [vmem:[%s5978] sm:$0xff]
  %v5980 = vld [vmem:[%s5978 + $0x8] sm:$0xff]
  %v5981 = vld [vmem:[%s5978 + $0x10] sm:$0xff]
  %v5982 = vld [vmem:[%s5978 + $0x18] sm:$0xff]
  %v5983 = vld [vmem:[%s5978 + $0x20] sm:$0xff]
  %v5984 = vld [vmem:[%s5978 + $0x28] sm:$0xff]
  %v5985 = vld [vmem:[%s5978 + $0x30] sm:$0xff]
  %v5986 = vld [vmem:[%s5978 + $0x38] sm:$0xff]
  %v5988 = vsel %vm985, %v5970, 0
  %v5991 = vsel %vm985, %v5975, 0
  %5993 = vmatprep.subr.mxu0 0.0
  %5994 = vmatpush1.msra.mxu0 %v5979
  %5995 = vmatprep.subr.mxu0 0.0
  %5996 = vmatpush1.msra.mxu0 %v5980
  %5997 = vmatprep.subr.mxu0 0.0
  %5998 = vmatpush1.msra.mxu0 %v5981
  %5999 = vmatprep.subr.mxu0 0.0
  %6000 = vmatpush1.msra.mxu0 %v5982
  %6001 = vmatprep.subr.mxu0 0.0
  %6002 = vmatpush1.msra.mxu0 %v5983
  %6003 = vmatprep.subr.mxu0 0.0
  %6004 = vmatpush1.msra.mxu0 %v5984
  %6005 = vmatprep.subr.mxu0 0.0
  %6006 = vmatpush1.msra.mxu0 %v5985
  %6007 = vmatprep.subr.mxu0 0.0
  %6008 = vmatpush1.msra.mxu0 %v5986
  %6009 = vmatprep.subr.mxu0 0.0
  %6010 = vmatpush1.msra.mxu0 0.0
  %6011 = vmatprep.subr.mxu0 0.0
  %6012 = vmatpush1.msra.mxu0 0.0
  %6013 = vmatprep.subr.mxu0 0.0
  %6014 = vmatpush1.msra.mxu0 0.0
  %6015 = vmatprep.subr.mxu0 0.0
  %6016 = vmatpush1.msra.mxu0 0.0
  %6017 = vmatprep.subr.mxu0 0.0
  %6018 = vmatpush1.msra.mxu0 0.0
  %6019 = vmatprep.subr.mxu0 0.0
  %6020 = vmatpush1.msra.mxu0 0.0
  %6021 = vmatprep.subr.mxu0 0.0
  %6022 = vmatpush1.msra.mxu0 0.0
  %6023 = vmatprep.subr.mxu0 0.0
  %6024 = vmatpush1.msra.mxu0 0.0
  %6025 = vmatprep.subr.mxu0 0.0
  %6026 = vmatpush1.msra.mxu0 0.0
  %6027 = vmatprep.subr.mxu0 0.0
  %6028 = vmatpush1.msra.mxu0 0.0
  %6029 = vmatprep.subr.mxu0 0.0
  %6030 = vmatpush1.msra.mxu0 0.0
  %6031 = vmatprep.subr.mxu0 0.0
  %6032 = vmatpush1.msra.mxu0 0.0
  %6033 = vmatprep.subr.mxu0 0.0
  %6034 = vmatpush1.msra.mxu0 0.0
  %6035 = vmatprep.subr.mxu0 0.0
  %6036 = vmatpush1.msra.mxu0 0.0
  %6037 = vmatprep.subr.mxu0 0.0
  %6038 = vmatpush1.msra.mxu0 0.0
  %6039 = vmatprep.subr.mxu0 0.0
  %6040 = vmatpush1.msra.mxu0 0.0
  %6041 = vmatprep.subr.mxu0 0.0
  %6042 = vmatpush1.msra.mxu0 0.0
  %6043 = vmatprep.subr.mxu0 0.0
  %6044 = vmatpush1.msra.mxu0 0.0
  %6045 = vmatprep.subr.mxu0 0.0
  %6046 = vmatpush1.msra.mxu0 0.0
  %6047 = vmatprep.subr.mxu0 0.0
  %6048 = vmatpush1.msra.mxu0 0.0
  %6049 = vmatprep.subr.mxu0 0.0
  %6050 = vmatpush1.msra.mxu0 0.0
  %6051 = vmatprep.subr.mxu0 0.0
  %6052 = vmatpush1.msra.mxu0 0.0
  %6053 = vmatprep.subr.mxu0 0.0
  %6054 = vmatpush1.msra.mxu0 0.0
  %6055 = vmatprep.subr.mxu0 0.0
  %6056 = vmatpush1.msra.mxu0 0.0
  %6057 = vmatprep.mubr.f32.mxu0 0.0
  %6058 = vmatmul.mubr.f32.gmra.mrb[0].mxu0 %v5988
  %v6059 = vpop.f32.mrb[0].mxu0
  %v6060 = vadd.f32 0.0, %v6059
  %v6061 = vpop.f32.mrb[0].mxu0
  %6062 = vmatprep.mubr.f32.mxu0 0.0
  %6063 = vmatmul.mubr.f32.gmra.mrb[0].mxu0 %v5991
  %v6064 = vpop.f32.mrb[0].mxu0
  %v6065 = vadd.f32 0.0, %v6064
  %v6066 = vpop.f32.mrb[0].mxu0
  %6067 = vdwg.mxu0
  %v6069 = vsel %vm985, %v5875, 0
  %v6072 = vsel %vm985, %v5880, 0
  %6074 = vmatprep.subr.mxu0 0.0
  %6075 = vmatpush1.msra.mxu0 %v5883
  %6076 = vmatprep.subr.mxu0 0.0
  %6077 = vmatpush1.msra.mxu0 %v5884
  %6078 = vmatprep.subr.mxu0 0.0
  %6079 = vmatpush1.msra.mxu0 %v5885
  %6080 = vmatprep.subr.mxu0 0.0
  %6081 = vmatpush1.msra.mxu0 %v5886
  %6082 = vmatprep.subr.mxu0 0.0
  %6083 = vmatpush1.msra.mxu0 %v5887
  %6084 = vmatprep.subr.mxu0 0.0
  %6085 = vmatpush1.msra.mxu0 %v5888
  %6086 = vmatprep.subr.mxu0 0.0
  %6087 = vmatpush1.msra.mxu0 %v5889
  %6088 = vmatprep.subr.mxu0 0.0
  %6089 = vmatpush1.msra.mxu0 %v5890
  %6090 = vmatprep.subr.mxu0 0.0
  %6091 = vmatpush1.msra.mxu0 0.0
  %6092 = vmatprep.subr.mxu0 0.0
  %6093 = vmatpush1.msra.mxu0 0.0
  %6094 = vmatprep.subr.mxu0 0.0
  %6095 = vmatpush1.msra.mxu0 0.0
  %6096 = vmatprep.subr.mxu0 0.0
  %6097 = vmatpush1.msra.mxu0 0.0
  %6098 = vmatprep.subr.mxu0 0.0
  %6099 = vmatpush1.msra.mxu0 0.0
  %6100 = vmatprep.subr.mxu0 0.0
  %6101 = vmatpush1.msra.mxu0 0.0
  %6102 = vmatprep.subr.mxu0 0.0
  %6103 = vmatpush1.msra.mxu0 0.0
  %6104 = vmatprep.subr.mxu0 0.0
  %6105 = vmatpush1.msra.mxu0 0.0
  %6106 = vmatprep.subr.mxu0 0.0
  %6107 = vmatpush1.msra.mxu0 0.0
  %6108 = vmatprep.subr.mxu0 0.0
  %6109 = vmatpush1.msra.mxu0 0.0
  %6110 = vmatprep.subr.mxu0 0.0
  %6111 = vmatpush1.msra.mxu0 0.0
  %6112 = vmatprep.subr.mxu0 0.0
  %6113 = vmatpush1.msra.mxu0 0.0
  %6114 = vmatprep.subr.mxu0 0.0
  %6115 = vmatpush1.msra.mxu0 0.0
  %6116 = vmatprep.subr.mxu0 0.0
  %6117 = vmatpush1.msra.mxu0 0.0
  %6118 = vmatprep.subr.mxu0 0.0
  %6119 = vmatpush1.msra.mxu0 0.0
  %6120 = vmatprep.subr.mxu0 0.0
  %6121 = vmatpush1.msra.mxu0 0.0
  %6122 = vmatprep.subr.mxu0 0.0
  %6123 = vmatpush1.msra.mxu0 0.0
  %6124 = vmatprep.subr.mxu0 0.0
  %6125 = vmatpush1.msra.mxu0 0.0
  %6126 = vmatprep.subr.mxu0 0.0
  %6127 = vmatpush1.msra.mxu0 0.0
  %6128 = vmatprep.subr.mxu0 0.0
  %6129 = vmatpush1.msra.mxu0 0.0
  %6130 = vmatprep.subr.mxu0 0.0
  %6131 = vmatpush1.msra.mxu0 0.0
  %6132 = vmatprep.subr.mxu0 0.0
  %6133 = vmatpush1.msra.mxu0 0.0
  %6134 = vmatprep.subr.mxu0 0.0
  %6135 = vmatpush1.msra.mxu0 0.0
  %6136 = vmatprep.subr.mxu0 0.0
  %6137 = vmatpush1.msra.mxu0 0.0
  %6138 = vmatprep.mubr.f32.mxu0 0.0
  %6139 = vmatmul.mubr.f32.gmra.mrb[0].mxu0 %v6069
  %v6140 = vpop.f32.mrb[0].mxu0
  %v6141 = vadd.f32 %v6060, %v6140
  %v6142 = vpop.f32.mrb[0].mxu0
  %6143 = vmatprep.mubr.f32.mxu0 0.0
  %6144 = vmatmul.mubr.f32.gmra.mrb[0].mxu0 %v6072
  %v6145 = vpop.f32.mrb[0].mxu0
  %v6146 = vadd.f32 %v6065, %v6145
  %v6147 = vpop.f32.mrb[0].mxu0
  %6148 = vdwg.mxu0
  %v6149 = vsub.s32 %v5792, 2
  %v6150 = vsub.s32 %v5793, 2
  %vm6151 = vcmp.eq.s32.totalorder %v5791, %v6149
  %vm6152 = vcmp.eq.s32.totalorder %v5791, %v6150
  %vm6153 = vmand %vm5796, %vm6151
  %vm6154 = vmand %vm5797, %vm6152
  %v6155 = vsel %vm6153, 1.0, 0.0
  %v6156 = vsel %vm6154, 1.0, 0.0
  %v6158 = vsel %vm1830, %v6155, 0
  %v6161 = vsel %vm1830, %v6156, 0
  %6163 = vmatprep.subr.mxu0 0.0
  %6164 = vmatpush1.msra.mxu0 %v5790
  %6165 = vmatprep.subr.mxu0 0.0
  %6166 = vmatpush1.msra.mxu0 0.0
  %6167 = vmatprep.subr.mxu0 0.0
  %6168 = vmatpush1.msra.mxu0 0.0
  %6169 = vmatprep.subr.mxu0 0.0
  %6170 = vmatpush1.msra.mxu0 0.0
  %6171 = vmatprep.subr.mxu0 0.0
  %6172 = vmatpush1.msra.mxu0 0.0
  %6173 = vmatprep.subr.mxu0 0.0
  %6174 = vmatpush1.msra.mxu0 0.0
  %6175 = vmatprep.subr.mxu0 0.0
  %6176 = vmatpush1.msra.mxu0 0.0
  %6177 = vmatprep.subr.mxu0 0.0
  %6178 = vmatpush1.msra.mxu0 0.0
  %6179 = vmatprep.subr.mxu0 0.0
  %6180 = vmatpush1.msra.mxu0 0.0
  %6181 = vmatprep.subr.mxu0 0.0
  %6182 = vmatpush1.msra.mxu0 0.0
  %6183 = vmatprep.subr.mxu0 0.0
  %6184 = vmatpush1.msra.mxu0 0.0
  %6185 = vmatprep.subr.mxu0 0.0
  %6186 = vmatpush1.msra.mxu0 0.0
  %6187 = vmatprep.subr.mxu0 0.0
  %6188 = vmatpush1.msra.mxu0 0.0
  %6189 = vmatprep.subr.mxu0 0.0
  %6190 = vmatpush1.msra.mxu0 0.0
  %6191 = vmatprep.subr.mxu0 0.0
  %6192 = vmatpush1.msra.mxu0 0.0
  %6193 = vmatprep.subr.mxu0 0.0
  %6194 = vmatpush1.msra.mxu0 0.0
  %6195 = vmatprep.subr.mxu0 0.0
  %6196 = vmatpush1.msra.mxu0 0.0
  %6197 = vmatprep.subr.mxu0 0.0
  %6198 = vmatpush1.msra.mxu0 0.0
  %6199 = vmatprep.subr.mxu0 0.0
  %6200 = vmatpush1.msra.mxu0 0.0
  %6201 = vmatprep.subr.mxu0 0.0
  %6202 = vmatpush1.msra.mxu0 0.0
  %6203 = vmatprep.subr.mxu0 0.0
  %6204 = vmatpush1.msra.mxu0 0.0
  %6205 = vmatprep.subr.mxu0 0.0
  %6206 = vmatpush1.msra.mxu0 0.0
  %6207 = vmatprep.subr.mxu0 0.0
  %6208 = vmatpush1.msra.mxu0 0.0
  %6209 = vmatprep.subr.mxu0 0.0
  %6210 = vmatpush1.msra.mxu0 0.0
  %6211 = vmatprep.subr.mxu0 0.0
  %6212 = vmatpush1.msra.mxu0 0.0
  %6213 = vmatprep.subr.mxu0 0.0
  %6214 = vmatpush1.msra.mxu0 0.0
  %6215 = vmatprep.subr.mxu0 0.0
  %6216 = vmatpush1.msra.mxu0 0.0
  %6217 = vmatprep.subr.mxu0 0.0
  %6218 = vmatpush1.msra.mxu0 0.0
  %6219 = vmatprep.subr.mxu0 0.0
  %6220 = vmatpush1.msra.mxu0 0.0
  %6221 = vmatprep.subr.mxu0 0.0
  %6222 = vmatpush1.msra.mxu0 0.0
  %6223 = vmatprep.subr.mxu0 0.0
  %6224 = vmatpush1.msra.mxu0 0.0
  %6225 = vmatprep.subr.mxu0 0.0
  %6226 = vmatpush1.msra.mxu0 0.0
  %6227 = vmatprep.mubr.f32.mxu0 0.0
  %6228 = vmatmul.mubr.f32.gmra.mrb[0].mxu0 %v6158
  %v6229 = vpop.f32.mrb[0].mxu0
  %v6230 = vadd.f32 0.0, %v6229
  %v6231 = vpop.f32.mrb[0].mxu0
  %6232 = vmatprep.mubr.f32.mxu0 0.0
  %6233 = vmatmul.mubr.f32.gmra.mrb[0].mxu0 %v6161
  %v6234 = vpop.f32.mrb[0].mxu0
  %v6235 = vadd.f32 0.0, %v6234
  %v6236 = vpop.f32.mrb[0].mxu0
  %6237 = vdwg.mxu0
  %s6238 = scalar_lea.vmem %s7, 128
  %v6239 = vld [vmem:[%s6238] sm:$0xff]
  %v6240 = vld [vmem:[%s6238 + $0x8] sm:$0xff]
  %v6241 = vld [vmem:[%s6238 + $0x10] sm:$0xff]
  %v6242 = vld [vmem:[%s6238 + $0x18] sm:$0xff]
  %v6243 = vld [vmem:[%s6238 + $0x20] sm:$0xff]
  %v6244 = vld [vmem:[%s6238 + $0x28] sm:$0xff]
  %v6245 = vld [vmem:[%s6238 + $0x30] sm:$0xff]
  %v6246 = vld [vmem:[%s6238 + $0x38] sm:$0xff]
  %v6248 = vsel %vm985, %v6230, 0
  %v6251 = vsel %vm985, %v6235, 0
  %6253 = vmatprep.subr.mxu0 0.0
  %6254 = vmatpush1.msra.mxu0 %v6239
  %6255 = vmatprep.subr.mxu0 0.0
  %6256 = vmatpush1.msra.mxu0 %v6240
  %6257 = vmatprep.subr.mxu0 0.0
  %6258 = vmatpush1.msra.mxu0 %v6241
  %6259 = vmatprep.subr.mxu0 0.0
  %6260 = vmatpush1.msra.mxu0 %v6242
  %6261 = vmatprep.subr.mxu0 0.0
  %6262 = vmatpush1.msra.mxu0 %v6243
  %6263 = vmatprep.subr.mxu0 0.0
  %6264 = vmatpush1.msra.mxu0 %v6244
  %6265 = vmatprep.subr.mxu0 0.0
  %6266 = vmatpush1.msra.mxu0 %v6245
  %6267 = vmatprep.subr.mxu0 0.0
  %6268 = vmatpush1.msra.mxu0 %v6246
  %6269 = vmatprep.subr.mxu0 0.0
  %6270 = vmatpush1.msra.mxu0 0.0
  %6271 = vmatprep.subr.mxu0 0.0
  %6272 = vmatpush1.msra.mxu0 0.0
  %6273 = vmatprep.subr.mxu0 0.0
  %6274 = vmatpush1.msra.mxu0 0.0
  %6275 = vmatprep.subr.mxu0 0.0
  %6276 = vmatpush1.msra.mxu0 0.0
  %6277 = vmatprep.subr.mxu0 0.0
  %6278 = vmatpush1.msra.mxu0 0.0
  %6279 = vmatprep.subr.mxu0 0.0
  %6280 = vmatpush1.msra.mxu0 0.0
  %6281 = vmatprep.subr.mxu0 0.0
  %6282 = vmatpush1.msra.mxu0 0.0
  %6283 = vmatprep.subr.mxu0 0.0
  %6284 = vmatpush1.msra.mxu0 0.0
  %6285 = vmatprep.subr.mxu0 0.0
  %6286 = vmatpush1.msra.mxu0 0.0
  %6287 = vmatprep.subr.mxu0 0.0
  %6288 = vmatpush1.msra.mxu0 0.0
  %6289 = vmatprep.subr.mxu0 0.0
  %6290 = vmatpush1.msra.mxu0 0.0
  %6291 = vmatprep.subr.mxu0 0.0
  %6292 = vmatpush1.msra.mxu0 0.0
  %6293 = vmatprep.subr.mxu0 0.0
  %6294 = vmatpush1.msra.mxu0 0.0
  %6295 = vmatprep.subr.mxu0 0.0
  %6296 = vmatpush1.msra.mxu0 0.0
  %6297 = vmatprep.subr.mxu0 0.0
  %6298 = vmatpush1.msra.mxu0 0.0
  %6299 = vmatprep.subr.mxu0 0.0
  %6300 = vmatpush1.msra.mxu0 0.0
  %6301 = vmatprep.subr.mxu0 0.0
  %6302 = vmatpush1.msra.mxu0 0.0
  %6303 = vmatprep.subr.mxu0 0.0
  %6304 = vmatpush1.msra.mxu0 0.0
  %6305 = vmatprep.subr.mxu0 0.0
  %6306 = vmatpush1.msra.mxu0 0.0
  %6307 = vmatprep.subr.mxu0 0.0
  %6308 = vmatpush1.msra.mxu0 0.0
  %6309 = vmatprep.subr.mxu0 0.0
  %6310 = vmatpush1.msra.mxu0 0.0
  %6311 = vmatprep.subr.mxu0 0.0
  %6312 = vmatpush1.msra.mxu0 0.0
  %6313 = vmatprep.subr.mxu0 0.0
  %6314 = vmatpush1.msra.mxu0 0.0
  %6315 = vmatprep.subr.mxu0 0.0
  %6316 = vmatpush1.msra.mxu0 0.0
  %6317 = vmatprep.mubr.f32.mxu0 0.0
  %6318 = vmatmul.mubr.f32.gmra.mrb[0].mxu0 %v6248
  %v6319 = vpop.f32.mrb[0].mxu0
  %v6320 = vadd.f32 0.0, %v6319
  %v6321 = vpop.f32.mrb[0].mxu0
  %6322 = vmatprep.mubr.f32.mxu0 0.0
  %6323 = vmatmul.mubr.f32.gmra.mrb[0].mxu0 %v6251
  %v6324 = vpop.f32.mrb[0].mxu0
  %v6325 = vadd.f32 0.0, %v6324
  %v6326 = vpop.f32.mrb[0].mxu0
  %6327 = vdwg.mxu0
  %v6328 = vadd.f32 %v6141, %v6320
  %v6329 = vadd.f32 %v6146, %v6325
  %v6330 = vsub.s32 %v5792, 3
  %v6331 = vsub.s32 %v5793, 3
  %vm6332 = vcmp.eq.s32.totalorder %v5791, %v6330
  %vm6333 = vcmp.eq.s32.totalorder %v5791, %v6331
  %vm6334 = vmand %vm5796, %vm6332
  %vm6335 = vmand %vm5797, %vm6333
  %v6336 = vsel %vm6334, 1.0, 0.0
  %v6337 = vsel %vm6335, 1.0, 0.0
  %v6339 = vsel %vm1830, %v6336, 0
  %v6342 = vsel %vm1830, %v6337, 0
  %6344 = vmatprep.subr.mxu0 0.0
  %6345 = vmatpush1.msra.mxu0 %v5790
  %6346 = vmatprep.subr.mxu0 0.0
  %6347 = vmatpush1.msra.mxu0 0.0
  %6348 = vmatprep.subr.mxu0 0.0
  %6349 = vmatpush1.msra.mxu0 0.0
  %6350 = vmatprep.subr.mxu0 0.0
  %6351 = vmatpush1.msra.mxu0 0.0
  %6352 = vmatprep.subr.mxu0 0.0
  %6353 = vmatpush1.msra.mxu0 0.0
  %6354 = vmatprep.subr.mxu0 0.0
  %6355 = vmatpush1.msra.mxu0 0.0
  %6356 = vmatprep.subr.mxu0 0.0
  %6357 = vmatpush1.msra.mxu0 0.0
  %6358 = vmatprep.subr.mxu0 0.0
  %6359 = vmatpush1.msra.mxu0 0.0
  %6360 = vmatprep.subr.mxu0 0.0
  %6361 = vmatpush1.msra.mxu0 0.0
  %6362 = vmatprep.subr.mxu0 0.0
  %6363 = vmatpush1.msra.mxu0 0.0
  %6364 = vmatprep.subr.mxu0 0.0
  %6365 = vmatpush1.msra.mxu0 0.0
  %6366 = vmatprep.subr.mxu0 0.0
  %6367 = vmatpush1.msra.mxu0 0.0
  %6368 = vmatprep.subr.mxu0 0.0
  %6369 = vmatpush1.msra.mxu0 0.0
  %6370 = vmatprep.subr.mxu0 0.0
  %6371 = vmatpush1.msra.mxu0 0.0
  %6372 = vmatprep.subr.mxu0 0.0
  %6373 = vmatpush1.msra.mxu0 0.0
  %6374 = vmatprep.subr.mxu0 0.0
  %6375 = vmatpush1.msra.mxu0 0.0
  %6376 = vmatprep.subr.mxu0 0.0
  %6377 = vmatpush1.msra.mxu0 0.0
  %6378 = vmatprep.subr.mxu0 0.0
  %6379 = vmatpush1.msra.mxu0 0.0
  %6380 = vmatprep.subr.mxu0 0.0
  %6381 = vmatpush1.msra.mxu0 0.0
  %6382 = vmatprep.subr.mxu0 0.0
  %6383 = vmatpush1.msra.mxu0 0.0
  %6384 = vmatprep.subr.mxu0 0.0
  %6385 = vmatpush1.msra.mxu0 0.0
  %6386 = vmatprep.subr.mxu0 0.0
  %6387 = vmatpush1.msra.mxu0 0.0
  %6388 = vmatprep.subr.mxu0 0.0
  %6389 = vmatpush1.msra.mxu0 0.0
  %6390 = vmatprep.subr.mxu0 0.0
  %6391 = vmatpush1.msra.mxu0 0.0
  %6392 = vmatprep.subr.mxu0 0.0
  %6393 = vmatpush1.msra.mxu0 0.0
  %6394 = vmatprep.subr.mxu0 0.0
  %6395 = vmatpush1.msra.mxu0 0.0
  %6396 = vmatprep.subr.mxu0 0.0
  %6397 = vmatpush1.msra.mxu0 0.0
  %6398 = vmatprep.subr.mxu0 0.0
  %6399 = vmatpush1.msra.mxu0 0.0
  %6400 = vmatprep.subr.mxu0 0.0
  %6401 = vmatpush1.msra.mxu0 0.0
  %6402 = vmatprep.subr.mxu0 0.0
  %6403 = vmatpush1.msra.mxu0 0.0
  %6404 = vmatprep.subr.mxu0 0.0
  %6405 = vmatpush1.msra.mxu0 0.0
  %6406 = vmatprep.subr.mxu0 0.0
  %6407 = vmatpush1.msra.mxu0 0.0
  %6408 = vmatprep.mubr.f32.mxu0 0.0
  %6409 = vmatmul.mubr.f32.gmra.mrb[0].mxu0 %v6339
  %v6410 = vpop.f32.mrb[0].mxu0
  %v6411 = vadd.f32 0.0, %v6410
  %v6412 = vpop.f32.mrb[0].mxu0
  %6413 = vmatprep.mubr.f32.mxu0 0.0
  %6414 = vmatmul.mubr.f32.gmra.mrb[0].mxu0 %v6342
  %v6415 = vpop.f32.mrb[0].mxu0
  %v6416 = vadd.f32 0.0, %v6415
  %v6417 = vpop.f32.mrb[0].mxu0
  %6418 = vdwg.mxu0
  %s6419 = scalar_lea.vmem %s7, 192
  %v6420 = vld [vmem:[%s6419] sm:$0xff]
  %v6421 = vld [vmem:[%s6419 + $0x8] sm:$0xff]
  %v6422 = vld [vmem:[%s6419 + $0x10] sm:$0xff]
  %v6423 = vld [vmem:[%s6419 + $0x18] sm:$0xff]
  %v6424 = vld [vmem:[%s6419 + $0x20] sm:$0xff]
  %v6425 = vld [vmem:[%s6419 + $0x28] sm:$0xff]
  %v6426 = vld [vmem:[%s6419 + $0x30] sm:$0xff]
  %v6427 = vld [vmem:[%s6419 + $0x38] sm:$0xff]
  %v6429 = vsel %vm985, %v6411, 0
  %v6432 = vsel %vm985, %v6416, 0
  %6434 = vmatprep.subr.mxu0 0.0
  %6435 = vmatpush1.msra.mxu0 %v6420
  %6436 = vmatprep.subr.mxu0 0.0
  %6437 = vmatpush1.msra.mxu0 %v6421
  %6438 = vmatprep.subr.mxu0 0.0
  %6439 = vmatpush1.msra.mxu0 %v6422
  %6440 = vmatprep.subr.mxu0 0.0
  %6441 = vmatpush1.msra.mxu0 %v6423
  %6442 = vmatprep.subr.mxu0 0.0
  %6443 = vmatpush1.msra.mxu0 %v6424
  %6444 = vmatprep.subr.mxu0 0.0
  %6445 = vmatpush1.msra.mxu0 %v6425
  %6446 = vmatprep.subr.mxu0 0.0
  %6447 = vmatpush1.msra.mxu0 %v6426
  %6448 = vmatprep.subr.mxu0 0.0
  %6449 = vmatpush1.msra.mxu0 %v6427
  %6450 = vmatprep.subr.mxu0 0.0
  %6451 = vmatpush1.msra.mxu0 0.0
  %6452 = vmatprep.subr.mxu0 0.0
  %6453 = vmatpush1.msra.mxu0 0.0
  %6454 = vmatprep.subr.mxu0 0.0
  %6455 = vmatpush1.msra.mxu0 0.0
  %6456 = vmatprep.subr.mxu0 0.0
  %6457 = vmatpush1.msra.mxu0 0.0
  %6458 = vmatprep.subr.mxu0 0.0
  %6459 = vmatpush1.msra.mxu0 0.0
  %6460 = vmatprep.subr.mxu0 0.0
  %6461 = vmatpush1.msra.mxu0 0.0
  %6462 = vmatprep.subr.mxu0 0.0
  %6463 = vmatpush1.msra.mxu0 0.0
  %6464 = vmatprep.subr.mxu0 0.0
  %6465 = vmatpush1.msra.mxu0 0.0
  %6466 = vmatprep.subr.mxu0 0.0
  %6467 = vmatpush1.msra.mxu0 0.0
  %6468 = vmatprep.subr.mxu0 0.0
  %6469 = vmatpush1.msra.mxu0 0.0
  %6470 = vmatprep.subr.mxu0 0.0
  %6471 = vmatpush1.msra.mxu0 0.0
  %6472 = vmatprep.subr.mxu0 0.0
  %6473 = vmatpush1.msra.mxu0 0.0
  %6474 = vmatprep.subr.mxu0 0.0
  %6475 = vmatpush1.msra.mxu0 0.0
  %6476 = vmatprep.subr.mxu0 0.0
  %6477 = vmatpush1.msra.mxu0 0.0
  %6478 = vmatprep.subr.mxu0 0.0
  %6479 = vmatpush1.msra.mxu0 0.0
  %6480 = vmatprep.subr.mxu0 0.0
  %6481 = vmatpush1.msra.mxu0 0.0
  %6482 = vmatprep.subr.mxu0 0.0
  %6483 = vmatpush1.msra.mxu0 0.0
  %6484 = vmatprep.subr.mxu0 0.0
  %6485 = vmatpush1.msra.mxu0 0.0
  %6486 = vmatprep.subr.mxu0 0.0
  %6487 = vmatpush1.msra.mxu0 0.0
  %6488 = vmatprep.subr.mxu0 0.0
  %6489 = vmatpush1.msra.mxu0 0.0
  %6490 = vmatprep.subr.mxu0 0.0
  %6491 = vmatpush1.msra.mxu0 0.0
  %6492 = vmatprep.subr.mxu0 0.0
  %6493 = vmatpush1.msra.mxu0 0.0
  %6494 = vmatprep.subr.mxu0 0.0
  %6495 = vmatpush1.msra.mxu0 0.0
  %6496 = vmatprep.subr.mxu0 0.0
  %6497 = vmatpush1.msra.mxu0 0.0
  %6498 = vmatprep.mubr.f32.mxu0 0.0
  %6499 = vmatmul.mubr.f32.gmra.mrb[0].mxu0 %v6429
  %v6500 = vpop.f32.mrb[0].mxu0
  %v6501 = vadd.f32 0.0, %v6500
  %v6502 = vpop.f32.mrb[0].mxu0
  %6503 = vmatprep.mubr.f32.mxu0 0.0
  %6504 = vmatmul.mubr.f32.gmra.mrb[0].mxu0 %v6432
  %v6505 = vpop.f32.mrb[0].mxu0
  %v6506 = vadd.f32 0.0, %v6505
  %v6507 = vpop.f32.mrb[0].mxu0
  %6508 = vdwg.mxu0
  %v6509 = vadd.f32 %v6328, %v6501
  %v6510 = vadd.f32 %v6329, %v6506
  %v6511 = vld [vmem:[%s19] sm:$0x1]
  %v6512 = vld [vmem:[%s20] sm:$0x1]
  %v6513 = vand.u32 %v1456, 7
  %v6514 = vand.u32 %v1457, 7
  %v6515 = vand.u32 %v1458, 7
  %v6516 = vand.u32 %v1459, 7
  %v6517 = vand.u32 %v1460, 7
  %v6518 = vand.u32 %v1461, 7
  %vm6519 = vcmp.eq.s32.totalorder %v79, %v76
  %vm6520 = vcmp.eq.s32.totalorder %v80, %v76
  %vm6521 = vcmp.eq.s32.totalorder %v6513, %v76
  %vm6522 = vcmp.eq.s32.totalorder %v6514, %v76
  %vm6523 = vcmp.eq.s32.totalorder %v6515, %v76
  %vm6524 = vcmp.eq.s32.totalorder %v6516, %v76
  %vm6525 = vcmp.eq.s32.totalorder %v6517, %v76
  %vm6526 = vcmp.eq.s32.totalorder %v6518, %v76
  %v6527 = vsel %vm6519, 1.0, 0.0
  %v6528 = vsel %vm6520, 1.0, 0.0
  %v6529 = vsel %vm6521, 1.0, 0.0
  %v6530 = vsel %vm6522, 1.0, 0.0
  %v6531 = vsel %vm6523, 1.0, 0.0
  %v6532 = vsel %vm6524, 1.0, 0.0
  %v6533 = vsel %vm6525, 1.0, 0.0
  %v6534 = vsel %vm6526, 1.0, 0.0
  %vm6535 = vcmp.eq.s32.totalorder %v811, %v73
  %v6536 = vsel %vm6535, 1.0, 0.0
  %v6537 = vsel %vm985, %v6509, 0.0
  %v6538 = vsel %vm985, %v6510, 0.0
  %v6539 = vadd.f32 %v6537, %v6538
  %v6540 = vrot.slane %v6539, 4
  %v6541 = vadd.f32 %v6539, %v6540
  %v6542 = vrot.slane %v6541, 2
  %v6543 = vadd.f32 %v6541, %v6542
  %v6544 = vrot.slane %v6543, 1
  %v6545 = vadd.f32 %v6543, %v6544
  %v6546 = vmul.f32 %v6509, %v6509
  %v6547 = vmul.f32 %v6510, %v6510
  %v6548 = vsel %vm985, %v6546, 0.0
  %v6549 = vsel %vm985, %v6547, 0.0
  %v6550 = vadd.f32 %v6548, %v6549
  %v6551 = vrot.slane %v6550, 4
  %v6552 = vadd.f32 %v6550, %v6551
  %v6553 = vrot.slane %v6552, 2
  %v6554 = vadd.f32 %v6552, %v6553
  %v6555 = vrot.slane %v6554, 1
  %v6556 = vadd.f32 %v6554, %v6555
  %v6558 = vsel %vm985, %v6545, 0
  %6560 = vmatprep.subr.mxu0 0.0
  %6561 = vmatpush1.msra.mxu0 %v6527
  %6562 = vmatprep.subr.mxu0 0.0
  %6563 = vmatpush1.msra.mxu0 %v6528
  %6564 = vmatprep.subr.mxu0 0.0
  %6565 = vmatpush1.msra.mxu0 %v6529
  %6566 = vmatprep.subr.mxu0 0.0
  %6567 = vmatpush1.msra.mxu0 %v6530
  %6568 = vmatprep.subr.mxu0 0.0
  %6569 = vmatpush1.msra.mxu0 %v6531
  %6570 = vmatprep.subr.mxu0 0.0
  %6571 = vmatpush1.msra.mxu0 %v6532
  %6572 = vmatprep.subr.mxu0 0.0
  %6573 = vmatpush1.msra.mxu0 %v6533
  %6574 = vmatprep.subr.mxu0 0.0
  %6575 = vmatpush1.msra.mxu0 %v6534
  %6576 = vmatprep.subr.mxu0 0.0
  %6577 = vmatpush1.msra.mxu0 0.0
  %6578 = vmatprep.subr.mxu0 0.0
  %6579 = vmatpush1.msra.mxu0 0.0
  %6580 = vmatprep.subr.mxu0 0.0
  %6581 = vmatpush1.msra.mxu0 0.0
  %6582 = vmatprep.subr.mxu0 0.0
  %6583 = vmatpush1.msra.mxu0 0.0
  %6584 = vmatprep.subr.mxu0 0.0
  %6585 = vmatpush1.msra.mxu0 0.0
  %6586 = vmatprep.subr.mxu0 0.0
  %6587 = vmatpush1.msra.mxu0 0.0
  %6588 = vmatprep.subr.mxu0 0.0
  %6589 = vmatpush1.msra.mxu0 0.0
  %6590 = vmatprep.subr.mxu0 0.0
  %6591 = vmatpush1.msra.mxu0 0.0
  %6592 = vmatprep.subr.mxu0 0.0
  %6593 = vmatpush1.msra.mxu0 0.0
  %6594 = vmatprep.subr.mxu0 0.0
  %6595 = vmatpush1.msra.mxu0 0.0
  %6596 = vmatprep.subr.mxu0 0.0
  %6597 = vmatpush1.msra.mxu0 0.0
  %6598 = vmatprep.subr.mxu0 0.0
  %6599 = vmatpush1.msra.mxu0 0.0
  %6600 = vmatprep.subr.mxu0 0.0
  %6601 = vmatpush1.msra.mxu0 0.0
  %6602 = vmatprep.subr.mxu0 0.0
  %6603 = vmatpush1.msra.mxu0 0.0
  %6604 = vmatprep.subr.mxu0 0.0
  %6605 = vmatpush1.msra.mxu0 0.0
  %6606 = vmatprep.subr.mxu0 0.0
  %6607 = vmatpush1.msra.mxu0 0.0
  %6608 = vmatprep.subr.mxu0 0.0
  %6609 = vmatpush1.msra.mxu0 0.0
  %6610 = vmatprep.subr.mxu0 0.0
  %6611 = vmatpush1.msra.mxu0 0.0
  %6612 = vmatprep.subr.mxu0 0.0
  %6613 = vmatpush1.msra.mxu0 0.0
  %6614 = vmatprep.subr.mxu0 0.0
  %6615 = vmatpush1.msra.mxu0 0.0
  %6616 = vmatprep.subr.mxu0 0.0
  %6617 = vmatpush1.msra.mxu0 0.0
  %6618 = vmatprep.subr.mxu0 0.0
  %6619 = vmatpush1.msra.mxu0 0.0
  %6620 = vmatprep.subr.mxu0 0.0
  %6621 = vmatpush1.msra.mxu0 0.0
  %6622 = vmatprep.subr.mxu0 0.0
  %6623 = vmatpush1.msra.mxu0 0.0
  %6624 = vmatprep.mubr.f32.mxu0 0.0
  %6625 = vmatmul.mubr.f32.gmra.mrb[0].mxu0 %v6558
  %v6626 = vpop.f32.mrb[0].mxu0
  %v6627 = vadd.f32 0.0, %v6626
  %v6628 = vpop.f32.mrb[0].mxu0
  %6629 = vdwg.mxu0
  %v6630 = vrcp.pop 128.0
  %v6631 = vmul.f32 %v6627, %v6630
  %v6633 = vsel %vm985, %v6556, 0
  %6635 = vmatprep.subr.mxu0 0.0
  %6636 = vmatpush1.msra.mxu0 %v6527
  %6637 = vmatprep.subr.mxu0 0.0
  %6638 = vmatpush1.msra.mxu0 %v6528
  %6639 = vmatprep.subr.mxu0 0.0
  %6640 = vmatpush1.msra.mxu0 %v6529
  %6641 = vmatprep.subr.mxu0 0.0
  %6642 = vmatpush1.msra.mxu0 %v6530
  %6643 = vmatprep.subr.mxu0 0.0
  %6644 = vmatpush1.msra.mxu0 %v6531
  %6645 = vmatprep.subr.mxu0 0.0
  %6646 = vmatpush1.msra.mxu0 %v6532
  %6647 = vmatprep.subr.mxu0 0.0
  %6648 = vmatpush1.msra.mxu0 %v6533
  %6649 = vmatprep.subr.mxu0 0.0
  %6650 = vmatpush1.msra.mxu0 %v6534
  %6651 = vmatprep.subr.mxu0 0.0
  %6652 = vmatpush1.msra.mxu0 0.0
  %6653 = vmatprep.subr.mxu0 0.0
  %6654 = vmatpush1.msra.mxu0 0.0
  %6655 = vmatprep.subr.mxu0 0.0
  %6656 = vmatpush1.msra.mxu0 0.0
  %6657 = vmatprep.subr.mxu0 0.0
  %6658 = vmatpush1.msra.mxu0 0.0
  %6659 = vmatprep.subr.mxu0 0.0
  %6660 = vmatpush1.msra.mxu0 0.0
  %6661 = vmatprep.subr.mxu0 0.0
  %6662 = vmatpush1.msra.mxu0 0.0
  %6663 = vmatprep.subr.mxu0 0.0
  %6664 = vmatpush1.msra.mxu0 0.0
  %6665 = vmatprep.subr.mxu0 0.0
  %6666 = vmatpush1.msra.mxu0 0.0
  %6667 = vmatprep.subr.mxu0 0.0
  %6668 = vmatpush1.msra.mxu0 0.0
  %6669 = vmatprep.subr.mxu0 0.0
  %6670 = vmatpush1.msra.mxu0 0.0
  %6671 = vmatprep.subr.mxu0 0.0
  %6672 = vmatpush1.msra.mxu0 0.0
  %6673 = vmatprep.subr.mxu0 0.0
  %6674 = vmatpush1.msra.mxu0 0.0
  %6675 = vmatprep.subr.mxu0 0.0
  %6676 = vmatpush1.msra.mxu0 0.0
  %6677 = vmatprep.subr.mxu0 0.0
  %6678 = vmatpush1.msra.mxu0 0.0
  %6679 = vmatprep.subr.mxu0 0.0
  %6680 = vmatpush1.msra.mxu0 0.0
  %6681 = vmatprep.subr.mxu0 0.0
  %6682 = vmatpush1.msra.mxu0 0.0
  %6683 = vmatprep.subr.mxu0 0.0
  %6684 = vmatpush1.msra.mxu0 0.0
  %6685 = vmatprep.subr.mxu0 0.0
  %6686 = vmatpush1.msra.mxu0 0.0
  %6687 = vmatprep.subr.mxu0 0.0
  %6688 = vmatpush1.msra.mxu0 0.0
  %6689 = vmatprep.subr.mxu0 0.0
  %6690 = vmatpush1.msra.mxu0 0.0
  %6691 = vmatprep.subr.mxu0 0.0
  %6692 = vmatpush1.msra.mxu0 0.0
  %6693 = vmatprep.subr.mxu0 0.0
  %6694 = vmatpush1.msra.mxu0 0.0
  %6695 = vmatprep.subr.mxu0 0.0
  %6696 = vmatpush1.msra.mxu0 0.0
  %6697 = vmatprep.subr.mxu0 0.0
  %6698 = vmatpush1.msra.mxu0 0.0
  %6699 = vmatprep.mubr.f32.mxu0 0.0
  %6700 = vmatmul.mubr.f32.gmra.mrb[0].mxu0 %v6633
  %v6701 = vpop.f32.mrb[0].mxu0
  %v6702 = vadd.f32 0.0, %v6701
  %v6703 = vpop.f32.mrb[0].mxu0
  %6704 = vdwg.mxu0
  %v6705 = vmul.f32 %v6702, %v6630
  %v6706 = vmul.f32 %v6631, %v6631
  %v6707 = vsub.f32 %v6705, %v6706
  %v6708 = vadd.f32 %v6707, 1e-05
  %v6709 = vrsqrt.pop %v6708
  %v6710 = vmul.f32 %v6511, %v6709
  %v6711 = vmul.f32 %v6631, %v6710
  %v6712 = vsub.f32 %v6512, %v6711
  %v6714 = vsel %vm1830, %v6710, 0
  %6716 = vmatprep.subr.mxu0 0.0
  %6717 = vmatpush1.msra.mxu0 %v6536
  %6718 = vmatprep.subr.mxu0 0.0
  %6719 = vmatpush1.msra.mxu0 0.0
  %6720 = vmatprep.subr.mxu0 0.0
  %6721 = vmatpush1.msra.mxu0 0.0
  %6722 = vmatprep.subr.mxu0 0.0
  %6723 = vmatpush1.msra.mxu0 0.0
  %6724 = vmatprep.subr.mxu0 0.0
  %6725 = vmatpush1.msra.mxu0 0.0
  %6726 = vmatprep.subr.mxu0 0.0
  %6727 = vmatpush1.msra.mxu0 0.0
  %6728 = vmatprep.subr.mxu0 0.0
  %6729 = vmatpush1.msra.mxu0 0.0
  %6730 = vmatprep.subr.mxu0 0.0
  %6731 = vmatpush1.msra.mxu0 0.0
  %6732 = vmatprep.subr.mxu0 0.0
  %6733 = vmatpush1.msra.mxu0 0.0
  %6734 = vmatprep.subr.mxu0 0.0
  %6735 = vmatpush1.msra.mxu0 0.0
  %6736 = vmatprep.subr.mxu0 0.0
  %6737 = vmatpush1.msra.mxu0 0.0
  %6738 = vmatprep.subr.mxu0 0.0
  %6739 = vmatpush1.msra.mxu0 0.0
  %6740 = vmatprep.subr.mxu0 0.0
  %6741 = vmatpush1.msra.mxu0 0.0
  %6742 = vmatprep.subr.mxu0 0.0
  %6743 = vmatpush1.msra.mxu0 0.0
  %6744 = vmatprep.subr.mxu0 0.0
  %6745 = vmatpush1.msra.mxu0 0.0
  %6746 = vmatprep.subr.mxu0 0.0
  %6747 = vmatpush1.msra.mxu0 0.0
  %6748 = vmatprep.subr.mxu0 0.0
  %6749 = vmatpush1.msra.mxu0 0.0
  %6750 = vmatprep.subr.mxu0 0.0
  %6751 = vmatpush1.msra.mxu0 0.0
  %6752 = vmatprep.subr.mxu0 0.0
  %6753 = vmatpush1.msra.mxu0 0.0
  %6754 = vmatprep.subr.mxu0 0.0
  %6755 = vmatpush1.msra.mxu0 0.0
  %6756 = vmatprep.subr.mxu0 0.0
  %6757 = vmatpush1.msra.mxu0 0.0
  %6758 = vmatprep.subr.mxu0 0.0
  %6759 = vmatpush1.msra.mxu0 0.0
  %6760 = vmatprep.subr.mxu0 0.0
  %6761 = vmatpush1.msra.mxu0 0.0
  %6762 = vmatprep.subr.mxu0 0.0
  %6763 = vmatpush1.msra.mxu0 0.0
  %6764 = vmatprep.subr.mxu0 0.0
  %6765 = vmatpush1.msra.mxu0 0.0
  %6766 = vmatprep.subr.mxu0 0.0
  %6767 = vmatpush1.msra.mxu0 0.0
  %6768 = vmatprep.subr.mxu0 0.0
  %6769 = vmatpush1.msra.mxu0 0.0
  %6770 = vmatprep.subr.mxu0 0.0
  %6771 = vmatpush1.msra.mxu0 0.0
  %6772 = vmatprep.subr.mxu0 0.0
  %6773 = vmatpush1.msra.mxu0 0.0
  %6774 = vmatprep.subr.mxu0 0.0
  %6775 = vmatpush1.msra.mxu0 0.0
  %6776 = vmatprep.subr.mxu0 0.0
  %6777 = vmatpush1.msra.mxu0 0.0
  %6778 = vmatprep.subr.mxu0 0.0
  %6779 = vmatpush1.msra.mxu0 0.0
  %6780 = vmatprep.mubr.f32.mxu0 0.0
  %6781 = vmatmul.mubr.f32.gmra.mrb[0].mxu0 %v6714
  %v6782 = vpop.f32.mrb[0].mxu0
  %v6783 = vadd.f32 0.0, %v6782
  %v6784 = vpop.f32.mrb[0].mxu0
  %6785 = vdwg.mxu0
  %v6787 = vsel %vm1830, %v6712, 0
  %6789 = vmatprep.subr.mxu0 0.0
  %6790 = vmatpush1.msra.mxu0 %v6536
  %6791 = vmatprep.subr.mxu0 0.0
  %6792 = vmatpush1.msra.mxu0 0.0
  %6793 = vmatprep.subr.mxu0 0.0
  %6794 = vmatpush1.msra.mxu0 0.0
  %6795 = vmatprep.subr.mxu0 0.0
  %6796 = vmatpush1.msra.mxu0 0.0
  %6797 = vmatprep.subr.mxu0 0.0
  %6798 = vmatpush1.msra.mxu0 0.0
  %6799 = vmatprep.subr.mxu0 0.0
  %6800 = vmatpush1.msra.mxu0 0.0
  %6801 = vmatprep.subr.mxu0 0.0
  %6802 = vmatpush1.msra.mxu0 0.0
  %6803 = vmatprep.subr.mxu0 0.0
  %6804 = vmatpush1.msra.mxu0 0.0
  %6805 = vmatprep.subr.mxu0 0.0
  %6806 = vmatpush1.msra.mxu0 0.0
  %6807 = vmatprep.subr.mxu0 0.0
  %6808 = vmatpush1.msra.mxu0 0.0
  %6809 = vmatprep.subr.mxu0 0.0
  %6810 = vmatpush1.msra.mxu0 0.0
  %6811 = vmatprep.subr.mxu0 0.0
  %6812 = vmatpush1.msra.mxu0 0.0
  %6813 = vmatprep.subr.mxu0 0.0
  %6814 = vmatpush1.msra.mxu0 0.0
  %6815 = vmatprep.subr.mxu0 0.0
  %6816 = vmatpush1.msra.mxu0 0.0
  %6817 = vmatprep.subr.mxu0 0.0
  %6818 = vmatpush1.msra.mxu0 0.0
  %6819 = vmatprep.subr.mxu0 0.0
  %6820 = vmatpush1.msra.mxu0 0.0
  %6821 = vmatprep.subr.mxu0 0.0
  %6822 = vmatpush1.msra.mxu0 0.0
  %6823 = vmatprep.subr.mxu0 0.0
  %6824 = vmatpush1.msra.mxu0 0.0
  %6825 = vmatprep.subr.mxu0 0.0
  %6826 = vmatpush1.msra.mxu0 0.0
  %6827 = vmatprep.subr.mxu0 0.0
  %6828 = vmatpush1.msra.mxu0 0.0
  %6829 = vmatprep.subr.mxu0 0.0
  %6830 = vmatpush1.msra.mxu0 0.0
  %6831 = vmatprep.subr.mxu0 0.0
  %6832 = vmatpush1.msra.mxu0 0.0
  %6833 = vmatprep.subr.mxu0 0.0
  %6834 = vmatpush1.msra.mxu0 0.0
  %6835 = vmatprep.subr.mxu0 0.0
  %6836 = vmatpush1.msra.mxu0 0.0
  %6837 = vmatprep.subr.mxu0 0.0
  %6838 = vmatpush1.msra.mxu0 0.0
  %6839 = vmatprep.subr.mxu0 0.0
  %6840 = vmatpush1.msra.mxu0 0.0
  %6841 = vmatprep.subr.mxu0 0.0
  %6842 = vmatpush1.msra.mxu0 0.0
  %6843 = vmatprep.subr.mxu0 0.0
  %6844 = vmatpush1.msra.mxu0 0.0
  %6845 = vmatprep.subr.mxu0 0.0
  %6846 = vmatpush1.msra.mxu0 0.0
  %6847 = vmatprep.subr.mxu0 0.0
  %6848 = vmatpush1.msra.mxu0 0.0
  %6849 = vmatprep.subr.mxu0 0.0
  %6850 = vmatpush1.msra.mxu0 0.0
  %6851 = vmatprep.subr.mxu0 0.0
  %6852 = vmatpush1.msra.mxu0 0.0
  %6853 = vmatprep.mubr.f32.mxu0 0.0
  %6854 = vmatmul.mubr.f32.gmra.mrb[0].mxu0 %v6787
  %v6855 = vpop.f32.mrb[0].mxu0
  %v6856 = vadd.f32 0.0, %v6855
  %v6857 = vpop.f32.mrb[0].mxu0
  %6858 = vdwg.mxu0
  %v6859 = vlaneseq
  %v6860 = vshrl.u32 %v6859, 7
  %v6861 = vsub.s32 0, %v6860
  %v6862 = vrot.slane %v6783, %v6861
  %v6863 = vmul.f32 %v6509, %v6862
  %v6864 = vmul.f32 %v6510, %v6862
  %v6865 = vlaneseq
  %v6866 = vshrl.u32 %v6865, 7
  %v6867 = vsub.s32 0, %v6866
  %v6868 = vrot.slane %v6856, %v6867
  %v6869 = vadd.f32 %v6863, %v6868
  %v6870 = vadd.f32 %v6864, %v6868
  %vm6871 = vcmp.gt.f32.partialorder %v6869, 0.0
  %vm6872 = vcmp.gt.f32.partialorder %v6870, 0.0
  %v6873 = vmul.f32 %v6869, 0.2
  %v6874 = vmul.f32 %v6870, 0.2
  %v6875 = vsel %vm6871, %v6869, %v6873
  %v6876 = vsel %vm6872, %v6870, %v6874
  %v6877 = vshra.s32 %v73, 4
  %v6878 = vshra.s32 %v74, 4
  %v6879 = vshra.s32 %v1456, 4
  %v6880 = vshra.s32 %v1457, 4
  %v6881 = vmul.u32 %v811, 2
  %v6882 = vadd.s32 %v1462, 1
  %v6883 = vadd.s32 %v1463, 1
  %v6884 = vadd.s32 %v1464, 1
  %v6885 = vadd.s32 %v1465, 1
  %vm6886 = vcmp.eq.s32.totalorder %v6881, %v6882
  %vm6887 = vcmp.eq.s32.totalorder %v6881, %v6883
  %vm6888 = vcmp.eq.s32.totalorder %v6881, %v6884
  %vm6889 = vcmp.eq.s32.totalorder %v6881, %v6885
  %vm6890 = vcmp.eq.s32.totalorder %v6877, %v810
  %vm6891 = vcmp.eq.s32.totalorder %v6878, %v810
  %vm6892 = vcmp.eq.s32.totalorder %v6879, %v810
  %vm6893 = vcmp.eq.s32.totalorder %v6880, %v810
  %vm6894 = vmand %vm6890, %vm6886
  %vm6895 = vmand %vm6891, %vm6887
  %vm6896 = vmand %vm6892, %vm6888
  %vm6897 = vmand %vm6893, %vm6889
  %v6898 = vsel %vm6894, 1.0, 0.0
  %v6899 = vsel %vm6895, 1.0, 0.0
  %v6900 = vsel %vm6896, 1.0, 0.0
  %v6901 = vsel %vm6897, 1.0, 0.0
  %v6903 = vsel %vm818, %v6898, 0
  %v6906 = vsel %vm818, %v6899, 0
  %v6909 = vsel %vm818, %v6900, 0
  %v6912 = vsel %vm818, %v6901, 0
  %6914 = vmatprep.subr.mxu0 0.0
  %6915 = vmatpush1.msra.mxu0 %v6875
  %6916 = vmatprep.subr.mxu0 0.0
  %6917 = vmatpush1.msra.mxu0 %v6876
  %6918 = vmatprep.subr.mxu0 0.0
  %6919 = vmatpush1.msra.mxu0 0.0
  %6920 = vmatprep.subr.mxu0 0.0
  %6921 = vmatpush1.msra.mxu0 0.0
  %6922 = vmatprep.subr.mxu0 0.0
  %6923 = vmatpush1.msra.mxu0 0.0
  %6924 = vmatprep.subr.mxu0 0.0
  %6925 = vmatpush1.msra.mxu0 0.0
  %6926 = vmatprep.subr.mxu0 0.0
  %6927 = vmatpush1.msra.mxu0 0.0
  %6928 = vmatprep.subr.mxu0 0.0
  %6929 = vmatpush1.msra.mxu0 0.0
  %6930 = vmatprep.subr.mxu0 0.0
  %6931 = vmatpush1.msra.mxu0 0.0
  %6932 = vmatprep.subr.mxu0 0.0
  %6933 = vmatpush1.msra.mxu0 0.0
  %6934 = vmatprep.subr.mxu0 0.0
  %6935 = vmatpush1.msra.mxu0 0.0
  %6936 = vmatprep.subr.mxu0 0.0
  %6937 = vmatpush1.msra.mxu0 0.0
  %6938 = vmatprep.subr.mxu0 0.0
  %6939 = vmatpush1.msra.mxu0 0.0
  %6940 = vmatprep.subr.mxu0 0.0
  %6941 = vmatpush1.msra.mxu0 0.0
  %6942 = vmatprep.subr.mxu0 0.0
  %6943 = vmatpush1.msra.mxu0 0.0
  %6944 = vmatprep.subr.mxu0 0.0
  %6945 = vmatpush1.msra.mxu0 0.0
  %6946 = vmatprep.subr.mxu0 0.0
  %6947 = vmatpush1.msra.mxu0 0.0
  %6948 = vmatprep.subr.mxu0 0.0
  %6949 = vmatpush1.msra.mxu0 0.0
  %6950 = vmatprep.subr.mxu0 0.0
  %6951 = vmatpush1.msra.mxu0 0.0
  %6952 = vmatprep.subr.mxu0 0.0
  %6953 = vmatpush1.msra.mxu0 0.0
  %6954 = vmatprep.subr.mxu0 0.0
  %6955 = vmatpush1.msra.mxu0 0.0
  %6956 = vmatprep.subr.mxu0 0.0
  %6957 = vmatpush1.msra.mxu0 0.0
  %6958 = vmatprep.subr.mxu0 0.0
  %6959 = vmatpush1.msra.mxu0 0.0
  %6960 = vmatprep.subr.mxu0 0.0
  %6961 = vmatpush1.msra.mxu0 0.0
  %6962 = vmatprep.subr.mxu0 0.0
  %6963 = vmatpush1.msra.mxu0 0.0
  %6964 = vmatprep.subr.mxu0 0.0
  %6965 = vmatpush1.msra.mxu0 0.0
  %6966 = vmatprep.subr.mxu0 0.0
  %6967 = vmatpush1.msra.mxu0 0.0
  %6968 = vmatprep.subr.mxu0 0.0
  %6969 = vmatpush1.msra.mxu0 0.0
  %6970 = vmatprep.subr.mxu0 0.0
  %6971 = vmatpush1.msra.mxu0 0.0
  %6972 = vmatprep.subr.mxu0 0.0
  %6973 = vmatpush1.msra.mxu0 0.0
  %6974 = vmatprep.subr.mxu0 0.0
  %6975 = vmatpush1.msra.mxu0 0.0
  %6976 = vmatprep.subr.mxu0 0.0
  %6977 = vmatpush1.msra.mxu0 0.0
  %6978 = vmatprep.mubr.f32.mxu0 0.0
  %6979 = vmatmul.mubr.f32.gmra.mrb[0].mxu0 %v6903
  %v6980 = vpop.f32.mrb[0].mxu0
  %v6981 = vadd.f32 0.0, %v6980
  %v6982 = vpop.f32.mrb[0].mxu0
  %6983 = vmatprep.mubr.f32.mxu0 0.0
  %6984 = vmatmul.mubr.f32.gmra.mrb[0].mxu0 %v6906
  %v6985 = vpop.f32.mrb[0].mxu0
  %v6986 = vadd.f32 0.0, %v6985
  %v6987 = vpop.f32.mrb[0].mxu0
  %6988 = vmatprep.mubr.f32.mxu0 0.0
  %6989 = vmatmul.mubr.f32.gmra.mrb[0].mxu0 %v6909
  %v6990 = vpop.f32.mrb[0].mxu0
  %v6991 = vadd.f32 0.0, %v6990
  %v6992 = vpop.f32.mrb[0].mxu0
  %6993 = vmatprep.mubr.f32.mxu0 0.0
  %6994 = vmatmul.mubr.f32.gmra.mrb[0].mxu0 %v6912
  %v6995 = vpop.f32.mrb[0].mxu0
  %v6996 = vadd.f32 0.0, %v6995
  %v6997 = vpop.f32.mrb[0].mxu0
  %6998 = vdwg.mxu0
  %v6999 = vld [vmem:[%s8] sm:$0xff]
  %v7000 = vld [vmem:[%s8 + $0x8] sm:$0xff]
  %v7001 = vld [vmem:[%s8 + $0x10] sm:$0xff]
  %v7002 = vld [vmem:[%s8 + $0x18] sm:$0xff]
  %v7003 = vld [vmem:[%s8 + $0x20] sm:$0xff]
  %v7004 = vld [vmem:[%s8 + $0x28] sm:$0xff]
  %v7005 = vld [vmem:[%s8 + $0x30] sm:$0xff]
  %v7006 = vld [vmem:[%s8 + $0x38] sm:$0xff]
  %vm7007 = vcmp.eq.s32.totalorder %v6881, %v1462
  %vm7008 = vcmp.eq.s32.totalorder %v6881, %v1463
  %vm7009 = vcmp.eq.s32.totalorder %v6881, %v1464
  %vm7010 = vcmp.eq.s32.totalorder %v6881, %v1465
  %vm7011 = vmand %vm6890, %vm7007
  %vm7012 = vmand %vm6891, %vm7008
  %vm7013 = vmand %vm6892, %vm7009
  %vm7014 = vmand %vm6893, %vm7010
  %v7015 = vsel %vm7011, 1.0, 0.0
  %v7016 = vsel %vm7012, 1.0, 0.0
  %v7017 = vsel %vm7013, 1.0, 0.0
  %v7018 = vsel %vm7014, 1.0, 0.0
  %v7020 = vsel %vm818, %v7015, 0
  %v7023 = vsel %vm818, %v7016, 0
  %v7026 = vsel %vm818, %v7017, 0
  %v7029 = vsel %vm818, %v7018, 0
  %7031 = vmatprep.subr.mxu0 0.0
  %7032 = vmatpush1.msra.mxu0 %v6875
  %7033 = vmatprep.subr.mxu0 0.0
  %7034 = vmatpush1.msra.mxu0 %v6876
  %7035 = vmatprep.subr.mxu0 0.0
  %7036 = vmatpush1.msra.mxu0 0.0
  %7037 = vmatprep.subr.mxu0 0.0
  %7038 = vmatpush1.msra.mxu0 0.0
  %7039 = vmatprep.subr.mxu0 0.0
  %7040 = vmatpush1.msra.mxu0 0.0
  %7041 = vmatprep.subr.mxu0 0.0
  %7042 = vmatpush1.msra.mxu0 0.0
  %7043 = vmatprep.subr.mxu0 0.0
  %7044 = vmatpush1.msra.mxu0 0.0
  %7045 = vmatprep.subr.mxu0 0.0
  %7046 = vmatpush1.msra.mxu0 0.0
  %7047 = vmatprep.subr.mxu0 0.0
  %7048 = vmatpush1.msra.mxu0 0.0
  %7049 = vmatprep.subr.mxu0 0.0
  %7050 = vmatpush1.msra.mxu0 0.0
  %7051 = vmatprep.subr.mxu0 0.0
  %7052 = vmatpush1.msra.mxu0 0.0
  %7053 = vmatprep.subr.mxu0 0.0
  %7054 = vmatpush1.msra.mxu0 0.0
  %7055 = vmatprep.subr.mxu0 0.0
  %7056 = vmatpush1.msra.mxu0 0.0
  %7057 = vmatprep.subr.mxu0 0.0
  %7058 = vmatpush1.msra.mxu0 0.0
  %7059 = vmatprep.subr.mxu0 0.0
  %7060 = vmatpush1.msra.mxu0 0.0
  %7061 = vmatprep.subr.mxu0 0.0
  %7062 = vmatpush1.msra.mxu0 0.0
  %7063 = vmatprep.subr.mxu0 0.0
  %7064 = vmatpush1.msra.mxu0 0.0
  %7065 = vmatprep.subr.mxu0 0.0
  %7066 = vmatpush1.msra.mxu0 0.0
  %7067 = vmatprep.subr.mxu0 0.0
  %7068 = vmatpush1.msra.mxu0 0.0
  %7069 = vmatprep.subr.mxu0 0.0
  %7070 = vmatpush1.msra.mxu0 0.0
  %7071 = vmatprep.subr.mxu0 0.0
  %7072 = vmatpush1.msra.mxu0 0.0
  %7073 = vmatprep.subr.mxu0 0.0
  %7074 = vmatpush1.msra.mxu0 0.0
  %7075 = vmatprep.subr.mxu0 0.0
  %7076 = vmatpush1.msra.mxu0 0.0
  %7077 = vmatprep.subr.mxu0 0.0
  %7078 = vmatpush1.msra.mxu0 0.0
  %7079 = vmatprep.subr.mxu0 0.0
  %7080 = vmatpush1.msra.mxu0 0.0
  %7081 = vmatprep.subr.mxu0 0.0
  %7082 = vmatpush1.msra.mxu0 0.0
  %7083 = vmatprep.subr.mxu0 0.0
  %7084 = vmatpush1.msra.mxu0 0.0
  %7085 = vmatprep.subr.mxu0 0.0
  %7086 = vmatpush1.msra.mxu0 0.0
  %7087 = vmatprep.subr.mxu0 0.0
  %7088 = vmatpush1.msra.mxu0 0.0
  %7089 = vmatprep.subr.mxu0 0.0
  %7090 = vmatpush1.msra.mxu0 0.0
  %7091 = vmatprep.subr.mxu0 0.0
  %7092 = vmatpush1.msra.mxu0 0.0
  %7093 = vmatprep.subr.mxu0 0.0
  %7094 = vmatpush1.msra.mxu0 0.0
  %7095 = vmatprep.mubr.f32.mxu0 0.0
  %7096 = vmatmul.mubr.f32.gmra.mrb[0].mxu0 %v7020
  %v7097 = vpop.f32.mrb[0].mxu0
  %v7098 = vadd.f32 0.0, %v7097
  %v7099 = vpop.f32.mrb[0].mxu0
  %7100 = vmatprep.mubr.f32.mxu0 0.0
  %7101 = vmatmul.mubr.f32.gmra.mrb[0].mxu0 %v7023
  %v7102 = vpop.f32.mrb[0].mxu0
  %v7103 = vadd.f32 0.0, %v7102
  %v7104 = vpop.f32.mrb[0].mxu0
  %7105 = vmatprep.mubr.f32.mxu0 0.0
  %7106 = vmatmul.mubr.f32.gmra.mrb[0].mxu0 %v7026
  %v7107 = vpop.f32.mrb[0].mxu0
  %v7108 = vadd.f32 0.0, %v7107
  %v7109 = vpop.f32.mrb[0].mxu0
  %7110 = vmatprep.mubr.f32.mxu0 0.0
  %7111 = vmatmul.mubr.f32.gmra.mrb[0].mxu0 %v7029
  %v7112 = vpop.f32.mrb[0].mxu0
  %v7113 = vadd.f32 0.0, %v7112
  %v7114 = vpop.f32.mrb[0].mxu0
  %7115 = vdwg.mxu0
  %s7116 = scalar_lea.vmem %s8, 64
  %v7117 = vld [vmem:[%s7116] sm:$0xff]
  %v7118 = vld [vmem:[%s7116 + $0x8] sm:$0xff]
  %v7119 = vld [vmem:[%s7116 + $0x10] sm:$0xff]
  %v7120 = vld [vmem:[%s7116 + $0x18] sm:$0xff]
  %v7121 = vld [vmem:[%s7116 + $0x20] sm:$0xff]
  %v7122 = vld [vmem:[%s7116 + $0x28] sm:$0xff]
  %v7123 = vld [vmem:[%s7116 + $0x30] sm:$0xff]
  %v7124 = vld [vmem:[%s7116 + $0x38] sm:$0xff]
  %v7126 = vsel %vm985, %v7098, 0
  %v7129 = vsel %vm985, %v7103, 0
  %v7132 = vsel %vm985, %v7108, 0
  %v7135 = vsel %vm985, %v7113, 0
  %7137 = vmatprep.subr.mxu0 0.0
  %7138 = vmatpush1.msra.mxu0 %v7117
  %7139 = vmatprep.subr.mxu0 0.0
  %7140 = vmatpush1.msra.mxu0 %v7118
  %7141 = vmatprep.subr.mxu0 0.0
  %7142 = vmatpush1.msra.mxu0 %v7119
  %7143 = vmatprep.subr.mxu0 0.0
  %7144 = vmatpush1.msra.mxu0 %v7120
  %7145 = vmatprep.subr.mxu0 0.0
  %7146 = vmatpush1.msra.mxu0 %v7121
  %7147 = vmatprep.subr.mxu0 0.0
  %7148 = vmatpush1.msra.mxu0 %v7122
  %7149 = vmatprep.subr.mxu0 0.0
  %7150 = vmatpush1.msra.mxu0 %v7123
  %7151 = vmatprep.subr.mxu0 0.0
  %7152 = vmatpush1.msra.mxu0 %v7124
  %7153 = vmatprep.subr.mxu0 0.0
  %7154 = vmatpush1.msra.mxu0 0.0
  %7155 = vmatprep.subr.mxu0 0.0
  %7156 = vmatpush1.msra.mxu0 0.0
  %7157 = vmatprep.subr.mxu0 0.0
  %7158 = vmatpush1.msra.mxu0 0.0
  %7159 = vmatprep.subr.mxu0 0.0
  %7160 = vmatpush1.msra.mxu0 0.0
  %7161 = vmatprep.subr.mxu0 0.0
  %7162 = vmatpush1.msra.mxu0 0.0
  %7163 = vmatprep.subr.mxu0 0.0
  %7164 = vmatpush1.msra.mxu0 0.0
  %7165 = vmatprep.subr.mxu0 0.0
  %7166 = vmatpush1.msra.mxu0 0.0
  %7167 = vmatprep.subr.mxu0 0.0
  %7168 = vmatpush1.msra.mxu0 0.0
  %7169 = vmatprep.subr.mxu0 0.0
  %7170 = vmatpush1.msra.mxu0 0.0
  %7171 = vmatprep.subr.mxu0 0.0
  %7172 = vmatpush1.msra.mxu0 0.0
  %7173 = vmatprep.subr.mxu0 0.0
  %7174 = vmatpush1.msra.mxu0 0.0
  %7175 = vmatprep.subr.mxu0 0.0
  %7176 = vmatpush1.msra.mxu0 0.0
  %7177 = vmatprep.subr.mxu0 0.0
  %7178 = vmatpush1.msra.mxu0 0.0
  %7179 = vmatprep.subr.mxu0 0.0
  %7180 = vmatpush1.msra.mxu0 0.0
  %7181 = vmatprep.subr.mxu0 0.0
  %7182 = vmatpush1.msra.mxu0 0.0
  %7183 = vmatprep.subr.mxu0 0.0
  %7184 = vmatpush1.msra.mxu0 0.0
  %7185 = vmatprep.subr.mxu0 0.0
  %7186 = vmatpush1.msra.mxu0 0.0
  %7187 = vmatprep.subr.mxu0 0.0
  %7188 = vmatpush1.msra.mxu0 0.0
  %7189 = vmatprep.subr.mxu0 0.0
  %7190 = vmatpush1.msra.mxu0 0.0
  %7191 = vmatprep.subr.mxu0 0.0
  %7192 = vmatpush1.msra.mxu0 0.0
  %7193 = vmatprep.subr.mxu0 0.0
  %7194 = vmatpush1.msra.mxu0 0.0
  %7195 = vmatprep.subr.mxu0 0.0
  %7196 = vmatpush1.msra.mxu0 0.0
  %7197 = vmatprep.subr.mxu0 0.0
  %7198 = vmatpush1.msra.mxu0 0.0
  %7199 = vmatprep.subr.mxu0 0.0
  %7200 = vmatpush1.msra.mxu0 0.0
  %7201 = vmatprep.mubr.f32.mxu0 0.0
  %7202 = vmatmul.mubr.f32.gmra.mrb[0].mxu0 %v7126
  %v7203 = vpop.f32.mrb[0].mxu0
  %v7204 = vadd.f32 0.0, %v7203
  %v7205 = vpop.f32.mrb[0].mxu0
  %7206 = vmatprep.mubr.f32.mxu0 0.0
  %7207 = vmatmul.mubr.f32.gmra.mrb[0].mxu0 %v7129
  %v7208 = vpop.f32.mrb[0].mxu0
  %v7209 = vadd.f32 0.0, %v7208
  %v7210 = vpop.f32.mrb[0].mxu0
  %7211 = vmatprep.mubr.f32.mxu0 0.0
  %7212 = vmatmul.mubr.f32.gmra.mrb[0].mxu0 %v7132
  %v7213 = vpop.f32.mrb[0].mxu0
  %v7214 = vadd.f32 0.0, %v7213
  %v7215 = vpop.f32.mrb[0].mxu0
  %7216 = vmatprep.mubr.f32.mxu0 0.0
  %7217 = vmatmul.mubr.f32.gmra.mrb[0].mxu0 %v7135
  %v7218 = vpop.f32.mrb[0].mxu0
  %v7219 = vadd.f32 0.0, %v7218
  %v7220 = vpop.f32.mrb[0].mxu0
  %7221 = vdwg.mxu0
  %v7223 = vsel %vm985, %v6981, 0
  %v7226 = vsel %vm985, %v6986, 0
  %v7229 = vsel %vm985, %v6991, 0
  %v7232 = vsel %vm985, %v6996, 0
  %7234 = vmatprep.subr.mxu0 0.0
  %7235 = vmatpush1.msra.mxu0 %v6999
  %7236 = vmatprep.subr.mxu0 0.0
  %7237 = vmatpush1.msra.mxu0 %v7000
  %7238 = vmatprep.subr.mxu0 0.0
  %7239 = vmatpush1.msra.mxu0 %v7001
  %7240 = vmatprep.subr.mxu0 0.0
  %7241 = vmatpush1.msra.mxu0 %v7002
  %7242 = vmatprep.subr.mxu0 0.0
  %7243 = vmatpush1.msra.mxu0 %v7003
  %7244 = vmatprep.subr.mxu0 0.0
  %7245 = vmatpush1.msra.mxu0 %v7004
  %7246 = vmatprep.subr.mxu0 0.0
  %7247 = vmatpush1.msra.mxu0 %v7005
  %7248 = vmatprep.subr.mxu0 0.0
  %7249 = vmatpush1.msra.mxu0 %v7006
  %7250 = vmatprep.subr.mxu0 0.0
  %7251 = vmatpush1.msra.mxu0 0.0
  %7252 = vmatprep.subr.mxu0 0.0
  %7253 = vmatpush1.msra.mxu0 0.0
  %7254 = vmatprep.subr.mxu0 0.0
  %7255 = vmatpush1.msra.mxu0 0.0
  %7256 = vmatprep.subr.mxu0 0.0
  %7257 = vmatpush1.msra.mxu0 0.0
  %7258 = vmatprep.subr.mxu0 0.0
  %7259 = vmatpush1.msra.mxu0 0.0
  %7260 = vmatprep.subr.mxu0 0.0
  %7261 = vmatpush1.msra.mxu0 0.0
  %7262 = vmatprep.subr.mxu0 0.0
  %7263 = vmatpush1.msra.mxu0 0.0
  %7264 = vmatprep.subr.mxu0 0.0
  %7265 = vmatpush1.msra.mxu0 0.0
  %7266 = vmatprep.subr.mxu0 0.0
  %7267 = vmatpush1.msra.mxu0 0.0
  %7268 = vmatprep.subr.mxu0 0.0
  %7269 = vmatpush1.msra.mxu0 0.0
  %7270 = vmatprep.subr.mxu0 0.0
  %7271 = vmatpush1.msra.mxu0 0.0
  %7272 = vmatprep.subr.mxu0 0.0
  %7273 = vmatpush1.msra.mxu0 0.0
  %7274 = vmatprep.subr.mxu0 0.0
  %7275 = vmatpush1.msra.mxu0 0.0
  %7276 = vmatprep.subr.mxu0 0.0
  %7277 = vmatpush1.msra.mxu0 0.0
  %7278 = vmatprep.subr.mxu0 0.0
  %7279 = vmatpush1.msra.mxu0 0.0
  %7280 = vmatprep.subr.mxu0 0.0
  %7281 = vmatpush1.msra.mxu0 0.0
  %7282 = vmatprep.subr.mxu0 0.0
  %7283 = vmatpush1.msra.mxu0 0.0
  %7284 = vmatprep.subr.mxu0 0.0
  %7285 = vmatpush1.msra.mxu0 0.0
  %7286 = vmatprep.subr.mxu0 0.0
  %7287 = vmatpush1.msra.mxu0 0.0
  %7288 = vmatprep.subr.mxu0 0.0
  %7289 = vmatpush1.msra.mxu0 0.0
  %7290 = vmatprep.subr.mxu0 0.0
  %7291 = vmatpush1.msra.mxu0 0.0
  %7292 = vmatprep.subr.mxu0 0.0
  %7293 = vmatpush1.msra.mxu0 0.0
  %7294 = vmatprep.subr.mxu0 0.0
  %7295 = vmatpush1.msra.mxu0 0.0
  %7296 = vmatprep.subr.mxu0 0.0
  %7297 = vmatpush1.msra.mxu0 0.0
  %7298 = vmatprep.mubr.f32.mxu0 0.0
  %7299 = vmatmul.mubr.f32.gmra.mrb[0].mxu0 %v7223
  %v7300 = vpop.f32.mrb[0].mxu0
  %v7301 = vadd.f32 %v7204, %v7300
  %v7302 = vpop.f32.mrb[0].mxu0
  %7303 = vmatprep.mubr.f32.mxu0 0.0
  %7304 = vmatmul.mubr.f32.gmra.mrb[0].mxu0 %v7226
  %v7305 = vpop.f32.mrb[0].mxu0
  %v7306 = vadd.f32 %v7209, %v7305
  %v7307 = vpop.f32.mrb[0].mxu0
  %7308 = vmatprep.mubr.f32.mxu0 0.0
  %7309 = vmatmul.mubr.f32.gmra.mrb[0].mxu0 %v7229
  %v7310 = vpop.f32.mrb[0].mxu0
  %v7311 = vadd.f32 %v7214, %v7310
  %v7312 = vpop.f32.mrb[0].mxu0
  %7313 = vmatprep.mubr.f32.mxu0 0.0
  %7314 = vmatmul.mubr.f32.gmra.mrb[0].mxu0 %v7232
  %v7315 = vpop.f32.mrb[0].mxu0
  %v7316 = vadd.f32 %v7219, %v7315
  %v7317 = vpop.f32.mrb[0].mxu0
  %7318 = vdwg.mxu0
  %v7319 = vsub.s32 %v6882, 2
  %v7320 = vsub.s32 %v6883, 2
  %v7321 = vsub.s32 %v6884, 2
  %v7322 = vsub.s32 %v6885, 2
  %vm7323 = vcmp.eq.s32.totalorder %v6881, %v7319
  %vm7324 = vcmp.eq.s32.totalorder %v6881, %v7320
  %vm7325 = vcmp.eq.s32.totalorder %v6881, %v7321
  %vm7326 = vcmp.eq.s32.totalorder %v6881, %v7322
  %vm7327 = vmand %vm6890, %vm7323
  %vm7328 = vmand %vm6891, %vm7324
  %vm7329 = vmand %vm6892, %vm7325
  %vm7330 = vmand %vm6893, %vm7326
  %v7331 = vsel %vm7327, 1.0, 0.0
  %v7332 = vsel %vm7328, 1.0, 0.0
  %v7333 = vsel %vm7329, 1.0, 0.0
  %v7334 = vsel %vm7330, 1.0, 0.0
  %v7336 = vsel %vm818, %v7331, 0
  %v7339 = vsel %vm818, %v7332, 0
  %v7342 = vsel %vm818, %v7333, 0
  %v7345 = vsel %vm818, %v7334, 0
  %7347 = vmatprep.subr.mxu0 0.0
  %7348 = vmatpush1.msra.mxu0 %v6875
  %7349 = vmatprep.subr.mxu0 0.0
  %7350 = vmatpush1.msra.mxu0 %v6876
  %7351 = vmatprep.subr.mxu0 0.0
  %7352 = vmatpush1.msra.mxu0 0.0
  %7353 = vmatprep.subr.mxu0 0.0
  %7354 = vmatpush1.msra.mxu0 0.0
  %7355 = vmatprep.subr.mxu0 0.0
  %7356 = vmatpush1.msra.mxu0 0.0
  %7357 = vmatprep.subr.mxu0 0.0
  %7358 = vmatpush1.msra.mxu0 0.0
  %7359 = vmatprep.subr.mxu0 0.0
  %7360 = vmatpush1.msra.mxu0 0.0
  %7361 = vmatprep.subr.mxu0 0.0
  %7362 = vmatpush1.msra.mxu0 0.0
  %7363 = vmatprep.subr.mxu0 0.0
  %7364 = vmatpush1.msra.mxu0 0.0
  %7365 = vmatprep.subr.mxu0 0.0
  %7366 = vmatpush1.msra.mxu0 0.0
  %7367 = vmatprep.subr.mxu0 0.0
  %7368 = vmatpush1.msra.mxu0 0.0
  %7369 = vmatprep.subr.mxu0 0.0
  %7370 = vmatpush1.msra.mxu0 0.0
  %7371 = vmatprep.subr.mxu0 0.0
  %7372 = vmatpush1.msra.mxu0 0.0
  %7373 = vmatprep.subr.mxu0 0.0
  %7374 = vmatpush1.msra.mxu0 0.0
  %7375 = vmatprep.subr.mxu0 0.0
  %7376 = vmatpush1.msra.mxu0 0.0
  %7377 = vmatprep.subr.mxu0 0.0
  %7378 = vmatpush1.msra.mxu0 0.0
  %7379 = vmatprep.subr.mxu0 0.0
  %7380 = vmatpush1.msra.mxu0 0.0
  %7381 = vmatprep.subr.mxu0 0.0
  %7382 = vmatpush1.msra.mxu0 0.0
  %7383 = vmatprep.subr.mxu0 0.0
  %7384 = vmatpush1.msra.mxu0 0.0
  %7385 = vmatprep.subr.mxu0 0.0
  %7386 = vmatpush1.msra.mxu0 0.0
  %7387 = vmatprep.subr.mxu0 0.0
  %7388 = vmatpush1.msra.mxu0 0.0
  %7389 = vmatprep.subr.mxu0 0.0
  %7390 = vmatpush1.msra.mxu0 0.0
  %7391 = vmatprep.subr.mxu0 0.0
  %7392 = vmatpush1.msra.mxu0 0.0
  %7393 = vmatprep.subr.mxu0 0.0
  %7394 = vmatpush1.msra.mxu0 0.0
  %7395 = vmatprep.subr.mxu0 0.0
  %7396 = vmatpush1.msra.mxu0 0.0
  %7397 = vmatprep.subr.mxu0 0.0
  %7398 = vmatpush1.msra.mxu0 0.0
  %7399 = vmatprep.subr.mxu0 0.0
  %7400 = vmatpush1.msra.mxu0 0.0
  %7401 = vmatprep.subr.mxu0 0.0
  %7402 = vmatpush1.msra.mxu0 0.0
  %7403 = vmatprep.subr.mxu0 0.0
  %7404 = vmatpush1.msra.mxu0 0.0
  %7405 = vmatprep.subr.mxu0 0.0
  %7406 = vmatpush1.msra.mxu0 0.0
  %7407 = vmatprep.subr.mxu0 0.0
  %7408 = vmatpush1.msra.mxu0 0.0
  %7409 = vmatprep.subr.mxu0 0.0
  %7410 = vmatpush1.msra.mxu0 0.0
  %7411 = vmatprep.mubr.f32.mxu0 0.0
  %7412 = vmatmul.mubr.f32.gmra.mrb[0].mxu0 %v7336
  %v7413 = vpop.f32.mrb[0].mxu0
  %v7414 = vadd.f32 0.0, %v7413
  %v7415 = vpop.f32.mrb[0].mxu0
  %7416 = vmatprep.mubr.f32.mxu0 0.0
  %7417 = vmatmul.mubr.f32.gmra.mrb[0].mxu0 %v7339
  %v7418 = vpop.f32.mrb[0].mxu0
  %v7419 = vadd.f32 0.0, %v7418
  %v7420 = vpop.f32.mrb[0].mxu0
  %7421 = vmatprep.mubr.f32.mxu0 0.0
  %7422 = vmatmul.mubr.f32.gmra.mrb[0].mxu0 %v7342
  %v7423 = vpop.f32.mrb[0].mxu0
  %v7424 = vadd.f32 0.0, %v7423
  %v7425 = vpop.f32.mrb[0].mxu0
  %7426 = vmatprep.mubr.f32.mxu0 0.0
  %7427 = vmatmul.mubr.f32.gmra.mrb[0].mxu0 %v7345
  %v7428 = vpop.f32.mrb[0].mxu0
  %v7429 = vadd.f32 0.0, %v7428
  %v7430 = vpop.f32.mrb[0].mxu0
  %7431 = vdwg.mxu0
  %s7432 = scalar_lea.vmem %s8, 128
  %v7433 = vld [vmem:[%s7432] sm:$0xff]
  %v7434 = vld [vmem:[%s7432 + $0x8] sm:$0xff]
  %v7435 = vld [vmem:[%s7432 + $0x10] sm:$0xff]
  %v7436 = vld [vmem:[%s7432 + $0x18] sm:$0xff]
  %v7437 = vld [vmem:[%s7432 + $0x20] sm:$0xff]
  %v7438 = vld [vmem:[%s7432 + $0x28] sm:$0xff]
  %v7439 = vld [vmem:[%s7432 + $0x30] sm:$0xff]
  %v7440 = vld [vmem:[%s7432 + $0x38] sm:$0xff]
  %v7442 = vsel %vm985, %v7414, 0
  %v7445 = vsel %vm985, %v7419, 0
  %v7448 = vsel %vm985, %v7424, 0
  %v7451 = vsel %vm985, %v7429, 0
  %7453 = vmatprep.subr.mxu0 0.0
  %7454 = vmatpush1.msra.mxu0 %v7433
  %7455 = vmatprep.subr.mxu0 0.0
  %7456 = vmatpush1.msra.mxu0 %v7434
  %7457 = vmatprep.subr.mxu0 0.0
  %7458 = vmatpush1.msra.mxu0 %v7435
  %7459 = vmatprep.subr.mxu0 0.0
  %7460 = vmatpush1.msra.mxu0 %v7436
  %7461 = vmatprep.subr.mxu0 0.0
  %7462 = vmatpush1.msra.mxu0 %v7437
  %7463 = vmatprep.subr.mxu0 0.0
  %7464 = vmatpush1.msra.mxu0 %v7438
  %7465 = vmatprep.subr.mxu0 0.0
  %7466 = vmatpush1.msra.mxu0 %v7439
  %7467 = vmatprep.subr.mxu0 0.0
  %7468 = vmatpush1.msra.mxu0 %v7440
  %7469 = vmatprep.subr.mxu0 0.0
  %7470 = vmatpush1.msra.mxu0 0.0
  %7471 = vmatprep.subr.mxu0 0.0
  %7472 = vmatpush1.msra.mxu0 0.0
  %7473 = vmatprep.subr.mxu0 0.0
  %7474 = vmatpush1.msra.mxu0 0.0
  %7475 = vmatprep.subr.mxu0 0.0
  %7476 = vmatpush1.msra.mxu0 0.0
  %7477 = vmatprep.subr.mxu0 0.0
  %7478 = vmatpush1.msra.mxu0 0.0
  %7479 = vmatprep.subr.mxu0 0.0
  %7480 = vmatpush1.msra.mxu0 0.0
  %7481 = vmatprep.subr.mxu0 0.0
  %7482 = vmatpush1.msra.mxu0 0.0
  %7483 = vmatprep.subr.mxu0 0.0
  %7484 = vmatpush1.msra.mxu0 0.0
  %7485 = vmatprep.subr.mxu0 0.0
  %7486 = vmatpush1.msra.mxu0 0.0
  %7487 = vmatprep.subr.mxu0 0.0
  %7488 = vmatpush1.msra.mxu0 0.0
  %7489 = vmatprep.subr.mxu0 0.0
  %7490 = vmatpush1.msra.mxu0 0.0
  %7491 = vmatprep.subr.mxu0 0.0
  %7492 = vmatpush1.msra.mxu0 0.0
  %7493 = vmatprep.subr.mxu0 0.0
  %7494 = vmatpush1.msra.mxu0 0.0
  %7495 = vmatprep.subr.mxu0 0.0
  %7496 = vmatpush1.msra.mxu0 0.0
  %7497 = vmatprep.subr.mxu0 0.0
  %7498 = vmatpush1.msra.mxu0 0.0
  %7499 = vmatprep.subr.mxu0 0.0
  %7500 = vmatpush1.msra.mxu0 0.0
  %7501 = vmatprep.subr.mxu0 0.0
  %7502 = vmatpush1.msra.mxu0 0.0
  %7503 = vmatprep.subr.mxu0 0.0
  %7504 = vmatpush1.msra.mxu0 0.0
  %7505 = vmatprep.subr.mxu0 0.0
  %7506 = vmatpush1.msra.mxu0 0.0
  %7507 = vmatprep.subr.mxu0 0.0
  %7508 = vmatpush1.msra.mxu0 0.0
  %7509 = vmatprep.subr.mxu0 0.0
  %7510 = vmatpush1.msra.mxu0 0.0
  %7511 = vmatprep.subr.mxu0 0.0
  %7512 = vmatpush1.msra.mxu0 0.0
  %7513 = vmatprep.subr.mxu0 0.0
  %7514 = vmatpush1.msra.mxu0 0.0
  %7515 = vmatprep.subr.mxu0 0.0
  %7516 = vmatpush1.msra.mxu0 0.0
  %7517 = vmatprep.mubr.f32.mxu0 0.0
  %7518 = vmatmul.mubr.f32.gmra.mrb[0].mxu0 %v7442
  %v7519 = vpop.f32.mrb[0].mxu0
  %v7520 = vadd.f32 0.0, %v7519
  %v7521 = vpop.f32.mrb[0].mxu0
  %7522 = vmatprep.mubr.f32.mxu0 0.0
  %7523 = vmatmul.mubr.f32.gmra.mrb[0].mxu0 %v7445
  %v7524 = vpop.f32.mrb[0].mxu0
  %v7525 = vadd.f32 0.0, %v7524
  %v7526 = vpop.f32.mrb[0].mxu0
  %7527 = vmatprep.mubr.f32.mxu0 0.0
  %7528 = vmatmul.mubr.f32.gmra.mrb[0].mxu0 %v7448
  %v7529 = vpop.f32.mrb[0].mxu0
  %v7530 = vadd.f32 0.0, %v7529
  %v7531 = vpop.f32.mrb[0].mxu0
  %7532 = vmatprep.mubr.f32.mxu0 0.0
  %7533 = vmatmul.mubr.f32.gmra.mrb[0].mxu0 %v7451
  %v7534 = vpop.f32.mrb[0].mxu0
  %v7535 = vadd.f32 0.0, %v7534
  %v7536 = vpop.f32.mrb[0].mxu0
  %7537 = vdwg.mxu0
  %v7538 = vadd.f32 %v7301, %v7520
  %v7539 = vadd.f32 %v7306, %v7525
  %v7540 = vadd.f32 %v7311, %v7530
  %v7541 = vadd.f32 %v7316, %v7535
  %v7542 = vsub.s32 %v6882, 3
  %v7543 = vsub.s32 %v6883, 3
  %v7544 = vsub.s32 %v6884, 3
  %v7545 = vsub.s32 %v6885, 3
  %vm7546 = vcmp.eq.s32.totalorder %v6881, %v7542
  %vm7547 = vcmp.eq.s32.totalorder %v6881, %v7543
  %vm7548 = vcmp.eq.s32.totalorder %v6881, %v7544
  %vm7549 = vcmp.eq.s32.totalorder %v6881, %v7545
  %vm7550 = vmand %vm6890, %vm7546
  %vm7551 = vmand %vm6891, %vm7547
  %vm7552 = vmand %vm6892, %vm7548
  %vm7553 = vmand %vm6893, %vm7549
  %v7554 = vsel %vm7550, 1.0, 0.0
  %v7555 = vsel %vm7551, 1.0, 0.0
  %v7556 = vsel %vm7552, 1.0, 0.0
  %v7557 = vsel %vm7553, 1.0, 0.0
  %v7559 = vsel %vm818, %v7554, 0
  %v7562 = vsel %vm818, %v7555, 0
  %v7565 = vsel %vm818, %v7556, 0
  %v7568 = vsel %vm818, %v7557, 0
  %7570 = vmatprep.subr.mxu0 0.0
  %7571 = vmatpush1.msra.mxu0 %v6875
  %7572 = vmatprep.subr.mxu0 0.0
  %7573 = vmatpush1.msra.mxu0 %v6876
  %7574 = vmatprep.subr.mxu0 0.0
  %7575 = vmatpush1.msra.mxu0 0.0
  %7576 = vmatprep.subr.mxu0 0.0
  %7577 = vmatpush1.msra.mxu0 0.0
  %7578 = vmatprep.subr.mxu0 0.0
  %7579 = vmatpush1.msra.mxu0 0.0
  %7580 = vmatprep.subr.mxu0 0.0
  %7581 = vmatpush1.msra.mxu0 0.0
  %7582 = vmatprep.subr.mxu0 0.0
  %7583 = vmatpush1.msra.mxu0 0.0
  %7584 = vmatprep.subr.mxu0 0.0
  %7585 = vmatpush1.msra.mxu0 0.0
  %7586 = vmatprep.subr.mxu0 0.0
  %7587 = vmatpush1.msra.mxu0 0.0
  %7588 = vmatprep.subr.mxu0 0.0
  %7589 = vmatpush1.msra.mxu0 0.0
  %7590 = vmatprep.subr.mxu0 0.0
  %7591 = vmatpush1.msra.mxu0 0.0
  %7592 = vmatprep.subr.mxu0 0.0
  %7593 = vmatpush1.msra.mxu0 0.0
  %7594 = vmatprep.subr.mxu0 0.0
  %7595 = vmatpush1.msra.mxu0 0.0
  %7596 = vmatprep.subr.mxu0 0.0
  %7597 = vmatpush1.msra.mxu0 0.0
  %7598 = vmatprep.subr.mxu0 0.0
  %7599 = vmatpush1.msra.mxu0 0.0
  %7600 = vmatprep.subr.mxu0 0.0
  %7601 = vmatpush1.msra.mxu0 0.0
  %7602 = vmatprep.subr.mxu0 0.0
  %7603 = vmatpush1.msra.mxu0 0.0
  %7604 = vmatprep.subr.mxu0 0.0
  %7605 = vmatpush1.msra.mxu0 0.0
  %7606 = vmatprep.subr.mxu0 0.0
  %7607 = vmatpush1.msra.mxu0 0.0
  %7608 = vmatprep.subr.mxu0 0.0
  %7609 = vmatpush1.msra.mxu0 0.0
  %7610 = vmatprep.subr.mxu0 0.0
  %7611 = vmatpush1.msra.mxu0 0.0
  %7612 = vmatprep.subr.mxu0 0.0
  %7613 = vmatpush1.msra.mxu0 0.0
  %7614 = vmatprep.subr.mxu0 0.0
  %7615 = vmatpush1.msra.mxu0 0.0
  %7616 = vmatprep.subr.mxu0 0.0
  %7617 = vmatpush1.msra.mxu0 0.0
  %7618 = vmatprep.subr.mxu0 0.0
  %7619 = vmatpush1.msra.mxu0 0.0
  %7620 = vmatprep.subr.mxu0 0.0
  %7621 = vmatpush1.msra.mxu0 0.0
  %7622 = vmatprep.subr.mxu0 0.0
  %7623 = vmatpush1.msra.mxu0 0.0
  %7624 = vmatprep.subr.mxu0 0.0
  %7625 = vmatpush1.msra.mxu0 0.0
  %7626 = vmatprep.subr.mxu0 0.0
  %7627 = vmatpush1.msra.mxu0 0.0
  %7628 = vmatprep.subr.mxu0 0.0
  %7629 = vmatpush1.msra.mxu0 0.0
  %7630 = vmatprep.subr.mxu0 0.0
  %7631 = vmatpush1.msra.mxu0 0.0
  %7632 = vmatprep.subr.mxu0 0.0
  %7633 = vmatpush1.msra.mxu0 0.0
  %7634 = vmatprep.mubr.f32.mxu0 0.0
  %7635 = vmatmul.mubr.f32.gmra.mrb[0].mxu0 %v7559
  %v7636 = vpop.f32.mrb[0].mxu0
  %v7637 = vadd.f32 0.0, %v7636
  %v7638 = vpop.f32.mrb[0].mxu0
  %7639 = vmatprep.mubr.f32.mxu0 0.0
  %7640 = vmatmul.mubr.f32.gmra.mrb[0].mxu0 %v7562
  %v7641 = vpop.f32.mrb[0].mxu0
  %v7642 = vadd.f32 0.0, %v7641
  %v7643 = vpop.f32.mrb[0].mxu0
  %7644 = vmatprep.mubr.f32.mxu0 0.0
  %7645 = vmatmul.mubr.f32.gmra.mrb[0].mxu0 %v7565
  %v7646 = vpop.f32.mrb[0].mxu0
  %v7647 = vadd.f32 0.0, %v7646
  %v7648 = vpop.f32.mrb[0].mxu0
  %7649 = vmatprep.mubr.f32.mxu0 0.0
  %7650 = vmatmul.mubr.f32.gmra.mrb[0].mxu0 %v7568
  %v7651 = vpop.f32.mrb[0].mxu0
  %v7652 = vadd.f32 0.0, %v7651
  %v7653 = vpop.f32.mrb[0].mxu0
  %7654 = vdwg.mxu0
  %s7655 = scalar_lea.vmem %s8, 192
  %v7656 = vld [vmem:[%s7655] sm:$0xff]
  %v7657 = vld [vmem:[%s7655 + $0x8] sm:$0xff]
  %v7658 = vld [vmem:[%s7655 + $0x10] sm:$0xff]
  %v7659 = vld [vmem:[%s7655 + $0x18] sm:$0xff]
  %v7660 = vld [vmem:[%s7655 + $0x20] sm:$0xff]
  %v7661 = vld [vmem:[%s7655 + $0x28] sm:$0xff]
  %v7662 = vld [vmem:[%s7655 + $0x30] sm:$0xff]
  %v7663 = vld [vmem:[%s7655 + $0x38] sm:$0xff]
  %v7665 = vsel %vm985, %v7637, 0
  %v7668 = vsel %vm985, %v7642, 0
  %v7671 = vsel %vm985, %v7647, 0
  %v7674 = vsel %vm985, %v7652, 0
  %7676 = vmatprep.subr.mxu0 0.0
  %7677 = vmatpush1.msra.mxu0 %v7656
  %7678 = vmatprep.subr.mxu0 0.0
  %7679 = vmatpush1.msra.mxu0 %v7657
  %7680 = vmatprep.subr.mxu0 0.0
  %7681 = vmatpush1.msra.mxu0 %v7658
  %7682 = vmatprep.subr.mxu0 0.0
  %7683 = vmatpush1.msra.mxu0 %v7659
  %7684 = vmatprep.subr.mxu0 0.0
  %7685 = vmatpush1.msra.mxu0 %v7660
  %7686 = vmatprep.subr.mxu0 0.0
  %7687 = vmatpush1.msra.mxu0 %v7661
  %7688 = vmatprep.subr.mxu0 0.0
  %7689 = vmatpush1.msra.mxu0 %v7662
  %7690 = vmatprep.subr.mxu0 0.0
  %7691 = vmatpush1.msra.mxu0 %v7663
  %7692 = vmatprep.subr.mxu0 0.0
  %7693 = vmatpush1.msra.mxu0 0.0
  %7694 = vmatprep.subr.mxu0 0.0
  %7695 = vmatpush1.msra.mxu0 0.0
  %7696 = vmatprep.subr.mxu0 0.0
  %7697 = vmatpush1.msra.mxu0 0.0
  %7698 = vmatprep.subr.mxu0 0.0
  %7699 = vmatpush1.msra.mxu0 0.0
  %7700 = vmatprep.subr.mxu0 0.0
  %7701 = vmatpush1.msra.mxu0 0.0
  %7702 = vmatprep.subr.mxu0 0.0
  %7703 = vmatpush1.msra.mxu0 0.0
  %7704 = vmatprep.subr.mxu0 0.0
  %7705 = vmatpush1.msra.mxu0 0.0
  %7706 = vmatprep.subr.mxu0 0.0
  %7707 = vmatpush1.msra.mxu0 0.0
  %7708 = vmatprep.subr.mxu0 0.0
  %7709 = vmatpush1.msra.mxu0 0.0
  %7710 = vmatprep.subr.mxu0 0.0
  %7711 = vmatpush1.msra.mxu0 0.0
  %7712 = vmatprep.subr.mxu0 0.0
  %7713 = vmatpush1.msra.mxu0 0.0
  %7714 = vmatprep.subr.mxu0 0.0
  %7715 = vmatpush1.msra.mxu0 0.0
  %7716 = vmatprep.subr.mxu0 0.0
  %7717 = vmatpush1.msra.mxu0 0.0
  %7718 = vmatprep.subr.mxu0 0.0
  %7719 = vmatpush1.msra.mxu0 0.0
  %7720 = vmatprep.subr.mxu0 0.0
  %7721 = vmatpush1.msra.mxu0 0.0
  %7722 = vmatprep.subr.mxu0 0.0
  %7723 = vmatpush1.msra.mxu0 0.0
  %7724 = vmatprep.subr.mxu0 0.0
  %7725 = vmatpush1.msra.mxu0 0.0
  %7726 = vmatprep.subr.mxu0 0.0
  %7727 = vmatpush1.msra.mxu0 0.0
  %7728 = vmatprep.subr.mxu0 0.0
  %7729 = vmatpush1.msra.mxu0 0.0
  %7730 = vmatprep.subr.mxu0 0.0
  %7731 = vmatpush1.msra.mxu0 0.0
  %7732 = vmatprep.subr.mxu0 0.0
  %7733 = vmatpush1.msra.mxu0 0.0
  %7734 = vmatprep.subr.mxu0 0.0
  %7735 = vmatpush1.msra.mxu0 0.0
  %7736 = vmatprep.subr.mxu0 0.0
  %7737 = vmatpush1.msra.mxu0 0.0
  %7738 = vmatprep.subr.mxu0 0.0
  %7739 = vmatpush1.msra.mxu0 0.0
  %7740 = vmatprep.mubr.f32.mxu0 0.0
  %7741 = vmatmul.mubr.f32.gmra.mrb[0].mxu0 %v7665
  %v7742 = vpop.f32.mrb[0].mxu0
  %v7743 = vadd.f32 0.0, %v7742
  %v7744 = vpop.f32.mrb[0].mxu0
  %7745 = vmatprep.mubr.f32.mxu0 0.0
  %7746 = vmatmul.mubr.f32.gmra.mrb[0].mxu0 %v7668
  %v7747 = vpop.f32.mrb[0].mxu0
  %v7748 = vadd.f32 0.0, %v7747
  %v7749 = vpop.f32.mrb[0].mxu0
  %7750 = vmatprep.mubr.f32.mxu0 0.0
  %7751 = vmatmul.mubr.f32.gmra.mrb[0].mxu0 %v7671
  %v7752 = vpop.f32.mrb[0].mxu0
  %v7753 = vadd.f32 0.0, %v7752
  %v7754 = vpop.f32.mrb[0].mxu0
  %7755 = vmatprep.mubr.f32.mxu0 0.0
  %7756 = vmatmul.mubr.f32.gmra.mrb[0].mxu0 %v7674
  %v7757 = vpop.f32.mrb[0].mxu0
  %v7758 = vadd.f32 0.0, %v7757
  %v7759 = vpop.f32.mrb[0].mxu0
  %7760 = vdwg.mxu0
  %v7761 = vadd.f32 %v7538, %v7743
  %v7762 = vadd.f32 %v7539, %v7748
  %v7763 = vadd.f32 %v7540, %v7753
  %v7764 = vadd.f32 %v7541, %v7758
  %7765 = vst.msk [vmem:[%s21] sm:$0xff] %vm277, %v7761
  %7766 = vst.msk [vmem:[%s21 + $0x8] sm:$0xff] %vm277, %v7762
  %7767 = vst.msk [vmem:[%s21 + $0x10] sm:$0xff] %vm277, %v7763
  %7768 = vst.msk [vmem:[%s21 + $0x18] sm:$0xff] %vm277, %v7764
  // Predicated region
  $region86: #{netD_forward.1} parent=0 // pred_check
    _
  $region87: #{netD_forward.1} parent=0 // pred_check_branch
    %7770 = sbr.rel (0) target = $region89
  $region88: #{netD_forward.1} parent=0 // pred_region
    _
  $region89: #{netD_forward.1} parent=0 // pred_fallthru
    _
  // Predicated region
  $region90: #{netD_forward.1} parent=0 // pred_check
    _
  $region91: #{netD_forward.1} parent=0 // pred_check_branch
    %7772 = sbr.rel (0) target = $region93
  $region92: #{netD_forward.1} parent=0 // pred_region
    _
  $region93: #{netD_forward.1} parent=0 // pred_fallthru
    _

</llo_original>
